<compile_context>
chip_gen: v6e
topology: v6e:2x2x1
jax: 0.10.0
libtpu: 0.0.40
codegen_flags: <defaults>
</compile_context>

<pallas_src>
import math
from functools import partial

import jax
import jax.numpy as jnp
from jax.experimental import pallas as pl
from jax.experimental.pallas import tpu as pltpu

_LN_EPS = 1e-5


def _layer_norm(v, gamma, beta):
    mu = jnp.mean(v, axis=-1, keepdims=True)
    var = jnp.mean((v - mu) ** 2, axis=-1, keepdims=True)
    return (v - mu) * jax.lax.rsqrt(var + _LN_EPS) * gamma + beta


# -----------------------------------------------------------------------------
# Kernel 1: LN1 + QKV projection producer (runs once per (batch, row tile)).
# Writes bf16 head-split (B, H, T, Dh) Q/K/V to HBM with PE added to Q/K,
# biases added, and the 1/sqrt(Dh) score scale folded into Q.
# -----------------------------------------------------------------------------
def _qkv_producer_kernel(x_ref, pe_ref, g1_ref, be1_ref,
                         wq_ref, wk_ref, wv_ref, bq_ref, bk_ref, bv_ref,
                         q_ref, k_ref, v_ref, *, num_heads, head_dim):
    TR, _ = x_ref.shape
    H, Dh = num_heads, head_dim
    xn = _layer_norm(x_ref[...], g1_ref[0], be1_ref[0]).astype(jnp.bfloat16)
    pe = pe_ref[...]
    q = jnp.dot(xn, wq_ref[...], preferred_element_type=jnp.float32) + bq_ref[0] + pe
    q = q * (1.0 / math.sqrt(Dh))                 # fold score scale into Q
    k = jnp.dot(xn, wk_ref[...], preferred_element_type=jnp.float32) + bk_ref[0] + pe
    v = jnp.dot(xn, wv_ref[...], preferred_element_type=jnp.float32) + bv_ref[0]
    q_ref[...] = pltpu.einshape("thd->htd", q.astype(jnp.bfloat16).reshape(TR, H, Dh))
    k_ref[...] = pltpu.einshape("thd->htd", k.astype(jnp.bfloat16).reshape(TR, H, Dh))
    v_ref[...] = pltpu.einshape("thd->htd", v.astype(jnp.bfloat16).reshape(TR, H, Dh))


# -----------------------------------------------------------------------------
# Kernel 2: causal flash attention (online softmax over KV blocks) + output
# projection + residual + LN2 + MLP + residual, fused in the epilogue.
# Grid = (B, q_tiles, kv_tiles); kv axis is "arbitrary" (scratch-carried).
# -----------------------------------------------------------------------------
def _attn_mlp_kernel(x_ref, q_ref, k_ref, v_ref,
                     wo_ref, bo_ref, g2_ref, be2_ref,
                     w1_ref, b1_ref, w2_ref, b2_ref,
                     o_ref, m_scr, l_scr, acc_scr):
    H, TQ, Dh = q_ref.shape
    TK = k_ref.shape[1]
    C = x_ref.shape[-1]
    q_i = pl.program_id(1)
    kv_i = pl.program_id(2)

    @pl.when(kv_i == 0)
    def _init():
        m_scr[...] = jnp.full(m_scr.shape, -jnp.inf, jnp.float32)
        l_scr[...] = jnp.zeros(l_scr.shape, jnp.float32)
        acc_scr[...] = jnp.zeros(acc_scr.shape, jnp.float32)

    def _online_softmax_update(apply_causal_mask):
        s = jnp.einsum("hqd,hkd->hqk", q_ref[...], k_ref[...],
                       preferred_element_type=jnp.float32)        # (H, TQ, TK) f32
        if apply_causal_mask:
            # Diagonal block only (q_i == kv_i, TQ == TK): local row >= local col.
            r = jax.lax.broadcasted_iota(jnp.int32, (TQ, TK), 0)
            c = jax.lax.broadcasted_iota(jnp.int32, (TQ, TK), 1)
            s = jnp.where((c <= r)[None, :, :], s, jnp.float32(-1e30))
        m_prev = m_scr[...]
        m_new = jnp.maximum(m_prev, jnp.max(s, axis=-1, keepdims=True))
        alpha = jnp.exp(m_prev - m_new)
        p = jnp.exp(s - m_new)
        l_scr[...] = alpha * l_scr[...] + jnp.sum(p, axis=-1, keepdims=True)
        acc_scr[...] = alpha * acc_scr[...] + jnp.einsum(
            "hqk,hkd->hqd", p.astype(jnp.bfloat16), v_ref[...],
            preferred_element_type=jnp.float32)
        m_scr[...] = m_new

    # Off-diagonal causal blocks: no mask.  Blocks with kv > q are fully masked
    # -> skipped entirely (their index_map is clamped, so no new DMA either).
    @pl.when(kv_i < q_i)
    def _():
        _online_softmax_update(False)

    @pl.when(kv_i == q_i)
    def _():
        _online_softmax_update(True)

    @pl.when(kv_i == pl.num_programs(2) - 1)
    def _epilogue():
        y = acc_scr[...] * pl.reciprocal(l_scr[...], approx=True)   # EUP divide
        y = pltpu.einshape("hqd->qhd", y).reshape(TQ, C)
        y = jnp.dot(y.astype(jnp.bfloat16), wo_ref[...],
                    preferred_element_type=jnp.float32) + bo_ref[0]
        src = x_ref[...] + y                                        # residual 1
        xn2 = _layer_norm(src, g2_ref[0], be2_ref[0]).astype(jnp.bfloat16)
        h = jnp.dot(xn2, w1_ref[...], preferred_element_type=jnp.float32) + b1_ref[0]
        h = jnp.maximum(h, 0.0)
        h = jnp.dot(h.astype(jnp.bfloat16), w2_ref[...],
                    preferred_element_type=jnp.float32) + b2_ref[0]
        o_ref[...] = (src + h).astype(o_ref.dtype)                  # residual 2


# -----------------------------------------------------------------------------
# Wrapper helpers
# -----------------------------------------------------------------------------
def _const_spec(shape, grid_rank, single_buffered):
    """BlockSpec for an operand whose block index never changes across the grid."""
    nd = len(shape)
    if grid_rank == 2:
        idx = lambda b, r: (0,) * nd
    else:
        idx = lambda b, q, k: (0,) * nd
    if single_buffered:
        # No pipelining benefit from double-buffering a constant block; halve VMEM.
        return pl.BlockSpec(shape, idx, pipeline_mode=pl.Buffered(1))
    return pl.BlockSpec(shape, idx)


def _vmem_limit_bytes():
    # ~85% of physical VMEM: ~54 MiB on v7x (64 MiB), ~109 MiB on v5e/v6e (128 MiB).
    try:
        cap = int(pltpu.get_tpu_info().vmem_capacity_bytes)
        return int(cap * 0.85)
    except Exception:
        return 64 * 1024 * 1024          # conservative, known-safe default


def _pick_block(T):
    # 256-row tiles fill the 256-wide MXU on v6e/v7x; v2-v5 MXUs are 128-wide.
    kind = ""
    try:
        kind = jax.devices()[0].device_kind.lower()
    except Exception:
        pass
    small_mxu = any(s in kind for s in ("v2", "v3", "v4", "v5"))
    blk = 128 if small_mxu else 256
    if T <= blk:
        return max(T, 1)                 # single tile (block == full dim is legal)
    return blk


def prepare_params(params):
    """Split the fused QKV projection and cast matmul weights to bf16 ONCE."""
    C = params["wqkv"].shape[0]
    bf16 = jnp.bfloat16
    wqkv, bqkv = params["wqkv"], params["bqkv"]
    return dict(
        wq=wqkv[:, :C].astype(bf16), wk=wqkv[:, C:2 * C].astype(bf16),
        wv=wqkv[:, 2 * C:].astype(bf16),
        bq=bqkv[:, :C], bk=bqkv[:, C:2 * C], bv=bqkv[:, 2 * C:],
        wo=params["wproj"].astype(bf16), bo=params["bproj"],
        w1=params["w1"].astype(bf16), b1=params["b1"],
        w2=params["w2"].astype(bf16), b2=params["b2"],
        g1=params["g1"], be1=params["be1"], g2=params["g2"], be2=params["be2"],
        pe=params["pe"],
    )


@partial(jax.jit, static_argnames=("num_heads", "single_buffered"))
def _encoder_layer_impl(x, p, num_heads, single_buffered):
    B, T, C = x.shape
    H = num_heads
    Dh = C // H
    F_dim = p["w1"].shape[1]

    blk = _pick_block(T)
    n_tiles = int(pl.cdiv(T, blk))
    T_pad = n_tiles * blk
    x_p = x if T_pad == T else jnp.pad(x, ((0, 0), (0, T_pad - T), (0, 0)))
    pe_t = p["pe"][:T]
    if T_pad != T:
        pe_t = jnp.pad(pe_t, ((0, T_pad - T), (0, 0)))

    vmem_limit = _vmem_limit_bytes()
    cs2 = lambda s: _const_spec(s, 2, single_buffered)
    cs3 = lambda s: _const_spec(s, 3, single_buffered)

    # ---------------- kernel 1: LN1 + QKV projection (once per row tile) --------
    qkv_shape = jax.ShapeDtypeStruct((B, H, T_pad, Dh), jnp.bfloat16)
    q_hbm, k_hbm, v_hbm = pl.pallas_call(
        partial(_qkv_producer_kernel, num_heads=H, head_dim=Dh),
        out_shape=(qkv_shape, qkv_shape, qkv_shape),
        grid_spec=pltpu.PrefetchScalarGridSpec(
            num_scalar_prefetch=0,
            grid=(B, n_tiles),
            in_specs=[
                pl.BlockSpec((None, blk, C), lambda b, r: (b, r, 0)),   # x tile
                pl.BlockSpec((blk, C), lambda b, r: (r, 0)),            # pe tile
                cs2((1, C)), cs2((1, C)),                               # g1, be1
                cs2((C, C)), cs2((C, C)), cs2((C, C)),                  # wq wk wv
                cs2((1, C)), cs2((1, C)), cs2((1, C)),                  # bq bk bv
            ],
            out_specs=[
                pl.BlockSpec((None, H, blk, Dh), lambda b, r: (b, 0, r, 0)),
                pl.BlockSpec((None, H, blk, Dh), lambda b, r: (b, 0, r, 0)),
                pl.BlockSpec((None, H, blk, Dh), lambda b, r: (b, 0, r, 0)),
            ],
        ),
        compiler_params=pltpu.CompilerParams(
            dimension_semantics=("parallel", "parallel"),
            vmem_limit_bytes=vmem_limit,
        ),
        cost_estimate=pl.CostEstimate(
            flops=int(6 * B * T_pad * C * C),
            transcendentals=0,
            bytes_accessed=int(B * T_pad * C * 4 + T_pad * C * 4
                               + 3 * C * C * 2 + 3 * B * T_pad * C * 2),
        ),
    )(x_p, pe_t, p["g1"], p["be1"],
      p["wq"], p["wk"], p["wv"], p["bq"], p["bk"], p["bv"])

    # -------- kernel 2: causal flash attention + out-proj + LN2 + MLP -----------
    causal_pairs = T_pad * (T_pad + blk) // 2
    attn_flops = int(4 * B * C * causal_pairs)               # QK^T + PV (causal)
    mlp_flops = int(2 * B * T_pad * C * C + 4 * B * T_pad * C * F_dim)
    out = pl.pallas_call(
        _attn_mlp_kernel,
        out_shape=jax.ShapeDtypeStruct((B, T_pad, C), x.dtype),
        grid_spec=pltpu.PrefetchScalarGridSpec(
            num_scalar_prefetch=0,
            grid=(B, n_tiles, n_tiles),
            in_specs=[
                pl.BlockSpec((None, blk, C), lambda b, q, k: (b, q, 0)),         # x
                pl.BlockSpec((None, H, blk, Dh), lambda b, q, k: (b, 0, q, 0)),  # Q
                pl.BlockSpec((None, H, blk, Dh),                                 # K
                             lambda b, q, k: (b, 0, jnp.minimum(k, q), 0)),
                pl.BlockSpec((None, H, blk, Dh),                                 # V
                             lambda b, q, k: (b, 0, jnp.minimum(k, q), 0)),
                cs3((C, C)), cs3((1, C)),                                        # wo bo
                cs3((1, C)), cs3((1, C)),                                        # g2 be2
                cs3((C, F_dim)), cs3((1, F_dim)),                                # w1 b1
                cs3((F_dim, C)), cs3((1, C)),                                    # w2 b2
            ],
            out_specs=pl.BlockSpec((None, blk, C), lambda b, q, k: (b, q, 0)),
            scratch_shapes=[
                pltpu.VMEM((H, blk, 1), jnp.float32),    # running max m
                pltpu.VMEM((H, blk, 1), jnp.float32),    # running sum l
                pltpu.VMEM((H, blk, Dh), jnp.float32),   # output accumulator
            ],
        ),
        compiler_params=pltpu.CompilerParams(
            dimension_semantics=("parallel", "parallel", "arbitrary"),
            vmem_limit_bytes=vmem_limit,
        ),
        cost_estimate=pl.CostEstimate(
            flops=attn_flops + mlp_flops,
            transcendentals=int(B * H * causal_pairs),
            bytes_accessed=int(2 * B * T_pad * C * 4            # x in + out
                               + B * T_pad * C * 2              # Q
                               + B * C * causal_pairs // max(blk, 1) * 2 * 2  # K/V
                               + (C * C + 2 * C * F_dim) * 2),
        ),
    )(x_p, q_hbm, k_hbm, v_hbm,
      p["wo"], p["bo"], p["g2"], p["be2"],
      p["w1"], p["b1"], p["w2"], p["b2"])

    if T_pad != T:
        out = out[:, :T, :]
    return out


def transformer_encoder_layer(x, params, num_heads):
    try:
        out = _encoder_layer_impl(x, params, num_heads=num_heads,
                                  single_buffered=True)
        return jax.block_until_ready(out)
    except Exception:
        # pipeline_mode=pl.Buffered(1) unsupported on this jax/libtpu combination:
        # fall back to default (double-buffered) constant-operand specs.
        return _encoder_layer_impl(x, params, num_heads=num_heads,
                                   single_buffered=False)


# -------------------- pure-JAX f32 reference (for validation) --------------------
def reference(x, params, num_heads):
    B, T, C = x.shape
    Dh = C // num_heads
    eps = 1e-5

    def ln(v, g, b):
        mu = jnp.mean(v, -1, keepdims=True)
        var = jnp.mean((v - mu) ** 2, -1, keepdims=True)
        return (v - mu) / jnp.sqrt(var + eps) * g + b

    src2 = ln(x, params["g1"][0], params["be1"][0])
    qkv = src2 @ params["wqkv"] + params["bqkv"][0]
    pe = params["pe"][:T]
    q = (qkv[..., :C] + pe).reshape(B, T, num_heads, Dh).transpose(0, 2, 1, 3)
    k = (qkv[..., C:2 * C] + pe).reshape(B, T, num_heads, Dh).transpose(0, 2, 1, 3)
    v = qkv[..., 2 * C:].reshape(B, T, num_heads, Dh).transpose(0, 2, 1, 3)
    s = jnp.einsum("bhqd,bhkd->bhqk", q, k) / math.sqrt(Dh)
    mask = jnp.tril(jnp.ones((T, T), bool))
    s = jnp.where(mask, s, -jnp.inf)
    p = jax.nn.softmax(s, axis=-1)
    y = jnp.einsum("bhqk,bhkd->bhqd", p, v).transpose(0, 2, 1, 3).reshape(B, T, C)
    y = y @ params["wproj"] + params["bproj"][0]
    src = x + y
    src2 = ln(src, params["g2"][0], params["be2"][0])
    h = jax.nn.relu(src2 @ params["w1"] + params["b1"][0])
    return src + h @ params["w2"] + params["b2"][0]


def init_params(key, embed_dim, dim_feedforward):
    C, F = embed_dim, dim_feedforward

    def linear(k, fan_in, fan_out):
        kw, kb = jax.random.split(k)
        bound = 1.0 / math.sqrt(fan_in)
        w = jax.random.uniform(kw, (fan_in, fan_out), jnp.float32, -bound, bound)
        b = jax.random.uniform(kb, (1, fan_out), jnp.float32, -bound, bound)
        return w, b

    k1, k2, k3, k4 = jax.random.split(key, 4)
    wqkv, bqkv = linear(k1, C, 3 * C)
    wproj, bproj = linear(k2, C, C)
    w1, b1 = linear(k3, C, F)
    w2, b2 = linear(k4, F, C)

    # sinusoidal positional encoding (matches the PyTorch buffer construction)
    position = jnp.arange(5000, dtype=jnp.float32)[:, None]
    div_term = jnp.exp(jnp.arange(0, C, 2, dtype=jnp.float32) * (-math.log(10000.0) / C))
    pe = jnp.zeros((5000, C), jnp.float32)
    pe = pe.at[:, 0::2].set(jnp.sin(position * div_term))
    pe = pe.at[:, 1::2].set(jnp.cos(position * div_term))

    return dict(
        wqkv=wqkv, bqkv=bqkv, wproj=wproj, bproj=bproj,
        w1=w1, b1=b1, w2=w2, b2=b2,
        g1=jnp.ones((1, C), jnp.float32), be1=jnp.zeros((1, C), jnp.float32),
        g2=jnp.ones((1, C), jnp.float32), be2=jnp.zeros((1, C), jnp.float32),
        pe=pe,
    )


if __name__ == "__main__":
    B, T, C = 2, 8, 32
    num_heads = 4
    dim_feedforward = 64

    key = jax.random.PRNGKey(0)
    kx, kp = jax.random.split(key)
    x = jax.random.normal(kx, (B, T, C), jnp.float32)
    params = init_params(kp, C, dim_feedforward)

    kernel_params = prepare_params(params)   # split / cast weights once
    out = transformer_encoder_layer(x, kernel_params, num_heads)
    out = jax.block_until_ready(out)

    ref = reference(x, params, num_heads)
    assert out.shape == (B, T, C)
    # Kernel uses bf16 matmul operands / bf16 Q,K,V residency with f32 accumulation.
    err = float(jnp.max(jnp.abs(out - ref)))
    assert jnp.allclose(out, ref, atol=8e-2, rtol=8e-2), \
        f"mismatch vs reference (max |diff| = {err})"

    print("KERNEL_OK")
</pallas_src>

<mosaic_0001>
module attributes {stable_mosaic.version = 11 : i64} {
  func.func @_attn_mlp_kernel(%arg0: i32, %arg1: i32, %arg2: i32, %arg3: memref<1x8x32xf32, #tpu.memory_space<vmem>>, %arg4: memref<1x4x8x8xbf16, #tpu.memory_space<vmem>>, %arg5: memref<1x4x8x8xbf16, #tpu.memory_space<vmem>>, %arg6: memref<1x4x8x8xbf16, #tpu.memory_space<vmem>>, %arg7: memref<32x32xbf16, #tpu.memory_space<vmem>>, %arg8: memref<1x32xf32, #tpu.memory_space<vmem>>, %arg9: memref<1x32xf32, #tpu.memory_space<vmem>>, %arg10: memref<1x32xf32, #tpu.memory_space<vmem>>, %arg11: memref<32x64xbf16, #tpu.memory_space<vmem>>, %arg12: memref<1x64xf32, #tpu.memory_space<vmem>>, %arg13: memref<64x32xbf16, #tpu.memory_space<vmem>>, %arg14: memref<1x32xf32, #tpu.memory_space<vmem>>, %arg15: memref<1x8x32xf32, #tpu.memory_space<vmem>>, %arg16: memref<4x8x1xf32, #tpu.memory_space<vmem>>, %arg17: memref<4x8x1xf32, #tpu.memory_space<vmem>>, %arg18: memref<4x8x8xf32, #tpu.memory_space<vmem>>) attributes {dimension_semantics = [#tpu.dimension_semantics<parallel>, #tpu.dimension_semantics<parallel>, #tpu.dimension_semantics<arbitrary>], iteration_bounds = array<i64: 2, 1, 1>, scalar_prefetch = 0 : i64, scratch_operands = 3 : i64, tpu.core_type = #tpu.core_type<tc>, window_params = [{transform_indices = @transform_0, window_bounds = array<i64: 1, 8, 32>}, {transform_indices = @transform_1, window_bounds = array<i64: 1, 4, 8, 8>}, {transform_indices = @transform_2, window_bounds = array<i64: 1, 4, 8, 8>}, {transform_indices = @transform_3, window_bounds = array<i64: 1, 4, 8, 8>}, {pipeline_mode = #tpu.pipeline_mode<synchronous>, transform_indices = @transform_4, window_bounds = array<i64: 32, 32>}, {pipeline_mode = #tpu.pipeline_mode<synchronous>, transform_indices = @transform_5, window_bounds = array<i64: 1, 32>}, {pipeline_mode = #tpu.pipeline_mode<synchronous>, transform_indices = @transform_6, window_bounds = array<i64: 1, 32>}, {pipeline_mode = #tpu.pipeline_mode<synchronous>, transform_indices = @transform_7, window_bounds = array<i64: 1, 32>}, {pipeline_mode = #tpu.pipeline_mode<synchronous>, transform_indices = @transform_8, window_bounds = array<i64: 32, 64>}, {pipeline_mode = #tpu.pipeline_mode<synchronous>, transform_indices = @transform_9, window_bounds = array<i64: 1, 64>}, {pipeline_mode = #tpu.pipeline_mode<synchronous>, transform_indices = @transform_10, window_bounds = array<i64: 64, 32>}, {pipeline_mode = #tpu.pipeline_mode<synchronous>, transform_indices = @transform_11, window_bounds = array<i64: 1, 32>}, {transform_indices = @transform_12, window_bounds = array<i64: 1, 8, 32>}]} {
    %c0_i32 = arith.constant 0 : i32
    %0 = arith.cmpi eq, %arg2, %c0_i32 : i32
    %1 = arith.extui %0 : i1 to i32
    %c0_i32_0 = arith.constant 0 : i32
    %2 = arith.cmpi ne, %1, %c0_i32_0 : i32
    scf.if %2 {
      %cst = arith.constant 0xFF800000 : f32
      %12 = vector.broadcast %cst : f32 to vector<4x8x1xf32>
      %c0 = arith.constant 0 : index
      %c0_5 = arith.constant 0 : index
      %c0_6 = arith.constant 0 : index
      %13 = vector.load %arg16[%c0, %c0_5, %c0_6] : memref<4x8x1xf32, #tpu.memory_space<vmem>>, vector<4x8x1xf32>
      tpu.vector_store %arg16[%c0, %c0_5, %c0_6], %12 {strides = array<i32>} : memref<4x8x1xf32, #tpu.memory_space<vmem>>, vector<4x8x1xf32>,
      %cst_7 = arith.constant 0.000000e+00 : f32
      %14 = vector.broadcast %cst_7 : f32 to vector<4x8x1xf32>
      %c0_8 = arith.constant 0 : index
      %c0_9 = arith.constant 0 : index
      %c0_10 = arith.constant 0 : index
      %15 = vector.load %arg17[%c0_8, %c0_9, %c0_10] : memref<4x8x1xf32, #tpu.memory_space<vmem>>, vector<4x8x1xf32>
      tpu.vector_store %arg17[%c0_8, %c0_9, %c0_10], %14 {strides = array<i32>} : memref<4x8x1xf32, #tpu.memory_space<vmem>>, vector<4x8x1xf32>,
      %cst_11 = arith.constant 0.000000e+00 : f32
      %16 = vector.broadcast %cst_11 : f32 to vector<4x8x8xf32>
      %c0_12 = arith.constant 0 : index
      %c0_13 = arith.constant 0 : index
      %c0_14 = arith.constant 0 : index
      %17 = vector.load %arg18[%c0_12, %c0_13, %c0_14] : memref<4x8x8xf32, #tpu.memory_space<vmem>>, vector<4x8x8xf32>
      tpu.vector_store %arg18[%c0_12, %c0_13, %c0_14], %16 {strides = array<i32>} : memref<4x8x8xf32, #tpu.memory_space<vmem>>, vector<4x8x8xf32>,
    } else {
    }
    %3 = arith.cmpi slt, %arg2, %arg1 : i32
    %4 = arith.extui %3 : i1 to i32
    %c0_i32_1 = arith.constant 0 : i32
    %5 = arith.cmpi ne, %4, %c0_i32_1 : i32
    scf.if %5 {
      %c0 = arith.constant 0 : index
      %c0_5 = arith.constant 0 : index
      %c0_6 = arith.constant 0 : index
      %c0_7 = arith.constant 0 : index
      %12 = vector.load %arg4[%c0, %c0_5, %c0_6, %c0_7] : memref<1x4x8x8xbf16, #tpu.memory_space<vmem>>, vector<1x4x8x8xbf16>
      %13 = vector.shape_cast %12 : vector<1x4x8x8xbf16> to vector<4x8x8xbf16>
      %c0_8 = arith.constant 0 : index
      %c0_9 = arith.constant 0 : index
      %c0_10 = arith.constant 0 : index
      %c0_11 = arith.constant 0 : index
      %14 = vector.load %arg5[%c0_8, %c0_9, %c0_10, %c0_11] : memref<1x4x8x8xbf16, #tpu.memory_space<vmem>>, vector<1x4x8x8xbf16>
      %15 = vector.shape_cast %14 : vector<1x4x8x8xbf16> to vector<4x8x8xbf16>
      "tpu.trace_start"() <{level = 10 : i32, message = "hqd,hkd->hqk"}> : () -> ()
      %cst = arith.constant dense<0.000000e+00> : vector<4x8x8xf32>
      %16 = tpu.matmul %13, %15, %cst {dimension_numbers = #tpu.dot_dimension_numbers<[2], [2], [1], [1], [0, 0, 0, 1, 1, 1], [0], [0]>} : vector<4x8x8xbf16>, vector<4x8x8xbf16>, vector<4x8x8xf32> -> vector<4x8x8xf32>
      "tpu.trace_stop"() : () -> ()
      %c0_12 = arith.constant 0 : index
      %c0_13 = arith.constant 0 : index
      %c0_14 = arith.constant 0 : index
      %17 = vector.load %arg16[%c0_12, %c0_13, %c0_14] : memref<4x8x1xf32, #tpu.memory_space<vmem>>, vector<4x8x1xf32>
      %cst_15 = arith.constant dense<0xFF800000> : vector<4x8xf32>
      %18 = vector.multi_reduction <maximumf>, %16, %cst_15 [2] : vector<4x8x8xf32> to vector<4x8xf32>
      %19 = vector.shape_cast %18 : vector<4x8xf32> to vector<4x8x1xf32>
      %20 = arith.maximumf %17, %19 : vector<4x8x1xf32>
      %21 = arith.subf %17, %20 : vector<4x8x1xf32>
      %22 = math.exp %21 : vector<4x8x1xf32>
      %23 = vector.broadcast %20 : vector<4x8x1xf32> to vector<4x8x8xf32>
      %24 = arith.subf %16, %23 : vector<4x8x8xf32>
      %25 = math.exp %24 : vector<4x8x8xf32>
      %c0_16 = arith.constant 0 : index
      %c0_17 = arith.constant 0 : index
      %c0_18 = arith.constant 0 : index
      %26 = vector.load %arg17[%c0_16, %c0_17, %c0_18] : memref<4x8x1xf32, #tpu.memory_space<vmem>>, vector<4x8x1xf32>
      %27 = arith.mulf %22, %26 : vector<4x8x1xf32>
      %cst_19 = arith.constant dense<0.000000e+00> : vector<4x8xf32>
      %28 = vector.multi_reduction <add>, %25, %cst_19 [2] : vector<4x8x8xf32> to vector<4x8xf32>
      %29 = vector.shape_cast %28 : vector<4x8xf32> to vector<4x8x1xf32>
      %30 = arith.addf %27, %29 : vector<4x8x1xf32>
      %c0_20 = arith.constant 0 : index
      %c0_21 = arith.constant 0 : index
      %c0_22 = arith.constant 0 : index
      %31 = vector.load %arg17[%c0_20, %c0_21, %c0_22] : memref<4x8x1xf32, #tpu.memory_space<vmem>>, vector<4x8x1xf32>
      tpu.vector_store %arg17[%c0_20, %c0_21, %c0_22], %30 {strides = array<i32>} : memref<4x8x1xf32, #tpu.memory_space<vmem>>, vector<4x8x1xf32>,
      %c0_23 = arith.constant 0 : index
      %c0_24 = arith.constant 0 : index
      %c0_25 = arith.constant 0 : index
      %32 = vector.load %arg18[%c0_23, %c0_24, %c0_25] : memref<4x8x8xf32, #tpu.memory_space<vmem>>, vector<4x8x8xf32>
      %33 = vector.broadcast %22 : vector<4x8x1xf32> to vector<4x8x8xf32>
      %34 = arith.mulf %33, %32 : vector<4x8x8xf32>
      %35 = arith.truncf %25 : vector<4x8x8xf32> to vector<4x8x8xbf16>
      %c0_26 = arith.constant 0 : index
      %c0_27 = arith.constant 0 : index
      %c0_28 = arith.constant 0 : index
      %c0_29 = arith.constant 0 : index
      %36 = vector.load %arg6[%c0_26, %c0_27, %c0_28, %c0_29] : memref<1x4x8x8xbf16, #tpu.memory_space<vmem>>, vector<1x4x8x8xbf16>
      %37 = vector.shape_cast %36 : vector<1x4x8x8xbf16> to vector<4x8x8xbf16>
      "tpu.trace_start"() <{level = 10 : i32, message = "hqk,hkd->hqd"}> : () -> ()
      %cst_30 = arith.constant dense<0.000000e+00> : vector<4x8x8xf32>
      %38 = tpu.matmul %35, %37, %cst_30 {dimension_numbers = #tpu.dot_dimension_numbers<[2], [1], [1], [2], [0, 0, 0, 1, 1, 2], [0], [0]>} : vector<4x8x8xbf16>, vector<4x8x8xbf16>, vector<4x8x8xf32> -> vector<4x8x8xf32>
      "tpu.trace_stop"() : () -> ()
      %39 = arith.addf %34, %38 : vector<4x8x8xf32>
      %c0_31 = arith.constant 0 : index
      %c0_32 = arith.constant 0 : index
      %c0_33 = arith.constant 0 : index
      %40 = vector.load %arg18[%c0_31, %c0_32, %c0_33] : memref<4x8x8xf32, #tpu.memory_space<vmem>>, vector<4x8x8xf32>
      tpu.vector_store %arg18[%c0_31, %c0_32, %c0_33], %39 {strides = array<i32>} : memref<4x8x8xf32, #tpu.memory_space<vmem>>, vector<4x8x8xf32>,
      %c0_34 = arith.constant 0 : index
      %c0_35 = arith.constant 0 : index
      %c0_36 = arith.constant 0 : index
      %41 = vector.load %arg16[%c0_34, %c0_35, %c0_36] : memref<4x8x1xf32, #tpu.memory_space<vmem>>, vector<4x8x1xf32>
      tpu.vector_store %arg16[%c0_34, %c0_35, %c0_36], %20 {strides = array<i32>} : memref<4x8x1xf32, #tpu.memory_space<vmem>>, vector<4x8x1xf32>,
    } else {
    }
    %6 = arith.cmpi eq, %arg2, %arg1 : i32
    %7 = arith.extui %6 : i1 to i32
    %c0_i32_2 = arith.constant 0 : i32
    %8 = arith.cmpi ne, %7, %c0_i32_2 : i32
    scf.if %8 {
      %c0 = arith.constant 0 : index
      %c0_5 = arith.constant 0 : index
      %c0_6 = arith.constant 0 : index
      %c0_7 = arith.constant 0 : index
      %12 = vector.load %arg4[%c0, %c0_5, %c0_6, %c0_7] : memref<1x4x8x8xbf16, #tpu.memory_space<vmem>>, vector<1x4x8x8xbf16>
      %13 = vector.shape_cast %12 : vector<1x4x8x8xbf16> to vector<4x8x8xbf16>
      %c0_8 = arith.constant 0 : index
      %c0_9 = arith.constant 0 : index
      %c0_10 = arith.constant 0 : index
      %c0_11 = arith.constant 0 : index
      %14 = vector.load %arg5[%c0_8, %c0_9, %c0_10, %c0_11] : memref<1x4x8x8xbf16, #tpu.memory_space<vmem>>, vector<1x4x8x8xbf16>
      %15 = vector.shape_cast %14 : vector<1x4x8x8xbf16> to vector<4x8x8xbf16>
      "tpu.trace_start"() <{level = 10 : i32, message = "hqd,hkd->hqk"}> : () -> ()
      %cst = arith.constant dense<0.000000e+00> : vector<4x8x8xf32>
      %16 = tpu.matmul %13, %15, %cst {dimension_numbers = #tpu.dot_dimension_numbers<[2], [2], [1], [1], [0, 0, 0, 1, 1, 1], [0], [0]>} : vector<4x8x8xbf16>, vector<4x8x8xbf16>, vector<4x8x8xf32> -> vector<4x8x8xf32>
      "tpu.trace_stop"() : () -> ()
      %17 = tpu.iota {dimensions = array<i32: 0>} : vector<8x8xi32>
      %18 = tpu.iota {dimensions = array<i32: 1>} : vector<8x8xi32>
      %19 = arith.cmpi sle, %18, %17 : vector<8x8xi32>
      %20 = vector.shape_cast %19 : vector<8x8xi1> to vector<1x8x8xi1>
      %cst_12 = arith.constant -1.000000e+30 : f32
      %21 = vector.shape_cast %20 : vector<1x8x8xi1> to vector<1x8x8xi1>
      %22 = vector.broadcast %21 : vector<1x8x8xi1> to vector<4x8x8xi1>
      %23 = vector.broadcast %cst_12 : f32 to vector<4x8x8xf32>
      %24 = arith.select %22, %16, %23 : vector<4x8x8xi1>, vector<4x8x8xf32>
      %c0_13 = arith.constant 0 : index
      %c0_14 = arith.constant 0 : index
      %c0_15 = arith.constant 0 : index
      %25 = vector.load %arg16[%c0_13, %c0_14, %c0_15] : memref<4x8x1xf32, #tpu.memory_space<vmem>>, vector<4x8x1xf32>
      %cst_16 = arith.constant dense<0xFF800000> : vector<4x8xf32>
      %26 = vector.multi_reduction <maximumf>, %24, %cst_16 [2] : vector<4x8x8xf32> to vector<4x8xf32>
      %27 = vector.shape_cast %26 : vector<4x8xf32> to vector<4x8x1xf32>
      %28 = arith.maximumf %25, %27 : vector<4x8x1xf32>
      %29 = arith.subf %25, %28 : vector<4x8x1xf32>
      %30 = math.exp %29 : vector<4x8x1xf32>
      %31 = vector.broadcast %28 : vector<4x8x1xf32> to vector<4x8x8xf32>
      %32 = arith.subf %24, %31 : vector<4x8x8xf32>
      %33 = math.exp %32 : vector<4x8x8xf32>
      %c0_17 = arith.constant 0 : index
      %c0_18 = arith.constant 0 : index
      %c0_19 = arith.constant 0 : index
      %34 = vector.load %arg17[%c0_17, %c0_18, %c0_19] : memref<4x8x1xf32, #tpu.memory_space<vmem>>, vector<4x8x1xf32>
      %35 = arith.mulf %30, %34 : vector<4x8x1xf32>
      %cst_20 = arith.constant dense<0.000000e+00> : vector<4x8xf32>
      %36 = vector.multi_reduction <add>, %33, %cst_20 [2] : vector<4x8x8xf32> to vector<4x8xf32>
      %37 = vector.shape_cast %36 : vector<4x8xf32> to vector<4x8x1xf32>
      %38 = arith.addf %35, %37 : vector<4x8x1xf32>
      %c0_21 = arith.constant 0 : index
      %c0_22 = arith.constant 0 : index
      %c0_23 = arith.constant 0 : index
      %39 = vector.load %arg17[%c0_21, %c0_22, %c0_23] : memref<4x8x1xf32, #tpu.memory_space<vmem>>, vector<4x8x1xf32>
      tpu.vector_store %arg17[%c0_21, %c0_22, %c0_23], %38 {strides = array<i32>} : memref<4x8x1xf32, #tpu.memory_space<vmem>>, vector<4x8x1xf32>,
      %c0_24 = arith.constant 0 : index
      %c0_25 = arith.constant 0 : index
      %c0_26 = arith.constant 0 : index
      %40 = vector.load %arg18[%c0_24, %c0_25, %c0_26] : memref<4x8x8xf32, #tpu.memory_space<vmem>>, vector<4x8x8xf32>
      %41 = vector.broadcast %30 : vector<4x8x1xf32> to vector<4x8x8xf32>
      %42 = arith.mulf %41, %40 : vector<4x8x8xf32>
      %43 = arith.truncf %33 : vector<4x8x8xf32> to vector<4x8x8xbf16>
      %c0_27 = arith.constant 0 : index
      %c0_28 = arith.constant 0 : index
      %c0_29 = arith.constant 0 : index
      %c0_30 = arith.constant 0 : index
      %44 = vector.load %arg6[%c0_27, %c0_28, %c0_29, %c0_30] : memref<1x4x8x8xbf16, #tpu.memory_space<vmem>>, vector<1x4x8x8xbf16>
      %45 = vector.shape_cast %44 : vector<1x4x8x8xbf16> to vector<4x8x8xbf16>
      "tpu.trace_start"() <{level = 10 : i32, message = "hqk,hkd->hqd"}> : () -> ()
      %cst_31 = arith.constant dense<0.000000e+00> : vector<4x8x8xf32>
      %46 = tpu.matmul %43, %45, %cst_31 {dimension_numbers = #tpu.dot_dimension_numbers<[2], [1], [1], [2], [0, 0, 0, 1, 1, 2], [0], [0]>} : vector<4x8x8xbf16>, vector<4x8x8xbf16>, vector<4x8x8xf32> -> vector<4x8x8xf32>
      "tpu.trace_stop"() : () -> ()
      %47 = arith.addf %42, %46 : vector<4x8x8xf32>
      %c0_32 = arith.constant 0 : index
      %c0_33 = arith.constant 0 : index
      %c0_34 = arith.constant 0 : index
      %48 = vector.load %arg18[%c0_32, %c0_33, %c0_34] : memref<4x8x8xf32, #tpu.memory_space<vmem>>, vector<4x8x8xf32>
      tpu.vector_store %arg18[%c0_32, %c0_33, %c0_34], %47 {strides = array<i32>} : memref<4x8x8xf32, #tpu.memory_space<vmem>>, vector<4x8x8xf32>,
      %c0_35 = arith.constant 0 : index
      %c0_36 = arith.constant 0 : index
      %c0_37 = arith.constant 0 : index
      %49 = vector.load %arg16[%c0_35, %c0_36, %c0_37] : memref<4x8x1xf32, #tpu.memory_space<vmem>>, vector<4x8x1xf32>
      tpu.vector_store %arg16[%c0_35, %c0_36, %c0_37], %28 {strides = array<i32>} : memref<4x8x1xf32, #tpu.memory_space<vmem>>, vector<4x8x1xf32>,
    } else {
    }
    %c0_i32_3 = arith.constant 0 : i32
    %9 = arith.cmpi eq, %arg2, %c0_i32_3 : i32
    %10 = arith.extui %9 : i1 to i32
    %c0_i32_4 = arith.constant 0 : i32
    %11 = arith.cmpi ne, %10, %c0_i32_4 : i32
    scf.if %11 {
      %c0 = arith.constant 0 : index
      %c0_5 = arith.constant 0 : index
      %c0_6 = arith.constant 0 : index
      %12 = vector.load %arg18[%c0, %c0_5, %c0_6] : memref<4x8x8xf32, #tpu.memory_space<vmem>>, vector<4x8x8xf32>
      %c0_7 = arith.constant 0 : index
      %c0_8 = arith.constant 0 : index
      %c0_9 = arith.constant 0 : index
      %13 = vector.load %arg17[%c0_7, %c0_8, %c0_9] : memref<4x8x1xf32, #tpu.memory_space<vmem>>, vector<4x8x1xf32>
      %14 = tpu.reciprocal %13 {approx = true} : vector<4x8x1xf32> -> vector<4x8x1xf32>
      %15 = vector.broadcast %14 : vector<4x8x1xf32> to vector<4x8x8xf32>
      %16 = arith.mulf %12, %15 : vector<4x8x8xf32>
      %17 = tpu.transpose %16, [1, 0, 2] : vector<4x8x8xf32> -> vector<8x4x8xf32>
      %18 = vector.shape_cast %17 : vector<8x4x8xf32> to vector<8x32xf32>
      %19 = arith.truncf %18 : vector<8x32xf32> to vector<8x32xbf16>
      %c0_10 = arith.constant 0 : index
      %c0_11 = arith.constant 0 : index
      %20 = vector.load %arg7[%c0_10, %c0_11] : memref<32x32xbf16, #tpu.memory_space<vmem>>, vector<32x32xbf16>
      %cst = arith.constant dense<0.000000e+00> : vector<8x32xf32>
      %21 = tpu.matmul %19, %20, %cst {dimension_numbers = #tpu.dot_dimension_numbers<[1], [0], [0], [1], [0, 0, 1, 1], [], []>} : vector<8x32xbf16>, vector<32x32xbf16>, vector<8x32xf32> -> vector<8x32xf32>
      %c0_12 = arith.constant 0 : index
      %c0_13 = arith.constant 0 : index
      %22 = vector.load %arg8[%c0_12, %c0_13] : memref<1x32xf32, #tpu.memory_space<vmem>>, vector<1x32xf32>
      %23 = vector.shape_cast %22 : vector<1x32xf32> to vector<32xf32>
      %24 = vector.shape_cast %23 : vector<32xf32> to vector<1x32xf32>
      %25 = vector.broadcast %24 : vector<1x32xf32> to vector<8x32xf32>
      %26 = arith.addf %21, %25 : vector<8x32xf32>
      %c0_14 = arith.constant 0 : index
      %c0_15 = arith.constant 0 : index
      %c0_16 = arith.constant 0 : index
      %27 = vector.load %arg3[%c0_14, %c0_15, %c0_16] : memref<1x8x32xf32, #tpu.memory_space<vmem>>, vector<1x8x32xf32>
      %28 = vector.shape_cast %27 : vector<1x8x32xf32> to vector<8x32xf32>
      %29 = arith.addf %28, %26 : vector<8x32xf32>
      %c0_17 = arith.constant 0 : index
      %c0_18 = arith.constant 0 : index
      %30 = vector.load %arg9[%c0_17, %c0_18] : memref<1x32xf32, #tpu.memory_space<vmem>>, vector<1x32xf32>
      %31 = vector.shape_cast %30 : vector<1x32xf32> to vector<32xf32>
      %c0_19 = arith.constant 0 : index
      %c0_20 = arith.constant 0 : index
      %32 = vector.load %arg10[%c0_19, %c0_20] : memref<1x32xf32, #tpu.memory_space<vmem>>, vector<1x32xf32>
      %33 = vector.shape_cast %32 : vector<1x32xf32> to vector<32xf32>
      %cst_21 = arith.constant dense<0.000000e+00> : vector<8xf32>
      %34 = vector.multi_reduction <add>, %29, %cst_21 [1] : vector<8x32xf32> to vector<8xf32>
      %35 = vector.shape_cast %34 : vector<8xf32> to vector<8x1xf32>
      %cst_22 = arith.constant 3.200000e+01 : f32
      %36 = vector.broadcast %cst_22 : f32 to vector<8x1xf32>
      %37 = arith.divf %35, %36 : vector<8x1xf32>
      %38 = vector.broadcast %37 : vector<8x1xf32> to vector<8x32xf32>
      %39 = arith.subf %29, %38 : vector<8x32xf32>
      %40 = arith.mulf %39, %39 : vector<8x32xf32>
      %cst_23 = arith.constant dense<0.000000e+00> : vector<8xf32>
      %41 = vector.multi_reduction <add>, %40, %cst_23 [1] : vector<8x32xf32> to vector<8xf32>
      %42 = vector.shape_cast %41 : vector<8xf32> to vector<8x1xf32>
      %cst_24 = arith.constant 3.200000e+01 : f32
      %43 = vector.broadcast %cst_24 : f32 to vector<8x1xf32>
      %44 = arith.divf %42, %43 : vector<8x1xf32>
      %45 = vector.broadcast %37 : vector<8x1xf32> to vector<8x32xf32>
      %46 = arith.subf %29, %45 : vector<8x32xf32>
      %cst_25 = arith.constant 9.99999974E-6 : f32
      %47 = vector.broadcast %cst_25 : f32 to vector<8x1xf32>
      %48 = arith.addf %44, %47 : vector<8x1xf32>
      %49 = math.rsqrt %48 : vector<8x1xf32>
      %50 = vector.broadcast %49 : vector<8x1xf32> to vector<8x32xf32>
      %51 = arith.mulf %46, %50 : vector<8x32xf32>
      %52 = vector.shape_cast %31 : vector<32xf32> to vector<1x32xf32>
      %53 = vector.broadcast %52 : vector<1x32xf32> to vector<8x32xf32>
      %54 = arith.mulf %51, %53 : vector<8x32xf32>
      %55 = vector.shape_cast %33 : vector<32xf32> to vector<1x32xf32>
      %56 = vector.broadcast %55 : vector<1x32xf32> to vector<8x32xf32>
      %57 = arith.addf %54, %56 : vector<8x32xf32>
      %58 = arith.truncf %57 : vector<8x32xf32> to vector<8x32xbf16>
      %c0_26 = arith.constant 0 : index
      %c0_27 = arith.constant 0 : index
      %59 = vector.load %arg11[%c0_26, %c0_27] : memref<32x64xbf16, #tpu.memory_space<vmem>>, vector<32x64xbf16>
      %cst_28 = arith.constant dense<0.000000e+00> : vector<8x64xf32>
      %60 = tpu.matmul %58, %59, %cst_28 {dimension_numbers = #tpu.dot_dimension_numbers<[1], [0], [0], [1], [0, 0, 1, 1], [], []>} : vector<8x32xbf16>, vector<32x64xbf16>, vector<8x64xf32> -> vector<8x64xf32>
      %c0_29 = arith.constant 0 : index
      %c0_30 = arith.constant 0 : index
      %61 = vector.load %arg12[%c0_29, %c0_30] : memref<1x64xf32, #tpu.memory_space<vmem>>, vector<1x64xf32>
      %62 = vector.shape_cast %61 : vector<1x64xf32> to vector<64xf32>
      %63 = vector.shape_cast %62 : vector<64xf32> to vector<1x64xf32>
      %64 = vector.broadcast %63 : vector<1x64xf32> to vector<8x64xf32>
      %65 = arith.addf %60, %64 : vector<8x64xf32>
      %cst_31 = arith.constant 0.000000e+00 : f32
      %66 = vector.broadcast %cst_31 : f32 to vector<8x64xf32>
      %67 = arith.maximumf %65, %66 : vector<8x64xf32>
      %68 = arith.truncf %67 : vector<8x64xf32> to vector<8x64xbf16>
      %c0_32 = arith.constant 0 : index
      %c0_33 = arith.constant 0 : index
      %69 = vector.load %arg13[%c0_32, %c0_33] : memref<64x32xbf16, #tpu.memory_space<vmem>>, vector<64x32xbf16>
      %cst_34 = arith.constant dense<0.000000e+00> : vector<8x32xf32>
      %70 = tpu.matmul %68, %69, %cst_34 {dimension_numbers = #tpu.dot_dimension_numbers<[1], [0], [0], [1], [0, 0, 1, 1], [], []>} : vector<8x64xbf16>, vector<64x32xbf16>, vector<8x32xf32> -> vector<8x32xf32>
      %c0_35 = arith.constant 0 : index
      %c0_36 = arith.constant 0 : index
      %71 = vector.load %arg14[%c0_35, %c0_36] : memref<1x32xf32, #tpu.memory_space<vmem>>, vector<1x32xf32>
      %72 = vector.shape_cast %71 : vector<1x32xf32> to vector<32xf32>
      %73 = vector.shape_cast %72 : vector<32xf32> to vector<1x32xf32>
      %74 = vector.broadcast %73 : vector<1x32xf32> to vector<8x32xf32>
      %75 = arith.addf %70, %74 : vector<8x32xf32>
      %76 = arith.addf %29, %75 : vector<8x32xf32>
      %c0_37 = arith.constant 0 : index
      %c0_38 = arith.constant 0 : index
      %c0_39 = arith.constant 0 : index
      %77 = vector.load %arg15[%c0_37, %c0_38, %c0_39] : memref<1x8x32xf32, #tpu.memory_space<vmem>>, vector<1x8x32xf32>
      %78 = vector.shape_cast %77 : vector<1x8x32xf32> to vector<8x32xf32>
      %79 = vector.shape_cast %76 : vector<8x32xf32> to vector<1x8x32xf32>
      tpu.vector_store %arg15[%c0_37, %c0_38, %c0_39], %79 {strides = array<i32>} : memref<1x8x32xf32, #tpu.memory_space<vmem>>, vector<1x8x32xf32>,
    } else {
    }
    return
  }
  func.func @transform_0(%arg0: i32, %arg1: i32, %arg2: i32) -> (i32, i32, i32) {
    %c0_i32 = arith.constant 0 : i32
    %c0_i32_0 = arith.constant 0 : i32
    return %arg0, %arg1, %c0_i32 : i32, i32, i32
  }
  func.func @transform_1(%arg0: i32, %arg1: i32, %arg2: i32) -> (i32, i32, i32, i32) {
    %c0_i32 = arith.constant 0 : i32
    %c0_i32_0 = arith.constant 0 : i32
    %c0_i32_1 = arith.constant 0 : i32
    return %arg0, %c0_i32, %arg1, %c0_i32_0 : i32, i32, i32, i32
  }
  func.func @transform_2(%arg0: i32, %arg1: i32, %arg2: i32) -> (i32, i32, i32, i32) {
    %0 = arith.minsi %arg2, %arg1 : i32
    %c0_i32 = arith.constant 0 : i32
    %c0_i32_0 = arith.constant 0 : i32
    %c0_i32_1 = arith.constant 0 : i32
    return %arg0, %c0_i32, %0, %c0_i32_0 : i32, i32, i32, i32
  }
  func.func @transform_3(%arg0: i32, %arg1: i32, %arg2: i32) -> (i32, i32, i32, i32) {
    %0 = arith.minsi %arg2, %arg1 : i32
    %c0_i32 = arith.constant 0 : i32
    %c0_i32_0 = arith.constant 0 : i32
    %c0_i32_1 = arith.constant 0 : i32
    return %arg0, %c0_i32, %0, %c0_i32_0 : i32, i32, i32, i32
  }
  func.func @transform_4(%arg0: i32, %arg1: i32, %arg2: i32) -> (i32, i32) {
    %c0_i32 = arith.constant 0 : i32
    %c0_i32_0 = arith.constant 0 : i32
    %c0_i32_1 = arith.constant 0 : i32
    return %c0_i32, %c0_i32_0 : i32, i32
  }
  func.func @transform_5(%arg0: i32, %arg1: i32, %arg2: i32) -> (i32, i32) {
    %c0_i32 = arith.constant 0 : i32
    %c0_i32_0 = arith.constant 0 : i32
    %c0_i32_1 = arith.constant 0 : i32
    return %c0_i32, %c0_i32_0 : i32, i32
  }
  func.func @transform_6(%arg0: i32, %arg1: i32, %arg2: i32) -> (i32, i32) {
    %c0_i32 = arith.constant 0 : i32
    %c0_i32_0 = arith.constant 0 : i32
    %c0_i32_1 = arith.constant 0 : i32
    return %c0_i32, %c0_i32_0 : i32, i32
  }
  func.func @transform_7(%arg0: i32, %arg1: i32, %arg2: i32) -> (i32, i32) {
    %c0_i32 = arith.constant 0 : i32
    %c0_i32_0 = arith.constant 0 : i32
    %c0_i32_1 = arith.constant 0 : i32
    return %c0_i32, %c0_i32_0 : i32, i32
  }
  func.func @transform_8(%arg0: i32, %arg1: i32, %arg2: i32) -> (i32, i32) {
    %c0_i32 = arith.constant 0 : i32
    %c0_i32_0 = arith.constant 0 : i32
    %c0_i32_1 = arith.constant 0 : i32
    return %c0_i32, %c0_i32_0 : i32, i32
  }
  func.func @transform_9(%arg0: i32, %arg1: i32, %arg2: i32) -> (i32, i32) {
    %c0_i32 = arith.constant 0 : i32
    %c0_i32_0 = arith.constant 0 : i32
    %c0_i32_1 = arith.constant 0 : i32
    return %c0_i32, %c0_i32_0 : i32, i32
  }
  func.func @transform_10(%arg0: i32, %arg1: i32, %arg2: i32) -> (i32, i32) {
    %c0_i32 = arith.constant 0 : i32
    %c0_i32_0 = arith.constant 0 : i32
    %c0_i32_1 = arith.constant 0 : i32
    return %c0_i32, %c0_i32_0 : i32, i32
  }
  func.func @transform_11(%arg0: i32, %arg1: i32, %arg2: i32) -> (i32, i32) {
    %c0_i32 = arith.constant 0 : i32
    %c0_i32_0 = arith.constant 0 : i32
    %c0_i32_1 = arith.constant 0 : i32
    return %c0_i32, %c0_i32_0 : i32, i32
  }
  func.func @transform_12(%arg0: i32, %arg1: i32, %arg2: i32) -> (i32, i32, i32) {
    %c0_i32 = arith.constant 0 : i32
    %c0_i32_0 = arith.constant 0 : i32
    return %arg0, %arg1, %c0_i32 : i32, i32, i32
  }
}

module attributes {stable_mosaic.version = 11 : i64} {
  func.func @_qkv_producer_kernel(%arg0: i32, %arg1: i32, %arg2: memref<1x8x32xf32, #tpu.memory_space<vmem>>, %arg3: memref<8x32xf32, #tpu.memory_space<vmem>>, %arg4: memref<1x32xf32, #tpu.memory_space<vmem>>, %arg5: memref<1x32xf32, #tpu.memory_space<vmem>>, %arg6: memref<32x32xbf16, #tpu.memory_space<vmem>>, %arg7: memref<32x32xbf16, #tpu.memory_space<vmem>>, %arg8: memref<32x32xbf16, #tpu.memory_space<vmem>>, %arg9: memref<1x32xf32, #tpu.memory_space<vmem>>, %arg10: memref<1x32xf32, #tpu.memory_space<vmem>>, %arg11: memref<1x32xf32, #tpu.memory_space<vmem>>, %arg12: memref<1x4x8x8xbf16, #tpu.memory_space<vmem>>, %arg13: memref<1x4x8x8xbf16, #tpu.memory_space<vmem>>, %arg14: memref<1x4x8x8xbf16, #tpu.memory_space<vmem>>) attributes {dimension_semantics = [#tpu.dimension_semantics<parallel>, #tpu.dimension_semantics<parallel>], iteration_bounds = array<i64: 2, 1>, scalar_prefetch = 0 : i64, scratch_operands = 0 : i64, tpu.core_type = #tpu.core_type<tc>, window_params = [{transform_indices = @transform_0, window_bounds = array<i64: 1, 8, 32>}, {transform_indices = @transform_1, window_bounds = array<i64: 8, 32>}, {pipeline_mode = #tpu.pipeline_mode<synchronous>, transform_indices = @transform_2, window_bounds = array<i64: 1, 32>}, {pipeline_mode = #tpu.pipeline_mode<synchronous>, transform_indices = @transform_3, window_bounds = array<i64: 1, 32>}, {pipeline_mode = #tpu.pipeline_mode<synchronous>, transform_indices = @transform_4, window_bounds = array<i64: 32, 32>}, {pipeline_mode = #tpu.pipeline_mode<synchronous>, transform_indices = @transform_5, window_bounds = array<i64: 32, 32>}, {pipeline_mode = #tpu.pipeline_mode<synchronous>, transform_indices = @transform_6, window_bounds = array<i64: 32, 32>}, {pipeline_mode = #tpu.pipeline_mode<synchronous>, transform_indices = @transform_7, window_bounds = array<i64: 1, 32>}, {pipeline_mode = #tpu.pipeline_mode<synchronous>, transform_indices = @transform_8, window_bounds = array<i64: 1, 32>}, {pipeline_mode = #tpu.pipeline_mode<synchronous>, transform_indices = @transform_9, window_bounds = array<i64: 1, 32>}, {transform_indices = @transform_10, window_bounds = array<i64: 1, 4, 8, 8>}, {transform_indices = @transform_11, window_bounds = array<i64: 1, 4, 8, 8>}, {transform_indices = @transform_12, window_bounds = array<i64: 1, 4, 8, 8>}]} {
    %c0 = arith.constant 0 : index
    %c0_0 = arith.constant 0 : index
    %c0_1 = arith.constant 0 : index
    %0 = vector.load %arg2[%c0, %c0_0, %c0_1] : memref<1x8x32xf32, #tpu.memory_space<vmem>>, vector<1x8x32xf32>
    %1 = vector.shape_cast %0 : vector<1x8x32xf32> to vector<8x32xf32>
    %c0_2 = arith.constant 0 : index
    %c0_3 = arith.constant 0 : index
    %2 = vector.load %arg4[%c0_2, %c0_3] : memref<1x32xf32, #tpu.memory_space<vmem>>, vector<1x32xf32>
    %3 = vector.shape_cast %2 : vector<1x32xf32> to vector<32xf32>
    %c0_4 = arith.constant 0 : index
    %c0_5 = arith.constant 0 : index
    %4 = vector.load %arg5[%c0_4, %c0_5] : memref<1x32xf32, #tpu.memory_space<vmem>>, vector<1x32xf32>
    %5 = vector.shape_cast %4 : vector<1x32xf32> to vector<32xf32>
    %cst = arith.constant dense<0.000000e+00> : vector<8xf32>
    %6 = vector.multi_reduction <add>, %1, %cst [1] : vector<8x32xf32> to vector<8xf32>
    %7 = vector.shape_cast %6 : vector<8xf32> to vector<8x1xf32>
    %cst_6 = arith.constant 3.200000e+01 : f32
    %8 = vector.broadcast %cst_6 : f32 to vector<8x1xf32>
    %9 = arith.divf %7, %8 : vector<8x1xf32>
    %10 = vector.broadcast %9 : vector<8x1xf32> to vector<8x32xf32>
    %11 = arith.subf %1, %10 : vector<8x32xf32>
    %12 = arith.mulf %11, %11 : vector<8x32xf32>
    %cst_7 = arith.constant dense<0.000000e+00> : vector<8xf32>
    %13 = vector.multi_reduction <add>, %12, %cst_7 [1] : vector<8x32xf32> to vector<8xf32>
    %14 = vector.shape_cast %13 : vector<8xf32> to vector<8x1xf32>
    %cst_8 = arith.constant 3.200000e+01 : f32
    %15 = vector.broadcast %cst_8 : f32 to vector<8x1xf32>
    %16 = arith.divf %14, %15 : vector<8x1xf32>
    %17 = vector.broadcast %9 : vector<8x1xf32> to vector<8x32xf32>
    %18 = arith.subf %1, %17 : vector<8x32xf32>
    %cst_9 = arith.constant 9.99999974E-6 : f32
    %19 = vector.broadcast %cst_9 : f32 to vector<8x1xf32>
    %20 = arith.addf %16, %19 : vector<8x1xf32>
    %21 = math.rsqrt %20 : vector<8x1xf32>
    %22 = vector.broadcast %21 : vector<8x1xf32> to vector<8x32xf32>
    %23 = arith.mulf %18, %22 : vector<8x32xf32>
    %24 = vector.shape_cast %3 : vector<32xf32> to vector<1x32xf32>
    %25 = vector.broadcast %24 : vector<1x32xf32> to vector<8x32xf32>
    %26 = arith.mulf %23, %25 : vector<8x32xf32>
    %27 = vector.shape_cast %5 : vector<32xf32> to vector<1x32xf32>
    %28 = vector.broadcast %27 : vector<1x32xf32> to vector<8x32xf32>
    %29 = arith.addf %26, %28 : vector<8x32xf32>
    %30 = arith.truncf %29 : vector<8x32xf32> to vector<8x32xbf16>
    %c0_10 = arith.constant 0 : index
    %c0_11 = arith.constant 0 : index
    %31 = vector.load %arg3[%c0_10, %c0_11] : memref<8x32xf32, #tpu.memory_space<vmem>>, vector<8x32xf32>
    %c0_12 = arith.constant 0 : index
    %c0_13 = arith.constant 0 : index
    %32 = vector.load %arg6[%c0_12, %c0_13] : memref<32x32xbf16, #tpu.memory_space<vmem>>, vector<32x32xbf16>
    %cst_14 = arith.constant dense<0.000000e+00> : vector<8x32xf32>
    %33 = tpu.matmul %30, %32, %cst_14 {dimension_numbers = #tpu.dot_dimension_numbers<[1], [0], [0], [1], [0, 0, 1, 1], [], []>} : vector<8x32xbf16>, vector<32x32xbf16>, vector<8x32xf32> -> vector<8x32xf32>
    %c0_15 = arith.constant 0 : index
    %c0_16 = arith.constant 0 : index
    %34 = vector.load %arg9[%c0_15, %c0_16] : memref<1x32xf32, #tpu.memory_space<vmem>>, vector<1x32xf32>
    %35 = vector.shape_cast %34 : vector<1x32xf32> to vector<32xf32>
    %36 = vector.shape_cast %35 : vector<32xf32> to vector<1x32xf32>
    %37 = vector.broadcast %36 : vector<1x32xf32> to vector<8x32xf32>
    %38 = arith.addf %33, %37 : vector<8x32xf32>
    %39 = arith.addf %38, %31 : vector<8x32xf32>
    %cst_17 = arith.constant 0.353553385 : f32
    %40 = vector.broadcast %cst_17 : f32 to vector<8x32xf32>
    %41 = arith.mulf %39, %40 : vector<8x32xf32>
    %c0_18 = arith.constant 0 : index
    %c0_19 = arith.constant 0 : index
    %42 = vector.load %arg7[%c0_18, %c0_19] : memref<32x32xbf16, #tpu.memory_space<vmem>>, vector<32x32xbf16>
    %cst_20 = arith.constant dense<0.000000e+00> : vector<8x32xf32>
    %43 = tpu.matmul %30, %42, %cst_20 {dimension_numbers = #tpu.dot_dimension_numbers<[1], [0], [0], [1], [0, 0, 1, 1], [], []>} : vector<8x32xbf16>, vector<32x32xbf16>, vector<8x32xf32> -> vector<8x32xf32>
    %c0_21 = arith.constant 0 : index
    %c0_22 = arith.constant 0 : index
    %44 = vector.load %arg10[%c0_21, %c0_22] : memref<1x32xf32, #tpu.memory_space<vmem>>, vector<1x32xf32>
    %45 = vector.shape_cast %44 : vector<1x32xf32> to vector<32xf32>
    %46 = vector.shape_cast %45 : vector<32xf32> to vector<1x32xf32>
    %47 = vector.broadcast %46 : vector<1x32xf32> to vector<8x32xf32>
    %48 = arith.addf %43, %47 : vector<8x32xf32>
    %49 = arith.addf %48, %31 : vector<8x32xf32>
    %c0_23 = arith.constant 0 : index
    %c0_24 = arith.constant 0 : index
    %50 = vector.load %arg8[%c0_23, %c0_24] : memref<32x32xbf16, #tpu.memory_space<vmem>>, vector<32x32xbf16>
    %cst_25 = arith.constant dense<0.000000e+00> : vector<8x32xf32>
    %51 = tpu.matmul %30, %50, %cst_25 {dimension_numbers = #tpu.dot_dimension_numbers<[1], [0], [0], [1], [0, 0, 1, 1], [], []>} : vector<8x32xbf16>, vector<32x32xbf16>, vector<8x32xf32> -> vector<8x32xf32>
    %c0_26 = arith.constant 0 : index
    %c0_27 = arith.constant 0 : index
    %52 = vector.load %arg11[%c0_26, %c0_27] : memref<1x32xf32, #tpu.memory_space<vmem>>, vector<1x32xf32>
    %53 = vector.shape_cast %52 : vector<1x32xf32> to vector<32xf32>
    %54 = vector.shape_cast %53 : vector<32xf32> to vector<1x32xf32>
    %55 = vector.broadcast %54 : vector<1x32xf32> to vector<8x32xf32>
    %56 = arith.addf %51, %55 : vector<8x32xf32>
    %57 = arith.truncf %41 : vector<8x32xf32> to vector<8x32xbf16>
    %58 = vector.shape_cast %57 : vector<8x32xbf16> to vector<8x4x8xbf16>
    %59 = tpu.transpose %58, [1, 0, 2] : vector<8x4x8xbf16> -> vector<4x8x8xbf16>
    %c0_28 = arith.constant 0 : index
    %c0_29 = arith.constant 0 : index
    %c0_30 = arith.constant 0 : index
    %c0_31 = arith.constant 0 : index
    %60 = vector.load %arg12[%c0_28, %c0_29, %c0_30, %c0_31] : memref<1x4x8x8xbf16, #tpu.memory_space<vmem>>, vector<1x4x8x8xbf16>
    %61 = vector.shape_cast %60 : vector<1x4x8x8xbf16> to vector<4x8x8xbf16>
    %62 = vector.shape_cast %59 : vector<4x8x8xbf16> to vector<1x4x8x8xbf16>
    tpu.vector_store %arg12[%c0_28, %c0_29, %c0_30, %c0_31], %62 {strides = array<i32>} : memref<1x4x8x8xbf16, #tpu.memory_space<vmem>>, vector<1x4x8x8xbf16>,
    %63 = arith.truncf %49 : vector<8x32xf32> to vector<8x32xbf16>
    %64 = vector.shape_cast %63 : vector<8x32xbf16> to vector<8x4x8xbf16>
    %65 = tpu.transpose %64, [1, 0, 2] : vector<8x4x8xbf16> -> vector<4x8x8xbf16>
    %c0_32 = arith.constant 0 : index
    %c0_33 = arith.constant 0 : index
    %c0_34 = arith.constant 0 : index
    %c0_35 = arith.constant 0 : index
    %66 = vector.load %arg13[%c0_32, %c0_33, %c0_34, %c0_35] : memref<1x4x8x8xbf16, #tpu.memory_space<vmem>>, vector<1x4x8x8xbf16>
    %67 = vector.shape_cast %66 : vector<1x4x8x8xbf16> to vector<4x8x8xbf16>
    %68 = vector.shape_cast %65 : vector<4x8x8xbf16> to vector<1x4x8x8xbf16>
    tpu.vector_store %arg13[%c0_32, %c0_33, %c0_34, %c0_35], %68 {strides = array<i32>} : memref<1x4x8x8xbf16, #tpu.memory_space<vmem>>, vector<1x4x8x8xbf16>,
    %69 = arith.truncf %56 : vector<8x32xf32> to vector<8x32xbf16>
    %70 = vector.shape_cast %69 : vector<8x32xbf16> to vector<8x4x8xbf16>
    %71 = tpu.transpose %70, [1, 0, 2] : vector<8x4x8xbf16> -> vector<4x8x8xbf16>
    %c0_36 = arith.constant 0 : index
    %c0_37 = arith.constant 0 : index
    %c0_38 = arith.constant 0 : index
    %c0_39 = arith.constant 0 : index
    %72 = vector.load %arg14[%c0_36, %c0_37, %c0_38, %c0_39] : memref<1x4x8x8xbf16, #tpu.memory_space<vmem>>, vector<1x4x8x8xbf16>
    %73 = vector.shape_cast %72 : vector<1x4x8x8xbf16> to vector<4x8x8xbf16>
    %74 = vector.shape_cast %71 : vector<4x8x8xbf16> to vector<1x4x8x8xbf16>
    tpu.vector_store %arg14[%c0_36, %c0_37, %c0_38, %c0_39], %74 {strides = array<i32>} : memref<1x4x8x8xbf16, #tpu.memory_space<vmem>>, vector<1x4x8x8xbf16>,
    return
  }
  func.func @transform_0(%arg0: i32, %arg1: i32) -> (i32, i32, i32) {
    %c0_i32 = arith.constant 0 : i32
    %c0_i32_0 = arith.constant 0 : i32
    return %arg0, %arg1, %c0_i32 : i32, i32, i32
  }
  func.func @transform_1(%arg0: i32, %arg1: i32) -> (i32, i32) {
    %c0_i32 = arith.constant 0 : i32
    %c0_i32_0 = arith.constant 0 : i32
    return %arg1, %c0_i32 : i32, i32
  }
  func.func @transform_2(%arg0: i32, %arg1: i32) -> (i32, i32) {
    %c0_i32 = arith.constant 0 : i32
    %c0_i32_0 = arith.constant 0 : i32
    %c0_i32_1 = arith.constant 0 : i32
    return %c0_i32, %c0_i32_0 : i32, i32
  }
  func.func @transform_3(%arg0: i32, %arg1: i32) -> (i32, i32) {
    %c0_i32 = arith.constant 0 : i32
    %c0_i32_0 = arith.constant 0 : i32
    %c0_i32_1 = arith.constant 0 : i32
    return %c0_i32, %c0_i32_0 : i32, i32
  }
  func.func @transform_4(%arg0: i32, %arg1: i32) -> (i32, i32) {
    %c0_i32 = arith.constant 0 : i32
    %c0_i32_0 = arith.constant 0 : i32
    %c0_i32_1 = arith.constant 0 : i32
    return %c0_i32, %c0_i32_0 : i32, i32
  }
  func.func @transform_5(%arg0: i32, %arg1: i32) -> (i32, i32) {
    %c0_i32 = arith.constant 0 : i32
    %c0_i32_0 = arith.constant 0 : i32
    %c0_i32_1 = arith.constant 0 : i32
    return %c0_i32, %c0_i32_0 : i32, i32
  }
  func.func @transform_6(%arg0: i32, %arg1: i32) -> (i32, i32) {
    %c0_i32 = arith.constant 0 : i32
    %c0_i32_0 = arith.constant 0 : i32
    %c0_i32_1 = arith.constant 0 : i32
    return %c0_i32, %c0_i32_0 : i32, i32
  }
  func.func @transform_7(%arg0: i32, %arg1: i32) -> (i32, i32) {
    %c0_i32 = arith.constant 0 : i32
    %c0_i32_0 = arith.constant 0 : i32
    %c0_i32_1 = arith.constant 0 : i32
    return %c0_i32, %c0_i32_0 : i32, i32
  }
  func.func @transform_8(%arg0: i32, %arg1: i32) -> (i32, i32) {
    %c0_i32 = arith.constant 0 : i32
    %c0_i32_0 = arith.constant 0 : i32
    %c0_i32_1 = arith.constant 0 : i32
    return %c0_i32, %c0_i32_0 : i32, i32
  }
  func.func @transform_9(%arg0: i32, %arg1: i32) -> (i32, i32) {
    %c0_i32 = arith.constant 0 : i32
    %c0_i32_0 = arith.constant 0 : i32
    %c0_i32_1 = arith.constant 0 : i32
    return %c0_i32, %c0_i32_0 : i32, i32
  }
  func.func @transform_10(%arg0: i32, %arg1: i32) -> (i32, i32, i32, i32) {
    %c0_i32 = arith.constant 0 : i32
    %c0_i32_0 = arith.constant 0 : i32
    %c0_i32_1 = arith.constant 0 : i32
    return %arg0, %c0_i32, %arg1, %c0_i32_0 : i32, i32, i32, i32
  }
  func.func @transform_11(%arg0: i32, %arg1: i32) -> (i32, i32, i32, i32) {
    %c0_i32 = arith.constant 0 : i32
    %c0_i32_0 = arith.constant 0 : i32
    %c0_i32_1 = arith.constant 0 : i32
    return %arg0, %c0_i32, %arg1, %c0_i32_0 : i32, i32, i32, i32
  }
  func.func @transform_12(%arg0: i32, %arg1: i32) -> (i32, i32, i32, i32) {
    %c0_i32 = arith.constant 0 : i32
    %c0_i32_0 = arith.constant 0 : i32
    %c0_i32_1 = arith.constant 0 : i32
    return %arg0, %c0_i32, %arg1, %c0_i32_0 : i32, i32, i32, i32
  }
}

module attributes {stable_mosaic.version = 11 : i64} {
  func.func @_qkv_producer_kernel(%arg0: i32, %arg1: i32, %arg2: memref<1x8x32xf32, #tpu.memory_space<vmem>>, %arg3: memref<8x32xf32, #tpu.memory_space<vmem>>, %arg4: memref<1x32xf32, #tpu.memory_space<vmem>>, %arg5: memref<1x32xf32, #tpu.memory_space<vmem>>, %arg6: memref<32x32xbf16, #tpu.memory_space<vmem>>, %arg7: memref<32x32xbf16, #tpu.memory_space<vmem>>, %arg8: memref<32x32xbf16, #tpu.memory_space<vmem>>, %arg9: memref<1x32xf32, #tpu.memory_space<vmem>>, %arg10: memref<1x32xf32, #tpu.memory_space<vmem>>, %arg11: memref<1x32xf32, #tpu.memory_space<vmem>>, %arg12: memref<1x4x8x8xbf16, #tpu.memory_space<vmem>>, %arg13: memref<1x4x8x8xbf16, #tpu.memory_space<vmem>>, %arg14: memref<1x4x8x8xbf16, #tpu.memory_space<vmem>>) attributes {dimension_semantics = [#tpu.dimension_semantics<parallel>, #tpu.dimension_semantics<parallel>], iteration_bounds = array<i64: 2, 1>, scalar_prefetch = 0 : i64, scratch_operands = 0 : i64, tpu.core_type = #tpu.core_type<tc>, window_params = [{transform_indices = @transform_0, window_bounds = array<i64: 1, 8, 32>}, {transform_indices = @transform_1, window_bounds = array<i64: 8, 32>}, {pipeline_mode = #tpu.pipeline_mode<synchronous>, transform_indices = @transform_2, window_bounds = array<i64: 1, 32>}, {pipeline_mode = #tpu.pipeline_mode<synchronous>, transform_indices = @transform_3, window_bounds = array<i64: 1, 32>}, {pipeline_mode = #tpu.pipeline_mode<synchronous>, transform_indices = @transform_4, window_bounds = array<i64: 32, 32>}, {pipeline_mode = #tpu.pipeline_mode<synchronous>, transform_indices = @transform_5, window_bounds = array<i64: 32, 32>}, {pipeline_mode = #tpu.pipeline_mode<synchronous>, transform_indices = @transform_6, window_bounds = array<i64: 32, 32>}, {pipeline_mode = #tpu.pipeline_mode<synchronous>, transform_indices = @transform_7, window_bounds = array<i64: 1, 32>}, {pipeline_mode = #tpu.pipeline_mode<synchronous>, transform_indices = @transform_8, window_bounds = array<i64: 1, 32>}, {pipeline_mode = #tpu.pipeline_mode<synchronous>, transform_indices = @transform_9, window_bounds = array<i64: 1, 32>}, {transform_indices = @transform_10, window_bounds = array<i64: 1, 4, 8, 8>}, {transform_indices = @transform_11, window_bounds = array<i64: 1, 4, 8, 8>}, {transform_indices = @transform_12, window_bounds = array<i64: 1, 4, 8, 8>}]} {
    %c0 = arith.constant 0 : index
    %c0_0 = arith.constant 0 : index
    %c0_1 = arith.constant 0 : index
    %0 = vector.load %arg2[%c0, %c0_0, %c0_1] : memref<1x8x32xf32, #tpu.memory_space<vmem>>, vector<1x8x32xf32>
    %1 = vector.shape_cast %0 : vector<1x8x32xf32> to vector<8x32xf32>
    %c0_2 = arith.constant 0 : index
    %c0_3 = arith.constant 0 : index
    %2 = vector.load %arg4[%c0_2, %c0_3] : memref<1x32xf32, #tpu.memory_space<vmem>>, vector<1x32xf32>
    %3 = vector.shape_cast %2 : vector<1x32xf32> to vector<32xf32>
    %c0_4 = arith.constant 0 : index
    %c0_5 = arith.constant 0 : index
    %4 = vector.load %arg5[%c0_4, %c0_5] : memref<1x32xf32, #tpu.memory_space<vmem>>, vector<1x32xf32>
    %5 = vector.shape_cast %4 : vector<1x32xf32> to vector<32xf32>
    %cst = arith.constant dense<0.000000e+00> : vector<8xf32>
    %6 = vector.multi_reduction <add>, %1, %cst [1] : vector<8x32xf32> to vector<8xf32>
    %7 = vector.shape_cast %6 : vector<8xf32> to vector<8x1xf32>
    %cst_6 = arith.constant 3.200000e+01 : f32
    %8 = vector.broadcast %cst_6 : f32 to vector<8x1xf32>
    %9 = arith.divf %7, %8 : vector<8x1xf32>
    %10 = vector.broadcast %9 : vector<8x1xf32> to vector<8x32xf32>
    %11 = arith.subf %1, %10 : vector<8x32xf32>
    %12 = arith.mulf %11, %11 : vector<8x32xf32>
    %cst_7 = arith.constant dense<0.000000e+00> : vector<8xf32>
    %13 = vector.multi_reduction <add>, %12, %cst_7 [1] : vector<8x32xf32> to vector<8xf32>
    %14 = vector.shape_cast %13 : vector<8xf32> to vector<8x1xf32>
    %cst_8 = arith.constant 3.200000e+01 : f32
    %15 = vector.broadcast %cst_8 : f32 to vector<8x1xf32>
    %16 = arith.divf %14, %15 : vector<8x1xf32>
    %17 = vector.broadcast %9 : vector<8x1xf32> to vector<8x32xf32>
    %18 = arith.subf %1, %17 : vector<8x32xf32>
    %cst_9 = arith.constant 9.99999974E-6 : f32
    %19 = vector.broadcast %cst_9 : f32 to vector<8x1xf32>
    %20 = arith.addf %16, %19 : vector<8x1xf32>
    %21 = math.rsqrt %20 : vector<8x1xf32>
    %22 = vector.broadcast %21 : vector<8x1xf32> to vector<8x32xf32>
    %23 = arith.mulf %18, %22 : vector<8x32xf32>
    %24 = vector.shape_cast %3 : vector<32xf32> to vector<1x32xf32>
    %25 = vector.broadcast %24 : vector<1x32xf32> to vector<8x32xf32>
    %26 = arith.mulf %23, %25 : vector<8x32xf32>
    %27 = vector.shape_cast %5 : vector<32xf32> to vector<1x32xf32>
    %28 = vector.broadcast %27 : vector<1x32xf32> to vector<8x32xf32>
    %29 = arith.addf %26, %28 : vector<8x32xf32>
    %30 = arith.truncf %29 : vector<8x32xf32> to vector<8x32xbf16>
    %c0_10 = arith.constant 0 : index
    %c0_11 = arith.constant 0 : index
    %31 = vector.load %arg3[%c0_10, %c0_11] : memref<8x32xf32, #tpu.memory_space<vmem>>, vector<8x32xf32>
    %c0_12 = arith.constant 0 : index
    %c0_13 = arith.constant 0 : index
    %32 = vector.load %arg6[%c0_12, %c0_13] : memref<32x32xbf16, #tpu.memory_space<vmem>>, vector<32x32xbf16>
    %cst_14 = arith.constant dense<0.000000e+00> : vector<8x32xf32>
    %33 = tpu.matmul %30, %32, %cst_14 {dimension_numbers = #tpu.dot_dimension_numbers<[1], [0], [0], [1], [0, 0, 1, 1], [], []>} : vector<8x32xbf16>, vector<32x32xbf16>, vector<8x32xf32> -> vector<8x32xf32>
    %c0_15 = arith.constant 0 : index
    %c0_16 = arith.constant 0 : index
    %34 = vector.load %arg9[%c0_15, %c0_16] : memref<1x32xf32, #tpu.memory_space<vmem>>, vector<1x32xf32>
    %35 = vector.shape_cast %34 : vector<1x32xf32> to vector<32xf32>
    %36 = vector.shape_cast %35 : vector<32xf32> to vector<1x32xf32>
    %37 = vector.broadcast %36 : vector<1x32xf32> to vector<8x32xf32>
    %38 = arith.addf %33, %37 : vector<8x32xf32>
    %39 = arith.addf %38, %31 : vector<8x32xf32>
    %cst_17 = arith.constant 0.353553385 : f32
    %40 = vector.broadcast %cst_17 : f32 to vector<8x32xf32>
    %41 = arith.mulf %39, %40 : vector<8x32xf32>
    %c0_18 = arith.constant 0 : index
    %c0_19 = arith.constant 0 : index
    %42 = vector.load %arg7[%c0_18, %c0_19] : memref<32x32xbf16, #tpu.memory_space<vmem>>, vector<32x32xbf16>
    %cst_20 = arith.constant dense<0.000000e+00> : vector<8x32xf32>
    %43 = tpu.matmul %30, %42, %cst_20 {dimension_numbers = #tpu.dot_dimension_numbers<[1], [0], [0], [1], [0, 0, 1, 1], [], []>} : vector<8x32xbf16>, vector<32x32xbf16>, vector<8x32xf32> -> vector<8x32xf32>
    %c0_21 = arith.constant 0 : index
    %c0_22 = arith.constant 0 : index
    %44 = vector.load %arg10[%c0_21, %c0_22] : memref<1x32xf32, #tpu.memory_space<vmem>>, vector<1x32xf32>
    %45 = vector.shape_cast %44 : vector<1x32xf32> to vector<32xf32>
    %46 = vector.shape_cast %45 : vector<32xf32> to vector<1x32xf32>
    %47 = vector.broadcast %46 : vector<1x32xf32> to vector<8x32xf32>
    %48 = arith.addf %43, %47 : vector<8x32xf32>
    %49 = arith.addf %48, %31 : vector<8x32xf32>
    %c0_23 = arith.constant 0 : index
    %c0_24 = arith.constant 0 : index
    %50 = vector.load %arg8[%c0_23, %c0_24] : memref<32x32xbf16, #tpu.memory_space<vmem>>, vector<32x32xbf16>
    %cst_25 = arith.constant dense<0.000000e+00> : vector<8x32xf32>
    %51 = tpu.matmul %30, %50, %cst_25 {dimension_numbers = #tpu.dot_dimension_numbers<[1], [0], [0], [1], [0, 0, 1, 1], [], []>} : vector<8x32xbf16>, vector<32x32xbf16>, vector<8x32xf32> -> vector<8x32xf32>
    %c0_26 = arith.constant 0 : index
    %c0_27 = arith.constant 0 : index
    %52 = vector.load %arg11[%c0_26, %c0_27] : memref<1x32xf32, #tpu.memory_space<vmem>>, vector<1x32xf32>
    %53 = vector.shape_cast %52 : vector<1x32xf32> to vector<32xf32>
    %54 = vector.shape_cast %53 : vector<32xf32> to vector<1x32xf32>
    %55 = vector.broadcast %54 : vector<1x32xf32> to vector<8x32xf32>
    %56 = arith.addf %51, %55 : vector<8x32xf32>
    %57 = arith.truncf %41 : vector<8x32xf32> to vector<8x32xbf16>
    %58 = vector.shape_cast %57 : vector<8x32xbf16> to vector<8x4x8xbf16>
    %59 = tpu.transpose %58, [1, 0, 2] : vector<8x4x8xbf16> -> vector<4x8x8xbf16>
    %c0_28 = arith.constant 0 : index
    %c0_29 = arith.constant 0 : index
    %c0_30 = arith.constant 0 : index
    %c0_31 = arith.constant 0 : index
    %60 = vector.load %arg12[%c0_28, %c0_29, %c0_30, %c0_31] : memref<1x4x8x8xbf16, #tpu.memory_space<vmem>>, vector<1x4x8x8xbf16>
    %61 = vector.shape_cast %60 : vector<1x4x8x8xbf16> to vector<4x8x8xbf16>
    %62 = vector.shape_cast %59 : vector<4x8x8xbf16> to vector<1x4x8x8xbf16>
    tpu.vector_store %arg12[%c0_28, %c0_29, %c0_30, %c0_31], %62 {strides = array<i32>} : memref<1x4x8x8xbf16, #tpu.memory_space<vmem>>, vector<1x4x8x8xbf16>,
    %63 = arith.truncf %49 : vector<8x32xf32> to vector<8x32xbf16>
    %64 = vector.shape_cast %63 : vector<8x32xbf16> to vector<8x4x8xbf16>
    %65 = tpu.transpose %64, [1, 0, 2] : vector<8x4x8xbf16> -> vector<4x8x8xbf16>
    %c0_32 = arith.constant 0 : index
    %c0_33 = arith.constant 0 : index
    %c0_34 = arith.constant 0 : index
    %c0_35 = arith.constant 0 : index
    %66 = vector.load %arg13[%c0_32, %c0_33, %c0_34, %c0_35] : memref<1x4x8x8xbf16, #tpu.memory_space<vmem>>, vector<1x4x8x8xbf16>
    %67 = vector.shape_cast %66 : vector<1x4x8x8xbf16> to vector<4x8x8xbf16>
    %68 = vector.shape_cast %65 : vector<4x8x8xbf16> to vector<1x4x8x8xbf16>
    tpu.vector_store %arg13[%c0_32, %c0_33, %c0_34, %c0_35], %68 {strides = array<i32>} : memref<1x4x8x8xbf16, #tpu.memory_space<vmem>>, vector<1x4x8x8xbf16>,
    %69 = arith.truncf %56 : vector<8x32xf32> to vector<8x32xbf16>
    %70 = vector.shape_cast %69 : vector<8x32xbf16> to vector<8x4x8xbf16>
    %71 = tpu.transpose %70, [1, 0, 2] : vector<8x4x8xbf16> -> vector<4x8x8xbf16>
    %c0_36 = arith.constant 0 : index
    %c0_37 = arith.constant 0 : index
    %c0_38 = arith.constant 0 : index
    %c0_39 = arith.constant 0 : index
    %72 = vector.load %arg14[%c0_36, %c0_37, %c0_38, %c0_39] : memref<1x4x8x8xbf16, #tpu.memory_space<vmem>>, vector<1x4x8x8xbf16>
    %73 = vector.shape_cast %72 : vector<1x4x8x8xbf16> to vector<4x8x8xbf16>
    %74 = vector.shape_cast %71 : vector<4x8x8xbf16> to vector<1x4x8x8xbf16>
    tpu.vector_store %arg14[%c0_36, %c0_37, %c0_38, %c0_39], %74 {strides = array<i32>} : memref<1x4x8x8xbf16, #tpu.memory_space<vmem>>, vector<1x4x8x8xbf16>,
    return
  }
  func.func @transform_0(%arg0: i32, %arg1: i32) -> (i32, i32, i32) {
    %c0_i32 = arith.constant 0 : i32
    %c0_i32_0 = arith.constant 0 : i32
    return %arg0, %arg1, %c0_i32 : i32, i32, i32
  }
  func.func @transform_1(%arg0: i32, %arg1: i32) -> (i32, i32) {
    %c0_i32 = arith.constant 0 : i32
    %c0_i32_0 = arith.constant 0 : i32
    return %arg1, %c0_i32 : i32, i32
  }
  func.func @transform_2(%arg0: i32, %arg1: i32) -> (i32, i32) {
    %c0_i32 = arith.constant 0 : i32
    %c0_i32_0 = arith.constant 0 : i32
    %c0_i32_1 = arith.constant 0 : i32
    return %c0_i32, %c0_i32_0 : i32, i32
  }
  func.func @transform_3(%arg0: i32, %arg1: i32) -> (i32, i32) {
    %c0_i32 = arith.constant 0 : i32
    %c0_i32_0 = arith.constant 0 : i32
    %c0_i32_1 = arith.constant 0 : i32
    return %c0_i32, %c0_i32_0 : i32, i32
  }
  func.func @transform_4(%arg0: i32, %arg1: i32) -> (i32, i32) {
    %c0_i32 = arith.constant 0 : i32
    %c0_i32_0 = arith.constant 0 : i32
    %c0_i32_1 = arith.constant 0 : i32
    return %c0_i32, %c0_i32_0 : i32, i32
  }
  func.func @transform_5(%arg0: i32, %arg1: i32) -> (i32, i32) {
    %c0_i32 = arith.constant 0 : i32
    %c0_i32_0 = arith.constant 0 : i32
    %c0_i32_1 = arith.constant 0 : i32
    return %c0_i32, %c0_i32_0 : i32, i32
  }
  func.func @transform_6(%arg0: i32, %arg1: i32) -> (i32, i32) {
    %c0_i32 = arith.constant 0 : i32
    %c0_i32_0 = arith.constant 0 : i32
    %c0_i32_1 = arith.constant 0 : i32
    return %c0_i32, %c0_i32_0 : i32, i32
  }
  func.func @transform_7(%arg0: i32, %arg1: i32) -> (i32, i32) {
    %c0_i32 = arith.constant 0 : i32
    %c0_i32_0 = arith.constant 0 : i32
    %c0_i32_1 = arith.constant 0 : i32
    return %c0_i32, %c0_i32_0 : i32, i32
  }
  func.func @transform_8(%arg0: i32, %arg1: i32) -> (i32, i32) {
    %c0_i32 = arith.constant 0 : i32
    %c0_i32_0 = arith.constant 0 : i32
    %c0_i32_1 = arith.constant 0 : i32
    return %c0_i32, %c0_i32_0 : i32, i32
  }
  func.func @transform_9(%arg0: i32, %arg1: i32) -> (i32, i32) {
    %c0_i32 = arith.constant 0 : i32
    %c0_i32_0 = arith.constant 0 : i32
    %c0_i32_1 = arith.constant 0 : i32
    return %c0_i32, %c0_i32_0 : i32, i32
  }
  func.func @transform_10(%arg0: i32, %arg1: i32) -> (i32, i32, i32, i32) {
    %c0_i32 = arith.constant 0 : i32
    %c0_i32_0 = arith.constant 0 : i32
    %c0_i32_1 = arith.constant 0 : i32
    return %arg0, %c0_i32, %arg1, %c0_i32_0 : i32, i32, i32, i32
  }
  func.func @transform_11(%arg0: i32, %arg1: i32) -> (i32, i32, i32, i32) {
    %c0_i32 = arith.constant 0 : i32
    %c0_i32_0 = arith.constant 0 : i32
    %c0_i32_1 = arith.constant 0 : i32
    return %arg0, %c0_i32, %arg1, %c0_i32_0 : i32, i32, i32, i32
  }
  func.func @transform_12(%arg0: i32, %arg1: i32) -> (i32, i32, i32, i32) {
    %c0_i32 = arith.constant 0 : i32
    %c0_i32_0 = arith.constant 0 : i32
    %c0_i32_1 = arith.constant 0 : i32
    return %arg0, %c0_i32, %arg1, %c0_i32_0 : i32, i32, i32, i32
  }
}

module attributes {stable_mosaic.version = 11 : i64} {
  func.func @_attn_mlp_kernel(%arg0: i32, %arg1: i32, %arg2: i32, %arg3: memref<1x8x32xf32, #tpu.memory_space<vmem>>, %arg4: memref<1x4x8x8xbf16, #tpu.memory_space<vmem>>, %arg5: memref<1x4x8x8xbf16, #tpu.memory_space<vmem>>, %arg6: memref<1x4x8x8xbf16, #tpu.memory_space<vmem>>, %arg7: memref<32x32xbf16, #tpu.memory_space<vmem>>, %arg8: memref<1x32xf32, #tpu.memory_space<vmem>>, %arg9: memref<1x32xf32, #tpu.memory_space<vmem>>, %arg10: memref<1x32xf32, #tpu.memory_space<vmem>>, %arg11: memref<32x64xbf16, #tpu.memory_space<vmem>>, %arg12: memref<1x64xf32, #tpu.memory_space<vmem>>, %arg13: memref<64x32xbf16, #tpu.memory_space<vmem>>, %arg14: memref<1x32xf32, #tpu.memory_space<vmem>>, %arg15: memref<1x8x32xf32, #tpu.memory_space<vmem>>, %arg16: memref<4x8x1xf32, #tpu.memory_space<vmem>>, %arg17: memref<4x8x1xf32, #tpu.memory_space<vmem>>, %arg18: memref<4x8x8xf32, #tpu.memory_space<vmem>>) attributes {dimension_semantics = [#tpu.dimension_semantics<parallel>, #tpu.dimension_semantics<parallel>, #tpu.dimension_semantics<arbitrary>], iteration_bounds = array<i64: 2, 1, 1>, scalar_prefetch = 0 : i64, scratch_operands = 3 : i64, tpu.core_type = #tpu.core_type<tc>, window_params = [{transform_indices = @transform_0, window_bounds = array<i64: 1, 8, 32>}, {transform_indices = @transform_1, window_bounds = array<i64: 1, 4, 8, 8>}, {transform_indices = @transform_2, window_bounds = array<i64: 1, 4, 8, 8>}, {transform_indices = @transform_3, window_bounds = array<i64: 1, 4, 8, 8>}, {pipeline_mode = #tpu.pipeline_mode<synchronous>, transform_indices = @transform_4, window_bounds = array<i64: 32, 32>}, {pipeline_mode = #tpu.pipeline_mode<synchronous>, transform_indices = @transform_5, window_bounds = array<i64: 1, 32>}, {pipeline_mode = #tpu.pipeline_mode<synchronous>, transform_indices = @transform_6, window_bounds = array<i64: 1, 32>}, {pipeline_mode = #tpu.pipeline_mode<synchronous>, transform_indices = @transform_7, window_bounds = array<i64: 1, 32>}, {pipeline_mode = #tpu.pipeline_mode<synchronous>, transform_indices = @transform_8, window_bounds = array<i64: 32, 64>}, {pipeline_mode = #tpu.pipeline_mode<synchronous>, transform_indices = @transform_9, window_bounds = array<i64: 1, 64>}, {pipeline_mode = #tpu.pipeline_mode<synchronous>, transform_indices = @transform_10, window_bounds = array<i64: 64, 32>}, {pipeline_mode = #tpu.pipeline_mode<synchronous>, transform_indices = @transform_11, window_bounds = array<i64: 1, 32>}, {transform_indices = @transform_12, window_bounds = array<i64: 1, 8, 32>}]} {
    %c0_i32 = arith.constant 0 : i32
    %0 = arith.cmpi eq, %arg2, %c0_i32 : i32
    %1 = arith.extui %0 : i1 to i32
    %c0_i32_0 = arith.constant 0 : i32
    %2 = arith.cmpi ne, %1, %c0_i32_0 : i32
    scf.if %2 {
      %cst = arith.constant 0xFF800000 : f32
      %12 = vector.broadcast %cst : f32 to vector<4x8x1xf32>
      %c0 = arith.constant 0 : index
      %c0_5 = arith.constant 0 : index
      %c0_6 = arith.constant 0 : index
      %13 = vector.load %arg16[%c0, %c0_5, %c0_6] : memref<4x8x1xf32, #tpu.memory_space<vmem>>, vector<4x8x1xf32>
      tpu.vector_store %arg16[%c0, %c0_5, %c0_6], %12 {strides = array<i32>} : memref<4x8x1xf32, #tpu.memory_space<vmem>>, vector<4x8x1xf32>,
      %cst_7 = arith.constant 0.000000e+00 : f32
      %14 = vector.broadcast %cst_7 : f32 to vector<4x8x1xf32>
      %c0_8 = arith.constant 0 : index
      %c0_9 = arith.constant 0 : index
      %c0_10 = arith.constant 0 : index
      %15 = vector.load %arg17[%c0_8, %c0_9, %c0_10] : memref<4x8x1xf32, #tpu.memory_space<vmem>>, vector<4x8x1xf32>
      tpu.vector_store %arg17[%c0_8, %c0_9, %c0_10], %14 {strides = array<i32>} : memref<4x8x1xf32, #tpu.memory_space<vmem>>, vector<4x8x1xf32>,
      %cst_11 = arith.constant 0.000000e+00 : f32
      %16 = vector.broadcast %cst_11 : f32 to vector<4x8x8xf32>
      %c0_12 = arith.constant 0 : index
      %c0_13 = arith.constant 0 : index
      %c0_14 = arith.constant 0 : index
      %17 = vector.load %arg18[%c0_12, %c0_13, %c0_14] : memref<4x8x8xf32, #tpu.memory_space<vmem>>, vector<4x8x8xf32>
      tpu.vector_store %arg18[%c0_12, %c0_13, %c0_14], %16 {strides = array<i32>} : memref<4x8x8xf32, #tpu.memory_space<vmem>>, vector<4x8x8xf32>,
    } else {
    }
    %3 = arith.cmpi slt, %arg2, %arg1 : i32
    %4 = arith.extui %3 : i1 to i32
    %c0_i32_1 = arith.constant 0 : i32
    %5 = arith.cmpi ne, %4, %c0_i32_1 : i32
    scf.if %5 {
      %c0 = arith.constant 0 : index
      %c0_5 = arith.constant 0 : index
      %c0_6 = arith.constant 0 : index
      %c0_7 = arith.constant 0 : index
      %12 = vector.load %arg4[%c0, %c0_5, %c0_6, %c0_7] : memref<1x4x8x8xbf16, #tpu.memory_space<vmem>>, vector<1x4x8x8xbf16>
      %13 = vector.shape_cast %12 : vector<1x4x8x8xbf16> to vector<4x8x8xbf16>
      %c0_8 = arith.constant 0 : index
      %c0_9 = arith.constant 0 : index
      %c0_10 = arith.constant 0 : index
      %c0_11 = arith.constant 0 : index
      %14 = vector.load %arg5[%c0_8, %c0_9, %c0_10, %c0_11] : memref<1x4x8x8xbf16, #tpu.memory_space<vmem>>, vector<1x4x8x8xbf16>
      %15 = vector.shape_cast %14 : vector<1x4x8x8xbf16> to vector<4x8x8xbf16>
      "tpu.trace_start"() <{level = 10 : i32, message = "hqd,hkd->hqk"}> : () -> ()
      %cst = arith.constant dense<0.000000e+00> : vector<4x8x8xf32>
      %16 = tpu.matmul %13, %15, %cst {dimension_numbers = #tpu.dot_dimension_numbers<[2], [2], [1], [1], [0, 0, 0, 1, 1, 1], [0], [0]>} : vector<4x8x8xbf16>, vector<4x8x8xbf16>, vector<4x8x8xf32> -> vector<4x8x8xf32>
      "tpu.trace_stop"() : () -> ()
      %c0_12 = arith.constant 0 : index
      %c0_13 = arith.constant 0 : index
      %c0_14 = arith.constant 0 : index
      %17 = vector.load %arg16[%c0_12, %c0_13, %c0_14] : memref<4x8x1xf32, #tpu.memory_space<vmem>>, vector<4x8x1xf32>
      %cst_15 = arith.constant dense<0xFF800000> : vector<4x8xf32>
      %18 = vector.multi_reduction <maximumf>, %16, %cst_15 [2] : vector<4x8x8xf32> to vector<4x8xf32>
      %19 = vector.shape_cast %18 : vector<4x8xf32> to vector<4x8x1xf32>
      %20 = arith.maximumf %17, %19 : vector<4x8x1xf32>
      %21 = arith.subf %17, %20 : vector<4x8x1xf32>
      %22 = math.exp %21 : vector<4x8x1xf32>
      %23 = vector.broadcast %20 : vector<4x8x1xf32> to vector<4x8x8xf32>
      %24 = arith.subf %16, %23 : vector<4x8x8xf32>
      %25 = math.exp %24 : vector<4x8x8xf32>
      %c0_16 = arith.constant 0 : index
      %c0_17 = arith.constant 0 : index
      %c0_18 = arith.constant 0 : index
      %26 = vector.load %arg17[%c0_16, %c0_17, %c0_18] : memref<4x8x1xf32, #tpu.memory_space<vmem>>, vector<4x8x1xf32>
      %27 = arith.mulf %22, %26 : vector<4x8x1xf32>
      %cst_19 = arith.constant dense<0.000000e+00> : vector<4x8xf32>
      %28 = vector.multi_reduction <add>, %25, %cst_19 [2] : vector<4x8x8xf32> to vector<4x8xf32>
      %29 = vector.shape_cast %28 : vector<4x8xf32> to vector<4x8x1xf32>
      %30 = arith.addf %27, %29 : vector<4x8x1xf32>
      %c0_20 = arith.constant 0 : index
      %c0_21 = arith.constant 0 : index
      %c0_22 = arith.constant 0 : index
      %31 = vector.load %arg17[%c0_20, %c0_21, %c0_22] : memref<4x8x1xf32, #tpu.memory_space<vmem>>, vector<4x8x1xf32>
      tpu.vector_store %arg17[%c0_20, %c0_21, %c0_22], %30 {strides = array<i32>} : memref<4x8x1xf32, #tpu.memory_space<vmem>>, vector<4x8x1xf32>,
      %c0_23 = arith.constant 0 : index
      %c0_24 = arith.constant 0 : index
      %c0_25 = arith.constant 0 : index
      %32 = vector.load %arg18[%c0_23, %c0_24, %c0_25] : memref<4x8x8xf32, #tpu.memory_space<vmem>>, vector<4x8x8xf32>
      %33 = vector.broadcast %22 : vector<4x8x1xf32> to vector<4x8x8xf32>
      %34 = arith.mulf %33, %32 : vector<4x8x8xf32>
      %35 = arith.truncf %25 : vector<4x8x8xf32> to vector<4x8x8xbf16>
      %c0_26 = arith.constant 0 : index
      %c0_27 = arith.constant 0 : index
      %c0_28 = arith.constant 0 : index
      %c0_29 = arith.constant 0 : index
      %36 = vector.load %arg6[%c0_26, %c0_27, %c0_28, %c0_29] : memref<1x4x8x8xbf16, #tpu.memory_space<vmem>>, vector<1x4x8x8xbf16>
      %37 = vector.shape_cast %36 : vector<1x4x8x8xbf16> to vector<4x8x8xbf16>
      "tpu.trace_start"() <{level = 10 : i32, message = "hqk,hkd->hqd"}> : () -> ()
      %cst_30 = arith.constant dense<0.000000e+00> : vector<4x8x8xf32>
      %38 = tpu.matmul %35, %37, %cst_30 {dimension_numbers = #tpu.dot_dimension_numbers<[2], [1], [1], [2], [0, 0, 0, 1, 1, 2], [0], [0]>} : vector<4x8x8xbf16>, vector<4x8x8xbf16>, vector<4x8x8xf32> -> vector<4x8x8xf32>
      "tpu.trace_stop"() : () -> ()
      %39 = arith.addf %34, %38 : vector<4x8x8xf32>
      %c0_31 = arith.constant 0 : index
      %c0_32 = arith.constant 0 : index
      %c0_33 = arith.constant 0 : index
      %40 = vector.load %arg18[%c0_31, %c0_32, %c0_33] : memref<4x8x8xf32, #tpu.memory_space<vmem>>, vector<4x8x8xf32>
      tpu.vector_store %arg18[%c0_31, %c0_32, %c0_33], %39 {strides = array<i32>} : memref<4x8x8xf32, #tpu.memory_space<vmem>>, vector<4x8x8xf32>,
      %c0_34 = arith.constant 0 : index
      %c0_35 = arith.constant 0 : index
      %c0_36 = arith.constant 0 : index
      %41 = vector.load %arg16[%c0_34, %c0_35, %c0_36] : memref<4x8x1xf32, #tpu.memory_space<vmem>>, vector<4x8x1xf32>
      tpu.vector_store %arg16[%c0_34, %c0_35, %c0_36], %20 {strides = array<i32>} : memref<4x8x1xf32, #tpu.memory_space<vmem>>, vector<4x8x1xf32>,
    } else {
    }
    %6 = arith.cmpi eq, %arg2, %arg1 : i32
    %7 = arith.extui %6 : i1 to i32
    %c0_i32_2 = arith.constant 0 : i32
    %8 = arith.cmpi ne, %7, %c0_i32_2 : i32
    scf.if %8 {
      %c0 = arith.constant 0 : index
      %c0_5 = arith.constant 0 : index
      %c0_6 = arith.constant 0 : index
      %c0_7 = arith.constant 0 : index
      %12 = vector.load %arg4[%c0, %c0_5, %c0_6, %c0_7] : memref<1x4x8x8xbf16, #tpu.memory_space<vmem>>, vector<1x4x8x8xbf16>
      %13 = vector.shape_cast %12 : vector<1x4x8x8xbf16> to vector<4x8x8xbf16>
      %c0_8 = arith.constant 0 : index
      %c0_9 = arith.constant 0 : index
      %c0_10 = arith.constant 0 : index
      %c0_11 = arith.constant 0 : index
      %14 = vector.load %arg5[%c0_8, %c0_9, %c0_10, %c0_11] : memref<1x4x8x8xbf16, #tpu.memory_space<vmem>>, vector<1x4x8x8xbf16>
      %15 = vector.shape_cast %14 : vector<1x4x8x8xbf16> to vector<4x8x8xbf16>
      "tpu.trace_start"() <{level = 10 : i32, message = "hqd,hkd->hqk"}> : () -> ()
      %cst = arith.constant dense<0.000000e+00> : vector<4x8x8xf32>
      %16 = tpu.matmul %13, %15, %cst {dimension_numbers = #tpu.dot_dimension_numbers<[2], [2], [1], [1], [0, 0, 0, 1, 1, 1], [0], [0]>} : vector<4x8x8xbf16>, vector<4x8x8xbf16>, vector<4x8x8xf32> -> vector<4x8x8xf32>
      "tpu.trace_stop"() : () -> ()
      %17 = tpu.iota {dimensions = array<i32: 0>} : vector<8x8xi32>
      %18 = tpu.iota {dimensions = array<i32: 1>} : vector<8x8xi32>
      %19 = arith.cmpi sle, %18, %17 : vector<8x8xi32>
      %20 = vector.shape_cast %19 : vector<8x8xi1> to vector<1x8x8xi1>
      %cst_12 = arith.constant -1.000000e+30 : f32
      %21 = vector.shape_cast %20 : vector<1x8x8xi1> to vector<1x8x8xi1>
      %22 = vector.broadcast %21 : vector<1x8x8xi1> to vector<4x8x8xi1>
      %23 = vector.broadcast %cst_12 : f32 to vector<4x8x8xf32>
      %24 = arith.select %22, %16, %23 : vector<4x8x8xi1>, vector<4x8x8xf32>
      %c0_13 = arith.constant 0 : index
      %c0_14 = arith.constant 0 : index
      %c0_15 = arith.constant 0 : index
      %25 = vector.load %arg16[%c0_13, %c0_14, %c0_15] : memref<4x8x1xf32, #tpu.memory_space<vmem>>, vector<4x8x1xf32>
      %cst_16 = arith.constant dense<0xFF800000> : vector<4x8xf32>
      %26 = vector.multi_reduction <maximumf>, %24, %cst_16 [2] : vector<4x8x8xf32> to vector<4x8xf32>
      %27 = vector.shape_cast %26 : vector<4x8xf32> to vector<4x8x1xf32>
      %28 = arith.maximumf %25, %27 : vector<4x8x1xf32>
      %29 = arith.subf %25, %28 : vector<4x8x1xf32>
      %30 = math.exp %29 : vector<4x8x1xf32>
      %31 = vector.broadcast %28 : vector<4x8x1xf32> to vector<4x8x8xf32>
      %32 = arith.subf %24, %31 : vector<4x8x8xf32>
      %33 = math.exp %32 : vector<4x8x8xf32>
      %c0_17 = arith.constant 0 : index
      %c0_18 = arith.constant 0 : index
      %c0_19 = arith.constant 0 : index
      %34 = vector.load %arg17[%c0_17, %c0_18, %c0_19] : memref<4x8x1xf32, #tpu.memory_space<vmem>>, vector<4x8x1xf32>
      %35 = arith.mulf %30, %34 : vector<4x8x1xf32>
      %cst_20 = arith.constant dense<0.000000e+00> : vector<4x8xf32>
      %36 = vector.multi_reduction <add>, %33, %cst_20 [2] : vector<4x8x8xf32> to vector<4x8xf32>
      %37 = vector.shape_cast %36 : vector<4x8xf32> to vector<4x8x1xf32>
      %38 = arith.addf %35, %37 : vector<4x8x1xf32>
      %c0_21 = arith.constant 0 : index
      %c0_22 = arith.constant 0 : index
      %c0_23 = arith.constant 0 : index
      %39 = vector.load %arg17[%c0_21, %c0_22, %c0_23] : memref<4x8x1xf32, #tpu.memory_space<vmem>>, vector<4x8x1xf32>
      tpu.vector_store %arg17[%c0_21, %c0_22, %c0_23], %38 {strides = array<i32>} : memref<4x8x1xf32, #tpu.memory_space<vmem>>, vector<4x8x1xf32>,
      %c0_24 = arith.constant 0 : index
      %c0_25 = arith.constant 0 : index
      %c0_26 = arith.constant 0 : index
      %40 = vector.load %arg18[%c0_24, %c0_25, %c0_26] : memref<4x8x8xf32, #tpu.memory_space<vmem>>, vector<4x8x8xf32>
      %41 = vector.broadcast %30 : vector<4x8x1xf32> to vector<4x8x8xf32>
      %42 = arith.mulf %41, %40 : vector<4x8x8xf32>
      %43 = arith.truncf %33 : vector<4x8x8xf32> to vector<4x8x8xbf16>
      %c0_27 = arith.constant 0 : index
      %c0_28 = arith.constant 0 : index
      %c0_29 = arith.constant 0 : index
      %c0_30 = arith.constant 0 : index
      %44 = vector.load %arg6[%c0_27, %c0_28, %c0_29, %c0_30] : memref<1x4x8x8xbf16, #tpu.memory_space<vmem>>, vector<1x4x8x8xbf16>
      %45 = vector.shape_cast %44 : vector<1x4x8x8xbf16> to vector<4x8x8xbf16>
      "tpu.trace_start"() <{level = 10 : i32, message = "hqk,hkd->hqd"}> : () -> ()
      %cst_31 = arith.constant dense<0.000000e+00> : vector<4x8x8xf32>
      %46 = tpu.matmul %43, %45, %cst_31 {dimension_numbers = #tpu.dot_dimension_numbers<[2], [1], [1], [2], [0, 0, 0, 1, 1, 2], [0], [0]>} : vector<4x8x8xbf16>, vector<4x8x8xbf16>, vector<4x8x8xf32> -> vector<4x8x8xf32>
      "tpu.trace_stop"() : () -> ()
      %47 = arith.addf %42, %46 : vector<4x8x8xf32>
      %c0_32 = arith.constant 0 : index
      %c0_33 = arith.constant 0 : index
      %c0_34 = arith.constant 0 : index
      %48 = vector.load %arg18[%c0_32, %c0_33, %c0_34] : memref<4x8x8xf32, #tpu.memory_space<vmem>>, vector<4x8x8xf32>
      tpu.vector_store %arg18[%c0_32, %c0_33, %c0_34], %47 {strides = array<i32>} : memref<4x8x8xf32, #tpu.memory_space<vmem>>, vector<4x8x8xf32>,
      %c0_35 = arith.constant 0 : index
      %c0_36 = arith.constant 0 : index
      %c0_37 = arith.constant 0 : index
      %49 = vector.load %arg16[%c0_35, %c0_36, %c0_37] : memref<4x8x1xf32, #tpu.memory_space<vmem>>, vector<4x8x1xf32>
      tpu.vector_store %arg16[%c0_35, %c0_36, %c0_37], %28 {strides = array<i32>} : memref<4x8x1xf32, #tpu.memory_space<vmem>>, vector<4x8x1xf32>,
    } else {
    }
    %c0_i32_3 = arith.constant 0 : i32
    %9 = arith.cmpi eq, %arg2, %c0_i32_3 : i32
    %10 = arith.extui %9 : i1 to i32
    %c0_i32_4 = arith.constant 0 : i32
    %11 = arith.cmpi ne, %10, %c0_i32_4 : i32
    scf.if %11 {
      %c0 = arith.constant 0 : index
      %c0_5 = arith.constant 0 : index
      %c0_6 = arith.constant 0 : index
      %12 = vector.load %arg18[%c0, %c0_5, %c0_6] : memref<4x8x8xf32, #tpu.memory_space<vmem>>, vector<4x8x8xf32>
      %c0_7 = arith.constant 0 : index
      %c0_8 = arith.constant 0 : index
      %c0_9 = arith.constant 0 : index
      %13 = vector.load %arg17[%c0_7, %c0_8, %c0_9] : memref<4x8x1xf32, #tpu.memory_space<vmem>>, vector<4x8x1xf32>
      %14 = tpu.reciprocal %13 {approx = true} : vector<4x8x1xf32> -> vector<4x8x1xf32>
      %15 = vector.broadcast %14 : vector<4x8x1xf32> to vector<4x8x8xf32>
      %16 = arith.mulf %12, %15 : vector<4x8x8xf32>
      %17 = tpu.transpose %16, [1, 0, 2] : vector<4x8x8xf32> -> vector<8x4x8xf32>
      %18 = vector.shape_cast %17 : vector<8x4x8xf32> to vector<8x32xf32>
      %19 = arith.truncf %18 : vector<8x32xf32> to vector<8x32xbf16>
      %c0_10 = arith.constant 0 : index
      %c0_11 = arith.constant 0 : index
      %20 = vector.load %arg7[%c0_10, %c0_11] : memref<32x32xbf16, #tpu.memory_space<vmem>>, vector<32x32xbf16>
      %cst = arith.constant dense<0.000000e+00> : vector<8x32xf32>
      %21 = tpu.matmul %19, %20, %cst {dimension_numbers = #tpu.dot_dimension_numbers<[1], [0], [0], [1], [0, 0, 1, 1], [], []>} : vector<8x32xbf16>, vector<32x32xbf16>, vector<8x32xf32> -> vector<8x32xf32>
      %c0_12 = arith.constant 0 : index
      %c0_13 = arith.constant 0 : index
      %22 = vector.load %arg8[%c0_12, %c0_13] : memref<1x32xf32, #tpu.memory_space<vmem>>, vector<1x32xf32>
      %23 = vector.shape_cast %22 : vector<1x32xf32> to vector<32xf32>
      %24 = vector.shape_cast %23 : vector<32xf32> to vector<1x32xf32>
      %25 = vector.broadcast %24 : vector<1x32xf32> to vector<8x32xf32>
      %26 = arith.addf %21, %25 : vector<8x32xf32>
      %c0_14 = arith.constant 0 : index
      %c0_15 = arith.constant 0 : index
      %c0_16 = arith.constant 0 : index
      %27 = vector.load %arg3[%c0_14, %c0_15, %c0_16] : memref<1x8x32xf32, #tpu.memory_space<vmem>>, vector<1x8x32xf32>
      %28 = vector.shape_cast %27 : vector<1x8x32xf32> to vector<8x32xf32>
      %29 = arith.addf %28, %26 : vector<8x32xf32>
      %c0_17 = arith.constant 0 : index
      %c0_18 = arith.constant 0 : index
      %30 = vector.load %arg9[%c0_17, %c0_18] : memref<1x32xf32, #tpu.memory_space<vmem>>, vector<1x32xf32>
      %31 = vector.shape_cast %30 : vector<1x32xf32> to vector<32xf32>
      %c0_19 = arith.constant 0 : index
      %c0_20 = arith.constant 0 : index
      %32 = vector.load %arg10[%c0_19, %c0_20] : memref<1x32xf32, #tpu.memory_space<vmem>>, vector<1x32xf32>
      %33 = vector.shape_cast %32 : vector<1x32xf32> to vector<32xf32>
      %cst_21 = arith.constant dense<0.000000e+00> : vector<8xf32>
      %34 = vector.multi_reduction <add>, %29, %cst_21 [1] : vector<8x32xf32> to vector<8xf32>
      %35 = vector.shape_cast %34 : vector<8xf32> to vector<8x1xf32>
      %cst_22 = arith.constant 3.200000e+01 : f32
      %36 = vector.broadcast %cst_22 : f32 to vector<8x1xf32>
      %37 = arith.divf %35, %36 : vector<8x1xf32>
      %38 = vector.broadcast %37 : vector<8x1xf32> to vector<8x32xf32>
      %39 = arith.subf %29, %38 : vector<8x32xf32>
      %40 = arith.mulf %39, %39 : vector<8x32xf32>
      %cst_23 = arith.constant dense<0.000000e+00> : vector<8xf32>
      %41 = vector.multi_reduction <add>, %40, %cst_23 [1] : vector<8x32xf32> to vector<8xf32>
      %42 = vector.shape_cast %41 : vector<8xf32> to vector<8x1xf32>
      %cst_24 = arith.constant 3.200000e+01 : f32
      %43 = vector.broadcast %cst_24 : f32 to vector<8x1xf32>
      %44 = arith.divf %42, %43 : vector<8x1xf32>
      %45 = vector.broadcast %37 : vector<8x1xf32> to vector<8x32xf32>
      %46 = arith.subf %29, %45 : vector<8x32xf32>
      %cst_25 = arith.constant 9.99999974E-6 : f32
      %47 = vector.broadcast %cst_25 : f32 to vector<8x1xf32>
      %48 = arith.addf %44, %47 : vector<8x1xf32>
      %49 = math.rsqrt %48 : vector<8x1xf32>
      %50 = vector.broadcast %49 : vector<8x1xf32> to vector<8x32xf32>
      %51 = arith.mulf %46, %50 : vector<8x32xf32>
      %52 = vector.shape_cast %31 : vector<32xf32> to vector<1x32xf32>
      %53 = vector.broadcast %52 : vector<1x32xf32> to vector<8x32xf32>
      %54 = arith.mulf %51, %53 : vector<8x32xf32>
      %55 = vector.shape_cast %33 : vector<32xf32> to vector<1x32xf32>
      %56 = vector.broadcast %55 : vector<1x32xf32> to vector<8x32xf32>
      %57 = arith.addf %54, %56 : vector<8x32xf32>
      %58 = arith.truncf %57 : vector<8x32xf32> to vector<8x32xbf16>
      %c0_26 = arith.constant 0 : index
      %c0_27 = arith.constant 0 : index
      %59 = vector.load %arg11[%c0_26, %c0_27] : memref<32x64xbf16, #tpu.memory_space<vmem>>, vector<32x64xbf16>
      %cst_28 = arith.constant dense<0.000000e+00> : vector<8x64xf32>
      %60 = tpu.matmul %58, %59, %cst_28 {dimension_numbers = #tpu.dot_dimension_numbers<[1], [0], [0], [1], [0, 0, 1, 1], [], []>} : vector<8x32xbf16>, vector<32x64xbf16>, vector<8x64xf32> -> vector<8x64xf32>
      %c0_29 = arith.constant 0 : index
      %c0_30 = arith.constant 0 : index
      %61 = vector.load %arg12[%c0_29, %c0_30] : memref<1x64xf32, #tpu.memory_space<vmem>>, vector<1x64xf32>
      %62 = vector.shape_cast %61 : vector<1x64xf32> to vector<64xf32>
      %63 = vector.shape_cast %62 : vector<64xf32> to vector<1x64xf32>
      %64 = vector.broadcast %63 : vector<1x64xf32> to vector<8x64xf32>
      %65 = arith.addf %60, %64 : vector<8x64xf32>
      %cst_31 = arith.constant 0.000000e+00 : f32
      %66 = vector.broadcast %cst_31 : f32 to vector<8x64xf32>
      %67 = arith.maximumf %65, %66 : vector<8x64xf32>
      %68 = arith.truncf %67 : vector<8x64xf32> to vector<8x64xbf16>
      %c0_32 = arith.constant 0 : index
      %c0_33 = arith.constant 0 : index
      %69 = vector.load %arg13[%c0_32, %c0_33] : memref<64x32xbf16, #tpu.memory_space<vmem>>, vector<64x32xbf16>
      %cst_34 = arith.constant dense<0.000000e+00> : vector<8x32xf32>
      %70 = tpu.matmul %68, %69, %cst_34 {dimension_numbers = #tpu.dot_dimension_numbers<[1], [0], [0], [1], [0, 0, 1, 1], [], []>} : vector<8x64xbf16>, vector<64x32xbf16>, vector<8x32xf32> -> vector<8x32xf32>
      %c0_35 = arith.constant 0 : index
      %c0_36 = arith.constant 0 : index
      %71 = vector.load %arg14[%c0_35, %c0_36] : memref<1x32xf32, #tpu.memory_space<vmem>>, vector<1x32xf32>
      %72 = vector.shape_cast %71 : vector<1x32xf32> to vector<32xf32>
      %73 = vector.shape_cast %72 : vector<32xf32> to vector<1x32xf32>
      %74 = vector.broadcast %73 : vector<1x32xf32> to vector<8x32xf32>
      %75 = arith.addf %70, %74 : vector<8x32xf32>
      %76 = arith.addf %29, %75 : vector<8x32xf32>
      %c0_37 = arith.constant 0 : index
      %c0_38 = arith.constant 0 : index
      %c0_39 = arith.constant 0 : index
      %77 = vector.load %arg15[%c0_37, %c0_38, %c0_39] : memref<1x8x32xf32, #tpu.memory_space<vmem>>, vector<1x8x32xf32>
      %78 = vector.shape_cast %77 : vector<1x8x32xf32> to vector<8x32xf32>
      %79 = vector.shape_cast %76 : vector<8x32xf32> to vector<1x8x32xf32>
      tpu.vector_store %arg15[%c0_37, %c0_38, %c0_39], %79 {strides = array<i32>} : memref<1x8x32xf32, #tpu.memory_space<vmem>>, vector<1x8x32xf32>,
    } else {
    }
    return
  }
  func.func @transform_0(%arg0: i32, %arg1: i32, %arg2: i32) -> (i32, i32, i32) {
    %c0_i32 = arith.constant 0 : i32
    %c0_i32_0 = arith.constant 0 : i32
    return %arg0, %arg1, %c0_i32 : i32, i32, i32
  }
  func.func @transform_1(%arg0: i32, %arg1: i32, %arg2: i32) -> (i32, i32, i32, i32) {
    %c0_i32 = arith.constant 0 : i32
    %c0_i32_0 = arith.constant 0 : i32
    %c0_i32_1 = arith.constant 0 : i32
    return %arg0, %c0_i32, %arg1, %c0_i32_0 : i32, i32, i32, i32
  }
  func.func @transform_2(%arg0: i32, %arg1: i32, %arg2: i32) -> (i32, i32, i32, i32) {
    %0 = arith.minsi %arg2, %arg1 : i32
    %c0_i32 = arith.constant 0 : i32
    %c0_i32_0 = arith.constant 0 : i32
    %c0_i32_1 = arith.constant 0 : i32
    return %arg0, %c0_i32, %0, %c0_i32_0 : i32, i32, i32, i32
  }
  func.func @transform_3(%arg0: i32, %arg1: i32, %arg2: i32) -> (i32, i32, i32, i32) {
    %0 = arith.minsi %arg2, %arg1 : i32
    %c0_i32 = arith.constant 0 : i32
    %c0_i32_0 = arith.constant 0 : i32
    %c0_i32_1 = arith.constant 0 : i32
    return %arg0, %c0_i32, %0, %c0_i32_0 : i32, i32, i32, i32
  }
  func.func @transform_4(%arg0: i32, %arg1: i32, %arg2: i32) -> (i32, i32) {
    %c0_i32 = arith.constant 0 : i32
    %c0_i32_0 = arith.constant 0 : i32
    %c0_i32_1 = arith.constant 0 : i32
    return %c0_i32, %c0_i32_0 : i32, i32
  }
  func.func @transform_5(%arg0: i32, %arg1: i32, %arg2: i32) -> (i32, i32) {
    %c0_i32 = arith.constant 0 : i32
    %c0_i32_0 = arith.constant 0 : i32
    %c0_i32_1 = arith.constant 0 : i32
    return %c0_i32, %c0_i32_0 : i32, i32
  }
  func.func @transform_6(%arg0: i32, %arg1: i32, %arg2: i32) -> (i32, i32) {
    %c0_i32 = arith.constant 0 : i32
    %c0_i32_0 = arith.constant 0 : i32
    %c0_i32_1 = arith.constant 0 : i32
    return %c0_i32, %c0_i32_0 : i32, i32
  }
  func.func @transform_7(%arg0: i32, %arg1: i32, %arg2: i32) -> (i32, i32) {
    %c0_i32 = arith.constant 0 : i32
    %c0_i32_0 = arith.constant 0 : i32
    %c0_i32_1 = arith.constant 0 : i32
    return %c0_i32, %c0_i32_0 : i32, i32
  }
  func.func @transform_8(%arg0: i32, %arg1: i32, %arg2: i32) -> (i32, i32) {
    %c0_i32 = arith.constant 0 : i32
    %c0_i32_0 = arith.constant 0 : i32
    %c0_i32_1 = arith.constant 0 : i32
    return %c0_i32, %c0_i32_0 : i32, i32
  }
  func.func @transform_9(%arg0: i32, %arg1: i32, %arg2: i32) -> (i32, i32) {
    %c0_i32 = arith.constant 0 : i32
    %c0_i32_0 = arith.constant 0 : i32
    %c0_i32_1 = arith.constant 0 : i32
    return %c0_i32, %c0_i32_0 : i32, i32
  }
  func.func @transform_10(%arg0: i32, %arg1: i32, %arg2: i32) -> (i32, i32) {
    %c0_i32 = arith.constant 0 : i32
    %c0_i32_0 = arith.constant 0 : i32
    %c0_i32_1 = arith.constant 0 : i32
    return %c0_i32, %c0_i32_0 : i32, i32
  }
  func.func @transform_11(%arg0: i32, %arg1: i32, %arg2: i32) -> (i32, i32) {
    %c0_i32 = arith.constant 0 : i32
    %c0_i32_0 = arith.constant 0 : i32
    %c0_i32_1 = arith.constant 0 : i32
    return %c0_i32, %c0_i32_0 : i32, i32
  }
  func.func @transform_12(%arg0: i32, %arg1: i32, %arg2: i32) -> (i32, i32, i32) {
    %c0_i32 = arith.constant 0 : i32
    %c0_i32_0 = arith.constant 0 : i32
    return %arg0, %arg1, %c0_i32 : i32, i32, i32
  }
}

</mosaic_0001>

<llo_original>
// kernel: _encoder_layer_impl.2
$region0: #{_encoder_layer_impl.2}
  #allocation0 [shape = 'u32[]', space=smem, size = 0x4, offset = 0x4, fixed_abs, tag = 'smem constant byte address 0x4 - core index']
  #allocation1 [shape = 'u32[144,128]{1,0:T(1,128)}', space=vmem, size = 0x12000, scoped, tag = 'internal scratch']
  %s0 = inlined_call_operand.vmem [shape: f32[2,8,32], index: 0, kind: input, shape index: {}]
  %s1 = inlined_call_operand.vmem [shape: f32[8,32], index: 1, kind: input, shape index: {}]
  %s2 = inlined_call_operand.vmem [shape: f32[1,32], index: 2, kind: input, shape index: {}]
  %s3 = inlined_call_operand.vmem [shape: f32[1,32], index: 3, kind: input, shape index: {}]
  %s4 = inlined_call_operand.vmem [shape: bf16[32,32], index: 4, kind: input, shape index: {}]
  %s5 = inlined_call_operand.vmem [shape: bf16[32,32], index: 5, kind: input, shape index: {}]
  %s6 = inlined_call_operand.vmem [shape: bf16[32,32], index: 6, kind: input, shape index: {}]
  %s7 = inlined_call_operand.vmem [shape: f32[1,32], index: 7, kind: input, shape index: {}]
  %s8 = inlined_call_operand.vmem [shape: f32[1,32], index: 8, kind: input, shape index: {}]
  %s9 = inlined_call_operand.vmem [shape: f32[1,32], index: 9, kind: input, shape index: {}]
  %s10 = inlined_call_operand.vmem [shape: bf16[2,4,8,8], index: 10, kind: output, shape index: {0}]
  %s11 = inlined_call_operand.vmem [shape: bf16[2,4,8,8], index: 11, kind: output, shape index: {1}]
  %s12 = inlined_call_operand.vmem [shape: bf16[2,4,8,8], index: 12, kind: output, shape index: {2}]
  %13 = xla_tuple %s10, %s11, %s12
  %s14 = sld [smem:[#allocation0]]
  $region89: #{_encoder_layer_impl.2} parent=0
    _
  %s16 = ssub.s32 1, %s14
  %s17 = scalar_select 0, %s16, %s14
  loop: start=0, step=1, limit=4
  $region2: #{_encoder_layer_impl.2} parent=0 // loop_pre_header
    _
  $region3: #{_encoder_layer_impl.2} parent=0 // loop_header
    %s19 = sphi 0, %s23
    %p20 = scmp.ge.s32.totalorder %s19, 4
    %s26 = sphi 0, %s38
    %s27 = sphi 0, %s34
    %s28 = sphi 0, %s26
    %s29 = sphi 0, %s27
    %s30 = sphi 0, %s28
    %s31 = sphi 0, %s29
    %s43 = sphi 0, %s45
    %s46 = sphi 0, %s43
    %s47 = sphi 0, %s46
    %s63 = sphi 0, %s47
    %s69 = sphi 0, %s71
    %s72 = sphi 0, %s69
    %s73 = sphi 0, %s72
    %s89 = sphi 0, %s73
    %s93 = sphi 0, %s93
    %s95 = sphi 0, %s93
    %s96 = sphi 0, %s95
    %s110 = sphi 0, %s96
    %s114 = sphi 0, %s114
    %s116 = sphi 0, %s114
    %s117 = sphi 0, %s116
    %s131 = sphi 0, %s117
    %s135 = sphi 0, %s135
    %s137 = sphi 0, %s135
    %s138 = sphi 0, %s137
    %s152 = sphi 0, %s138
    %s156 = sphi 0, %s156
    %s158 = sphi 0, %s156
    %s159 = sphi 0, %s158
    %s173 = sphi 0, %s159
    %s177 = sphi 0, %s177
    %s179 = sphi 0, %s177
    %s180 = sphi 0, %s179
    %s194 = sphi 0, %s180
    %s198 = sphi 0, %s198
    %s200 = sphi 0, %s198
    %s201 = sphi 0, %s200
    %s215 = sphi 0, %s201
    %s219 = sphi 0, %s219
    %s221 = sphi 0, %s219
    %s222 = sphi 0, %s221
    %s236 = sphi 0, %s222
    %s240 = sphi 0, %s240
    %s242 = sphi 0, %s240
    %s243 = sphi 0, %s242
    %s257 = sphi 0, %s243
    %s265 = sphi 0, %s267
    %s268 = sphi 0, %s265
    %s269 = sphi 0, %s268
    %s285 = sphi 0, %s269
    %s293 = sphi 0, %s295
    %s296 = sphi 0, %s293
    %s297 = sphi 0, %s296
    %s313 = sphi 0, %s297
    %s321 = sphi 0, %s323
    %s324 = sphi 0, %s321
    %s325 = sphi 0, %s324
    %s341 = sphi 0, %s325
  $region4: #{_encoder_layer_impl.2} parent=0 // loop_header_branch
    %22 = sbr.rel (%p20) target = $region8
  $region5: #{_encoder_layer_impl.2} parent=0 // loop_body
    %s24 = ssub.s32 %s19, 1
    %s25 = ssub.s32 %s19, 2
    %s32 = sadd.s32 1, %s27
    %p33 = scmp.ge.s32.totalorder %s32, 1
    %s34 = scalar_select %p33, 0, %s32
    %s35 = sadd.s32 1, %s26
    %s36 = scalar_select %p33, %s35, %s26
    %p37 = scmp.ge.s32.totalorder %s36, 2
    %s38 = scalar_select %p37, 0, %s36
    %s39 = ssub.s32 %s26, %s38
    %s40 = ssub.s32 %s27, %s34
    %s41 = sor.u32 %s39, %s40
    %p42 = scmp.eq.s32.totalorder %s41, 0
    %s44 = sadd.s32 %s43, 1
    %s45 = scalar_select %p42, %s43, %s44
    %p48 = pneg %p42
    %p49 = scmp.eq.s32.totalorder %s19, 1
    %p50 = por %p48, %p49
    %p51 = scmp.ne.s32.totalorder %s43, %s46
    %p52 = scmp.eq.s32.totalorder %s19, 0
    %p53 = por %p51, %p52
    %p54 = scmp.ne.s32.totalorder %s43, %s46
    %p55 = scmp.eq.s32.totalorder %s24, 1
    %p56 = por %p54, %p55
    %p57 = scmp.ne.s32.totalorder %s46, %s47
    %p58 = scmp.eq.s32.totalorder %s24, 0
    %p59 = por %p57, %p58
    %p60 = scmp.ne.s32.totalorder %s46, %s47
    %p61 = scmp.eq.s32.totalorder %s25, 1
    %p62 = por %p60, %p61
    %p64 = scmp.ne.s32.totalorder %s47, %s63
    %p65 = scmp.eq.s32.totalorder %s25, 0
    %p66 = por %p64, %p65
    %s67 = ssub.s32 %s27, %s34
    %p68 = scmp.eq.s32.totalorder %s67, 0
    %s70 = sadd.s32 %s69, 1
    %s71 = scalar_select %p68, %s69, %s70
    %p74 = pneg %p68
    %p75 = scmp.eq.s32.totalorder %s19, 1
    %p76 = por %p74, %p75
    %p77 = scmp.ne.s32.totalorder %s69, %s72
    %p78 = scmp.eq.s32.totalorder %s19, 0
    %p79 = por %p77, %p78
    %p80 = scmp.ne.s32.totalorder %s69, %s72
    %p81 = scmp.eq.s32.totalorder %s24, 1
    %p82 = por %p80, %p81
    %p83 = scmp.ne.s32.totalorder %s72, %s73
    %p84 = scmp.eq.s32.totalorder %s24, 0
    %p85 = por %p83, %p84
    %p86 = scmp.ne.s32.totalorder %s72, %s73
    %p87 = scmp.eq.s32.totalorder %s25, 1
    %p88 = por %p86, %p87
    %p90 = scmp.ne.s32.totalorder %s73, %s89
    %p91 = scmp.eq.s32.totalorder %s25, 0
    %p92 = por %p90, %p91
    %s94 = sadd.s32 %s93, 1
    %p97 = scmp.eq.s32.totalorder %s19, 1
    %p98 = scmp.ne.s32.totalorder %s93, %s95
    %p99 = scmp.eq.s32.totalorder %s19, 0
    %p100 = por %p98, %p99
    %p101 = scmp.ne.s32.totalorder %s93, %s95
    %p102 = scmp.eq.s32.totalorder %s24, 1
    %p103 = por %p101, %p102
    %p104 = scmp.ne.s32.totalorder %s95, %s96
    %p105 = scmp.eq.s32.totalorder %s24, 0
    %p106 = por %p104, %p105
    %p107 = scmp.ne.s32.totalorder %s95, %s96
    %p108 = scmp.eq.s32.totalorder %s25, 1
    %p109 = por %p107, %p108
    %p111 = scmp.ne.s32.totalorder %s96, %s110
    %p112 = scmp.eq.s32.totalorder %s25, 0
    %p113 = por %p111, %p112
    %s115 = sadd.s32 %s114, 1
    %p118 = scmp.eq.s32.totalorder %s19, 1
    %p119 = scmp.ne.s32.totalorder %s114, %s116
    %p120 = scmp.eq.s32.totalorder %s19, 0
    %p121 = por %p119, %p120
    %p122 = scmp.ne.s32.totalorder %s114, %s116
    %p123 = scmp.eq.s32.totalorder %s24, 1
    %p124 = por %p122, %p123
    %p125 = scmp.ne.s32.totalorder %s116, %s117
    %p126 = scmp.eq.s32.totalorder %s24, 0
    %p127 = por %p125, %p126
    %p128 = scmp.ne.s32.totalorder %s116, %s117
    %p129 = scmp.eq.s32.totalorder %s25, 1
    %p130 = por %p128, %p129
    %p132 = scmp.ne.s32.totalorder %s117, %s131
    %p133 = scmp.eq.s32.totalorder %s25, 0
    %p134 = por %p132, %p133
    %s136 = sadd.s32 %s135, 1
    %p139 = scmp.eq.s32.totalorder %s19, 1
    %p140 = scmp.ne.s32.totalorder %s135, %s137
    %p141 = scmp.eq.s32.totalorder %s19, 0
    %p142 = por %p140, %p141
    %p143 = scmp.ne.s32.totalorder %s135, %s137
    %p144 = scmp.eq.s32.totalorder %s24, 1
    %p145 = por %p143, %p144
    %p146 = scmp.ne.s32.totalorder %s137, %s138
    %p147 = scmp.eq.s32.totalorder %s24, 0
    %p148 = por %p146, %p147
    %p149 = scmp.ne.s32.totalorder %s137, %s138
    %p150 = scmp.eq.s32.totalorder %s25, 1
    %p151 = por %p149, %p150
    %p153 = scmp.ne.s32.totalorder %s138, %s152
    %p154 = scmp.eq.s32.totalorder %s25, 0
    %p155 = por %p153, %p154
    %s157 = sadd.s32 %s156, 1
    %p160 = scmp.eq.s32.totalorder %s19, 1
    %p161 = scmp.ne.s32.totalorder %s156, %s158
    %p162 = scmp.eq.s32.totalorder %s19, 0
    %p163 = por %p161, %p162
    %p164 = scmp.ne.s32.totalorder %s156, %s158
    %p165 = scmp.eq.s32.totalorder %s24, 1
    %p166 = por %p164, %p165
    %p167 = scmp.ne.s32.totalorder %s158, %s159
    %p168 = scmp.eq.s32.totalorder %s24, 0
    %p169 = por %p167, %p168
    %p170 = scmp.ne.s32.totalorder %s158, %s159
    %p171 = scmp.eq.s32.totalorder %s25, 1
    %p172 = por %p170, %p171
    %p174 = scmp.ne.s32.totalorder %s159, %s173
    %p175 = scmp.eq.s32.totalorder %s25, 0
    %p176 = por %p174, %p175
    %s178 = sadd.s32 %s177, 1
    %p181 = scmp.eq.s32.totalorder %s19, 1
    %p182 = scmp.ne.s32.totalorder %s177, %s179
    %p183 = scmp.eq.s32.totalorder %s19, 0
    %p184 = por %p182, %p183
    %p185 = scmp.ne.s32.totalorder %s177, %s179
    %p186 = scmp.eq.s32.totalorder %s24, 1
    %p187 = por %p185, %p186
    %p188 = scmp.ne.s32.totalorder %s179, %s180
    %p189 = scmp.eq.s32.totalorder %s24, 0
    %p190 = por %p188, %p189
    %p191 = scmp.ne.s32.totalorder %s179, %s180
    %p192 = scmp.eq.s32.totalorder %s25, 1
    %p193 = por %p191, %p192
    %p195 = scmp.ne.s32.totalorder %s180, %s194
    %p196 = scmp.eq.s32.totalorder %s25, 0
    %p197 = por %p195, %p196
    %s199 = sadd.s32 %s198, 1
    %p202 = scmp.eq.s32.totalorder %s19, 1
    %p203 = scmp.ne.s32.totalorder %s198, %s200
    %p204 = scmp.eq.s32.totalorder %s19, 0
    %p205 = por %p203, %p204
    %p206 = scmp.ne.s32.totalorder %s198, %s200
    %p207 = scmp.eq.s32.totalorder %s24, 1
    %p208 = por %p206, %p207
    %p209 = scmp.ne.s32.totalorder %s200, %s201
    %p210 = scmp.eq.s32.totalorder %s24, 0
    %p211 = por %p209, %p210
    %p212 = scmp.ne.s32.totalorder %s200, %s201
    %p213 = scmp.eq.s32.totalorder %s25, 1
    %p214 = por %p212, %p213
    %p216 = scmp.ne.s32.totalorder %s201, %s215
    %p217 = scmp.eq.s32.totalorder %s25, 0
    %p218 = por %p216, %p217
    %s220 = sadd.s32 %s219, 1
    %p223 = scmp.eq.s32.totalorder %s19, 1
    %p224 = scmp.ne.s32.totalorder %s219, %s221
    %p225 = scmp.eq.s32.totalorder %s19, 0
    %p226 = por %p224, %p225
    %p227 = scmp.ne.s32.totalorder %s219, %s221
    %p228 = scmp.eq.s32.totalorder %s24, 1
    %p229 = por %p227, %p228
    %p230 = scmp.ne.s32.totalorder %s221, %s222
    %p231 = scmp.eq.s32.totalorder %s24, 0
    %p232 = por %p230, %p231
    %p233 = scmp.ne.s32.totalorder %s221, %s222
    %p234 = scmp.eq.s32.totalorder %s25, 1
    %p235 = por %p233, %p234
    %p237 = scmp.ne.s32.totalorder %s222, %s236
    %p238 = scmp.eq.s32.totalorder %s25, 0
    %p239 = por %p237, %p238
    %s241 = sadd.s32 %s240, 1
    %p244 = scmp.eq.s32.totalorder %s19, 1
    %p245 = scmp.ne.s32.totalorder %s240, %s242
    %p246 = scmp.eq.s32.totalorder %s19, 0
    %p247 = por %p245, %p246
    %p248 = scmp.ne.s32.totalorder %s240, %s242
    %p249 = scmp.eq.s32.totalorder %s24, 1
    %p250 = por %p248, %p249
    %p251 = scmp.ne.s32.totalorder %s242, %s243
    %p252 = scmp.eq.s32.totalorder %s24, 0
    %p253 = por %p251, %p252
    %p254 = scmp.ne.s32.totalorder %s242, %s243
    %p255 = scmp.eq.s32.totalorder %s25, 1
    %p256 = por %p254, %p255
    %p258 = scmp.ne.s32.totalorder %s243, %s257
    %p259 = scmp.eq.s32.totalorder %s25, 0
    %p260 = por %p258, %p259
    %s261 = ssub.s32 %s26, %s38
    %s262 = ssub.s32 %s27, %s34
    %s263 = sor.u32 %s261, %s262
    %p264 = scmp.eq.s32.totalorder %s263, 0
    %s266 = sadd.s32 %s265, 1
    %s267 = scalar_select %p264, %s265, %s266
    %p270 = pneg %p264
    %p271 = scmp.eq.s32.totalorder %s19, 1
    %p272 = por %p270, %p271
    %p273 = scmp.ne.s32.totalorder %s265, %s268
    %p274 = scmp.eq.s32.totalorder %s19, 0
    %p275 = por %p273, %p274
    %p276 = scmp.ne.s32.totalorder %s265, %s268
    %p277 = scmp.eq.s32.totalorder %s24, 1
    %p278 = por %p276, %p277
    %p279 = scmp.ne.s32.totalorder %s268, %s269
    %p280 = scmp.eq.s32.totalorder %s24, 0
    %p281 = por %p279, %p280
    %p282 = scmp.ne.s32.totalorder %s268, %s269
    %p283 = scmp.eq.s32.totalorder %s25, 1
    %p284 = por %p282, %p283
    %p286 = scmp.ne.s32.totalorder %s269, %s285
    %p287 = scmp.eq.s32.totalorder %s25, 0
    %p288 = por %p286, %p287
    %s289 = ssub.s32 %s26, %s38
    %s290 = ssub.s32 %s27, %s34
    %s291 = sor.u32 %s289, %s290
    %p292 = scmp.eq.s32.totalorder %s291, 0
    %s294 = sadd.s32 %s293, 1
    %s295 = scalar_select %p292, %s293, %s294
    %p298 = pneg %p292
    %p299 = scmp.eq.s32.totalorder %s19, 1
    %p300 = por %p298, %p299
    %p301 = scmp.ne.s32.totalorder %s293, %s296
    %p302 = scmp.eq.s32.totalorder %s19, 0
    %p303 = por %p301, %p302
    %p304 = scmp.ne.s32.totalorder %s293, %s296
    %p305 = scmp.eq.s32.totalorder %s24, 1
    %p306 = por %p304, %p305
    %p307 = scmp.ne.s32.totalorder %s296, %s297
    %p308 = scmp.eq.s32.totalorder %s24, 0
    %p309 = por %p307, %p308
    %p310 = scmp.ne.s32.totalorder %s296, %s297
    %p311 = scmp.eq.s32.totalorder %s25, 1
    %p312 = por %p310, %p311
    %p314 = scmp.ne.s32.totalorder %s297, %s313
    %p315 = scmp.eq.s32.totalorder %s25, 0
    %p316 = por %p314, %p315
    %s317 = ssub.s32 %s26, %s38
    %s318 = ssub.s32 %s27, %s34
    %s319 = sor.u32 %s317, %s318
    %p320 = scmp.eq.s32.totalorder %s319, 0
    %s322 = sadd.s32 %s321, 1
    %s323 = scalar_select %p320, %s321, %s322
    %p326 = pneg %p320
    %p327 = scmp.eq.s32.totalorder %s19, 1
    %p328 = por %p326, %p327
    %p329 = scmp.ne.s32.totalorder %s321, %s324
    %p330 = scmp.eq.s32.totalorder %s19, 0
    %p331 = por %p329, %p330
    %p332 = scmp.ne.s32.totalorder %s321, %s324
    %p333 = scmp.eq.s32.totalorder %s24, 1
    %p334 = por %p332, %p333
    %p335 = scmp.ne.s32.totalorder %s324, %s325
    %p336 = scmp.eq.s32.totalorder %s24, 0
    %p337 = por %p335, %p336
    %p338 = scmp.ne.s32.totalorder %s324, %s325
    %p339 = scmp.eq.s32.totalorder %s25, 1
    %p340 = por %p338, %p339
    %p342 = scmp.ne.s32.totalorder %s325, %s341
    %p343 = scmp.eq.s32.totalorder %s25, 0
    %p344 = por %p342, %p343
    %p345 = scmp.le.s32.totalorder 1, %s19
    %p346 = scmp.lt.s32.totalorder %s19, 3
    %p347 = pnand %p345, %p346
    %p348 = pneg %p347
    // Predicated region
    $region9: #{_encoder_layer_impl.2} parent=5 // pred_check
      _
    $region10: #{_encoder_layer_impl.2} parent=5 // pred_check_branch
      %350 = sbr.rel (%p347) target = $region12
    $region11: #{_encoder_layer_impl.2} parent=5 // pred_region
      %s351 = ssub.s32 %s19, 1
      // Predicated region
      $region13: #{_encoder_layer_impl.2} parent=11 // pred_check
        %p352 = pneg %p85
      $region14: #{_encoder_layer_impl.2} parent=11 // pred_check_branch
        %354 = sbr.rel (%p352) target = $region16
      $region15: #{_encoder_layer_impl.2} parent=11 // pred_region
        %p355 = scmp.lt.s32.totalorder %s29, 0
        %s356 = scalar_select %p355, %s29, 0
        %s357 = smul.addr %s356, 8
        %s358 = scalar_lea.vmem %s1, %s357
      $region16: #{_encoder_layer_impl.2} parent=11 // pred_fallthru
        _
      // Predicated region
      $region17: #{_encoder_layer_impl.2} parent=11 // pred_check
        %p359 = pneg %p106
      $region18: #{_encoder_layer_impl.2} parent=11 // pred_check_branch
        %361 = sbr.rel (%p359) target = $region20
      $region19: #{_encoder_layer_impl.2} parent=11 // pred_region
        _
      $region20: #{_encoder_layer_impl.2} parent=11 // pred_fallthru
        _
      // Predicated region
      $region21: #{_encoder_layer_impl.2} parent=11 // pred_check
        %p362 = pneg %p127
      $region22: #{_encoder_layer_impl.2} parent=11 // pred_check_branch
        %364 = sbr.rel (%p362) target = $region24
      $region23: #{_encoder_layer_impl.2} parent=11 // pred_region
        _
      $region24: #{_encoder_layer_impl.2} parent=11 // pred_fallthru
        _
      // Predicated region
      $region25: #{_encoder_layer_impl.2} parent=11 // pred_check
        %p365 = pneg %p148
      $region26: #{_encoder_layer_impl.2} parent=11 // pred_check_branch
        %367 = sbr.rel (%p365) target = $region28
      $region27: #{_encoder_layer_impl.2} parent=11 // pred_region
        _
      $region28: #{_encoder_layer_impl.2} parent=11 // pred_fallthru
        _
      // Predicated region
      $region29: #{_encoder_layer_impl.2} parent=11 // pred_check
        %p368 = pneg %p169
      $region30: #{_encoder_layer_impl.2} parent=11 // pred_check_branch
        %370 = sbr.rel (%p368) target = $region32
      $region31: #{_encoder_layer_impl.2} parent=11 // pred_region
        _
      $region32: #{_encoder_layer_impl.2} parent=11 // pred_fallthru
        _
      // Predicated region
      $region33: #{_encoder_layer_impl.2} parent=11 // pred_check
        %p371 = pneg %p190
      $region34: #{_encoder_layer_impl.2} parent=11 // pred_check_branch
        %373 = sbr.rel (%p371) target = $region36
      $region35: #{_encoder_layer_impl.2} parent=11 // pred_region
        _
      $region36: #{_encoder_layer_impl.2} parent=11 // pred_fallthru
        _
      // Predicated region
      $region37: #{_encoder_layer_impl.2} parent=11 // pred_check
        %p374 = pneg %p211
      $region38: #{_encoder_layer_impl.2} parent=11 // pred_check_branch
        %376 = sbr.rel (%p374) target = $region40
      $region39: #{_encoder_layer_impl.2} parent=11 // pred_region
        _
      $region40: #{_encoder_layer_impl.2} parent=11 // pred_fallthru
        _
      // Predicated region
      $region41: #{_encoder_layer_impl.2} parent=11 // pred_check
        %p377 = pneg %p232
      $region42: #{_encoder_layer_impl.2} parent=11 // pred_check_branch
        %379 = sbr.rel (%p377) target = $region44
      $region43: #{_encoder_layer_impl.2} parent=11 // pred_region
        _
      $region44: #{_encoder_layer_impl.2} parent=11 // pred_fallthru
        _
      // Predicated region
      $region45: #{_encoder_layer_impl.2} parent=11 // pred_check
        %p380 = pneg %p253
      $region46: #{_encoder_layer_impl.2} parent=11 // pred_check_branch
        %382 = sbr.rel (%p380) target = $region48
      $region47: #{_encoder_layer_impl.2} parent=11 // pred_region
        _
      $region48: #{_encoder_layer_impl.2} parent=11 // pred_fallthru
        _
    $region12: #{_encoder_layer_impl.2} parent=5 // pred_fallthru
      _
    %p383 = scmp.lt.s32.totalorder %s19, 2
    // Predicated region
    $region49: #{_encoder_layer_impl.2} parent=5 // pred_check
      %p384 = pneg %p383
    $region50: #{_encoder_layer_impl.2} parent=5 // pred_check_branch
      %386 = sbr.rel (%p384) target = $region52
    $region51: #{_encoder_layer_impl.2} parent=5 // pred_region
      // Predicated region
      $region53: #{_encoder_layer_impl.2} parent=51 // pred_check
        %p387 = pneg %p53
      $region54: #{_encoder_layer_impl.2} parent=51 // pred_check_branch
        %389 = sbr.rel (%p387) target = $region56
      $region55: #{_encoder_layer_impl.2} parent=51 // pred_region
        %p390 = scmp.lt.s32.totalorder %s26, 1
        %s391 = scalar_select %p390, %s26, 1
        %p392 = scmp.lt.s32.totalorder %s27, 0
        %s393 = scalar_select %p392, %s27, 0
        %s394 = sadd.s32 %s393, %s391
        %s395 = smul.addr %s394, 8
        %s396 = scalar_lea.vmem %s0, %s395
      $region56: #{_encoder_layer_impl.2} parent=51 // pred_fallthru
        _
    $region52: #{_encoder_layer_impl.2} parent=5 // pred_fallthru
      _
    %p397 = scmp.le.s32.totalorder 1, %s19
    %p398 = scmp.lt.s32.totalorder %s19, 3
    %p399 = pnand %p397, %p398
    %p400 = pneg %p399
    // Predicated region
    $region57: #{_encoder_layer_impl.2} parent=5 // pred_check
      _
    $region58: #{_encoder_layer_impl.2} parent=5 // pred_check_branch
      %402 = sbr.rel (%p399) target = $region60
    $region59: #{_encoder_layer_impl.2} parent=5 // pred_region
      %s403 = ssub.s32 %s19, 1
      %p404 = scmp.lt.s32.totalorder %s28, 1
      %s405 = scalar_select %p404, %s28, 1
      %p406 = scmp.lt.s32.totalorder %s29, 0
      %s407 = scalar_select %p406, %s29, 0
      %s408 = sadd.s32 %s407, %s405
      %s409 = smul.addr %s408, 8
      %s410 = scalar_lea.vmem %s0, %s409
      %p411 = pneg %p59
      %p412 = pneg %p56
      %p413 = scmp.lt.s32.totalorder %s29, 0
      %s414 = scalar_select %p413, %s29, 0
      %s415 = smul.addr %s414, 8
      %s416 = scalar_lea.vmem %s1, %s415
      %p417 = pneg %p85
      %p418 = pneg %p82
      %p419 = pneg %p106
      %p420 = pneg %p103
      %p421 = pneg %p127
      %p422 = pneg %p124
      %p423 = pneg %p148
      %p424 = pneg %p145
      %p425 = pneg %p169
      %p426 = pneg %p166
      %p427 = pneg %p190
      %p428 = pneg %p187
      %p429 = pneg %p211
      %p430 = pneg %p208
      %p431 = pneg %p232
      %p432 = pneg %p229
      %p433 = pneg %p253
      %p434 = pneg %p250
      %p435 = pneg %p281
      %p436 = pneg %p278
      %p437 = scmp.lt.s32.totalorder %s28, 1
      %s438 = scalar_select %p437, %s28, 1
      %p439 = scmp.lt.s32.totalorder %s29, 0
      %s440 = scalar_select %p439, %s29, 0
      %s441 = smul.addr %s438, 4
      %s442 = sadd.s32 %s440, %s441
      %s443 = smul.addr %s442, 4
      %s444 = scalar_lea.vmem %s10, %s443
      %p445 = pneg %p309
      %p446 = pneg %p306
      %p447 = scmp.lt.s32.totalorder %s28, 1
      %s448 = scalar_select %p447, %s28, 1
      %p449 = scmp.lt.s32.totalorder %s29, 0
      %s450 = scalar_select %p449, %s29, 0
      %s451 = smul.addr %s448, 4
      %s452 = sadd.s32 %s450, %s451
      %s453 = smul.addr %s452, 4
      %s454 = scalar_lea.vmem %s11, %s453
      %p455 = pneg %p337
      %p456 = pneg %p334
      %p457 = scmp.lt.s32.totalorder %s28, 1
      %s458 = scalar_select %p457, %s28, 1
      %p459 = scmp.lt.s32.totalorder %s29, 0
      %s460 = scalar_select %p459, %s29, 0
      %s461 = smul.addr %s458, 4
      %s462 = sadd.s32 %s460, %s461
      %s463 = smul.addr %s462, 4
      %s464 = scalar_lea.vmem %s12, %s463
      %p465 = scmp.lt.s32.totalorder %s28, 1
      %s466 = scalar_select %p465, %s28, 1
      %p467 = scmp.lt.s32.totalorder %s29, 0
      %s468 = scalar_select %p467, %s29, 0
      %s469 = sadd.s32 %s468, %s466
      %s470 = smul.addr %s469, 8
      %s471 = scalar_lea.vmem %s0, %s470
      %p472 = scmp.lt.s32.totalorder %s29, 0
      %s473 = scalar_select %p472, %s29, 0
      %s474 = smul.addr %s473, 8
      %s475 = scalar_lea.vmem %s1, %s474
      %p476 = scmp.lt.s32.totalorder %s28, 1
      %s477 = scalar_select %p476, %s28, 1
      %p478 = scmp.lt.s32.totalorder %s29, 0
      %s479 = scalar_select %p478, %s29, 0
      %s480 = smul.addr %s477, 4
      %s481 = sadd.s32 %s479, %s480
      %s482 = smul.addr %s481, 4
      %s483 = scalar_lea.vmem %s10, %s482
      %p484 = scmp.lt.s32.totalorder %s28, 1
      %s485 = scalar_select %p484, %s28, 1
      %p486 = scmp.lt.s32.totalorder %s29, 0
      %s487 = scalar_select %p486, %s29, 0
      %s488 = smul.addr %s485, 4
      %s489 = sadd.s32 %s487, %s488
      %s490 = smul.addr %s489, 4
      %s491 = scalar_lea.vmem %s11, %s490
      %p492 = scmp.lt.s32.totalorder %s28, 1
      %s493 = scalar_select %p492, %s28, 1
      %p494 = scmp.lt.s32.totalorder %s29, 0
      %s495 = scalar_select %p494, %s29, 0
      %s496 = smul.addr %s493, 4
      %s497 = sadd.s32 %s495, %s496
      %s498 = smul.addr %s497, 4
      %s499 = scalar_lea.vmem %s12, %s498
      %v501 = vld [vmem:[%s471] sm:$0xff]
      %v502 = vld [vmem:[%s2] sm:$0x1]
      %v503 = vld [vmem:[%s3] sm:$0x1]
      %vm504 = vcmask 261120
      %v505 = vsel %vm504, %v501, 0.0
      %506 = vadd.xlane.f32.xlu0 %v505
      %v507 = vpop.xlane.xlu0 %506
      %v508 = vrcp.pop 32.0
      %v509 = vmul.f32 %v507, %v508
      %v510 = vsub.f32 %v501, %v509
      %v511 = vmul.f32 %v510, %v510
      %v512 = vsel %vm504, %v511, 0.0
      %513 = vadd.xlane.f32.xlu0 %v512
      %v514 = vpop.xlane.xlu0 %513
      %v515 = vmul.f32 %v514, %v508
      %v516 = vadd.f32 %v515, 1e-05
      %v517 = vrsqrt.pop %v516
      %v518 = vmul.f32 %v510, %v517
      %v520 = vlaneseq
      %v521 = vshrl.u32 %v520, 7
      %v522 = vsub.s32 0, %v521
      %v523 = vrot.slane %v502, %v522
      %v525 = vmul.f32 %v518, %v523
      %v527 = vlaneseq
      %v528 = vshrl.u32 %v527, 7
      %v529 = vsub.s32 0, %v528
      %v530 = vrot.slane %v503, %v529
      %v532 = vadd.f32 %v525, %v530
      %v533 = vpack.c.bf16 %v532, %v532
      %v534 = vld [vmem:[%s475] sm:$0xff]
      %v535 = vld [vmem:[%s4] sm:$0xf]
      %v536 = vld [vmem:[%s4 + $0x4] sm:$0xf]
      %v537 = vld [vmem:[%s4 + $0x8] sm:$0xf]
      %v538 = vld [vmem:[%s4 + $0xc] sm:$0xf]
      %v539 = vld [vmem:[%s7] sm:$0x1]
      %v541 = vlaneseq
      %v542 = vshrl.u32 %v541, 7
      %v543 = vsub.s32 0, %v542
      %v544 = vrot.slane %v539, %v543
      %v550 = vunpack.c.l.b16 %v535
      %v551 = vunpack.c.l.b16 %v536
      %v552 = vunpack.c.l.b16 %v537
      %v553 = vunpack.c.l.b16 %v538
      %v554 = vpack.c.b16 %v551, %v550
      %v555 = vpack.c.b16 %v553, %v552
      %v559 = vsel %vm504, %v533, 0
      %561 = vmatprep.subr.bf16.mxu0 0
      %562 = vmatpush1.bf16.msra.mxu0 0
      %563 = vmatprep.subr.bf16.mxu0 0
      %564 = vmatpush1.bf16.msra.mxu0 0
      %565 = vmatprep.subr.bf16.mxu0 0
      %566 = vmatpush1.bf16.msra.mxu0 0
      %567 = vmatprep.subr.bf16.mxu0 0
      %568 = vmatpush1.bf16.msra.mxu0 0
      %569 = vmatprep.subr.bf16.mxu0 0
      %570 = vmatpush1.bf16.msra.mxu0 0
      %571 = vmatprep.subr.bf16.mxu0 0
      %572 = vmatpush1.bf16.msra.mxu0 0
      %573 = vmatprep.subr.bf16.mxu0 0
      %574 = vmatpush1.bf16.msra.mxu0 %v555
      %575 = vmatprep.subr.bf16.mxu0 0
      %576 = vmatpush1.bf16.msra.mxu0 %v554
      %577 = vmatprep.subr.bf16.mxu0 0
      %578 = vmatpush2.bf16.msra.mxu0 0
      %579 = vmatprep.subr.bf16.mxu0 0
      %580 = vmatpush2.bf16.msra.mxu0 0
      %581 = vmatprep.subr.bf16.mxu0 0
      %582 = vmatpush2.bf16.msra.mxu0 0
      %583 = vmatprep.subr.bf16.mxu0 0
      %584 = vmatpush2.bf16.msra.mxu0 0
      %585 = vmatprep.subr.bf16.mxu0 0
      %586 = vmatpush2.bf16.msra.mxu0 0
      %587 = vmatprep.subr.bf16.mxu0 0
      %588 = vmatpush2.bf16.msra.mxu0 0
      %589 = vmatprep.subr.bf16.mxu0 0
      %590 = vmatpush2.bf16.msra.mxu0 0
      %591 = vmatprep.subr.bf16.mxu0 0
      %592 = vmatpush2.bf16.msra.mxu0 0
      %593 = vmatprep.mubr.bf16.mxu0 0
      %594 = vmatmul.mubr.bf16.gmra.mxu0 %v559
      %v595 = vpop.f32.mrf.mxu0
      %v596 = vadd.f32 %v544, %v595
      %v597 = vpop.f32.mrf.mxu0
      %v598 = vpop.f32.mrf.mxu0
      %v599 = vpop.f32.mrf.mxu0
      %600 = vdwg.mxu0
      %v601 = vadd.f32 %v596, %v534
      %v602 = vmul.f32 %v601, 0.35355338
      %v603 = vld [vmem:[%s5] sm:$0xf]
      %v604 = vld [vmem:[%s5 + $0x4] sm:$0xf]
      %v605 = vld [vmem:[%s5 + $0x8] sm:$0xf]
      %v606 = vld [vmem:[%s5 + $0xc] sm:$0xf]
      %v607 = vld [vmem:[%s8] sm:$0x1]
      %v609 = vlaneseq
      %v610 = vshrl.u32 %v609, 7
      %v611 = vsub.s32 0, %v610
      %v612 = vrot.slane %v607, %v611
      %v618 = vunpack.c.l.b16 %v603
      %v619 = vunpack.c.l.b16 %v604
      %v620 = vunpack.c.l.b16 %v605
      %v621 = vunpack.c.l.b16 %v606
      %v622 = vpack.c.b16 %v619, %v618
      %v623 = vpack.c.b16 %v621, %v620
      %626 = vmatprep.subr.bf16.mxu0 0
      %627 = vmatpush1.bf16.msra.mxu0 0
      %628 = vmatprep.subr.bf16.mxu0 0
      %629 = vmatpush1.bf16.msra.mxu0 0
      %630 = vmatprep.subr.bf16.mxu0 0
      %631 = vmatpush1.bf16.msra.mxu0 0
      %632 = vmatprep.subr.bf16.mxu0 0
      %633 = vmatpush1.bf16.msra.mxu0 0
      %634 = vmatprep.subr.bf16.mxu0 0
      %635 = vmatpush1.bf16.msra.mxu0 0
      %636 = vmatprep.subr.bf16.mxu0 0
      %637 = vmatpush1.bf16.msra.mxu0 0
      %638 = vmatprep.subr.bf16.mxu0 0
      %639 = vmatpush1.bf16.msra.mxu0 %v623
      %640 = vmatprep.subr.bf16.mxu0 0
      %641 = vmatpush1.bf16.msra.mxu0 %v622
      %642 = vmatprep.subr.bf16.mxu0 0
      %643 = vmatpush2.bf16.msra.mxu0 0
      %644 = vmatprep.subr.bf16.mxu0 0
      %645 = vmatpush2.bf16.msra.mxu0 0
      %646 = vmatprep.subr.bf16.mxu0 0
      %647 = vmatpush2.bf16.msra.mxu0 0
      %648 = vmatprep.subr.bf16.mxu0 0
      %649 = vmatpush2.bf16.msra.mxu0 0
      %650 = vmatprep.subr.bf16.mxu0 0
      %651 = vmatpush2.bf16.msra.mxu0 0
      %652 = vmatprep.subr.bf16.mxu0 0
      %653 = vmatpush2.bf16.msra.mxu0 0
      %654 = vmatprep.subr.bf16.mxu0 0
      %655 = vmatpush2.bf16.msra.mxu0 0
      %656 = vmatprep.subr.bf16.mxu0 0
      %657 = vmatpush2.bf16.msra.mxu0 0
      %658 = vmatprep.mubr.bf16.mxu0 0
      %659 = vmatmul.mubr.bf16.gmra.mxu0 %v559
      %v660 = vpop.f32.mrf.mxu0
      %v661 = vadd.f32 %v612, %v660
      %v662 = vpop.f32.mrf.mxu0
      %v663 = vpop.f32.mrf.mxu0
      %v664 = vpop.f32.mrf.mxu0
      %665 = vdwg.mxu0
      %v666 = vadd.f32 %v661, %v534
      %v667 = vld [vmem:[%s6] sm:$0xf]
      %v668 = vld [vmem:[%s6 + $0x4] sm:$0xf]
      %v669 = vld [vmem:[%s6 + $0x8] sm:$0xf]
      %v670 = vld [vmem:[%s6 + $0xc] sm:$0xf]
      %v671 = vld [vmem:[%s9] sm:$0x1]
      %v673 = vlaneseq
      %v674 = vshrl.u32 %v673, 7
      %v675 = vsub.s32 0, %v674
      %v676 = vrot.slane %v671, %v675
      %v682 = vunpack.c.l.b16 %v667
      %v683 = vunpack.c.l.b16 %v668
      %v684 = vunpack.c.l.b16 %v669
      %v685 = vunpack.c.l.b16 %v670
      %v686 = vpack.c.b16 %v683, %v682
      %v687 = vpack.c.b16 %v685, %v684
      %690 = vmatprep.subr.bf16.mxu0 0
      %691 = vmatpush1.bf16.msra.mxu0 0
      %692 = vmatprep.subr.bf16.mxu0 0
      %693 = vmatpush1.bf16.msra.mxu0 0
      %694 = vmatprep.subr.bf16.mxu0 0
      %695 = vmatpush1.bf16.msra.mxu0 0
      %696 = vmatprep.subr.bf16.mxu0 0
      %697 = vmatpush1.bf16.msra.mxu0 0
      %698 = vmatprep.subr.bf16.mxu0 0
      %699 = vmatpush1.bf16.msra.mxu0 0
      %700 = vmatprep.subr.bf16.mxu0 0
      %701 = vmatpush1.bf16.msra.mxu0 0
      %702 = vmatprep.subr.bf16.mxu0 0
      %703 = vmatpush1.bf16.msra.mxu0 %v687
      %704 = vmatprep.subr.bf16.mxu0 0
      %705 = vmatpush1.bf16.msra.mxu0 %v686
      %706 = vmatprep.subr.bf16.mxu0 0
      %707 = vmatpush2.bf16.msra.mxu0 0
      %708 = vmatprep.subr.bf16.mxu0 0
      %709 = vmatpush2.bf16.msra.mxu0 0
      %710 = vmatprep.subr.bf16.mxu0 0
      %711 = vmatpush2.bf16.msra.mxu0 0
      %712 = vmatprep.subr.bf16.mxu0 0
      %713 = vmatpush2.bf16.msra.mxu0 0
      %714 = vmatprep.subr.bf16.mxu0 0
      %715 = vmatpush2.bf16.msra.mxu0 0
      %716 = vmatprep.subr.bf16.mxu0 0
      %717 = vmatpush2.bf16.msra.mxu0 0
      %718 = vmatprep.subr.bf16.mxu0 0
      %719 = vmatpush2.bf16.msra.mxu0 0
      %720 = vmatprep.subr.bf16.mxu0 0
      %721 = vmatpush2.bf16.msra.mxu0 0
      %722 = vmatprep.mubr.bf16.mxu0 0
      %723 = vmatmul.mubr.bf16.gmra.mxu0 %v559
      %v724 = vpop.f32.mrf.mxu0
      %v725 = vadd.f32 %v676, %v724
      %v726 = vpop.f32.mrf.mxu0
      %v727 = vpop.f32.mrf.mxu0
      %v728 = vpop.f32.mrf.mxu0
      %729 = vdwg.mxu0
      %v730 = vpack.c.bf16 %v602, %v602
      %732 = vrot.lane.b32.xlu0 %v730, 120
      %v733 = vpop.permute.xlu0 %732
      %734 = vrot.lane.b32.xlu0 %v730, 112
      %v735 = vpop.permute.xlu0 %734
      %736 = vrot.lane.b32.xlu0 %v730, 104
      %v737 = vpop.permute.xlu0 %736
      %v739 = vunpack.c.l.s4 1983009808
      %v740 = vunpack.c.0.s8 %v739
      %v741 = vlaneseq
      %v742 = vshrl.u32 %v741, 7
      %v743 = vsub.s32 %v740, %v742
      %v744 = vrot.slane %v730, %v743
      %v747 = vunpack.c.l.s4 1983009808
      %v748 = vunpack.c.0.s8 %v747
      %v749 = vlaneseq
      %v750 = vshrl.u32 %v749, 7
      %v751 = vsub.s32 %v748, %v750
      %v752 = vrot.slane %v735, %v751
      %v753 = vcombine.low %v744, %v752
      %v754 = vcombine.high %v744, %v752
      %v756 = vunpack.c.l.s4 1934713408
      %v757 = vunpack.c.0.s8 %v756
      %v758 = vlaneseq
      %v759 = vshrl.u32 %v758, 7
      %v760 = vsub.s32 %v757, %v759
      %v761 = vrot.slane %v753, %v760
      %v763 = vunpack.c.l.s4 1934713408
      %v764 = vunpack.c.0.s8 %v763
      %v765 = vlaneseq
      %v766 = vshrl.u32 %v765, 7
      %v767 = vsub.s32 %v764, %v766
      %v768 = vrot.slane %v754, %v767
      %v769 = vcombine.high %v761, 0
      %v770 = vcombine.high %v768, 0
      %v773 = vunpack.c.l.s4 1983009808
      %v774 = vunpack.c.0.s8 %v773
      %v775 = vlaneseq
      %v776 = vshrl.u32 %v775, 7
      %v777 = vsub.s32 %v774, %v776
      %v778 = vrot.slane %v733, %v777
      %v781 = vunpack.c.l.s4 1983009808
      %v782 = vunpack.c.0.s8 %v781
      %v783 = vlaneseq
      %v784 = vshrl.u32 %v783, 7
      %v785 = vsub.s32 %v782, %v784
      %v786 = vrot.slane %v737, %v785
      %v787 = vcombine.low %v778, %v786
      %v788 = vcombine.high %v778, %v786
      %v790 = vunpack.c.l.s4 1934713408
      %v791 = vunpack.c.0.s8 %v790
      %v792 = vlaneseq
      %v793 = vshrl.u32 %v792, 7
      %v794 = vsub.s32 %v791, %v793
      %v795 = vrot.slane %v787, %v794
      %v797 = vunpack.c.l.s4 1934713408
      %v798 = vunpack.c.0.s8 %v797
      %v799 = vlaneseq
      %v800 = vshrl.u32 %v799, 7
      %v801 = vsub.s32 %v798, %v800
      %v802 = vrot.slane %v788, %v801
      %v803 = vcombine.high %v795, 0
      %v804 = vcombine.high %v802, 0
      %v807 = vpack.i.b16 %v795, %v761
      %v809 = vshrl.u32 %v761, 16
      %v810 = vshrl.u32 %v795, 16
      %v811 = vpack.i.b16 %v810, %v809
      %v815 = vpack.i.b16 %v803, %v769
      %v817 = vshrl.u32 %v769, 16
      %v818 = vshrl.u32 %v803, 16
      %v819 = vpack.i.b16 %v818, %v817
      %v823 = vpack.i.b16 %v802, %v768
      %v825 = vshrl.u32 %v768, 16
      %v826 = vshrl.u32 %v802, 16
      %v827 = vpack.i.b16 %v826, %v825
      %v831 = vpack.i.b16 %v804, %v770
      %v833 = vshrl.u32 %v770, 16
      %v834 = vshrl.u32 %v804, 16
      %v835 = vpack.i.b16 %v834, %v833
      %v837 = vcombine.low %v807, %v823
      %v839 = vunpack.c.l.s4 1983009808
      %v840 = vunpack.c.0.s8 %v839
      %v841 = vlaneseq
      %v842 = vshrl.u32 %v841, 7
      %v843 = vsub.s32 %v840, %v842
      %v844 = vrot.slane %v837, %v843
      %v845 = vcombine.low %v815, %v831
      %v847 = vunpack.c.l.s4 1983009808
      %v848 = vunpack.c.0.s8 %v847
      %v849 = vlaneseq
      %v850 = vshrl.u32 %v849, 7
      %v851 = vsub.s32 %v848, %v850
      %v852 = vrot.slane %v845, %v851
      %v853 = vcombine.low %v844, %v852
      %v855 = vunpack.c.l.s4 1934713408
      %v856 = vunpack.c.0.s8 %v855
      %v857 = vlaneseq
      %v858 = vshrl.u32 %v857, 7
      %v859 = vsub.s32 %v856, %v858
      %v860 = vrot.slane %v853, %v859
      %v861 = vcombine.high %v860, 0
      %v862 = vcombine.low %v811, %v827
      %v864 = vunpack.c.l.s4 1983009808
      %v865 = vunpack.c.0.s8 %v864
      %v866 = vlaneseq
      %v867 = vshrl.u32 %v866, 7
      %v868 = vsub.s32 %v865, %v867
      %v869 = vrot.slane %v862, %v868
      %v870 = vcombine.low %v819, %v835
      %v872 = vunpack.c.l.s4 1983009808
      %v873 = vunpack.c.0.s8 %v872
      %v874 = vlaneseq
      %v875 = vshrl.u32 %v874, 7
      %v876 = vsub.s32 %v873, %v875
      %v877 = vrot.slane %v870, %v876
      %v878 = vcombine.low %v869, %v877
      %v880 = vunpack.c.l.s4 1934713408
      %v881 = vunpack.c.0.s8 %v880
      %v882 = vlaneseq
      %v883 = vshrl.u32 %v882, 7
      %v884 = vsub.s32 %v881, %v883
      %v885 = vrot.slane %v878, %v884
      %v886 = vcombine.high %v885, 0
      %v889 = vpack.i.b16 %v885, %v860
      %v891 = vshrl.u32 %v860, 16
      %v892 = vshrl.u32 %v885, 16
      %v893 = vpack.i.b16 %v892, %v891
      %v897 = vpack.i.b16 %v886, %v861
      %v899 = vshrl.u32 %v861, 16
      %v900 = vshrl.u32 %v886, 16
      %v901 = vpack.i.b16 %v900, %v899
      %vm903 = vcmask 60416
      %904 = vst.msk [vmem:[%s483] sm:$0xf] %vm903, %v889
      %905 = vst.msk [vmem:[%s483 + $0x4] sm:$0xf] %vm903, %v893
      %906 = vst.msk [vmem:[%s483 + $0x8] sm:$0xf] %vm903, %v897
      %907 = vst.msk [vmem:[%s483 + $0xc] sm:$0xf] %vm903, %v901
      %v908 = vpack.c.bf16 %v666, %v666
      %910 = vrot.lane.b32.xlu0 %v908, 120
      %v911 = vpop.permute.xlu0 %910
      %912 = vrot.lane.b32.xlu0 %v908, 112
      %v913 = vpop.permute.xlu0 %912
      %914 = vrot.lane.b32.xlu0 %v908, 104
      %v915 = vpop.permute.xlu0 %914
      %v917 = vunpack.c.l.s4 1983009808
      %v918 = vunpack.c.0.s8 %v917
      %v919 = vlaneseq
      %v920 = vshrl.u32 %v919, 7
      %v921 = vsub.s32 %v918, %v920
      %v922 = vrot.slane %v908, %v921
      %v925 = vunpack.c.l.s4 1983009808
      %v926 = vunpack.c.0.s8 %v925
      %v927 = vlaneseq
      %v928 = vshrl.u32 %v927, 7
      %v929 = vsub.s32 %v926, %v928
      %v930 = vrot.slane %v913, %v929
      %v931 = vcombine.low %v922, %v930
      %v932 = vcombine.high %v922, %v930
      %v934 = vunpack.c.l.s4 1934713408
      %v935 = vunpack.c.0.s8 %v934
      %v936 = vlaneseq
      %v937 = vshrl.u32 %v936, 7
      %v938 = vsub.s32 %v935, %v937
      %v939 = vrot.slane %v931, %v938
      %v941 = vunpack.c.l.s4 1934713408
      %v942 = vunpack.c.0.s8 %v941
      %v943 = vlaneseq
      %v944 = vshrl.u32 %v943, 7
      %v945 = vsub.s32 %v942, %v944
      %v946 = vrot.slane %v932, %v945
      %v947 = vcombine.high %v939, 0
      %v948 = vcombine.high %v946, 0
      %v951 = vunpack.c.l.s4 1983009808
      %v952 = vunpack.c.0.s8 %v951
      %v953 = vlaneseq
      %v954 = vshrl.u32 %v953, 7
      %v955 = vsub.s32 %v952, %v954
      %v956 = vrot.slane %v911, %v955
      %v959 = vunpack.c.l.s4 1983009808
      %v960 = vunpack.c.0.s8 %v959
      %v961 = vlaneseq
      %v962 = vshrl.u32 %v961, 7
      %v963 = vsub.s32 %v960, %v962
      %v964 = vrot.slane %v915, %v963
      %v965 = vcombine.low %v956, %v964
      %v966 = vcombine.high %v956, %v964
      %v968 = vunpack.c.l.s4 1934713408
      %v969 = vunpack.c.0.s8 %v968
      %v970 = vlaneseq
      %v971 = vshrl.u32 %v970, 7
      %v972 = vsub.s32 %v969, %v971
      %v973 = vrot.slane %v965, %v972
      %v975 = vunpack.c.l.s4 1934713408
      %v976 = vunpack.c.0.s8 %v975
      %v977 = vlaneseq
      %v978 = vshrl.u32 %v977, 7
      %v979 = vsub.s32 %v976, %v978
      %v980 = vrot.slane %v966, %v979
      %v981 = vcombine.high %v973, 0
      %v982 = vcombine.high %v980, 0
      %v985 = vpack.i.b16 %v973, %v939
      %v987 = vshrl.u32 %v939, 16
      %v988 = vshrl.u32 %v973, 16
      %v989 = vpack.i.b16 %v988, %v987
      %v993 = vpack.i.b16 %v981, %v947
      %v995 = vshrl.u32 %v947, 16
      %v996 = vshrl.u32 %v981, 16
      %v997 = vpack.i.b16 %v996, %v995
      %v1001 = vpack.i.b16 %v980, %v946
      %v1003 = vshrl.u32 %v946, 16
      %v1004 = vshrl.u32 %v980, 16
      %v1005 = vpack.i.b16 %v1004, %v1003
      %v1009 = vpack.i.b16 %v982, %v948
      %v1011 = vshrl.u32 %v948, 16
      %v1012 = vshrl.u32 %v982, 16
      %v1013 = vpack.i.b16 %v1012, %v1011
      %v1015 = vcombine.low %v985, %v1001
      %v1017 = vunpack.c.l.s4 1983009808
      %v1018 = vunpack.c.0.s8 %v1017
      %v1019 = vlaneseq
      %v1020 = vshrl.u32 %v1019, 7
      %v1021 = vsub.s32 %v1018, %v1020
      %v1022 = vrot.slane %v1015, %v1021
      %v1023 = vcombine.low %v993, %v1009
      %v1025 = vunpack.c.l.s4 1983009808
      %v1026 = vunpack.c.0.s8 %v1025
      %v1027 = vlaneseq
      %v1028 = vshrl.u32 %v1027, 7
      %v1029 = vsub.s32 %v1026, %v1028
      %v1030 = vrot.slane %v1023, %v1029
      %v1031 = vcombine.low %v1022, %v1030
      %v1033 = vunpack.c.l.s4 1934713408
      %v1034 = vunpack.c.0.s8 %v1033
      %v1035 = vlaneseq
      %v1036 = vshrl.u32 %v1035, 7
      %v1037 = vsub.s32 %v1034, %v1036
      %v1038 = vrot.slane %v1031, %v1037
      %v1039 = vcombine.high %v1038, 0
      %v1040 = vcombine.low %v989, %v1005
      %v1042 = vunpack.c.l.s4 1983009808
      %v1043 = vunpack.c.0.s8 %v1042
      %v1044 = vlaneseq
      %v1045 = vshrl.u32 %v1044, 7
      %v1046 = vsub.s32 %v1043, %v1045
      %v1047 = vrot.slane %v1040, %v1046
      %v1048 = vcombine.low %v997, %v1013
      %v1050 = vunpack.c.l.s4 1983009808
      %v1051 = vunpack.c.0.s8 %v1050
      %v1052 = vlaneseq
      %v1053 = vshrl.u32 %v1052, 7
      %v1054 = vsub.s32 %v1051, %v1053
      %v1055 = vrot.slane %v1048, %v1054
      %v1056 = vcombine.low %v1047, %v1055
      %v1058 = vunpack.c.l.s4 1934713408
      %v1059 = vunpack.c.0.s8 %v1058
      %v1060 = vlaneseq
      %v1061 = vshrl.u32 %v1060, 7
      %v1062 = vsub.s32 %v1059, %v1061
      %v1063 = vrot.slane %v1056, %v1062
      %v1064 = vcombine.high %v1063, 0
      %v1067 = vpack.i.b16 %v1063, %v1038
      %v1069 = vshrl.u32 %v1038, 16
      %v1070 = vshrl.u32 %v1063, 16
      %v1071 = vpack.i.b16 %v1070, %v1069
      %v1075 = vpack.i.b16 %v1064, %v1039
      %v1077 = vshrl.u32 %v1039, 16
      %v1078 = vshrl.u32 %v1064, 16
      %v1079 = vpack.i.b16 %v1078, %v1077
      %1081 = vst.msk [vmem:[%s491] sm:$0xf] %vm903, %v1067
      %1082 = vst.msk [vmem:[%s491 + $0x4] sm:$0xf] %vm903, %v1071
      %1083 = vst.msk [vmem:[%s491 + $0x8] sm:$0xf] %vm903, %v1075
      %1084 = vst.msk [vmem:[%s491 + $0xc] sm:$0xf] %vm903, %v1079
      %v1085 = vpack.c.bf16 %v725, %v725
      %1087 = vrot.lane.b32.xlu0 %v1085, 120
      %v1088 = vpop.permute.xlu0 %1087
      %1089 = vrot.lane.b32.xlu0 %v1085, 112
      %v1090 = vpop.permute.xlu0 %1089
      %1091 = vrot.lane.b32.xlu0 %v1085, 104
      %v1092 = vpop.permute.xlu0 %1091
      %v1094 = vunpack.c.l.s4 1983009808
      %v1095 = vunpack.c.0.s8 %v1094
      %v1096 = vlaneseq
      %v1097 = vshrl.u32 %v1096, 7
      %v1098 = vsub.s32 %v1095, %v1097
      %v1099 = vrot.slane %v1085, %v1098
      %v1102 = vunpack.c.l.s4 1983009808
      %v1103 = vunpack.c.0.s8 %v1102
      %v1104 = vlaneseq
      %v1105 = vshrl.u32 %v1104, 7
      %v1106 = vsub.s32 %v1103, %v1105
      %v1107 = vrot.slane %v1090, %v1106
      %v1108 = vcombine.low %v1099, %v1107
      %v1109 = vcombine.high %v1099, %v1107
      %v1111 = vunpack.c.l.s4 1934713408
      %v1112 = vunpack.c.0.s8 %v1111
      %v1113 = vlaneseq
      %v1114 = vshrl.u32 %v1113, 7
      %v1115 = vsub.s32 %v1112, %v1114
      %v1116 = vrot.slane %v1108, %v1115
      %v1118 = vunpack.c.l.s4 1934713408
      %v1119 = vunpack.c.0.s8 %v1118
      %v1120 = vlaneseq
      %v1121 = vshrl.u32 %v1120, 7
      %v1122 = vsub.s32 %v1119, %v1121
      %v1123 = vrot.slane %v1109, %v1122
      %v1124 = vcombine.high %v1116, 0
      %v1125 = vcombine.high %v1123, 0
      %v1128 = vunpack.c.l.s4 1983009808
      %v1129 = vunpack.c.0.s8 %v1128
      %v1130 = vlaneseq
      %v1131 = vshrl.u32 %v1130, 7
      %v1132 = vsub.s32 %v1129, %v1131
      %v1133 = vrot.slane %v1088, %v1132
      %v1136 = vunpack.c.l.s4 1983009808
      %v1137 = vunpack.c.0.s8 %v1136
      %v1138 = vlaneseq
      %v1139 = vshrl.u32 %v1138, 7
      %v1140 = vsub.s32 %v1137, %v1139
      %v1141 = vrot.slane %v1092, %v1140
      %v1142 = vcombine.low %v1133, %v1141
      %v1143 = vcombine.high %v1133, %v1141
      %v1145 = vunpack.c.l.s4 1934713408
      %v1146 = vunpack.c.0.s8 %v1145
      %v1147 = vlaneseq
      %v1148 = vshrl.u32 %v1147, 7
      %v1149 = vsub.s32 %v1146, %v1148
      %v1150 = vrot.slane %v1142, %v1149
      %v1152 = vunpack.c.l.s4 1934713408
      %v1153 = vunpack.c.0.s8 %v1152
      %v1154 = vlaneseq
      %v1155 = vshrl.u32 %v1154, 7
      %v1156 = vsub.s32 %v1153, %v1155
      %v1157 = vrot.slane %v1143, %v1156
      %v1158 = vcombine.high %v1150, 0
      %v1159 = vcombine.high %v1157, 0
      %v1162 = vpack.i.b16 %v1150, %v1116
      %v1164 = vshrl.u32 %v1116, 16
      %v1165 = vshrl.u32 %v1150, 16
      %v1166 = vpack.i.b16 %v1165, %v1164
      %v1170 = vpack.i.b16 %v1158, %v1124
      %v1172 = vshrl.u32 %v1124, 16
      %v1173 = vshrl.u32 %v1158, 16
      %v1174 = vpack.i.b16 %v1173, %v1172
      %v1178 = vpack.i.b16 %v1157, %v1123
      %v1180 = vshrl.u32 %v1123, 16
      %v1181 = vshrl.u32 %v1157, 16
      %v1182 = vpack.i.b16 %v1181, %v1180
      %v1186 = vpack.i.b16 %v1159, %v1125
      %v1188 = vshrl.u32 %v1125, 16
      %v1189 = vshrl.u32 %v1159, 16
      %v1190 = vpack.i.b16 %v1189, %v1188
      %v1192 = vcombine.low %v1162, %v1178
      %v1194 = vunpack.c.l.s4 1983009808
      %v1195 = vunpack.c.0.s8 %v1194
      %v1196 = vlaneseq
      %v1197 = vshrl.u32 %v1196, 7
      %v1198 = vsub.s32 %v1195, %v1197
      %v1199 = vrot.slane %v1192, %v1198
      %v1200 = vcombine.low %v1170, %v1186
      %v1202 = vunpack.c.l.s4 1983009808
      %v1203 = vunpack.c.0.s8 %v1202
      %v1204 = vlaneseq
      %v1205 = vshrl.u32 %v1204, 7
      %v1206 = vsub.s32 %v1203, %v1205
      %v1207 = vrot.slane %v1200, %v1206
      %v1208 = vcombine.low %v1199, %v1207
      %v1210 = vunpack.c.l.s4 1934713408
      %v1211 = vunpack.c.0.s8 %v1210
      %v1212 = vlaneseq
      %v1213 = vshrl.u32 %v1212, 7
      %v1214 = vsub.s32 %v1211, %v1213
      %v1215 = vrot.slane %v1208, %v1214
      %v1216 = vcombine.high %v1215, 0
      %v1217 = vcombine.low %v1166, %v1182
      %v1219 = vunpack.c.l.s4 1983009808
      %v1220 = vunpack.c.0.s8 %v1219
      %v1221 = vlaneseq
      %v1222 = vshrl.u32 %v1221, 7
      %v1223 = vsub.s32 %v1220, %v1222
      %v1224 = vrot.slane %v1217, %v1223
      %v1225 = vcombine.low %v1174, %v1190
      %v1227 = vunpack.c.l.s4 1983009808
      %v1228 = vunpack.c.0.s8 %v1227
      %v1229 = vlaneseq
      %v1230 = vshrl.u32 %v1229, 7
      %v1231 = vsub.s32 %v1228, %v1230
      %v1232 = vrot.slane %v1225, %v1231
      %v1233 = vcombine.low %v1224, %v1232
      %v1235 = vunpack.c.l.s4 1934713408
      %v1236 = vunpack.c.0.s8 %v1235
      %v1237 = vlaneseq
      %v1238 = vshrl.u32 %v1237, 7
      %v1239 = vsub.s32 %v1236, %v1238
      %v1240 = vrot.slane %v1233, %v1239
      %v1241 = vcombine.high %v1240, 0
      %v1244 = vpack.i.b16 %v1240, %v1215
      %v1246 = vshrl.u32 %v1215, 16
      %v1247 = vshrl.u32 %v1240, 16
      %v1248 = vpack.i.b16 %v1247, %v1246
      %v1252 = vpack.i.b16 %v1241, %v1216
      %v1254 = vshrl.u32 %v1216, 16
      %v1255 = vshrl.u32 %v1241, 16
      %v1256 = vpack.i.b16 %v1255, %v1254
      %1258 = vst.msk [vmem:[%s499] sm:$0xf] %vm903, %v1244
      %1259 = vst.msk [vmem:[%s499 + $0x4] sm:$0xf] %vm903, %v1248
      %1260 = vst.msk [vmem:[%s499 + $0x8] sm:$0xf] %vm903, %v1252
      %1261 = vst.msk [vmem:[%s499 + $0xc] sm:$0xf] %vm903, %v1256
      %p1262 = scmp.lt.s32.totalorder %s28, 1
      %s1263 = scalar_select %p1262, %s28, 1
      %p1264 = scmp.lt.s32.totalorder %s29, 0
      %s1265 = scalar_select %p1264, %s29, 0
      %s1266 = smul.addr %s1263, 4
      %s1267 = sadd.s32 %s1265, %s1266
      %s1268 = smul.addr %s1267, 4
      %s1269 = scalar_lea.vmem %s10, %s1268
      %p1270 = scmp.lt.s32.totalorder %s28, 1
      %s1271 = scalar_select %p1270, %s28, 1
      %p1272 = scmp.lt.s32.totalorder %s29, 0
      %s1273 = scalar_select %p1272, %s29, 0
      %s1274 = smul.addr %s1271, 4
      %s1275 = sadd.s32 %s1273, %s1274
      %s1276 = smul.addr %s1275, 4
      %s1277 = scalar_lea.vmem %s11, %s1276
      %p1278 = scmp.lt.s32.totalorder %s28, 1
      %s1279 = scalar_select %p1278, %s28, 1
      %p1280 = scmp.lt.s32.totalorder %s29, 0
      %s1281 = scalar_select %p1280, %s29, 0
      %s1282 = smul.addr %s1279, 4
      %s1283 = sadd.s32 %s1281, %s1282
      %s1284 = smul.addr %s1283, 4
      %s1285 = scalar_lea.vmem %s12, %s1284
      // Predicated region
      $region61: #{_encoder_layer_impl.2} parent=59 // pred_check
        %p1286 = pneg %p278
      $region62: #{_encoder_layer_impl.2} parent=59 // pred_check_branch
        %1288 = sbr.rel (%p1286) target = $region64
      $region63: #{_encoder_layer_impl.2} parent=59 // pred_region
        _
      $region64: #{_encoder_layer_impl.2} parent=59 // pred_fallthru
        _
      // Predicated region
      $region65: #{_encoder_layer_impl.2} parent=59 // pred_check
        %p1289 = pneg %p306
      $region66: #{_encoder_layer_impl.2} parent=59 // pred_check_branch
        %1291 = sbr.rel (%p1289) target = $region68
      $region67: #{_encoder_layer_impl.2} parent=59 // pred_region
        _
      $region68: #{_encoder_layer_impl.2} parent=59 // pred_fallthru
        _
      // Predicated region
      $region69: #{_encoder_layer_impl.2} parent=59 // pred_check
        %p1292 = pneg %p334
      $region70: #{_encoder_layer_impl.2} parent=59 // pred_check_branch
        %1294 = sbr.rel (%p1292) target = $region72
      $region71: #{_encoder_layer_impl.2} parent=59 // pred_region
        _
      $region72: #{_encoder_layer_impl.2} parent=59 // pred_fallthru
        _
    $region60: #{_encoder_layer_impl.2} parent=5 // pred_fallthru
      _
    %p1295 = scmp.le.s32.totalorder 2, %s19
    // Predicated region
    $region73: #{_encoder_layer_impl.2} parent=5 // pred_check
      %p1296 = pneg %p1295
    $region74: #{_encoder_layer_impl.2} parent=5 // pred_check_branch
      %1298 = sbr.rel (%p1296) target = $region76
    $region75: #{_encoder_layer_impl.2} parent=5 // pred_region
      %s1299 = ssub.s32 %s19, 2
      // Predicated region
      $region77: #{_encoder_layer_impl.2} parent=75 // pred_check
        %p1300 = pneg %p284
      $region78: #{_encoder_layer_impl.2} parent=75 // pred_check_branch
        %1302 = sbr.rel (%p1300) target = $region80
      $region79: #{_encoder_layer_impl.2} parent=75 // pred_region
        %p1303 = scmp.lt.s32.totalorder %s30, 1
        %s1304 = scalar_select %p1303, %s30, 1
        %p1305 = scmp.lt.s32.totalorder %s31, 0
        %s1306 = scalar_select %p1305, %s31, 0
        %s1307 = smul.addr %s1304, 4
        %s1308 = sadd.s32 %s1306, %s1307
        %s1309 = smul.addr %s1308, 4
        %s1310 = scalar_lea.vmem %s10, %s1309
      $region80: #{_encoder_layer_impl.2} parent=75 // pred_fallthru
        _
      // Predicated region
      $region81: #{_encoder_layer_impl.2} parent=75 // pred_check
        %p1311 = pneg %p312
      $region82: #{_encoder_layer_impl.2} parent=75 // pred_check_branch
        %1313 = sbr.rel (%p1311) target = $region84
      $region83: #{_encoder_layer_impl.2} parent=75 // pred_region
        %p1314 = scmp.lt.s32.totalorder %s30, 1
        %s1315 = scalar_select %p1314, %s30, 1
        %p1316 = scmp.lt.s32.totalorder %s31, 0
        %s1317 = scalar_select %p1316, %s31, 0
        %s1318 = smul.addr %s1315, 4
        %s1319 = sadd.s32 %s1317, %s1318
        %s1320 = smul.addr %s1319, 4
        %s1321 = scalar_lea.vmem %s11, %s1320
      $region84: #{_encoder_layer_impl.2} parent=75 // pred_fallthru
        _
      // Predicated region
      $region85: #{_encoder_layer_impl.2} parent=75 // pred_check
        %p1322 = pneg %p340
      $region86: #{_encoder_layer_impl.2} parent=75 // pred_check_branch
        %1324 = sbr.rel (%p1322) target = $region88
      $region87: #{_encoder_layer_impl.2} parent=75 // pred_region
        %p1325 = scmp.lt.s32.totalorder %s30, 1
        %s1326 = scalar_select %p1325, %s30, 1
        %p1327 = scmp.lt.s32.totalorder %s31, 0
        %s1328 = scalar_select %p1327, %s31, 0
        %s1329 = smul.addr %s1326, 4
        %s1330 = sadd.s32 %s1328, %s1329
        %s1331 = smul.addr %s1330, 4
        %s1332 = scalar_lea.vmem %s12, %s1331
      $region88: #{_encoder_layer_impl.2} parent=75 // pred_fallthru
        _
    $region76: #{_encoder_layer_impl.2} parent=5 // pred_fallthru
      _
  $region6: #{_encoder_layer_impl.2} parent=0 // loop_footer
    %s23 = sadd.s32 1, %s19
  $region7: #{_encoder_layer_impl.2} parent=0 // loop_footer_branch
    %18 = sbr.rel target = $region3
  $region8: #{_encoder_layer_impl.2} parent=0 // loop_exit
    _

// kernel: _encoder_layer_impl.3
$region0: #{_encoder_layer_impl.3}
  #allocation0 [shape = 'u32[]', space=smem, size = 0x4, offset = 0x4, fixed_abs, tag = 'smem constant byte address 0x4 - core index']
  #allocation1 [shape = 'u32[144,128]{1,0:T(1,128)}', space=vmem, size = 0x12000, scoped, tag = 'internal scratch']
  #allocation2 [shape = 'f32[4,8,1]{2,1,0:T(8,128)}', space=vmem, size = 0x4000, scoped, tag = 'scratch operand']
  #allocation3 [shape = 'f32[4,8,1]{2,1,0:T(8,128)}', space=vmem, size = 0x4000, scoped, tag = 'scratch operand']
  #allocation4 [shape = 'f32[4,8,8]{2,1,0:T(8,128)}', space=vmem, size = 0x4000, scoped, tag = 'scratch operand']
  %s0 = inlined_call_operand.vmem [shape: f32[2,8,32], index: 0, kind: input, shape index: {}]
  %s1 = inlined_call_operand.vmem [shape: bf16[2,4,8,8], index: 1, kind: input, shape index: {}]
  %s2 = inlined_call_operand.vmem [shape: bf16[2,4,8,8], index: 2, kind: input, shape index: {}]
  %s3 = inlined_call_operand.vmem [shape: bf16[2,4,8,8], index: 3, kind: input, shape index: {}]
  %s4 = inlined_call_operand.vmem [shape: bf16[32,32], index: 4, kind: input, shape index: {}]
  %s5 = inlined_call_operand.vmem [shape: f32[1,32], index: 5, kind: input, shape index: {}]
  %s6 = inlined_call_operand.vmem [shape: f32[1,32], index: 6, kind: input, shape index: {}]
  %s7 = inlined_call_operand.vmem [shape: f32[1,32], index: 7, kind: input, shape index: {}]
  %s8 = inlined_call_operand.vmem [shape: bf16[32,64], index: 8, kind: input, shape index: {}]
  %s9 = inlined_call_operand.vmem [shape: f32[1,64], index: 9, kind: input, shape index: {}]
  %s10 = inlined_call_operand.vmem [shape: bf16[64,32], index: 10, kind: input, shape index: {}]
  %s11 = inlined_call_operand.vmem [shape: f32[1,32], index: 11, kind: input, shape index: {}]
  %s12 = inlined_call_operand.hbm [shape: f32[2,8,32], index: 12, kind: output, shape index: {}]
  %s13 = sld [smem:[#allocation0]]
  $region97: #{_encoder_layer_impl.3} parent=0
    _
  %s15 = ssub.s32 1, %s13
  %s16 = scalar_select 0, %s15, %s13
  $region1: #{_encoder_layer_impl.3} parent=0
    #allocation5 [shape = 'u8[8192]{0}', space=vmem, size = 0x2000, scoped, tag = 'output window, operand 0']
    #allocation6 [shape = 's32[2]{0}', space=sflag, size = 0x8, scoped, tag = 'scoped memory for _encoder_layer_impl.3']
    %17 = vsyncpa [#allocation6], 0
    %s18 = scalar_lea.sflag [#allocation6], 1
    %19 = vsyncpa %s18, 0
    loop: start=0, step=1, limit=4
    $region2: #{_encoder_layer_impl.3} parent=1 // loop_pre_header
      _
    $region3: #{_encoder_layer_impl.3} parent=1 // loop_header
      %s21 = sphi 0, %s25
      %p22 = scmp.ge.s32.totalorder %s21, 4
      %s28 = sphi 0, %s47
      %s29 = sphi 0, %s43
      %s30 = sphi 0, %s39
      %s31 = sphi 0, %s28
      %s32 = sphi 0, %s29
      %s33 = sphi 0, %s30
      %s34 = sphi 0, %s31
      %s35 = sphi 0, %s32
      %s36 = sphi 0, %s33
      %s52 = sphi 0, %s54
      %s55 = sphi 0, %s52
      %s56 = sphi 0, %s55
      %s72 = sphi 0, %s56
      %s80 = sphi 0, %s82
      %s83 = sphi 0, %s80
      %s84 = sphi 0, %s83
      %s100 = sphi 0, %s84
      %s112 = sphi 0, %s114
      %s115 = sphi 0, %s112
      %s116 = sphi 0, %s115
      %s132 = sphi 0, %s116
      %s144 = sphi 0, %s146
      %s147 = sphi 0, %s144
      %s148 = sphi 0, %s147
      %s164 = sphi 0, %s148
      %s168 = sphi 0, %s168
      %s170 = sphi 0, %s168
      %s171 = sphi 0, %s170
      %s185 = sphi 0, %s171
      %s189 = sphi 0, %s189
      %s191 = sphi 0, %s189
      %s192 = sphi 0, %s191
      %s206 = sphi 0, %s192
      %s210 = sphi 0, %s210
      %s212 = sphi 0, %s210
      %s213 = sphi 0, %s212
      %s227 = sphi 0, %s213
      %s231 = sphi 0, %s231
      %s233 = sphi 0, %s231
      %s234 = sphi 0, %s233
      %s248 = sphi 0, %s234
      %s252 = sphi 0, %s252
      %s254 = sphi 0, %s252
      %s255 = sphi 0, %s254
      %s269 = sphi 0, %s255
      %s273 = sphi 0, %s273
      %s275 = sphi 0, %s273
      %s276 = sphi 0, %s275
      %s290 = sphi 0, %s276
      %s294 = sphi 0, %s294
      %s296 = sphi 0, %s294
      %s297 = sphi 0, %s296
      %s311 = sphi 0, %s297
      %s315 = sphi 0, %s315
      %s317 = sphi 0, %s315
      %s318 = sphi 0, %s317
      %s332 = sphi 0, %s318
      %s340 = sphi 0, %s342
      %s343 = sphi 0, %s340
      %s344 = sphi 0, %s343
      %s360 = sphi 0, %s344
    $region4: #{_encoder_layer_impl.3} parent=1 // loop_header_branch
      %24 = sbr.rel (%p22) target = $region8
    $region5: #{_encoder_layer_impl.3} parent=1 // loop_body
      %s26 = ssub.s32 %s21, 1
      %s27 = ssub.s32 %s21, 2
      %s37 = sadd.s32 1, %s30
      %p38 = scmp.ge.s32.totalorder %s37, 1
      %s39 = scalar_select %p38, 0, %s37
      %s40 = sadd.s32 1, %s29
      %s41 = scalar_select %p38, %s40, %s29
      %p42 = scmp.ge.s32.totalorder %s41, 1
      %s43 = scalar_select %p42, 0, %s41
      %s44 = sadd.s32 1, %s28
      %s45 = scalar_select %p42, %s44, %s28
      %p46 = scmp.ge.s32.totalorder %s45, 2
      %s47 = scalar_select %p46, 0, %s45
      %s48 = ssub.s32 %s28, %s47
      %s49 = ssub.s32 %s29, %s43
      %s50 = sor.u32 %s48, %s49
      %p51 = scmp.eq.s32.totalorder %s50, 0
      %s53 = sadd.s32 %s52, 1
      %s54 = scalar_select %p51, %s52, %s53
      %p57 = pneg %p51
      %p58 = scmp.eq.s32.totalorder %s21, 1
      %p59 = por %p57, %p58
      %p60 = scmp.ne.s32.totalorder %s52, %s55
      %p61 = scmp.eq.s32.totalorder %s21, 0
      %p62 = por %p60, %p61
      %p63 = scmp.ne.s32.totalorder %s52, %s55
      %p64 = scmp.eq.s32.totalorder %s26, 1
      %p65 = por %p63, %p64
      %p66 = scmp.ne.s32.totalorder %s55, %s56
      %p67 = scmp.eq.s32.totalorder %s26, 0
      %p68 = por %p66, %p67
      %p69 = scmp.ne.s32.totalorder %s55, %s56
      %p70 = scmp.eq.s32.totalorder %s27, 1
      %p71 = por %p69, %p70
      %p73 = scmp.ne.s32.totalorder %s56, %s72
      %p74 = scmp.eq.s32.totalorder %s27, 0
      %p75 = por %p73, %p74
      %s76 = ssub.s32 %s28, %s47
      %s77 = ssub.s32 %s29, %s43
      %s78 = sor.u32 %s76, %s77
      %p79 = scmp.eq.s32.totalorder %s78, 0
      %s81 = sadd.s32 %s80, 1
      %s82 = scalar_select %p79, %s80, %s81
      %p85 = pneg %p79
      %p86 = scmp.eq.s32.totalorder %s21, 1
      %p87 = por %p85, %p86
      %p88 = scmp.ne.s32.totalorder %s80, %s83
      %p89 = scmp.eq.s32.totalorder %s21, 0
      %p90 = por %p88, %p89
      %p91 = scmp.ne.s32.totalorder %s80, %s83
      %p92 = scmp.eq.s32.totalorder %s26, 1
      %p93 = por %p91, %p92
      %p94 = scmp.ne.s32.totalorder %s83, %s84
      %p95 = scmp.eq.s32.totalorder %s26, 0
      %p96 = por %p94, %p95
      %p97 = scmp.ne.s32.totalorder %s83, %s84
      %p98 = scmp.eq.s32.totalorder %s27, 1
      %p99 = por %p97, %p98
      %p101 = scmp.ne.s32.totalorder %s84, %s100
      %p102 = scmp.eq.s32.totalorder %s27, 0
      %p103 = por %p101, %p102
      %p104 = scmp.lt.s32.totalorder %s30, %s29
      %s105 = scalar_select %p104, %s30, %s29
      %p106 = scmp.lt.s32.totalorder %s39, %s43
      %s107 = scalar_select %p106, %s39, %s43
      %s108 = ssub.s32 %s28, %s47
      %s109 = ssub.s32 %s105, %s107
      %s110 = sor.u32 %s108, %s109
      %p111 = scmp.eq.s32.totalorder %s110, 0
      %s113 = sadd.s32 %s112, 1
      %s114 = scalar_select %p111, %s112, %s113
      %p117 = pneg %p111
      %p118 = scmp.eq.s32.totalorder %s21, 1
      %p119 = por %p117, %p118
      %p120 = scmp.ne.s32.totalorder %s112, %s115
      %p121 = scmp.eq.s32.totalorder %s21, 0
      %p122 = por %p120, %p121
      %p123 = scmp.ne.s32.totalorder %s112, %s115
      %p124 = scmp.eq.s32.totalorder %s26, 1
      %p125 = por %p123, %p124
      %p126 = scmp.ne.s32.totalorder %s115, %s116
      %p127 = scmp.eq.s32.totalorder %s26, 0
      %p128 = por %p126, %p127
      %p129 = scmp.ne.s32.totalorder %s115, %s116
      %p130 = scmp.eq.s32.totalorder %s27, 1
      %p131 = por %p129, %p130
      %p133 = scmp.ne.s32.totalorder %s116, %s132
      %p134 = scmp.eq.s32.totalorder %s27, 0
      %p135 = por %p133, %p134
      %p136 = scmp.lt.s32.totalorder %s30, %s29
      %s137 = scalar_select %p136, %s30, %s29
      %p138 = scmp.lt.s32.totalorder %s39, %s43
      %s139 = scalar_select %p138, %s39, %s43
      %s140 = ssub.s32 %s28, %s47
      %s141 = ssub.s32 %s137, %s139
      %s142 = sor.u32 %s140, %s141
      %p143 = scmp.eq.s32.totalorder %s142, 0
      %s145 = sadd.s32 %s144, 1
      %s146 = scalar_select %p143, %s144, %s145
      %p149 = pneg %p143
      %p150 = scmp.eq.s32.totalorder %s21, 1
      %p151 = por %p149, %p150
      %p152 = scmp.ne.s32.totalorder %s144, %s147
      %p153 = scmp.eq.s32.totalorder %s21, 0
      %p154 = por %p152, %p153
      %p155 = scmp.ne.s32.totalorder %s144, %s147
      %p156 = scmp.eq.s32.totalorder %s26, 1
      %p157 = por %p155, %p156
      %p158 = scmp.ne.s32.totalorder %s147, %s148
      %p159 = scmp.eq.s32.totalorder %s26, 0
      %p160 = por %p158, %p159
      %p161 = scmp.ne.s32.totalorder %s147, %s148
      %p162 = scmp.eq.s32.totalorder %s27, 1
      %p163 = por %p161, %p162
      %p165 = scmp.ne.s32.totalorder %s148, %s164
      %p166 = scmp.eq.s32.totalorder %s27, 0
      %p167 = por %p165, %p166
      %s169 = sadd.s32 %s168, 1
      %p172 = scmp.eq.s32.totalorder %s21, 1
      %p173 = scmp.ne.s32.totalorder %s168, %s170
      %p174 = scmp.eq.s32.totalorder %s21, 0
      %p175 = por %p173, %p174
      %p176 = scmp.ne.s32.totalorder %s168, %s170
      %p177 = scmp.eq.s32.totalorder %s26, 1
      %p178 = por %p176, %p177
      %p179 = scmp.ne.s32.totalorder %s170, %s171
      %p180 = scmp.eq.s32.totalorder %s26, 0
      %p181 = por %p179, %p180
      %p182 = scmp.ne.s32.totalorder %s170, %s171
      %p183 = scmp.eq.s32.totalorder %s27, 1
      %p184 = por %p182, %p183
      %p186 = scmp.ne.s32.totalorder %s171, %s185
      %p187 = scmp.eq.s32.totalorder %s27, 0
      %p188 = por %p186, %p187
      %s190 = sadd.s32 %s189, 1
      %p193 = scmp.eq.s32.totalorder %s21, 1
      %p194 = scmp.ne.s32.totalorder %s189, %s191
      %p195 = scmp.eq.s32.totalorder %s21, 0
      %p196 = por %p194, %p195
      %p197 = scmp.ne.s32.totalorder %s189, %s191
      %p198 = scmp.eq.s32.totalorder %s26, 1
      %p199 = por %p197, %p198
      %p200 = scmp.ne.s32.totalorder %s191, %s192
      %p201 = scmp.eq.s32.totalorder %s26, 0
      %p202 = por %p200, %p201
      %p203 = scmp.ne.s32.totalorder %s191, %s192
      %p204 = scmp.eq.s32.totalorder %s27, 1
      %p205 = por %p203, %p204
      %p207 = scmp.ne.s32.totalorder %s192, %s206
      %p208 = scmp.eq.s32.totalorder %s27, 0
      %p209 = por %p207, %p208
      %s211 = sadd.s32 %s210, 1
      %p214 = scmp.eq.s32.totalorder %s21, 1
      %p215 = scmp.ne.s32.totalorder %s210, %s212
      %p216 = scmp.eq.s32.totalorder %s21, 0
      %p217 = por %p215, %p216
      %p218 = scmp.ne.s32.totalorder %s210, %s212
      %p219 = scmp.eq.s32.totalorder %s26, 1
      %p220 = por %p218, %p219
      %p221 = scmp.ne.s32.totalorder %s212, %s213
      %p222 = scmp.eq.s32.totalorder %s26, 0
      %p223 = por %p221, %p222
      %p224 = scmp.ne.s32.totalorder %s212, %s213
      %p225 = scmp.eq.s32.totalorder %s27, 1
      %p226 = por %p224, %p225
      %p228 = scmp.ne.s32.totalorder %s213, %s227
      %p229 = scmp.eq.s32.totalorder %s27, 0
      %p230 = por %p228, %p229
      %s232 = sadd.s32 %s231, 1
      %p235 = scmp.eq.s32.totalorder %s21, 1
      %p236 = scmp.ne.s32.totalorder %s231, %s233
      %p237 = scmp.eq.s32.totalorder %s21, 0
      %p238 = por %p236, %p237
      %p239 = scmp.ne.s32.totalorder %s231, %s233
      %p240 = scmp.eq.s32.totalorder %s26, 1
      %p241 = por %p239, %p240
      %p242 = scmp.ne.s32.totalorder %s233, %s234
      %p243 = scmp.eq.s32.totalorder %s26, 0
      %p244 = por %p242, %p243
      %p245 = scmp.ne.s32.totalorder %s233, %s234
      %p246 = scmp.eq.s32.totalorder %s27, 1
      %p247 = por %p245, %p246
      %p249 = scmp.ne.s32.totalorder %s234, %s248
      %p250 = scmp.eq.s32.totalorder %s27, 0
      %p251 = por %p249, %p250
      %s253 = sadd.s32 %s252, 1
      %p256 = scmp.eq.s32.totalorder %s21, 1
      %p257 = scmp.ne.s32.totalorder %s252, %s254
      %p258 = scmp.eq.s32.totalorder %s21, 0
      %p259 = por %p257, %p258
      %p260 = scmp.ne.s32.totalorder %s252, %s254
      %p261 = scmp.eq.s32.totalorder %s26, 1
      %p262 = por %p260, %p261
      %p263 = scmp.ne.s32.totalorder %s254, %s255
      %p264 = scmp.eq.s32.totalorder %s26, 0
      %p265 = por %p263, %p264
      %p266 = scmp.ne.s32.totalorder %s254, %s255
      %p267 = scmp.eq.s32.totalorder %s27, 1
      %p268 = por %p266, %p267
      %p270 = scmp.ne.s32.totalorder %s255, %s269
      %p271 = scmp.eq.s32.totalorder %s27, 0
      %p272 = por %p270, %p271
      %s274 = sadd.s32 %s273, 1
      %p277 = scmp.eq.s32.totalorder %s21, 1
      %p278 = scmp.ne.s32.totalorder %s273, %s275
      %p279 = scmp.eq.s32.totalorder %s21, 0
      %p280 = por %p278, %p279
      %p281 = scmp.ne.s32.totalorder %s273, %s275
      %p282 = scmp.eq.s32.totalorder %s26, 1
      %p283 = por %p281, %p282
      %p284 = scmp.ne.s32.totalorder %s275, %s276
      %p285 = scmp.eq.s32.totalorder %s26, 0
      %p286 = por %p284, %p285
      %p287 = scmp.ne.s32.totalorder %s275, %s276
      %p288 = scmp.eq.s32.totalorder %s27, 1
      %p289 = por %p287, %p288
      %p291 = scmp.ne.s32.totalorder %s276, %s290
      %p292 = scmp.eq.s32.totalorder %s27, 0
      %p293 = por %p291, %p292
      %s295 = sadd.s32 %s294, 1
      %p298 = scmp.eq.s32.totalorder %s21, 1
      %p299 = scmp.ne.s32.totalorder %s294, %s296
      %p300 = scmp.eq.s32.totalorder %s21, 0
      %p301 = por %p299, %p300
      %p302 = scmp.ne.s32.totalorder %s294, %s296
      %p303 = scmp.eq.s32.totalorder %s26, 1
      %p304 = por %p302, %p303
      %p305 = scmp.ne.s32.totalorder %s296, %s297
      %p306 = scmp.eq.s32.totalorder %s26, 0
      %p307 = por %p305, %p306
      %p308 = scmp.ne.s32.totalorder %s296, %s297
      %p309 = scmp.eq.s32.totalorder %s27, 1
      %p310 = por %p308, %p309
      %p312 = scmp.ne.s32.totalorder %s297, %s311
      %p313 = scmp.eq.s32.totalorder %s27, 0
      %p314 = por %p312, %p313
      %s316 = sadd.s32 %s315, 1
      %p319 = scmp.eq.s32.totalorder %s21, 1
      %p320 = scmp.ne.s32.totalorder %s315, %s317
      %p321 = scmp.eq.s32.totalorder %s21, 0
      %p322 = por %p320, %p321
      %p323 = scmp.ne.s32.totalorder %s315, %s317
      %p324 = scmp.eq.s32.totalorder %s26, 1
      %p325 = por %p323, %p324
      %p326 = scmp.ne.s32.totalorder %s317, %s318
      %p327 = scmp.eq.s32.totalorder %s26, 0
      %p328 = por %p326, %p327
      %p329 = scmp.ne.s32.totalorder %s317, %s318
      %p330 = scmp.eq.s32.totalorder %s27, 1
      %p331 = por %p329, %p330
      %p333 = scmp.ne.s32.totalorder %s318, %s332
      %p334 = scmp.eq.s32.totalorder %s27, 0
      %p335 = por %p333, %p334
      %s336 = ssub.s32 %s28, %s47
      %s337 = ssub.s32 %s29, %s43
      %s338 = sor.u32 %s336, %s337
      %p339 = scmp.eq.s32.totalorder %s338, 0
      %s341 = sadd.s32 %s340, 1
      %s342 = scalar_select %p339, %s340, %s341
      %p345 = pneg %p339
      %p346 = scmp.eq.s32.totalorder %s21, 1
      %p347 = por %p345, %p346
      %p348 = scmp.ne.s32.totalorder %s340, %s343
      %p349 = scmp.eq.s32.totalorder %s21, 0
      %p350 = por %p348, %p349
      %p351 = scmp.ne.s32.totalorder %s340, %s343
      %p352 = scmp.eq.s32.totalorder %s26, 1
      %p353 = por %p351, %p352
      %p354 = scmp.ne.s32.totalorder %s343, %s344
      %p355 = scmp.eq.s32.totalorder %s26, 0
      %p356 = por %p354, %p355
      %p357 = scmp.ne.s32.totalorder %s343, %s344
      %p358 = scmp.eq.s32.totalorder %s27, 1
      %p359 = por %p357, %p358
      %p361 = scmp.ne.s32.totalorder %s344, %s360
      %p362 = scmp.eq.s32.totalorder %s27, 0
      %p363 = por %p361, %p362
      %p364 = scmp.le.s32.totalorder 1, %s21
      %p365 = scmp.lt.s32.totalorder %s21, 3
      %p366 = pnand %p364, %p365
      %p367 = pneg %p366
      // Predicated region
      $region9: #{_encoder_layer_impl.3} parent=5 // pred_check
        _
      $region10: #{_encoder_layer_impl.3} parent=5 // pred_check_branch
        %369 = sbr.rel (%p366) target = $region12
      $region11: #{_encoder_layer_impl.3} parent=5 // pred_region
        %s370 = ssub.s32 %s21, 1
        // Predicated region
        $region13: #{_encoder_layer_impl.3} parent=11 // pred_check
          %p371 = pneg %p181
        $region14: #{_encoder_layer_impl.3} parent=11 // pred_check_branch
          %373 = sbr.rel (%p371) target = $region16
        $region15: #{_encoder_layer_impl.3} parent=11 // pred_region
          _
        $region16: #{_encoder_layer_impl.3} parent=11 // pred_fallthru
          _
        // Predicated region
        $region17: #{_encoder_layer_impl.3} parent=11 // pred_check
          %p374 = pneg %p202
        $region18: #{_encoder_layer_impl.3} parent=11 // pred_check_branch
          %376 = sbr.rel (%p374) target = $region20
        $region19: #{_encoder_layer_impl.3} parent=11 // pred_region
          _
        $region20: #{_encoder_layer_impl.3} parent=11 // pred_fallthru
          _
        // Predicated region
        $region21: #{_encoder_layer_impl.3} parent=11 // pred_check
          %p377 = pneg %p223
        $region22: #{_encoder_layer_impl.3} parent=11 // pred_check_branch
          %379 = sbr.rel (%p377) target = $region24
        $region23: #{_encoder_layer_impl.3} parent=11 // pred_region
          _
        $region24: #{_encoder_layer_impl.3} parent=11 // pred_fallthru
          _
        // Predicated region
        $region25: #{_encoder_layer_impl.3} parent=11 // pred_check
          %p380 = pneg %p244
        $region26: #{_encoder_layer_impl.3} parent=11 // pred_check_branch
          %382 = sbr.rel (%p380) target = $region28
        $region27: #{_encoder_layer_impl.3} parent=11 // pred_region
          _
        $region28: #{_encoder_layer_impl.3} parent=11 // pred_fallthru
          _
        // Predicated region
        $region29: #{_encoder_layer_impl.3} parent=11 // pred_check
          %p383 = pneg %p265
        $region30: #{_encoder_layer_impl.3} parent=11 // pred_check_branch
          %385 = sbr.rel (%p383) target = $region32
        $region31: #{_encoder_layer_impl.3} parent=11 // pred_region
          _
        $region32: #{_encoder_layer_impl.3} parent=11 // pred_fallthru
          _
        // Predicated region
        $region33: #{_encoder_layer_impl.3} parent=11 // pred_check
          %p386 = pneg %p286
        $region34: #{_encoder_layer_impl.3} parent=11 // pred_check_branch
          %388 = sbr.rel (%p386) target = $region36
        $region35: #{_encoder_layer_impl.3} parent=11 // pred_region
          _
        $region36: #{_encoder_layer_impl.3} parent=11 // pred_fallthru
          _
        // Predicated region
        $region37: #{_encoder_layer_impl.3} parent=11 // pred_check
          %p389 = pneg %p307
        $region38: #{_encoder_layer_impl.3} parent=11 // pred_check_branch
          %391 = sbr.rel (%p389) target = $region40
        $region39: #{_encoder_layer_impl.3} parent=11 // pred_region
          _
        $region40: #{_encoder_layer_impl.3} parent=11 // pred_fallthru
          _
        // Predicated region
        $region41: #{_encoder_layer_impl.3} parent=11 // pred_check
          %p392 = pneg %p328
        $region42: #{_encoder_layer_impl.3} parent=11 // pred_check_branch
          %394 = sbr.rel (%p392) target = $region44
        $region43: #{_encoder_layer_impl.3} parent=11 // pred_region
          _
        $region44: #{_encoder_layer_impl.3} parent=11 // pred_fallthru
          _
      $region12: #{_encoder_layer_impl.3} parent=5 // pred_fallthru
        _
      %p395 = scmp.lt.s32.totalorder %s21, 2
      // Predicated region
      $region45: #{_encoder_layer_impl.3} parent=5 // pred_check
        %p396 = pneg %p395
      $region46: #{_encoder_layer_impl.3} parent=5 // pred_check_branch
        %398 = sbr.rel (%p396) target = $region48
      $region47: #{_encoder_layer_impl.3} parent=5 // pred_region
        // Predicated region
        $region49: #{_encoder_layer_impl.3} parent=47 // pred_check
          %p399 = pneg %p62
        $region50: #{_encoder_layer_impl.3} parent=47 // pred_check_branch
          %401 = sbr.rel (%p399) target = $region52
        $region51: #{_encoder_layer_impl.3} parent=47 // pred_region
          %p402 = scmp.lt.s32.totalorder %s28, 1
          %s403 = scalar_select %p402, %s28, 1
          %p404 = scmp.lt.s32.totalorder %s29, 0
          %s405 = scalar_select %p404, %s29, 0
          %s406 = sadd.s32 %s405, %s403
          %s407 = smul.addr %s406, 8
          %s408 = scalar_lea.vmem %s0, %s407
        $region52: #{_encoder_layer_impl.3} parent=47 // pred_fallthru
          _
        // Predicated region
        $region53: #{_encoder_layer_impl.3} parent=47 // pred_check
          %p409 = pneg %p90
        $region54: #{_encoder_layer_impl.3} parent=47 // pred_check_branch
          %411 = sbr.rel (%p409) target = $region56
        $region55: #{_encoder_layer_impl.3} parent=47 // pred_region
          %p412 = scmp.lt.s32.totalorder %s28, 1
          %s413 = scalar_select %p412, %s28, 1
          %p414 = scmp.lt.s32.totalorder %s29, 0
          %s415 = scalar_select %p414, %s29, 0
          %s416 = smul.addr %s413, 4
          %s417 = sadd.s32 %s415, %s416
          %s418 = smul.addr %s417, 4
          %s419 = scalar_lea.vmem %s1, %s418
        $region56: #{_encoder_layer_impl.3} parent=47 // pred_fallthru
          _
        // Predicated region
        $region57: #{_encoder_layer_impl.3} parent=47 // pred_check
          %p420 = pneg %p122
        $region58: #{_encoder_layer_impl.3} parent=47 // pred_check_branch
          %422 = sbr.rel (%p420) target = $region60
        $region59: #{_encoder_layer_impl.3} parent=47 // pred_region
          %p423 = scmp.lt.s32.totalorder %s30, %s29
          %s424 = scalar_select %p423, %s30, %s29
          %p425 = scmp.lt.s32.totalorder %s28, 1
          %s426 = scalar_select %p425, %s28, 1
          %p427 = scmp.lt.s32.totalorder %s424, 0
          %s428 = scalar_select %p427, %s424, 0
          %s429 = smul.addr %s426, 4
          %s430 = sadd.s32 %s428, %s429
          %s431 = smul.addr %s430, 4
          %s432 = scalar_lea.vmem %s2, %s431
          %p433 = scmp.lt.s32.totalorder %s30, %s29
          %s434 = scalar_select %p433, %s30, %s29
        $region60: #{_encoder_layer_impl.3} parent=47 // pred_fallthru
          _
        // Predicated region
        $region61: #{_encoder_layer_impl.3} parent=47 // pred_check
          %p435 = pneg %p154
        $region62: #{_encoder_layer_impl.3} parent=47 // pred_check_branch
          %437 = sbr.rel (%p435) target = $region64
        $region63: #{_encoder_layer_impl.3} parent=47 // pred_region
          %p438 = scmp.lt.s32.totalorder %s30, %s29
          %s439 = scalar_select %p438, %s30, %s29
          %p440 = scmp.lt.s32.totalorder %s28, 1
          %s441 = scalar_select %p440, %s28, 1
          %p442 = scmp.lt.s32.totalorder %s439, 0
          %s443 = scalar_select %p442, %s439, 0
          %s444 = smul.addr %s441, 4
          %s445 = sadd.s32 %s443, %s444
          %s446 = smul.addr %s445, 4
          %s447 = scalar_lea.vmem %s3, %s446
          %p448 = scmp.lt.s32.totalorder %s30, %s29
          %s449 = scalar_select %p448, %s30, %s29
        $region64: #{_encoder_layer_impl.3} parent=47 // pred_fallthru
          _
      $region48: #{_encoder_layer_impl.3} parent=5 // pred_fallthru
        _
      %p450 = scmp.le.s32.totalorder 1, %s21
      %p451 = scmp.lt.s32.totalorder %s21, 3
      %p452 = pnand %p450, %p451
      %p453 = pneg %p452
      // Predicated region
      $region65: #{_encoder_layer_impl.3} parent=5 // pred_check
        _
      $region66: #{_encoder_layer_impl.3} parent=5 // pred_check_branch
        %455 = sbr.rel (%p452) target = $region68
      $region67: #{_encoder_layer_impl.3} parent=5 // pred_region
        %s456 = ssub.s32 %s21, 1
        %p457 = scmp.lt.s32.totalorder %s31, 1
        %s458 = scalar_select %p457, %s31, 1
        %p459 = scmp.lt.s32.totalorder %s32, 0
        %s460 = scalar_select %p459, %s32, 0
        %s461 = sadd.s32 %s460, %s458
        %s462 = smul.addr %s461, 8
        %s463 = scalar_lea.vmem %s0, %s462
        %p464 = pneg %p68
        %p465 = pneg %p65
        %p466 = scmp.lt.s32.totalorder %s31, 1
        %s467 = scalar_select %p466, %s31, 1
        %p468 = scmp.lt.s32.totalorder %s32, 0
        %s469 = scalar_select %p468, %s32, 0
        %s470 = smul.addr %s467, 4
        %s471 = sadd.s32 %s469, %s470
        %s472 = smul.addr %s471, 4
        %s473 = scalar_lea.vmem %s1, %s472
        %p474 = pneg %p96
        %p475 = pneg %p93
        %p476 = scmp.lt.s32.totalorder %s33, %s32
        %s477 = scalar_select %p476, %s33, %s32
        %p478 = scmp.lt.s32.totalorder %s31, 1
        %s479 = scalar_select %p478, %s31, 1
        %p480 = scmp.lt.s32.totalorder %s477, 0
        %s481 = scalar_select %p480, %s477, 0
        %s482 = smul.addr %s479, 4
        %s483 = sadd.s32 %s481, %s482
        %s484 = smul.addr %s483, 4
        %s485 = scalar_lea.vmem %s2, %s484
        %p486 = pneg %p128
        %p487 = pneg %p125
        %p488 = scmp.lt.s32.totalorder %s33, %s32
        %s489 = scalar_select %p488, %s33, %s32
        %p490 = scmp.lt.s32.totalorder %s31, 1
        %s491 = scalar_select %p490, %s31, 1
        %p492 = scmp.lt.s32.totalorder %s489, 0
        %s493 = scalar_select %p492, %s489, 0
        %s494 = smul.addr %s491, 4
        %s495 = sadd.s32 %s493, %s494
        %s496 = smul.addr %s495, 4
        %s497 = scalar_lea.vmem %s3, %s496
        %p498 = pneg %p160
        %p499 = pneg %p157
        %p500 = pneg %p181
        %p501 = pneg %p178
        %p502 = pneg %p202
        %p503 = pneg %p199
        %p504 = pneg %p223
        %p505 = pneg %p220
        %p506 = pneg %p244
        %p507 = pneg %p241
        %p508 = pneg %p265
        %p509 = pneg %p262
        %p510 = pneg %p286
        %p511 = pneg %p283
        %p512 = pneg %p307
        %p513 = pneg %p304
        %p514 = pneg %p328
        %p515 = pneg %p325
        %p516 = pneg %p356
        %p517 = pneg %p353
        %s518 = sand.u32 %s343, 1
        %s519 = scalar_lea.sflag [#allocation6], %s518
        %s520 = sand.u32 %s343, 1
        %s521 = smul.addr %s520, 8
        %s522 = scalar_lea.vmem [#allocation5], %s521
        %p523 = scmp.lt.s32.totalorder %s31, 1
        %s524 = scalar_select %p523, %s31, 1
        %p525 = scmp.lt.s32.totalorder %s32, 0
        %s526 = scalar_select %p525, %s32, 0
        %s527 = sadd.s32 %s526, %s524
        %s528 = smul.addr %s527, 8
        %s529 = scalar_lea.vmem %s0, %s528
        %p530 = scmp.lt.s32.totalorder %s31, 1
        %s531 = scalar_select %p530, %s31, 1
        %p532 = scmp.lt.s32.totalorder %s32, 0
        %s533 = scalar_select %p532, %s32, 0
        %s534 = smul.addr %s531, 4
        %s535 = sadd.s32 %s533, %s534
        %s536 = smul.addr %s535, 4
        %s537 = scalar_lea.vmem %s1, %s536
        %p538 = scmp.lt.s32.totalorder %s33, %s32
        %s539 = scalar_select %p538, %s33, %s32
        %p540 = scmp.lt.s32.totalorder %s31, 1
        %s541 = scalar_select %p540, %s31, 1
        %p542 = scmp.lt.s32.totalorder %s539, 0
        %s543 = scalar_select %p542, %s539, 0
        %s544 = smul.addr %s541, 4
        %s545 = sadd.s32 %s543, %s544
        %s546 = smul.addr %s545, 4
        %s547 = scalar_lea.vmem %s2, %s546
        %p548 = scmp.lt.s32.totalorder %s33, %s32
        %s549 = scalar_select %p548, %s33, %s32
        %p550 = scmp.lt.s32.totalorder %s33, %s32
        %s551 = scalar_select %p550, %s33, %s32
        %p552 = scmp.lt.s32.totalorder %s31, 1
        %s553 = scalar_select %p552, %s31, 1
        %p554 = scmp.lt.s32.totalorder %s551, 0
        %s555 = scalar_select %p554, %s551, 0
        %s556 = smul.addr %s553, 4
        %s557 = sadd.s32 %s555, %s556
        %s558 = smul.addr %s557, 4
        %s559 = scalar_lea.vmem %s3, %s558
        %p560 = scmp.lt.s32.totalorder %s33, %s32
        %s561 = scalar_select %p560, %s33, %s32
        %p563 = scmp.eq.s32.totalorder %s33, 0
        // Predicated region
        $region69: #{_encoder_layer_impl.3} parent=67 // pred_check
          %p564 = pneg %p563
        $region70: #{_encoder_layer_impl.3} parent=67 // pred_check_branch
          %566 = sbr.rel (%p564) target = $region72
        $region71: #{_encoder_layer_impl.3} parent=67 // pred_region
          %vm567 = vcmask 7168
          %568 = vst.msk [vmem:[#allocation2] sm:$0xff] %vm567, -inf
          %569 = vst.msk [vmem:[#allocation2 + $0x8] sm:$0xff] %vm567, -inf
          %570 = vst.msk [vmem:[#allocation2 + $0x10] sm:$0xff] %vm567, -inf
          %571 = vst.msk [vmem:[#allocation2 + $0x18] sm:$0xff] %vm567, -inf
          %572 = vst.msk [vmem:[#allocation3] sm:$0xff] %vm567, 0.0
          %573 = vst.msk [vmem:[#allocation3 + $0x8] sm:$0xff] %vm567, 0.0
          %574 = vst.msk [vmem:[#allocation3 + $0x10] sm:$0xff] %vm567, 0.0
          %575 = vst.msk [vmem:[#allocation3 + $0x18] sm:$0xff] %vm567, 0.0
          %vm576 = vcmask 64512
          %577 = vst.msk [vmem:[#allocation4] sm:$0xff] %vm576, 0.0
          %578 = vst.msk [vmem:[#allocation4 + $0x8] sm:$0xff] %vm576, 0.0
          %579 = vst.msk [vmem:[#allocation4 + $0x10] sm:$0xff] %vm576, 0.0
          %580 = vst.msk [vmem:[#allocation4 + $0x18] sm:$0xff] %vm576, 0.0
        $region72: #{_encoder_layer_impl.3} parent=67 // pred_fallthru
          _
        %p581 = scmp.lt.s32.totalorder %s33, %s32
        // Predicated region
        $region73: #{_encoder_layer_impl.3} parent=67 // pred_check
          %p582 = pneg %p581
        $region74: #{_encoder_layer_impl.3} parent=67 // pred_check_branch
          %584 = sbr.rel (%p582) target = $region76
        $region75: #{_encoder_layer_impl.3} parent=67 // pred_region
          %v585 = vld [vmem:[%s537] sm:$0xf]
          %v586 = vld [vmem:[%s537 + $0x4] sm:$0xf]
          %v587 = vld [vmem:[%s537 + $0x8] sm:$0xf]
          %v588 = vld [vmem:[%s537 + $0xc] sm:$0xf]
          %v589 = vld [vmem:[%s547] sm:$0xf]
          %v590 = vld [vmem:[%s547 + $0x4] sm:$0xf]
          %v591 = vld [vmem:[%s547 + $0x8] sm:$0xf]
          %v592 = vld [vmem:[%s547 + $0xc] sm:$0xf]
          %vm593 = vcmask 64512
          %v595 = vsel %vm593, %v585, 0
          %v598 = vsel %vm593, %v589, 0
          %600 = vmatprep.subr.bf16.mxu0 0
          %601 = vmatpush1.bf16.xpose.msra.mxu0 0
          %602 = vmatprep.subr.bf16.mxu0 0
          %603 = vmatpush1.bf16.xpose.msra.mxu0 0
          %604 = vmatprep.subr.bf16.mxu0 0
          %605 = vmatpush1.bf16.xpose.msra.mxu0 0
          %606 = vmatprep.subr.bf16.mxu0 0
          %607 = vmatpush1.bf16.xpose.msra.mxu0 0
          %608 = vmatprep.subr.bf16.mxu0 0
          %609 = vmatpush1.bf16.xpose.msra.mxu0 0
          %610 = vmatprep.subr.bf16.mxu0 0
          %611 = vmatpush1.bf16.xpose.msra.mxu0 0
          %612 = vmatprep.subr.bf16.mxu0 0
          %613 = vmatpush1.bf16.xpose.msra.mxu0 0
          %614 = vmatprep.subr.bf16.mxu0 0
          %615 = vmatpush1.bf16.xpose.msra.mxu0 %v598
          %616 = vmatprep.subr.bf16.mxu0 0
          %617 = vmatpush2.bf16.xpose.msra.mxu0 0
          %618 = vmatprep.subr.bf16.mxu0 0
          %619 = vmatpush2.bf16.xpose.msra.mxu0 0
          %620 = vmatprep.subr.bf16.mxu0 0
          %621 = vmatpush2.bf16.xpose.msra.mxu0 0
          %622 = vmatprep.subr.bf16.mxu0 0
          %623 = vmatpush2.bf16.xpose.msra.mxu0 0
          %624 = vmatprep.subr.bf16.mxu0 0
          %625 = vmatpush2.bf16.xpose.msra.mxu0 0
          %626 = vmatprep.subr.bf16.mxu0 0
          %627 = vmatpush2.bf16.xpose.msra.mxu0 0
          %628 = vmatprep.subr.bf16.mxu0 0
          %629 = vmatpush2.bf16.xpose.msra.mxu0 0
          %630 = vmatprep.subr.bf16.mxu0 0
          %631 = vmatpush2.bf16.xpose.msra.mxu0 0
          %632 = vmatprep.mubr.bf16.mxu0 0
          %633 = vmatmul.mubr.bf16.gmra.mxu0 %v595
          %v634 = vpop.f32.mrf.mxu0
          %v635 = vadd.f32 0.0, %v634
          %v636 = vpop.f32.mrf.mxu0
          %v637 = vpop.f32.mrf.mxu0
          %v638 = vpop.f32.mrf.mxu0
          %639 = vdwg.mxu0
          %v641 = vsel %vm593, %v586, 0
          %v644 = vsel %vm593, %v590, 0
          %646 = vmatprep.subr.bf16.mxu0 0
          %647 = vmatpush1.bf16.xpose.msra.mxu0 0
          %648 = vmatprep.subr.bf16.mxu0 0
          %649 = vmatpush1.bf16.xpose.msra.mxu0 0
          %650 = vmatprep.subr.bf16.mxu0 0
          %651 = vmatpush1.bf16.xpose.msra.mxu0 0
          %652 = vmatprep.subr.bf16.mxu0 0
          %653 = vmatpush1.bf16.xpose.msra.mxu0 0
          %654 = vmatprep.subr.bf16.mxu0 0
          %655 = vmatpush1.bf16.xpose.msra.mxu0 0
          %656 = vmatprep.subr.bf16.mxu0 0
          %657 = vmatpush1.bf16.xpose.msra.mxu0 0
          %658 = vmatprep.subr.bf16.mxu0 0
          %659 = vmatpush1.bf16.xpose.msra.mxu0 0
          %660 = vmatprep.subr.bf16.mxu0 0
          %661 = vmatpush1.bf16.xpose.msra.mxu0 %v644
          %662 = vmatprep.subr.bf16.mxu0 0
          %663 = vmatpush2.bf16.xpose.msra.mxu0 0
          %664 = vmatprep.subr.bf16.mxu0 0
          %665 = vmatpush2.bf16.xpose.msra.mxu0 0
          %666 = vmatprep.subr.bf16.mxu0 0
          %667 = vmatpush2.bf16.xpose.msra.mxu0 0
          %668 = vmatprep.subr.bf16.mxu0 0
          %669 = vmatpush2.bf16.xpose.msra.mxu0 0
          %670 = vmatprep.subr.bf16.mxu0 0
          %671 = vmatpush2.bf16.xpose.msra.mxu0 0
          %672 = vmatprep.subr.bf16.mxu0 0
          %673 = vmatpush2.bf16.xpose.msra.mxu0 0
          %674 = vmatprep.subr.bf16.mxu0 0
          %675 = vmatpush2.bf16.xpose.msra.mxu0 0
          %676 = vmatprep.subr.bf16.mxu0 0
          %677 = vmatpush2.bf16.xpose.msra.mxu0 0
          %678 = vmatprep.mubr.bf16.mxu0 0
          %679 = vmatmul.mubr.bf16.gmra.mxu0 %v641
          %v680 = vpop.f32.mrf.mxu0
          %v681 = vadd.f32 0.0, %v680
          %v682 = vpop.f32.mrf.mxu0
          %v683 = vpop.f32.mrf.mxu0
          %v684 = vpop.f32.mrf.mxu0
          %685 = vdwg.mxu0
          %v687 = vsel %vm593, %v587, 0
          %v690 = vsel %vm593, %v591, 0
          %692 = vmatprep.subr.bf16.mxu0 0
          %693 = vmatpush1.bf16.xpose.msra.mxu0 0
          %694 = vmatprep.subr.bf16.mxu0 0
          %695 = vmatpush1.bf16.xpose.msra.mxu0 0
          %696 = vmatprep.subr.bf16.mxu0 0
          %697 = vmatpush1.bf16.xpose.msra.mxu0 0
          %698 = vmatprep.subr.bf16.mxu0 0
          %699 = vmatpush1.bf16.xpose.msra.mxu0 0
          %700 = vmatprep.subr.bf16.mxu0 0
          %701 = vmatpush1.bf16.xpose.msra.mxu0 0
          %702 = vmatprep.subr.bf16.mxu0 0
          %703 = vmatpush1.bf16.xpose.msra.mxu0 0
          %704 = vmatprep.subr.bf16.mxu0 0
          %705 = vmatpush1.bf16.xpose.msra.mxu0 0
          %706 = vmatprep.subr.bf16.mxu0 0
          %707 = vmatpush1.bf16.xpose.msra.mxu0 %v690
          %708 = vmatprep.subr.bf16.mxu0 0
          %709 = vmatpush2.bf16.xpose.msra.mxu0 0
          %710 = vmatprep.subr.bf16.mxu0 0
          %711 = vmatpush2.bf16.xpose.msra.mxu0 0
          %712 = vmatprep.subr.bf16.mxu0 0
          %713 = vmatpush2.bf16.xpose.msra.mxu0 0
          %714 = vmatprep.subr.bf16.mxu0 0
          %715 = vmatpush2.bf16.xpose.msra.mxu0 0
          %716 = vmatprep.subr.bf16.mxu0 0
          %717 = vmatpush2.bf16.xpose.msra.mxu0 0
          %718 = vmatprep.subr.bf16.mxu0 0
          %719 = vmatpush2.bf16.xpose.msra.mxu0 0
          %720 = vmatprep.subr.bf16.mxu0 0
          %721 = vmatpush2.bf16.xpose.msra.mxu0 0
          %722 = vmatprep.subr.bf16.mxu0 0
          %723 = vmatpush2.bf16.xpose.msra.mxu0 0
          %724 = vmatprep.mubr.bf16.mxu0 0
          %725 = vmatmul.mubr.bf16.gmra.mxu0 %v687
          %v726 = vpop.f32.mrf.mxu0
          %v727 = vadd.f32 0.0, %v726
          %v728 = vpop.f32.mrf.mxu0
          %v729 = vpop.f32.mrf.mxu0
          %v730 = vpop.f32.mrf.mxu0
          %731 = vdwg.mxu0
          %v733 = vsel %vm593, %v588, 0
          %v736 = vsel %vm593, %v592, 0
          %738 = vmatprep.subr.bf16.mxu0 0
          %739 = vmatpush1.bf16.xpose.msra.mxu0 0
          %740 = vmatprep.subr.bf16.mxu0 0
          %741 = vmatpush1.bf16.xpose.msra.mxu0 0
          %742 = vmatprep.subr.bf16.mxu0 0
          %743 = vmatpush1.bf16.xpose.msra.mxu0 0
          %744 = vmatprep.subr.bf16.mxu0 0
          %745 = vmatpush1.bf16.xpose.msra.mxu0 0
          %746 = vmatprep.subr.bf16.mxu0 0
          %747 = vmatpush1.bf16.xpose.msra.mxu0 0
          %748 = vmatprep.subr.bf16.mxu0 0
          %749 = vmatpush1.bf16.xpose.msra.mxu0 0
          %750 = vmatprep.subr.bf16.mxu0 0
          %751 = vmatpush1.bf16.xpose.msra.mxu0 0
          %752 = vmatprep.subr.bf16.mxu0 0
          %753 = vmatpush1.bf16.xpose.msra.mxu0 %v736
          %754 = vmatprep.subr.bf16.mxu0 0
          %755 = vmatpush2.bf16.xpose.msra.mxu0 0
          %756 = vmatprep.subr.bf16.mxu0 0
          %757 = vmatpush2.bf16.xpose.msra.mxu0 0
          %758 = vmatprep.subr.bf16.mxu0 0
          %759 = vmatpush2.bf16.xpose.msra.mxu0 0
          %760 = vmatprep.subr.bf16.mxu0 0
          %761 = vmatpush2.bf16.xpose.msra.mxu0 0
          %762 = vmatprep.subr.bf16.mxu0 0
          %763 = vmatpush2.bf16.xpose.msra.mxu0 0
          %764 = vmatprep.subr.bf16.mxu0 0
          %765 = vmatpush2.bf16.xpose.msra.mxu0 0
          %766 = vmatprep.subr.bf16.mxu0 0
          %767 = vmatpush2.bf16.xpose.msra.mxu0 0
          %768 = vmatprep.subr.bf16.mxu0 0
          %769 = vmatpush2.bf16.xpose.msra.mxu0 0
          %770 = vmatprep.mubr.bf16.mxu0 0
          %771 = vmatmul.mubr.bf16.gmra.mxu0 %v733
          %v772 = vpop.f32.mrf.mxu0
          %v773 = vadd.f32 0.0, %v772
          %v774 = vpop.f32.mrf.mxu0
          %v775 = vpop.f32.mrf.mxu0
          %v776 = vpop.f32.mrf.mxu0
          %777 = vdwg.mxu0
          %v778 = vld [vmem:[#allocation2] sm:$0xff]
          %v779 = vld [vmem:[#allocation2 + $0x8] sm:$0xff]
          %v780 = vld [vmem:[#allocation2 + $0x10] sm:$0xff]
          %v781 = vld [vmem:[#allocation2 + $0x18] sm:$0xff]
          %v782 = vsel %vm593, %v635, -inf
          %783 = vmax.xlane.f32.xlu0 %v782
          %v784 = vpop.xlane.xlu0 %783
          %v785 = vsel %vm593, %v681, -inf
          %786 = vmax.xlane.f32.xlu0 %v785
          %v787 = vpop.xlane.xlu0 %786
          %v788 = vsel %vm593, %v727, -inf
          %789 = vmax.xlane.f32.xlu0 %v788
          %v790 = vpop.xlane.xlu0 %789
          %v791 = vsel %vm593, %v773, -inf
          %792 = vmax.xlane.f32.xlu0 %v791
          %v793 = vpop.xlane.xlu0 %792
          %v794 = vmax.f32 %v778, %v784
          %v795 = vmax.f32 %v779, %v787
          %v796 = vmax.f32 %v780, %v790
          %v797 = vmax.f32 %v781, %v793
          %v798 = vsub.f32 %v778, %v794
          %v799 = vsub.f32 %v779, %v795
          %v800 = vsub.f32 %v780, %v796
          %v801 = vsub.f32 %v781, %v797
          %v802 = vmul.f32 %v798, 1.442695
          %v803 = vpow.pop %v802
          %v804 = vmul.f32 %v799, 1.442695
          %v805 = vpow.pop %v804
          %v806 = vmul.f32 %v800, 1.442695
          %v807 = vpow.pop %v806
          %v808 = vmul.f32 %v801, 1.442695
          %v809 = vpow.pop %v808
          %811 = vset.pattern.permute.xlu0 0
          %812 = vperm.xlu0 %811, %v794
          %v813 = vpop.permute.xlu0 %812
          %816 = vset.pattern.permute.xlu0 0
          %817 = vperm.xlu0 %816, %v795
          %v818 = vpop.permute.xlu0 %817
          %821 = vset.pattern.permute.xlu0 0
          %822 = vperm.xlu0 %821, %v796
          %v823 = vpop.permute.xlu0 %822
          %826 = vset.pattern.permute.xlu0 0
          %827 = vperm.xlu0 %826, %v797
          %v828 = vpop.permute.xlu0 %827
          %v830 = vsub.f32 %v635, %v813
          %v831 = vsub.f32 %v681, %v818
          %v832 = vsub.f32 %v727, %v823
          %v833 = vsub.f32 %v773, %v828
          %v834 = vmul.f32 %v830, 1.442695
          %v835 = vpow.pop %v834
          %v836 = vmul.f32 %v831, 1.442695
          %v837 = vpow.pop %v836
          %v838 = vmul.f32 %v832, 1.442695
          %v839 = vpow.pop %v838
          %v840 = vmul.f32 %v833, 1.442695
          %v841 = vpow.pop %v840
          %v842 = vld [vmem:[#allocation3] sm:$0xff]
          %v843 = vld [vmem:[#allocation3 + $0x8] sm:$0xff]
          %v844 = vld [vmem:[#allocation3 + $0x10] sm:$0xff]
          %v845 = vld [vmem:[#allocation3 + $0x18] sm:$0xff]
          %v846 = vmul.f32 %v803, %v842
          %v847 = vmul.f32 %v805, %v843
          %v848 = vmul.f32 %v807, %v844
          %v849 = vmul.f32 %v809, %v845
          %v850 = vsel %vm593, %v835, 0.0
          %851 = vadd.xlane.f32.xlu0 %v850
          %v852 = vpop.xlane.xlu0 %851
          %v853 = vsel %vm593, %v837, 0.0
          %854 = vadd.xlane.f32.xlu0 %v853
          %v855 = vpop.xlane.xlu0 %854
          %v856 = vsel %vm593, %v839, 0.0
          %857 = vadd.xlane.f32.xlu0 %v856
          %v858 = vpop.xlane.xlu0 %857
          %v859 = vsel %vm593, %v841, 0.0
          %860 = vadd.xlane.f32.xlu0 %v859
          %v861 = vpop.xlane.xlu0 %860
          %v862 = vadd.f32 %v846, %v852
          %v863 = vadd.f32 %v847, %v855
          %v864 = vadd.f32 %v848, %v858
          %v865 = vadd.f32 %v849, %v861
          %vm866 = vcmask 7168
          %867 = vst.msk [vmem:[#allocation3] sm:$0xff] %vm866, %v862
          %868 = vst.msk [vmem:[#allocation3 + $0x8] sm:$0xff] %vm866, %v863
          %869 = vst.msk [vmem:[#allocation3 + $0x10] sm:$0xff] %vm866, %v864
          %870 = vst.msk [vmem:[#allocation3 + $0x18] sm:$0xff] %vm866, %v865
          %v871 = vld [vmem:[#allocation4] sm:$0xff]
          %v872 = vld [vmem:[#allocation4 + $0x8] sm:$0xff]
          %v873 = vld [vmem:[#allocation4 + $0x10] sm:$0xff]
          %v874 = vld [vmem:[#allocation4 + $0x18] sm:$0xff]
          %876 = vset.pattern.permute.xlu0 0
          %877 = vperm.xlu0 %876, %v803
          %v878 = vpop.permute.xlu0 %877
          %881 = vset.pattern.permute.xlu0 0
          %882 = vperm.xlu0 %881, %v805
          %v883 = vpop.permute.xlu0 %882
          %886 = vset.pattern.permute.xlu0 0
          %887 = vperm.xlu0 %886, %v807
          %v888 = vpop.permute.xlu0 %887
          %891 = vset.pattern.permute.xlu0 0
          %892 = vperm.xlu0 %891, %v809
          %v893 = vpop.permute.xlu0 %892
          %v895 = vmul.f32 %v878, %v871
          %v896 = vmul.f32 %v883, %v872
          %v897 = vmul.f32 %v888, %v873
          %v898 = vmul.f32 %v893, %v874
          %v899 = vpack.c.bf16 %v835, %v835
          %v900 = vpack.c.bf16 %v837, %v837
          %v901 = vpack.c.bf16 %v839, %v839
          %v902 = vpack.c.bf16 %v841, %v841
          %v903 = vld [vmem:[%s559] sm:$0xf]
          %v904 = vld [vmem:[%s559 + $0x4] sm:$0xf]
          %v905 = vld [vmem:[%s559 + $0x8] sm:$0xf]
          %v906 = vld [vmem:[%s559 + $0xc] sm:$0xf]
          %v908 = vsel %vm593, %v899, 0
          %vm910 = vcmask 1043456
          %v912 = vsel %vm910, %v903, 0
          %914 = vmatprep.subr.bf16.mxu0 0
          %915 = vmatpush1.bf16.msra.mxu0 0
          %916 = vmatprep.subr.bf16.mxu0 0
          %917 = vmatpush1.bf16.msra.mxu0 0
          %918 = vmatprep.subr.bf16.mxu0 0
          %919 = vmatpush1.bf16.msra.mxu0 0
          %920 = vmatprep.subr.bf16.mxu0 0
          %921 = vmatpush1.bf16.msra.mxu0 0
          %922 = vmatprep.subr.bf16.mxu0 0
          %923 = vmatpush1.bf16.msra.mxu0 0
          %924 = vmatprep.subr.bf16.mxu0 0
          %925 = vmatpush1.bf16.msra.mxu0 0
          %926 = vmatprep.subr.bf16.mxu0 0
          %927 = vmatpush1.bf16.msra.mxu0 0
          %928 = vmatprep.subr.bf16.mxu0 0
          %929 = vmatpush1.bf16.msra.mxu0 %v912
          %930 = vmatprep.subr.bf16.mxu0 0
          %931 = vmatpush2.bf16.msra.mxu0 0
          %932 = vmatprep.subr.bf16.mxu0 0
          %933 = vmatpush2.bf16.msra.mxu0 0
          %934 = vmatprep.subr.bf16.mxu0 0
          %935 = vmatpush2.bf16.msra.mxu0 0
          %936 = vmatprep.subr.bf16.mxu0 0
          %937 = vmatpush2.bf16.msra.mxu0 0
          %938 = vmatprep.subr.bf16.mxu0 0
          %939 = vmatpush2.bf16.msra.mxu0 0
          %940 = vmatprep.subr.bf16.mxu0 0
          %941 = vmatpush2.bf16.msra.mxu0 0
          %942 = vmatprep.subr.bf16.mxu0 0
          %943 = vmatpush2.bf16.msra.mxu0 0
          %944 = vmatprep.subr.bf16.mxu0 0
          %945 = vmatpush2.bf16.msra.mxu0 0
          %946 = vmatprep.mubr.bf16.mxu0 0
          %947 = vmatmul.mubr.bf16.gmra.mxu0 %v908
          %v948 = vpop.f32.mrf.mxu0
          %v949 = vadd.f32 0.0, %v948
          %v950 = vpop.f32.mrf.mxu0
          %v951 = vpop.f32.mrf.mxu0
          %v952 = vpop.f32.mrf.mxu0
          %953 = vdwg.mxu0
          %v955 = vsel %vm593, %v900, 0
          %v958 = vsel %vm910, %v904, 0
          %960 = vmatprep.subr.bf16.mxu0 0
          %961 = vmatpush1.bf16.msra.mxu0 0
          %962 = vmatprep.subr.bf16.mxu0 0
          %963 = vmatpush1.bf16.msra.mxu0 0
          %964 = vmatprep.subr.bf16.mxu0 0
          %965 = vmatpush1.bf16.msra.mxu0 0
          %966 = vmatprep.subr.bf16.mxu0 0
          %967 = vmatpush1.bf16.msra.mxu0 0
          %968 = vmatprep.subr.bf16.mxu0 0
          %969 = vmatpush1.bf16.msra.mxu0 0
          %970 = vmatprep.subr.bf16.mxu0 0
          %971 = vmatpush1.bf16.msra.mxu0 0
          %972 = vmatprep.subr.bf16.mxu0 0
          %973 = vmatpush1.bf16.msra.mxu0 0
          %974 = vmatprep.subr.bf16.mxu0 0
          %975 = vmatpush1.bf16.msra.mxu0 %v958
          %976 = vmatprep.subr.bf16.mxu0 0
          %977 = vmatpush2.bf16.msra.mxu0 0
          %978 = vmatprep.subr.bf16.mxu0 0
          %979 = vmatpush2.bf16.msra.mxu0 0
          %980 = vmatprep.subr.bf16.mxu0 0
          %981 = vmatpush2.bf16.msra.mxu0 0
          %982 = vmatprep.subr.bf16.mxu0 0
          %983 = vmatpush2.bf16.msra.mxu0 0
          %984 = vmatprep.subr.bf16.mxu0 0
          %985 = vmatpush2.bf16.msra.mxu0 0
          %986 = vmatprep.subr.bf16.mxu0 0
          %987 = vmatpush2.bf16.msra.mxu0 0
          %988 = vmatprep.subr.bf16.mxu0 0
          %989 = vmatpush2.bf16.msra.mxu0 0
          %990 = vmatprep.subr.bf16.mxu0 0
          %991 = vmatpush2.bf16.msra.mxu0 0
          %992 = vmatprep.mubr.bf16.mxu0 0
          %993 = vmatmul.mubr.bf16.gmra.mxu0 %v955
          %v994 = vpop.f32.mrf.mxu0
          %v995 = vadd.f32 0.0, %v994
          %v996 = vpop.f32.mrf.mxu0
          %v997 = vpop.f32.mrf.mxu0
          %v998 = vpop.f32.mrf.mxu0
          %999 = vdwg.mxu0
          %v1001 = vsel %vm593, %v901, 0
          %v1004 = vsel %vm910, %v905, 0
          %1006 = vmatprep.subr.bf16.mxu0 0
          %1007 = vmatpush1.bf16.msra.mxu0 0
          %1008 = vmatprep.subr.bf16.mxu0 0
          %1009 = vmatpush1.bf16.msra.mxu0 0
          %1010 = vmatprep.subr.bf16.mxu0 0
          %1011 = vmatpush1.bf16.msra.mxu0 0
          %1012 = vmatprep.subr.bf16.mxu0 0
          %1013 = vmatpush1.bf16.msra.mxu0 0
          %1014 = vmatprep.subr.bf16.mxu0 0
          %1015 = vmatpush1.bf16.msra.mxu0 0
          %1016 = vmatprep.subr.bf16.mxu0 0
          %1017 = vmatpush1.bf16.msra.mxu0 0
          %1018 = vmatprep.subr.bf16.mxu0 0
          %1019 = vmatpush1.bf16.msra.mxu0 0
          %1020 = vmatprep.subr.bf16.mxu0 0
          %1021 = vmatpush1.bf16.msra.mxu0 %v1004
          %1022 = vmatprep.subr.bf16.mxu0 0
          %1023 = vmatpush2.bf16.msra.mxu0 0
          %1024 = vmatprep.subr.bf16.mxu0 0
          %1025 = vmatpush2.bf16.msra.mxu0 0
          %1026 = vmatprep.subr.bf16.mxu0 0
          %1027 = vmatpush2.bf16.msra.mxu0 0
          %1028 = vmatprep.subr.bf16.mxu0 0
          %1029 = vmatpush2.bf16.msra.mxu0 0
          %1030 = vmatprep.subr.bf16.mxu0 0
          %1031 = vmatpush2.bf16.msra.mxu0 0
          %1032 = vmatprep.subr.bf16.mxu0 0
          %1033 = vmatpush2.bf16.msra.mxu0 0
          %1034 = vmatprep.subr.bf16.mxu0 0
          %1035 = vmatpush2.bf16.msra.mxu0 0
          %1036 = vmatprep.subr.bf16.mxu0 0
          %1037 = vmatpush2.bf16.msra.mxu0 0
          %1038 = vmatprep.mubr.bf16.mxu0 0
          %1039 = vmatmul.mubr.bf16.gmra.mxu0 %v1001
          %v1040 = vpop.f32.mrf.mxu0
          %v1041 = vadd.f32 0.0, %v1040
          %v1042 = vpop.f32.mrf.mxu0
          %v1043 = vpop.f32.mrf.mxu0
          %v1044 = vpop.f32.mrf.mxu0
          %1045 = vdwg.mxu0
          %v1047 = vsel %vm593, %v902, 0
          %v1050 = vsel %vm910, %v906, 0
          %1052 = vmatprep.subr.bf16.mxu0 0
          %1053 = vmatpush1.bf16.msra.mxu0 0
          %1054 = vmatprep.subr.bf16.mxu0 0
          %1055 = vmatpush1.bf16.msra.mxu0 0
          %1056 = vmatprep.subr.bf16.mxu0 0
          %1057 = vmatpush1.bf16.msra.mxu0 0
          %1058 = vmatprep.subr.bf16.mxu0 0
          %1059 = vmatpush1.bf16.msra.mxu0 0
          %1060 = vmatprep.subr.bf16.mxu0 0
          %1061 = vmatpush1.bf16.msra.mxu0 0
          %1062 = vmatprep.subr.bf16.mxu0 0
          %1063 = vmatpush1.bf16.msra.mxu0 0
          %1064 = vmatprep.subr.bf16.mxu0 0
          %1065 = vmatpush1.bf16.msra.mxu0 0
          %1066 = vmatprep.subr.bf16.mxu0 0
          %1067 = vmatpush1.bf16.msra.mxu0 %v1050
          %1068 = vmatprep.subr.bf16.mxu0 0
          %1069 = vmatpush2.bf16.msra.mxu0 0
          %1070 = vmatprep.subr.bf16.mxu0 0
          %1071 = vmatpush2.bf16.msra.mxu0 0
          %1072 = vmatprep.subr.bf16.mxu0 0
          %1073 = vmatpush2.bf16.msra.mxu0 0
          %1074 = vmatprep.subr.bf16.mxu0 0
          %1075 = vmatpush2.bf16.msra.mxu0 0
          %1076 = vmatprep.subr.bf16.mxu0 0
          %1077 = vmatpush2.bf16.msra.mxu0 0
          %1078 = vmatprep.subr.bf16.mxu0 0
          %1079 = vmatpush2.bf16.msra.mxu0 0
          %1080 = vmatprep.subr.bf16.mxu0 0
          %1081 = vmatpush2.bf16.msra.mxu0 0
          %1082 = vmatprep.subr.bf16.mxu0 0
          %1083 = vmatpush2.bf16.msra.mxu0 0
          %1084 = vmatprep.mubr.bf16.mxu0 0
          %1085 = vmatmul.mubr.bf16.gmra.mxu0 %v1047
          %v1086 = vpop.f32.mrf.mxu0
          %v1087 = vadd.f32 0.0, %v1086
          %v1088 = vpop.f32.mrf.mxu0
          %v1089 = vpop.f32.mrf.mxu0
          %v1090 = vpop.f32.mrf.mxu0
          %1091 = vdwg.mxu0
          %v1092 = vadd.f32 %v895, %v949
          %v1093 = vadd.f32 %v896, %v995
          %v1094 = vadd.f32 %v897, %v1041
          %v1095 = vadd.f32 %v898, %v1087
          %1096 = vst.msk [vmem:[#allocation4] sm:$0xff] %vm593, %v1092
          %1097 = vst.msk [vmem:[#allocation4 + $0x8] sm:$0xff] %vm593, %v1093
          %1098 = vst.msk [vmem:[#allocation4 + $0x10] sm:$0xff] %vm593, %v1094
          %1099 = vst.msk [vmem:[#allocation4 + $0x18] sm:$0xff] %vm593, %v1095
          %1100 = vst.msk [vmem:[#allocation2] sm:$0xff] %vm866, %v794
          %1101 = vst.msk [vmem:[#allocation2 + $0x8] sm:$0xff] %vm866, %v795
          %1102 = vst.msk [vmem:[#allocation2 + $0x10] sm:$0xff] %vm866, %v796
          %1103 = vst.msk [vmem:[#allocation2 + $0x18] sm:$0xff] %vm866, %v797
        $region76: #{_encoder_layer_impl.3} parent=67 // pred_fallthru
          _
        %p1104 = scmp.eq.s32.totalorder %s33, %s32
        // Predicated region
        $region77: #{_encoder_layer_impl.3} parent=67 // pred_check
          %p1105 = pneg %p1104
        $region78: #{_encoder_layer_impl.3} parent=67 // pred_check_branch
          %1107 = sbr.rel (%p1105) target = $region80
        $region79: #{_encoder_layer_impl.3} parent=67 // pred_region
          %v1108 = vld [vmem:[%s537] sm:$0xf]
          %v1109 = vld [vmem:[%s537 + $0x4] sm:$0xf]
          %v1110 = vld [vmem:[%s537 + $0x8] sm:$0xf]
          %v1111 = vld [vmem:[%s537 + $0xc] sm:$0xf]
          %v1112 = vld [vmem:[%s547] sm:$0xf]
          %v1113 = vld [vmem:[%s547 + $0x4] sm:$0xf]
          %v1114 = vld [vmem:[%s547 + $0x8] sm:$0xf]
          %v1115 = vld [vmem:[%s547 + $0xc] sm:$0xf]
          %vm1116 = vcmask 64512
          %v1118 = vsel %vm1116, %v1108, 0
          %v1121 = vsel %vm1116, %v1112, 0
          %1123 = vmatprep.subr.bf16.mxu0 0
          %1124 = vmatpush1.bf16.xpose.msra.mxu0 0
          %1125 = vmatprep.subr.bf16.mxu0 0
          %1126 = vmatpush1.bf16.xpose.msra.mxu0 0
          %1127 = vmatprep.subr.bf16.mxu0 0
          %1128 = vmatpush1.bf16.xpose.msra.mxu0 0
          %1129 = vmatprep.subr.bf16.mxu0 0
          %1130 = vmatpush1.bf16.xpose.msra.mxu0 0
          %1131 = vmatprep.subr.bf16.mxu0 0
          %1132 = vmatpush1.bf16.xpose.msra.mxu0 0
          %1133 = vmatprep.subr.bf16.mxu0 0
          %1134 = vmatpush1.bf16.xpose.msra.mxu0 0
          %1135 = vmatprep.subr.bf16.mxu0 0
          %1136 = vmatpush1.bf16.xpose.msra.mxu0 0
          %1137 = vmatprep.subr.bf16.mxu0 0
          %1138 = vmatpush1.bf16.xpose.msra.mxu0 %v1121
          %1139 = vmatprep.subr.bf16.mxu0 0
          %1140 = vmatpush2.bf16.xpose.msra.mxu0 0
          %1141 = vmatprep.subr.bf16.mxu0 0
          %1142 = vmatpush2.bf16.xpose.msra.mxu0 0
          %1143 = vmatprep.subr.bf16.mxu0 0
          %1144 = vmatpush2.bf16.xpose.msra.mxu0 0
          %1145 = vmatprep.subr.bf16.mxu0 0
          %1146 = vmatpush2.bf16.xpose.msra.mxu0 0
          %1147 = vmatprep.subr.bf16.mxu0 0
          %1148 = vmatpush2.bf16.xpose.msra.mxu0 0
          %1149 = vmatprep.subr.bf16.mxu0 0
          %1150 = vmatpush2.bf16.xpose.msra.mxu0 0
          %1151 = vmatprep.subr.bf16.mxu0 0
          %1152 = vmatpush2.bf16.xpose.msra.mxu0 0
          %1153 = vmatprep.subr.bf16.mxu0 0
          %1154 = vmatpush2.bf16.xpose.msra.mxu0 0
          %1155 = vmatprep.mubr.bf16.mxu0 0
          %1156 = vmatmul.mubr.bf16.gmra.mxu0 %v1118
          %v1157 = vpop.f32.mrf.mxu0
          %v1158 = vadd.f32 0.0, %v1157
          %v1159 = vpop.f32.mrf.mxu0
          %v1160 = vpop.f32.mrf.mxu0
          %v1161 = vpop.f32.mrf.mxu0
          %1162 = vdwg.mxu0
          %v1164 = vsel %vm1116, %v1109, 0
          %v1167 = vsel %vm1116, %v1113, 0
          %1169 = vmatprep.subr.bf16.mxu0 0
          %1170 = vmatpush1.bf16.xpose.msra.mxu0 0
          %1171 = vmatprep.subr.bf16.mxu0 0
          %1172 = vmatpush1.bf16.xpose.msra.mxu0 0
          %1173 = vmatprep.subr.bf16.mxu0 0
          %1174 = vmatpush1.bf16.xpose.msra.mxu0 0
          %1175 = vmatprep.subr.bf16.mxu0 0
          %1176 = vmatpush1.bf16.xpose.msra.mxu0 0
          %1177 = vmatprep.subr.bf16.mxu0 0
          %1178 = vmatpush1.bf16.xpose.msra.mxu0 0
          %1179 = vmatprep.subr.bf16.mxu0 0
          %1180 = vmatpush1.bf16.xpose.msra.mxu0 0
          %1181 = vmatprep.subr.bf16.mxu0 0
          %1182 = vmatpush1.bf16.xpose.msra.mxu0 0
          %1183 = vmatprep.subr.bf16.mxu0 0
          %1184 = vmatpush1.bf16.xpose.msra.mxu0 %v1167
          %1185 = vmatprep.subr.bf16.mxu0 0
          %1186 = vmatpush2.bf16.xpose.msra.mxu0 0
          %1187 = vmatprep.subr.bf16.mxu0 0
          %1188 = vmatpush2.bf16.xpose.msra.mxu0 0
          %1189 = vmatprep.subr.bf16.mxu0 0
          %1190 = vmatpush2.bf16.xpose.msra.mxu0 0
          %1191 = vmatprep.subr.bf16.mxu0 0
          %1192 = vmatpush2.bf16.xpose.msra.mxu0 0
          %1193 = vmatprep.subr.bf16.mxu0 0
          %1194 = vmatpush2.bf16.xpose.msra.mxu0 0
          %1195 = vmatprep.subr.bf16.mxu0 0
          %1196 = vmatpush2.bf16.xpose.msra.mxu0 0
          %1197 = vmatprep.subr.bf16.mxu0 0
          %1198 = vmatpush2.bf16.xpose.msra.mxu0 0
          %1199 = vmatprep.subr.bf16.mxu0 0
          %1200 = vmatpush2.bf16.xpose.msra.mxu0 0
          %1201 = vmatprep.mubr.bf16.mxu0 0
          %1202 = vmatmul.mubr.bf16.gmra.mxu0 %v1164
          %v1203 = vpop.f32.mrf.mxu0
          %v1204 = vadd.f32 0.0, %v1203
          %v1205 = vpop.f32.mrf.mxu0
          %v1206 = vpop.f32.mrf.mxu0
          %v1207 = vpop.f32.mrf.mxu0
          %1208 = vdwg.mxu0
          %v1210 = vsel %vm1116, %v1110, 0
          %v1213 = vsel %vm1116, %v1114, 0
          %1215 = vmatprep.subr.bf16.mxu0 0
          %1216 = vmatpush1.bf16.xpose.msra.mxu0 0
          %1217 = vmatprep.subr.bf16.mxu0 0
          %1218 = vmatpush1.bf16.xpose.msra.mxu0 0
          %1219 = vmatprep.subr.bf16.mxu0 0
          %1220 = vmatpush1.bf16.xpose.msra.mxu0 0
          %1221 = vmatprep.subr.bf16.mxu0 0
          %1222 = vmatpush1.bf16.xpose.msra.mxu0 0
          %1223 = vmatprep.subr.bf16.mxu0 0
          %1224 = vmatpush1.bf16.xpose.msra.mxu0 0
          %1225 = vmatprep.subr.bf16.mxu0 0
          %1226 = vmatpush1.bf16.xpose.msra.mxu0 0
          %1227 = vmatprep.subr.bf16.mxu0 0
          %1228 = vmatpush1.bf16.xpose.msra.mxu0 0
          %1229 = vmatprep.subr.bf16.mxu0 0
          %1230 = vmatpush1.bf16.xpose.msra.mxu0 %v1213
          %1231 = vmatprep.subr.bf16.mxu0 0
          %1232 = vmatpush2.bf16.xpose.msra.mxu0 0
          %1233 = vmatprep.subr.bf16.mxu0 0
          %1234 = vmatpush2.bf16.xpose.msra.mxu0 0
          %1235 = vmatprep.subr.bf16.mxu0 0
          %1236 = vmatpush2.bf16.xpose.msra.mxu0 0
          %1237 = vmatprep.subr.bf16.mxu0 0
          %1238 = vmatpush2.bf16.xpose.msra.mxu0 0
          %1239 = vmatprep.subr.bf16.mxu0 0
          %1240 = vmatpush2.bf16.xpose.msra.mxu0 0
          %1241 = vmatprep.subr.bf16.mxu0 0
          %1242 = vmatpush2.bf16.xpose.msra.mxu0 0
          %1243 = vmatprep.subr.bf16.mxu0 0
          %1244 = vmatpush2.bf16.xpose.msra.mxu0 0
          %1245 = vmatprep.subr.bf16.mxu0 0
          %1246 = vmatpush2.bf16.xpose.msra.mxu0 0
          %1247 = vmatprep.mubr.bf16.mxu0 0
          %1248 = vmatmul.mubr.bf16.gmra.mxu0 %v1210
          %v1249 = vpop.f32.mrf.mxu0
          %v1250 = vadd.f32 0.0, %v1249
          %v1251 = vpop.f32.mrf.mxu0
          %v1252 = vpop.f32.mrf.mxu0
          %v1253 = vpop.f32.mrf.mxu0
          %1254 = vdwg.mxu0
          %v1256 = vsel %vm1116, %v1111, 0
          %v1259 = vsel %vm1116, %v1115, 0
          %1261 = vmatprep.subr.bf16.mxu0 0
          %1262 = vmatpush1.bf16.xpose.msra.mxu0 0
          %1263 = vmatprep.subr.bf16.mxu0 0
          %1264 = vmatpush1.bf16.xpose.msra.mxu0 0
          %1265 = vmatprep.subr.bf16.mxu0 0
          %1266 = vmatpush1.bf16.xpose.msra.mxu0 0
          %1267 = vmatprep.subr.bf16.mxu0 0
          %1268 = vmatpush1.bf16.xpose.msra.mxu0 0
          %1269 = vmatprep.subr.bf16.mxu0 0
          %1270 = vmatpush1.bf16.xpose.msra.mxu0 0
          %1271 = vmatprep.subr.bf16.mxu0 0
          %1272 = vmatpush1.bf16.xpose.msra.mxu0 0
          %1273 = vmatprep.subr.bf16.mxu0 0
          %1274 = vmatpush1.bf16.xpose.msra.mxu0 0
          %1275 = vmatprep.subr.bf16.mxu0 0
          %1276 = vmatpush1.bf16.xpose.msra.mxu0 %v1259
          %1277 = vmatprep.subr.bf16.mxu0 0
          %1278 = vmatpush2.bf16.xpose.msra.mxu0 0
          %1279 = vmatprep.subr.bf16.mxu0 0
          %1280 = vmatpush2.bf16.xpose.msra.mxu0 0
          %1281 = vmatprep.subr.bf16.mxu0 0
          %1282 = vmatpush2.bf16.xpose.msra.mxu0 0
          %1283 = vmatprep.subr.bf16.mxu0 0
          %1284 = vmatpush2.bf16.xpose.msra.mxu0 0
          %1285 = vmatprep.subr.bf16.mxu0 0
          %1286 = vmatpush2.bf16.xpose.msra.mxu0 0
          %1287 = vmatprep.subr.bf16.mxu0 0
          %1288 = vmatpush2.bf16.xpose.msra.mxu0 0
          %1289 = vmatprep.subr.bf16.mxu0 0
          %1290 = vmatpush2.bf16.xpose.msra.mxu0 0
          %1291 = vmatprep.subr.bf16.mxu0 0
          %1292 = vmatpush2.bf16.xpose.msra.mxu0 0
          %1293 = vmatprep.mubr.bf16.mxu0 0
          %1294 = vmatmul.mubr.bf16.gmra.mxu0 %v1256
          %v1295 = vpop.f32.mrf.mxu0
          %v1296 = vadd.f32 0.0, %v1295
          %v1297 = vpop.f32.mrf.mxu0
          %v1298 = vpop.f32.mrf.mxu0
          %v1299 = vpop.f32.mrf.mxu0
          %1300 = vdwg.mxu0
          %v1301 = vlaneseq
          %v1302 = vshrl.u32 %v1301, 7
          %v1303 = vlaneseq
          %v1304 = vand.u32 %v1303, 127
          %vm1305 = vcmp.le.s32.totalorder %v1304, %v1302
          %v1306 = vsel %vm1305, 1, 0
          %vm1307 = vcmp.eq.s32.totalorder %v1306, 1
          %v1308 = vsel %vm1307, %v1158, -1e+30
          %v1309 = vsel %vm1307, %v1204, -1e+30
          %v1310 = vsel %vm1307, %v1250, -1e+30
          %v1311 = vsel %vm1307, %v1296, -1e+30
          %v1312 = vld [vmem:[#allocation2] sm:$0xff]
          %v1313 = vld [vmem:[#allocation2 + $0x8] sm:$0xff]
          %v1314 = vld [vmem:[#allocation2 + $0x10] sm:$0xff]
          %v1315 = vld [vmem:[#allocation2 + $0x18] sm:$0xff]
          %v1316 = vsel %vm1116, %v1308, -inf
          %1317 = vmax.xlane.f32.xlu0 %v1316
          %v1318 = vpop.xlane.xlu0 %1317
          %v1319 = vsel %vm1116, %v1309, -inf
          %1320 = vmax.xlane.f32.xlu0 %v1319
          %v1321 = vpop.xlane.xlu0 %1320
          %v1322 = vsel %vm1116, %v1310, -inf
          %1323 = vmax.xlane.f32.xlu0 %v1322
          %v1324 = vpop.xlane.xlu0 %1323
          %v1325 = vsel %vm1116, %v1311, -inf
          %1326 = vmax.xlane.f32.xlu0 %v1325
          %v1327 = vpop.xlane.xlu0 %1326
          %v1328 = vmax.f32 %v1312, %v1318
          %v1329 = vmax.f32 %v1313, %v1321
          %v1330 = vmax.f32 %v1314, %v1324
          %v1331 = vmax.f32 %v1315, %v1327
          %v1332 = vsub.f32 %v1312, %v1328
          %v1333 = vsub.f32 %v1313, %v1329
          %v1334 = vsub.f32 %v1314, %v1330
          %v1335 = vsub.f32 %v1315, %v1331
          %v1336 = vmul.f32 %v1332, 1.442695
          %v1337 = vpow.pop %v1336
          %v1338 = vmul.f32 %v1333, 1.442695
          %v1339 = vpow.pop %v1338
          %v1340 = vmul.f32 %v1334, 1.442695
          %v1341 = vpow.pop %v1340
          %v1342 = vmul.f32 %v1335, 1.442695
          %v1343 = vpow.pop %v1342
          %1345 = vset.pattern.permute.xlu0 0
          %1346 = vperm.xlu0 %1345, %v1328
          %v1347 = vpop.permute.xlu0 %1346
          %1350 = vset.pattern.permute.xlu0 0
          %1351 = vperm.xlu0 %1350, %v1329
          %v1352 = vpop.permute.xlu0 %1351
          %1355 = vset.pattern.permute.xlu0 0
          %1356 = vperm.xlu0 %1355, %v1330
          %v1357 = vpop.permute.xlu0 %1356
          %1360 = vset.pattern.permute.xlu0 0
          %1361 = vperm.xlu0 %1360, %v1331
          %v1362 = vpop.permute.xlu0 %1361
          %v1364 = vsub.f32 %v1308, %v1347
          %v1365 = vsub.f32 %v1309, %v1352
          %v1366 = vsub.f32 %v1310, %v1357
          %v1367 = vsub.f32 %v1311, %v1362
          %v1368 = vmul.f32 %v1364, 1.442695
          %v1369 = vpow.pop %v1368
          %v1370 = vmul.f32 %v1365, 1.442695
          %v1371 = vpow.pop %v1370
          %v1372 = vmul.f32 %v1366, 1.442695
          %v1373 = vpow.pop %v1372
          %v1374 = vmul.f32 %v1367, 1.442695
          %v1375 = vpow.pop %v1374
          %v1376 = vld [vmem:[#allocation3] sm:$0xff]
          %v1377 = vld [vmem:[#allocation3 + $0x8] sm:$0xff]
          %v1378 = vld [vmem:[#allocation3 + $0x10] sm:$0xff]
          %v1379 = vld [vmem:[#allocation3 + $0x18] sm:$0xff]
          %v1380 = vmul.f32 %v1337, %v1376
          %v1381 = vmul.f32 %v1339, %v1377
          %v1382 = vmul.f32 %v1341, %v1378
          %v1383 = vmul.f32 %v1343, %v1379
          %v1384 = vsel %vm1116, %v1369, 0.0
          %1385 = vadd.xlane.f32.xlu0 %v1384
          %v1386 = vpop.xlane.xlu0 %1385
          %v1387 = vsel %vm1116, %v1371, 0.0
          %1388 = vadd.xlane.f32.xlu0 %v1387
          %v1389 = vpop.xlane.xlu0 %1388
          %v1390 = vsel %vm1116, %v1373, 0.0
          %1391 = vadd.xlane.f32.xlu0 %v1390
          %v1392 = vpop.xlane.xlu0 %1391
          %v1393 = vsel %vm1116, %v1375, 0.0
          %1394 = vadd.xlane.f32.xlu0 %v1393
          %v1395 = vpop.xlane.xlu0 %1394
          %v1396 = vadd.f32 %v1380, %v1386
          %v1397 = vadd.f32 %v1381, %v1389
          %v1398 = vadd.f32 %v1382, %v1392
          %v1399 = vadd.f32 %v1383, %v1395
          %vm1400 = vcmask 7168
          %1401 = vst.msk [vmem:[#allocation3] sm:$0xff] %vm1400, %v1396
          %1402 = vst.msk [vmem:[#allocation3 + $0x8] sm:$0xff] %vm1400, %v1397
          %1403 = vst.msk [vmem:[#allocation3 + $0x10] sm:$0xff] %vm1400, %v1398
          %1404 = vst.msk [vmem:[#allocation3 + $0x18] sm:$0xff] %vm1400, %v1399
          %v1405 = vld [vmem:[#allocation4] sm:$0xff]
          %v1406 = vld [vmem:[#allocation4 + $0x8] sm:$0xff]
          %v1407 = vld [vmem:[#allocation4 + $0x10] sm:$0xff]
          %v1408 = vld [vmem:[#allocation4 + $0x18] sm:$0xff]
          %1410 = vset.pattern.permute.xlu0 0
          %1411 = vperm.xlu0 %1410, %v1337
          %v1412 = vpop.permute.xlu0 %1411
          %1415 = vset.pattern.permute.xlu0 0
          %1416 = vperm.xlu0 %1415, %v1339
          %v1417 = vpop.permute.xlu0 %1416
          %1420 = vset.pattern.permute.xlu0 0
          %1421 = vperm.xlu0 %1420, %v1341
          %v1422 = vpop.permute.xlu0 %1421
          %1425 = vset.pattern.permute.xlu0 0
          %1426 = vperm.xlu0 %1425, %v1343
          %v1427 = vpop.permute.xlu0 %1426
          %v1429 = vmul.f32 %v1412, %v1405
          %v1430 = vmul.f32 %v1417, %v1406
          %v1431 = vmul.f32 %v1422, %v1407
          %v1432 = vmul.f32 %v1427, %v1408
          %v1433 = vpack.c.bf16 %v1369, %v1369
          %v1434 = vpack.c.bf16 %v1371, %v1371
          %v1435 = vpack.c.bf16 %v1373, %v1373
          %v1436 = vpack.c.bf16 %v1375, %v1375
          %v1437 = vld [vmem:[%s559] sm:$0xf]
          %v1438 = vld [vmem:[%s559 + $0x4] sm:$0xf]
          %v1439 = vld [vmem:[%s559 + $0x8] sm:$0xf]
          %v1440 = vld [vmem:[%s559 + $0xc] sm:$0xf]
          %v1442 = vsel %vm1116, %v1433, 0
          %vm1444 = vcmask 1043456
          %v1446 = vsel %vm1444, %v1437, 0
          %1448 = vmatprep.subr.bf16.mxu0 0
          %1449 = vmatpush1.bf16.msra.mxu0 0
          %1450 = vmatprep.subr.bf16.mxu0 0
          %1451 = vmatpush1.bf16.msra.mxu0 0
          %1452 = vmatprep.subr.bf16.mxu0 0
          %1453 = vmatpush1.bf16.msra.mxu0 0
          %1454 = vmatprep.subr.bf16.mxu0 0
          %1455 = vmatpush1.bf16.msra.mxu0 0
          %1456 = vmatprep.subr.bf16.mxu0 0
          %1457 = vmatpush1.bf16.msra.mxu0 0
          %1458 = vmatprep.subr.bf16.mxu0 0
          %1459 = vmatpush1.bf16.msra.mxu0 0
          %1460 = vmatprep.subr.bf16.mxu0 0
          %1461 = vmatpush1.bf16.msra.mxu0 0
          %1462 = vmatprep.subr.bf16.mxu0 0
          %1463 = vmatpush1.bf16.msra.mxu0 %v1446
          %1464 = vmatprep.subr.bf16.mxu0 0
          %1465 = vmatpush2.bf16.msra.mxu0 0
          %1466 = vmatprep.subr.bf16.mxu0 0
          %1467 = vmatpush2.bf16.msra.mxu0 0
          %1468 = vmatprep.subr.bf16.mxu0 0
          %1469 = vmatpush2.bf16.msra.mxu0 0
          %1470 = vmatprep.subr.bf16.mxu0 0
          %1471 = vmatpush2.bf16.msra.mxu0 0
          %1472 = vmatprep.subr.bf16.mxu0 0
          %1473 = vmatpush2.bf16.msra.mxu0 0
          %1474 = vmatprep.subr.bf16.mxu0 0
          %1475 = vmatpush2.bf16.msra.mxu0 0
          %1476 = vmatprep.subr.bf16.mxu0 0
          %1477 = vmatpush2.bf16.msra.mxu0 0
          %1478 = vmatprep.subr.bf16.mxu0 0
          %1479 = vmatpush2.bf16.msra.mxu0 0
          %1480 = vmatprep.mubr.bf16.mxu0 0
          %1481 = vmatmul.mubr.bf16.gmra.mxu0 %v1442
          %v1482 = vpop.f32.mrf.mxu0
          %v1483 = vadd.f32 0.0, %v1482
          %v1484 = vpop.f32.mrf.mxu0
          %v1485 = vpop.f32.mrf.mxu0
          %v1486 = vpop.f32.mrf.mxu0
          %1487 = vdwg.mxu0
          %v1489 = vsel %vm1116, %v1434, 0
          %v1492 = vsel %vm1444, %v1438, 0
          %1494 = vmatprep.subr.bf16.mxu0 0
          %1495 = vmatpush1.bf16.msra.mxu0 0
          %1496 = vmatprep.subr.bf16.mxu0 0
          %1497 = vmatpush1.bf16.msra.mxu0 0
          %1498 = vmatprep.subr.bf16.mxu0 0
          %1499 = vmatpush1.bf16.msra.mxu0 0
          %1500 = vmatprep.subr.bf16.mxu0 0
          %1501 = vmatpush1.bf16.msra.mxu0 0
          %1502 = vmatprep.subr.bf16.mxu0 0
          %1503 = vmatpush1.bf16.msra.mxu0 0
          %1504 = vmatprep.subr.bf16.mxu0 0
          %1505 = vmatpush1.bf16.msra.mxu0 0
          %1506 = vmatprep.subr.bf16.mxu0 0
          %1507 = vmatpush1.bf16.msra.mxu0 0
          %1508 = vmatprep.subr.bf16.mxu0 0
          %1509 = vmatpush1.bf16.msra.mxu0 %v1492
          %1510 = vmatprep.subr.bf16.mxu0 0
          %1511 = vmatpush2.bf16.msra.mxu0 0
          %1512 = vmatprep.subr.bf16.mxu0 0
          %1513 = vmatpush2.bf16.msra.mxu0 0
          %1514 = vmatprep.subr.bf16.mxu0 0
          %1515 = vmatpush2.bf16.msra.mxu0 0
          %1516 = vmatprep.subr.bf16.mxu0 0
          %1517 = vmatpush2.bf16.msra.mxu0 0
          %1518 = vmatprep.subr.bf16.mxu0 0
          %1519 = vmatpush2.bf16.msra.mxu0 0
          %1520 = vmatprep.subr.bf16.mxu0 0
          %1521 = vmatpush2.bf16.msra.mxu0 0
          %1522 = vmatprep.subr.bf16.mxu0 0
          %1523 = vmatpush2.bf16.msra.mxu0 0
          %1524 = vmatprep.subr.bf16.mxu0 0
          %1525 = vmatpush2.bf16.msra.mxu0 0
          %1526 = vmatprep.mubr.bf16.mxu0 0
          %1527 = vmatmul.mubr.bf16.gmra.mxu0 %v1489
          %v1528 = vpop.f32.mrf.mxu0
          %v1529 = vadd.f32 0.0, %v1528
          %v1530 = vpop.f32.mrf.mxu0
          %v1531 = vpop.f32.mrf.mxu0
          %v1532 = vpop.f32.mrf.mxu0
          %1533 = vdwg.mxu0
          %v1535 = vsel %vm1116, %v1435, 0
          %v1538 = vsel %vm1444, %v1439, 0
          %1540 = vmatprep.subr.bf16.mxu0 0
          %1541 = vmatpush1.bf16.msra.mxu0 0
          %1542 = vmatprep.subr.bf16.mxu0 0
          %1543 = vmatpush1.bf16.msra.mxu0 0
          %1544 = vmatprep.subr.bf16.mxu0 0
          %1545 = vmatpush1.bf16.msra.mxu0 0
          %1546 = vmatprep.subr.bf16.mxu0 0
          %1547 = vmatpush1.bf16.msra.mxu0 0
          %1548 = vmatprep.subr.bf16.mxu0 0
          %1549 = vmatpush1.bf16.msra.mxu0 0
          %1550 = vmatprep.subr.bf16.mxu0 0
          %1551 = vmatpush1.bf16.msra.mxu0 0
          %1552 = vmatprep.subr.bf16.mxu0 0
          %1553 = vmatpush1.bf16.msra.mxu0 0
          %1554 = vmatprep.subr.bf16.mxu0 0
          %1555 = vmatpush1.bf16.msra.mxu0 %v1538
          %1556 = vmatprep.subr.bf16.mxu0 0
          %1557 = vmatpush2.bf16.msra.mxu0 0
          %1558 = vmatprep.subr.bf16.mxu0 0
          %1559 = vmatpush2.bf16.msra.mxu0 0
          %1560 = vmatprep.subr.bf16.mxu0 0
          %1561 = vmatpush2.bf16.msra.mxu0 0
          %1562 = vmatprep.subr.bf16.mxu0 0
          %1563 = vmatpush2.bf16.msra.mxu0 0
          %1564 = vmatprep.subr.bf16.mxu0 0
          %1565 = vmatpush2.bf16.msra.mxu0 0
          %1566 = vmatprep.subr.bf16.mxu0 0
          %1567 = vmatpush2.bf16.msra.mxu0 0
          %1568 = vmatprep.subr.bf16.mxu0 0
          %1569 = vmatpush2.bf16.msra.mxu0 0
          %1570 = vmatprep.subr.bf16.mxu0 0
          %1571 = vmatpush2.bf16.msra.mxu0 0
          %1572 = vmatprep.mubr.bf16.mxu0 0
          %1573 = vmatmul.mubr.bf16.gmra.mxu0 %v1535
          %v1574 = vpop.f32.mrf.mxu0
          %v1575 = vadd.f32 0.0, %v1574
          %v1576 = vpop.f32.mrf.mxu0
          %v1577 = vpop.f32.mrf.mxu0
          %v1578 = vpop.f32.mrf.mxu0
          %1579 = vdwg.mxu0
          %v1581 = vsel %vm1116, %v1436, 0
          %v1584 = vsel %vm1444, %v1440, 0
          %1586 = vmatprep.subr.bf16.mxu0 0
          %1587 = vmatpush1.bf16.msra.mxu0 0
          %1588 = vmatprep.subr.bf16.mxu0 0
          %1589 = vmatpush1.bf16.msra.mxu0 0
          %1590 = vmatprep.subr.bf16.mxu0 0
          %1591 = vmatpush1.bf16.msra.mxu0 0
          %1592 = vmatprep.subr.bf16.mxu0 0
          %1593 = vmatpush1.bf16.msra.mxu0 0
          %1594 = vmatprep.subr.bf16.mxu0 0
          %1595 = vmatpush1.bf16.msra.mxu0 0
          %1596 = vmatprep.subr.bf16.mxu0 0
          %1597 = vmatpush1.bf16.msra.mxu0 0
          %1598 = vmatprep.subr.bf16.mxu0 0
          %1599 = vmatpush1.bf16.msra.mxu0 0
          %1600 = vmatprep.subr.bf16.mxu0 0
          %1601 = vmatpush1.bf16.msra.mxu0 %v1584
          %1602 = vmatprep.subr.bf16.mxu0 0
          %1603 = vmatpush2.bf16.msra.mxu0 0
          %1604 = vmatprep.subr.bf16.mxu0 0
          %1605 = vmatpush2.bf16.msra.mxu0 0
          %1606 = vmatprep.subr.bf16.mxu0 0
          %1607 = vmatpush2.bf16.msra.mxu0 0
          %1608 = vmatprep.subr.bf16.mxu0 0
          %1609 = vmatpush2.bf16.msra.mxu0 0
          %1610 = vmatprep.subr.bf16.mxu0 0
          %1611 = vmatpush2.bf16.msra.mxu0 0
          %1612 = vmatprep.subr.bf16.mxu0 0
          %1613 = vmatpush2.bf16.msra.mxu0 0
          %1614 = vmatprep.subr.bf16.mxu0 0
          %1615 = vmatpush2.bf16.msra.mxu0 0
          %1616 = vmatprep.subr.bf16.mxu0 0
          %1617 = vmatpush2.bf16.msra.mxu0 0
          %1618 = vmatprep.mubr.bf16.mxu0 0
          %1619 = vmatmul.mubr.bf16.gmra.mxu0 %v1581
          %v1620 = vpop.f32.mrf.mxu0
          %v1621 = vadd.f32 0.0, %v1620
          %v1622 = vpop.f32.mrf.mxu0
          %v1623 = vpop.f32.mrf.mxu0
          %v1624 = vpop.f32.mrf.mxu0
          %1625 = vdwg.mxu0
          %v1626 = vadd.f32 %v1429, %v1483
          %v1627 = vadd.f32 %v1430, %v1529
          %v1628 = vadd.f32 %v1431, %v1575
          %v1629 = vadd.f32 %v1432, %v1621
          %1630 = vst.msk [vmem:[#allocation4] sm:$0xff] %vm1116, %v1626
          %1631 = vst.msk [vmem:[#allocation4 + $0x8] sm:$0xff] %vm1116, %v1627
          %1632 = vst.msk [vmem:[#allocation4 + $0x10] sm:$0xff] %vm1116, %v1628
          %1633 = vst.msk [vmem:[#allocation4 + $0x18] sm:$0xff] %vm1116, %v1629
          %1634 = vst.msk [vmem:[#allocation2] sm:$0xff] %vm1400, %v1328
          %1635 = vst.msk [vmem:[#allocation2 + $0x8] sm:$0xff] %vm1400, %v1329
          %1636 = vst.msk [vmem:[#allocation2 + $0x10] sm:$0xff] %vm1400, %v1330
          %1637 = vst.msk [vmem:[#allocation2 + $0x18] sm:$0xff] %vm1400, %v1331
        $region80: #{_encoder_layer_impl.3} parent=67 // pred_fallthru
          _
        // Predicated region
        $region81: #{_encoder_layer_impl.3} parent=67 // pred_check
          %p1638 = pneg %p563
        $region82: #{_encoder_layer_impl.3} parent=67 // pred_check_branch
          %1640 = sbr.rel (%p1638) target = $region84
        $region83: #{_encoder_layer_impl.3} parent=67 // pred_region
          %v1641 = vld [vmem:[#allocation4] sm:$0xff]
          %v1642 = vld [vmem:[#allocation4 + $0x8] sm:$0xff]
          %v1643 = vld [vmem:[#allocation4 + $0x10] sm:$0xff]
          %v1644 = vld [vmem:[#allocation4 + $0x18] sm:$0xff]
          %v1645 = vld [vmem:[#allocation3] sm:$0xff]
          %v1646 = vld [vmem:[#allocation3 + $0x8] sm:$0xff]
          %v1647 = vld [vmem:[#allocation3 + $0x10] sm:$0xff]
          %v1648 = vld [vmem:[#allocation3 + $0x18] sm:$0xff]
          %v1649 = vrcp.pop %v1645
          %v1650 = vrcp.pop %v1646
          %v1651 = vrcp.pop %v1647
          %v1652 = vrcp.pop %v1648
          %1654 = vset.pattern.permute.xlu0 0
          %1655 = vperm.xlu0 %1654, %v1649
          %v1656 = vpop.permute.xlu0 %1655
          %1659 = vset.pattern.permute.xlu0 0
          %1660 = vperm.xlu0 %1659, %v1650
          %v1661 = vpop.permute.xlu0 %1660
          %1664 = vset.pattern.permute.xlu0 0
          %1665 = vperm.xlu0 %1664, %v1651
          %v1666 = vpop.permute.xlu0 %1665
          %1669 = vset.pattern.permute.xlu0 0
          %1670 = vperm.xlu0 %1669, %v1652
          %v1671 = vpop.permute.xlu0 %1670
          %v1673 = vmul.f32 %v1641, %v1656
          %v1674 = vmul.f32 %v1642, %v1661
          %v1675 = vmul.f32 %v1643, %v1666
          %v1676 = vmul.f32 %v1644, %v1671
          %v1677 = vcombine.low %v1673, %v1675
          %v1678 = vcombine.high %v1673, %v1675
          %v1680 = vunpack.c.l.s4 1983009808
          %v1681 = vunpack.c.0.s8 %v1680
          %v1682 = vlaneseq
          %v1683 = vshrl.u32 %v1682, 7
          %v1684 = vsub.s32 %v1681, %v1683
          %v1685 = vrot.slane %v1677, %v1684
          %v1687 = vunpack.c.l.s4 1983009808
          %v1688 = vunpack.c.0.s8 %v1687
          %v1689 = vlaneseq
          %v1690 = vshrl.u32 %v1689, 7
          %v1691 = vsub.s32 %v1688, %v1690
          %v1692 = vrot.slane %v1678, %v1691
          %v1693 = vcombine.low %v1674, %v1676
          %v1694 = vcombine.high %v1674, %v1676
          %v1696 = vunpack.c.l.s4 1983009808
          %v1697 = vunpack.c.0.s8 %v1696
          %v1698 = vlaneseq
          %v1699 = vshrl.u32 %v1698, 7
          %v1700 = vsub.s32 %v1697, %v1699
          %v1701 = vrot.slane %v1693, %v1700
          %v1703 = vunpack.c.l.s4 1983009808
          %v1704 = vunpack.c.0.s8 %v1703
          %v1705 = vlaneseq
          %v1706 = vshrl.u32 %v1705, 7
          %v1707 = vsub.s32 %v1704, %v1706
          %v1708 = vrot.slane %v1694, %v1707
          %v1709 = vcombine.low %v1685, %v1701
          %v1710 = vcombine.high %v1685, %v1701
          %v1712 = vunpack.c.l.s4 1934713408
          %v1713 = vunpack.c.0.s8 %v1712
          %v1714 = vlaneseq
          %v1715 = vshrl.u32 %v1714, 7
          %v1716 = vsub.s32 %v1713, %v1715
          %v1717 = vrot.slane %v1709, %v1716
          %v1719 = vunpack.c.l.s4 1934713408
          %v1720 = vunpack.c.0.s8 %v1719
          %v1721 = vlaneseq
          %v1722 = vshrl.u32 %v1721, 7
          %v1723 = vsub.s32 %v1720, %v1722
          %v1724 = vrot.slane %v1710, %v1723
          %v1725 = vcombine.low %v1692, %v1708
          %v1726 = vcombine.high %v1692, %v1708
          %v1728 = vunpack.c.l.s4 1934713408
          %v1729 = vunpack.c.0.s8 %v1728
          %v1730 = vlaneseq
          %v1731 = vshrl.u32 %v1730, 7
          %v1732 = vsub.s32 %v1729, %v1731
          %v1733 = vrot.slane %v1725, %v1732
          %v1735 = vunpack.c.l.s4 1934713408
          %v1736 = vunpack.c.0.s8 %v1735
          %v1737 = vlaneseq
          %v1738 = vshrl.u32 %v1737, 7
          %v1739 = vsub.s32 %v1736, %v1738
          %v1740 = vrot.slane %v1726, %v1739
          %v1741 = vcombine.high %v1717, 0.0
          %v1742 = vcombine.high %v1724, 0.0
          %v1743 = vcombine.high %v1733, 0.0
          %v1744 = vcombine.high %v1740, 0.0
          %v1745 = vcombine.low %v1717, %v1724
          %v1747 = vunpack.c.l.s4 1983009808
          %v1748 = vunpack.c.0.s8 %v1747
          %v1749 = vlaneseq
          %v1750 = vshrl.u32 %v1749, 7
          %v1751 = vsub.s32 %v1748, %v1750
          %v1752 = vrot.slane %v1745, %v1751
          %v1753 = vcombine.low %v1741, %v1742
          %v1755 = vunpack.c.l.s4 1983009808
          %v1756 = vunpack.c.0.s8 %v1755
          %v1757 = vlaneseq
          %v1758 = vshrl.u32 %v1757, 7
          %v1759 = vsub.s32 %v1756, %v1758
          %v1760 = vrot.slane %v1753, %v1759
          %v1761 = vcombine.low %v1733, %v1740
          %v1763 = vunpack.c.l.s4 1983009808
          %v1764 = vunpack.c.0.s8 %v1763
          %v1765 = vlaneseq
          %v1766 = vshrl.u32 %v1765, 7
          %v1767 = vsub.s32 %v1764, %v1766
          %v1768 = vrot.slane %v1761, %v1767
          %v1769 = vcombine.low %v1743, %v1744
          %v1771 = vunpack.c.l.s4 1983009808
          %v1772 = vunpack.c.0.s8 %v1771
          %v1773 = vlaneseq
          %v1774 = vshrl.u32 %v1773, 7
          %v1775 = vsub.s32 %v1772, %v1774
          %v1776 = vrot.slane %v1769, %v1775
          %v1777 = vcombine.low %v1752, %v1760
          %v1778 = vcombine.high %v1752, %v1760
          %v1780 = vunpack.c.l.s4 1934713408
          %v1781 = vunpack.c.0.s8 %v1780
          %v1782 = vlaneseq
          %v1783 = vshrl.u32 %v1782, 7
          %v1784 = vsub.s32 %v1781, %v1783
          %v1785 = vrot.slane %v1777, %v1784
          %v1787 = vunpack.c.l.s4 1934713408
          %v1788 = vunpack.c.0.s8 %v1787
          %v1789 = vlaneseq
          %v1790 = vshrl.u32 %v1789, 7
          %v1791 = vsub.s32 %v1788, %v1790
          %v1792 = vrot.slane %v1778, %v1791
          %v1793 = vcombine.low %v1768, %v1776
          %v1794 = vcombine.high %v1768, %v1776
          %v1796 = vunpack.c.l.s4 1934713408
          %v1797 = vunpack.c.0.s8 %v1796
          %v1798 = vlaneseq
          %v1799 = vshrl.u32 %v1798, 7
          %v1800 = vsub.s32 %v1797, %v1799
          %v1801 = vrot.slane %v1793, %v1800
          %v1803 = vunpack.c.l.s4 1934713408
          %v1804 = vunpack.c.0.s8 %v1803
          %v1805 = vlaneseq
          %v1806 = vshrl.u32 %v1805, 7
          %v1807 = vsub.s32 %v1804, %v1806
          %v1808 = vrot.slane %v1794, %v1807
          %v1809 = vcombine.low %v1785, %v1801
          %v1810 = vcombine.high %v1785, %v1801
          %v1811 = vcombine.low %v1792, %v1808
          %v1812 = vcombine.high %v1792, %v1808
          %1814 = vrot.lane.b32.xlu0 %v1810, 8
          %v1815 = vpop.permute.xlu0 %1814
          %1818 = vrot.lane.b32.xlu0 %v1811, 16
          %v1819 = vpop.permute.xlu0 %1818
          %1822 = vrot.lane.b32.xlu0 %v1812, 24
          %v1823 = vpop.permute.xlu0 %1822
          %vm1825 = vcmask 64512
          %v1826 = vsel %vm1825, %v1809, %v1815
          %vm1827 = vcmask 130048
          %v1828 = vsel %vm1827, %v1826, %v1819
          %vm1829 = vcmask 195584
          %v1830 = vsel %vm1829, %v1828, %v1823
          %v1831 = vpack.c.bf16 %v1830, %v1830
          %v1832 = vld [vmem:[%s4] sm:$0xf]
          %v1833 = vld [vmem:[%s4 + $0x4] sm:$0xf]
          %v1834 = vld [vmem:[%s4 + $0x8] sm:$0xf]
          %v1835 = vld [vmem:[%s4 + $0xc] sm:$0xf]
          %v1836 = vld [vmem:[%s5] sm:$0x1]
          %v1838 = vlaneseq
          %v1839 = vshrl.u32 %v1838, 7
          %v1840 = vsub.s32 0, %v1839
          %v1841 = vrot.slane %v1836, %v1840
          %v1847 = vunpack.c.l.b16 %v1832
          %v1848 = vunpack.c.l.b16 %v1833
          %v1849 = vunpack.c.l.b16 %v1834
          %v1850 = vunpack.c.l.b16 %v1835
          %v1851 = vpack.c.b16 %v1848, %v1847
          %v1852 = vpack.c.b16 %v1850, %v1849
          %vm1855 = vcmask 261120
          %v1857 = vsel %vm1855, %v1831, 0
          %1859 = vmatprep.subr.bf16.mxu0 0
          %1860 = vmatpush1.bf16.msra.mxu0 0
          %1861 = vmatprep.subr.bf16.mxu0 0
          %1862 = vmatpush1.bf16.msra.mxu0 0
          %1863 = vmatprep.subr.bf16.mxu0 0
          %1864 = vmatpush1.bf16.msra.mxu0 0
          %1865 = vmatprep.subr.bf16.mxu0 0
          %1866 = vmatpush1.bf16.msra.mxu0 0
          %1867 = vmatprep.subr.bf16.mxu0 0
          %1868 = vmatpush1.bf16.msra.mxu0 0
          %1869 = vmatprep.subr.bf16.mxu0 0
          %1870 = vmatpush1.bf16.msra.mxu0 0
          %1871 = vmatprep.subr.bf16.mxu0 0
          %1872 = vmatpush1.bf16.msra.mxu0 %v1852
          %1873 = vmatprep.subr.bf16.mxu0 0
          %1874 = vmatpush1.bf16.msra.mxu0 %v1851
          %1875 = vmatprep.subr.bf16.mxu0 0
          %1876 = vmatpush2.bf16.msra.mxu0 0
          %1877 = vmatprep.subr.bf16.mxu0 0
          %1878 = vmatpush2.bf16.msra.mxu0 0
          %1879 = vmatprep.subr.bf16.mxu0 0
          %1880 = vmatpush2.bf16.msra.mxu0 0
          %1881 = vmatprep.subr.bf16.mxu0 0
          %1882 = vmatpush2.bf16.msra.mxu0 0
          %1883 = vmatprep.subr.bf16.mxu0 0
          %1884 = vmatpush2.bf16.msra.mxu0 0
          %1885 = vmatprep.subr.bf16.mxu0 0
          %1886 = vmatpush2.bf16.msra.mxu0 0
          %1887 = vmatprep.subr.bf16.mxu0 0
          %1888 = vmatpush2.bf16.msra.mxu0 0
          %1889 = vmatprep.subr.bf16.mxu0 0
          %1890 = vmatpush2.bf16.msra.mxu0 0
          %1891 = vmatprep.mubr.bf16.mxu0 0
          %1892 = vmatmul.mubr.bf16.gmra.mxu0 %v1857
          %v1893 = vpop.f32.mrf.mxu0
          %v1894 = vadd.f32 %v1841, %v1893
          %v1895 = vpop.f32.mrf.mxu0
          %v1896 = vpop.f32.mrf.mxu0
          %v1897 = vpop.f32.mrf.mxu0
          %1898 = vdwg.mxu0
          %v1899 = vld [vmem:[%s529] sm:$0xff]
          %v1900 = vadd.f32 %v1899, %v1894
          %v1901 = vld [vmem:[%s6] sm:$0x1]
          %v1902 = vld [vmem:[%s7] sm:$0x1]
          %v1903 = vsel %vm1855, %v1900, 0.0
          %1904 = vadd.xlane.f32.xlu0 %v1903
          %v1905 = vpop.xlane.xlu0 %1904
          %v1906 = vrcp.pop 32.0
          %v1907 = vmul.f32 %v1905, %v1906
          %v1908 = vsub.f32 %v1900, %v1907
          %v1909 = vmul.f32 %v1908, %v1908
          %v1910 = vsel %vm1855, %v1909, 0.0
          %1911 = vadd.xlane.f32.xlu0 %v1910
          %v1912 = vpop.xlane.xlu0 %1911
          %v1913 = vmul.f32 %v1912, %v1906
          %v1914 = vadd.f32 %v1913, 1e-05
          %v1915 = vrsqrt.pop %v1914
          %v1916 = vmul.f32 %v1908, %v1915
          %v1918 = vlaneseq
          %v1919 = vshrl.u32 %v1918, 7
          %v1920 = vsub.s32 0, %v1919
          %v1921 = vrot.slane %v1901, %v1920
          %v1923 = vmul.f32 %v1916, %v1921
          %v1925 = vlaneseq
          %v1926 = vshrl.u32 %v1925, 7
          %v1927 = vsub.s32 0, %v1926
          %v1928 = vrot.slane %v1902, %v1927
          %v1930 = vadd.f32 %v1923, %v1928
          %v1931 = vpack.c.bf16 %v1930, %v1930
          %v1932 = vld [vmem:[%s8] sm:$0xf]
          %v1933 = vld [vmem:[%s8 + $0x4] sm:$0xf]
          %v1934 = vld [vmem:[%s8 + $0x8] sm:$0xf]
          %v1935 = vld [vmem:[%s8 + $0xc] sm:$0xf]
          %v1936 = vld [vmem:[%s9] sm:$0x1]
          %v1938 = vlaneseq
          %v1939 = vshrl.u32 %v1938, 7
          %v1940 = vsub.s32 0, %v1939
          %v1941 = vrot.slane %v1936, %v1940
          %v1947 = vunpack.c.l.b16 %v1932
          %v1948 = vunpack.c.l.b16 %v1933
          %v1949 = vunpack.c.l.b16 %v1934
          %v1950 = vunpack.c.l.b16 %v1935
          %v1951 = vpack.c.b16 %v1948, %v1947
          %v1952 = vpack.c.b16 %v1950, %v1949
          %v1956 = vsel %vm1855, %v1931, 0
          %1958 = vmatprep.subr.bf16.mxu0 0
          %1959 = vmatpush1.bf16.msra.mxu0 0
          %1960 = vmatprep.subr.bf16.mxu0 0
          %1961 = vmatpush1.bf16.msra.mxu0 0
          %1962 = vmatprep.subr.bf16.mxu0 0
          %1963 = vmatpush1.bf16.msra.mxu0 0
          %1964 = vmatprep.subr.bf16.mxu0 0
          %1965 = vmatpush1.bf16.msra.mxu0 0
          %1966 = vmatprep.subr.bf16.mxu0 0
          %1967 = vmatpush1.bf16.msra.mxu0 0
          %1968 = vmatprep.subr.bf16.mxu0 0
          %1969 = vmatpush1.bf16.msra.mxu0 0
          %1970 = vmatprep.subr.bf16.mxu0 0
          %1971 = vmatpush1.bf16.msra.mxu0 %v1952
          %1972 = vmatprep.subr.bf16.mxu0 0
          %1973 = vmatpush1.bf16.msra.mxu0 %v1951
          %1974 = vmatprep.subr.bf16.mxu0 0
          %1975 = vmatpush2.bf16.msra.mxu0 0
          %1976 = vmatprep.subr.bf16.mxu0 0
          %1977 = vmatpush2.bf16.msra.mxu0 0
          %1978 = vmatprep.subr.bf16.mxu0 0
          %1979 = vmatpush2.bf16.msra.mxu0 0
          %1980 = vmatprep.subr.bf16.mxu0 0
          %1981 = vmatpush2.bf16.msra.mxu0 0
          %1982 = vmatprep.subr.bf16.mxu0 0
          %1983 = vmatpush2.bf16.msra.mxu0 0
          %1984 = vmatprep.subr.bf16.mxu0 0
          %1985 = vmatpush2.bf16.msra.mxu0 0
          %1986 = vmatprep.subr.bf16.mxu0 0
          %1987 = vmatpush2.bf16.msra.mxu0 0
          %1988 = vmatprep.subr.bf16.mxu0 0
          %1989 = vmatpush2.bf16.msra.mxu0 0
          %1990 = vmatprep.mubr.bf16.mxu0 0
          %1991 = vmatmul.mubr.bf16.gmra.mxu0 %v1956
          %v1992 = vpop.f32.mrf.mxu0
          %v1993 = vadd.f32 %v1941, %v1992
          %v1994 = vpop.f32.mrf.mxu0
          %v1995 = vpop.f32.mrf.mxu0
          %v1996 = vpop.f32.mrf.mxu0
          %1997 = vdwg.mxu0
          %v1998 = vmax.f32 %v1993, 0.0
          %v1999 = vpack.c.bf16 %v1998, %v1998
          %v2000 = vld [vmem:[%s10] sm:$0xf]
          %v2001 = vld [vmem:[%s10 + $0x4] sm:$0xf]
          %v2002 = vld [vmem:[%s10 + $0x8] sm:$0xf]
          %v2003 = vld [vmem:[%s10 + $0xc] sm:$0xf]
          %v2004 = vld [vmem:[%s10 + $0x10] sm:$0xf]
          %v2005 = vld [vmem:[%s10 + $0x14] sm:$0xf]
          %v2006 = vld [vmem:[%s10 + $0x18] sm:$0xf]
          %v2007 = vld [vmem:[%s10 + $0x1c] sm:$0xf]
          %v2008 = vld [vmem:[%s11] sm:$0x1]
          %v2010 = vlaneseq
          %v2011 = vshrl.u32 %v2010, 7
          %v2012 = vsub.s32 0, %v2011
          %v2013 = vrot.slane %v2008, %v2012
          %v2023 = vunpack.c.l.b16 %v2000
          %v2024 = vunpack.c.l.b16 %v2001
          %v2025 = vunpack.c.l.b16 %v2002
          %v2026 = vunpack.c.l.b16 %v2003
          %v2027 = vunpack.c.l.b16 %v2004
          %v2028 = vunpack.c.l.b16 %v2005
          %v2029 = vunpack.c.l.b16 %v2006
          %v2030 = vunpack.c.l.b16 %v2007
          %v2031 = vpack.c.b16 %v2024, %v2023
          %v2032 = vpack.c.b16 %v2026, %v2025
          %v2033 = vpack.c.b16 %v2028, %v2027
          %v2034 = vpack.c.b16 %v2030, %v2029
          %vm2039 = vcmask 523264
          %v2041 = vsel %vm2039, %v1999, 0
          %2043 = vmatprep.subr.bf16.mxu0 0
          %2044 = vmatpush1.bf16.msra.mxu0 0
          %2045 = vmatprep.subr.bf16.mxu0 0
          %2046 = vmatpush1.bf16.msra.mxu0 0
          %2047 = vmatprep.subr.bf16.mxu0 0
          %2048 = vmatpush1.bf16.msra.mxu0 0
          %2049 = vmatprep.subr.bf16.mxu0 0
          %2050 = vmatpush1.bf16.msra.mxu0 0
          %2051 = vmatprep.subr.bf16.mxu0 0
          %2052 = vmatpush1.bf16.msra.mxu0 %v2034
          %2053 = vmatprep.subr.bf16.mxu0 0
          %2054 = vmatpush1.bf16.msra.mxu0 %v2033
          %2055 = vmatprep.subr.bf16.mxu0 0
          %2056 = vmatpush1.bf16.msra.mxu0 %v2032
          %2057 = vmatprep.subr.bf16.mxu0 0
          %2058 = vmatpush1.bf16.msra.mxu0 %v2031
          %2059 = vmatprep.subr.bf16.mxu0 0
          %2060 = vmatpush2.bf16.msra.mxu0 0
          %2061 = vmatprep.subr.bf16.mxu0 0
          %2062 = vmatpush2.bf16.msra.mxu0 0
          %2063 = vmatprep.subr.bf16.mxu0 0
          %2064 = vmatpush2.bf16.msra.mxu0 0
          %2065 = vmatprep.subr.bf16.mxu0 0
          %2066 = vmatpush2.bf16.msra.mxu0 0
          %2067 = vmatprep.subr.bf16.mxu0 0
          %2068 = vmatpush2.bf16.msra.mxu0 0
          %2069 = vmatprep.subr.bf16.mxu0 0
          %2070 = vmatpush2.bf16.msra.mxu0 0
          %2071 = vmatprep.subr.bf16.mxu0 0
          %2072 = vmatpush2.bf16.msra.mxu0 0
          %2073 = vmatprep.subr.bf16.mxu0 0
          %2074 = vmatpush2.bf16.msra.mxu0 0
          %2075 = vmatprep.mubr.bf16.mxu0 0
          %2076 = vmatmul.mubr.bf16.gmra.mxu0 %v2041
          %v2077 = vpop.f32.mrf.mxu0
          %v2078 = vadd.f32 %v2013, %v2077
          %v2079 = vpop.f32.mrf.mxu0
          %v2080 = vpop.f32.mrf.mxu0
          %v2081 = vpop.f32.mrf.mxu0
          %2082 = vdwg.mxu0
          %v2083 = vadd.f32 %v1900, %v2078
          %2084 = vst.msk [vmem:[%s522] sm:$0xff] %vm1855, %v2083
        $region84: #{_encoder_layer_impl.3} parent=67 // pred_fallthru
          _
        %s2085 = sand.u32 %s343, 1
        %s2086 = scalar_lea.sflag [#allocation6], %s2085
        %s2087 = sand.u32 %s343, 1
        %s2088 = smul.addr %s2087, 8
        %s2089 = scalar_lea.vmem [#allocation5], %s2088
        // Predicated region
        $region85: #{_encoder_layer_impl.3} parent=67 // pred_check
          %p2090 = pneg %p353
        $region86: #{_encoder_layer_impl.3} parent=67 // pred_check_branch
          %2092 = sbr.rel (%p2090) target = $region88
        $region87: #{_encoder_layer_impl.3} parent=67 // pred_region
          %s2094 = ssub.s32 128, 128
          %2095 = vsyncadd %s2086, %s2094
          %s2096 = sadd.s32 %s32, %s31
          %s2097 = smul.addr %s2096, 128
          %s2098 = scalar_lea.hbm %s12, %s2097
          %s2100 = sshll.u32 %s2089, 4
          %s2101 = int_to_ptr.vmem [resolvable:$true] %s2100
          %2103 = dma.vmem_to_hbm [thread:$0]  %s2101, 128, %s2098, %s2086
        $region88: #{_encoder_layer_impl.3} parent=67 // pred_fallthru
          _
      $region68: #{_encoder_layer_impl.3} parent=5 // pred_fallthru
        _
      %p2104 = scmp.le.s32.totalorder 2, %s21
      // Predicated region
      $region89: #{_encoder_layer_impl.3} parent=5 // pred_check
        %p2105 = pneg %p2104
      $region90: #{_encoder_layer_impl.3} parent=5 // pred_check_branch
        %2107 = sbr.rel (%p2105) target = $region92
      $region91: #{_encoder_layer_impl.3} parent=5 // pred_region
        %s2108 = ssub.s32 %s21, 2
        // Predicated region
        $region93: #{_encoder_layer_impl.3} parent=91 // pred_check
          %p2109 = pneg %p359
        $region94: #{_encoder_layer_impl.3} parent=91 // pred_check_branch
          %2111 = sbr.rel (%p2109) target = $region96
        $region95: #{_encoder_layer_impl.3} parent=91 // pred_region
          %s2112 = sand.u32 %s344, 1
          %s2113 = scalar_lea.sflag [#allocation6], %s2112
          %s2114 = sand.u32 %s344, 1
          %s2115 = smul.addr %s2114, 8
          %s2116 = scalar_lea.vmem [#allocation5], %s2115
          %2117 = dma.done %s2113, 128
        $region96: #{_encoder_layer_impl.3} parent=91 // pred_fallthru
          _
      $region92: #{_encoder_layer_impl.3} parent=5 // pred_fallthru
        _
    $region6: #{_encoder_layer_impl.3} parent=1 // loop_footer
      %s25 = sadd.s32 1, %s21
    $region7: #{_encoder_layer_impl.3} parent=1 // loop_footer_branch
      %20 = sbr.rel target = $region3
    $region8: #{_encoder_layer_impl.3} parent=1 // loop_exit
      _
    %2118 = vsyncpa [#allocation6], 1
    %s2119 = scalar_lea.sflag [#allocation6], 1
    %2120 = vsyncpa %s2119, 1

// kernel: _encoder_layer_impl.2
$region0: #{_encoder_layer_impl.2}
  #allocation0 [shape = 'u32[]', space=smem, size = 0x4, offset = 0x4, fixed_abs, tag = 'smem constant byte address 0x4 - core index']
  #allocation1 [shape = 'u32[144,128]{1,0:T(1,128)}', space=vmem, size = 0x12000, scoped, tag = 'internal scratch']
  %s0 = inlined_call_operand.vmem [shape: f32[2,8,32], index: 0, kind: input, shape index: {}]
  %s1 = inlined_call_operand.vmem [shape: f32[8,32], index: 1, kind: input, shape index: {}]
  %s2 = inlined_call_operand.vmem [shape: f32[1,32], index: 2, kind: input, shape index: {}]
  %s3 = inlined_call_operand.vmem [shape: f32[1,32], index: 3, kind: input, shape index: {}]
  %s4 = inlined_call_operand.vmem [shape: bf16[32,32], index: 4, kind: input, shape index: {}]
  %s5 = inlined_call_operand.vmem [shape: bf16[32,32], index: 5, kind: input, shape index: {}]
  %s6 = inlined_call_operand.vmem [shape: bf16[32,32], index: 6, kind: input, shape index: {}]
  %s7 = inlined_call_operand.vmem [shape: f32[1,32], index: 7, kind: input, shape index: {}]
  %s8 = inlined_call_operand.vmem [shape: f32[1,32], index: 8, kind: input, shape index: {}]
  %s9 = inlined_call_operand.vmem [shape: f32[1,32], index: 9, kind: input, shape index: {}]
  %s10 = inlined_call_operand.vmem [shape: bf16[2,4,8,8], index: 10, kind: output, shape index: {0}]
  %s11 = inlined_call_operand.vmem [shape: bf16[2,4,8,8], index: 11, kind: output, shape index: {1}]
  %s12 = inlined_call_operand.vmem [shape: bf16[2,4,8,8], index: 12, kind: output, shape index: {2}]
  %13 = xla_tuple %s10, %s11, %s12
  %s14 = sld [smem:[#allocation0]]
  $region89: #{_encoder_layer_impl.2} parent=0
    _
  %s16 = ssub.s32 1, %s14
  %s17 = scalar_select 0, %s16, %s14
  loop: start=0, step=1, limit=4
  $region2: #{_encoder_layer_impl.2} parent=0 // loop_pre_header
    _
  $region3: #{_encoder_layer_impl.2} parent=0 // loop_header
    %s19 = sphi 0, %s23
    %p20 = scmp.ge.s32.totalorder %s19, 4
    %s26 = sphi 0, %s38
    %s27 = sphi 0, %s34
    %s28 = sphi 0, %s26
    %s29 = sphi 0, %s27
    %s30 = sphi 0, %s28
    %s31 = sphi 0, %s29
    %s43 = sphi 0, %s45
    %s46 = sphi 0, %s43
    %s47 = sphi 0, %s46
    %s63 = sphi 0, %s47
    %s69 = sphi 0, %s71
    %s72 = sphi 0, %s69
    %s73 = sphi 0, %s72
    %s89 = sphi 0, %s73
    %s93 = sphi 0, %s93
    %s95 = sphi 0, %s93
    %s96 = sphi 0, %s95
    %s110 = sphi 0, %s96
    %s114 = sphi 0, %s114
    %s116 = sphi 0, %s114
    %s117 = sphi 0, %s116
    %s131 = sphi 0, %s117
    %s135 = sphi 0, %s135
    %s137 = sphi 0, %s135
    %s138 = sphi 0, %s137
    %s152 = sphi 0, %s138
    %s156 = sphi 0, %s156
    %s158 = sphi 0, %s156
    %s159 = sphi 0, %s158
    %s173 = sphi 0, %s159
    %s177 = sphi 0, %s177
    %s179 = sphi 0, %s177
    %s180 = sphi 0, %s179
    %s194 = sphi 0, %s180
    %s198 = sphi 0, %s198
    %s200 = sphi 0, %s198
    %s201 = sphi 0, %s200
    %s215 = sphi 0, %s201
    %s219 = sphi 0, %s219
    %s221 = sphi 0, %s219
    %s222 = sphi 0, %s221
    %s236 = sphi 0, %s222
    %s240 = sphi 0, %s240
    %s242 = sphi 0, %s240
    %s243 = sphi 0, %s242
    %s257 = sphi 0, %s243
    %s265 = sphi 0, %s267
    %s268 = sphi 0, %s265
    %s269 = sphi 0, %s268
    %s285 = sphi 0, %s269
    %s293 = sphi 0, %s295
    %s296 = sphi 0, %s293
    %s297 = sphi 0, %s296
    %s313 = sphi 0, %s297
    %s321 = sphi 0, %s323
    %s324 = sphi 0, %s321
    %s325 = sphi 0, %s324
    %s341 = sphi 0, %s325
  $region4: #{_encoder_layer_impl.2} parent=0 // loop_header_branch
    %22 = sbr.rel (%p20) target = $region8
  $region5: #{_encoder_layer_impl.2} parent=0 // loop_body
    %s24 = ssub.s32 %s19, 1
    %s25 = ssub.s32 %s19, 2
    %s32 = sadd.s32 1, %s27
    %p33 = scmp.ge.s32.totalorder %s32, 1
    %s34 = scalar_select %p33, 0, %s32
    %s35 = sadd.s32 1, %s26
    %s36 = scalar_select %p33, %s35, %s26
    %p37 = scmp.ge.s32.totalorder %s36, 2
    %s38 = scalar_select %p37, 0, %s36
    %s39 = ssub.s32 %s26, %s38
    %s40 = ssub.s32 %s27, %s34
    %s41 = sor.u32 %s39, %s40
    %p42 = scmp.eq.s32.totalorder %s41, 0
    %s44 = sadd.s32 %s43, 1
    %s45 = scalar_select %p42, %s43, %s44
    %p48 = pneg %p42
    %p49 = scmp.eq.s32.totalorder %s19, 1
    %p50 = por %p48, %p49
    %p51 = scmp.ne.s32.totalorder %s43, %s46
    %p52 = scmp.eq.s32.totalorder %s19, 0
    %p53 = por %p51, %p52
    %p54 = scmp.ne.s32.totalorder %s43, %s46
    %p55 = scmp.eq.s32.totalorder %s24, 1
    %p56 = por %p54, %p55
    %p57 = scmp.ne.s32.totalorder %s46, %s47
    %p58 = scmp.eq.s32.totalorder %s24, 0
    %p59 = por %p57, %p58
    %p60 = scmp.ne.s32.totalorder %s46, %s47
    %p61 = scmp.eq.s32.totalorder %s25, 1
    %p62 = por %p60, %p61
    %p64 = scmp.ne.s32.totalorder %s47, %s63
    %p65 = scmp.eq.s32.totalorder %s25, 0
    %p66 = por %p64, %p65
    %s67 = ssub.s32 %s27, %s34
    %p68 = scmp.eq.s32.totalorder %s67, 0
    %s70 = sadd.s32 %s69, 1
    %s71 = scalar_select %p68, %s69, %s70
    %p74 = pneg %p68
    %p75 = scmp.eq.s32.totalorder %s19, 1
    %p76 = por %p74, %p75
    %p77 = scmp.ne.s32.totalorder %s69, %s72
    %p78 = scmp.eq.s32.totalorder %s19, 0
    %p79 = por %p77, %p78
    %p80 = scmp.ne.s32.totalorder %s69, %s72
    %p81 = scmp.eq.s32.totalorder %s24, 1
    %p82 = por %p80, %p81
    %p83 = scmp.ne.s32.totalorder %s72, %s73
    %p84 = scmp.eq.s32.totalorder %s24, 0
    %p85 = por %p83, %p84
    %p86 = scmp.ne.s32.totalorder %s72, %s73
    %p87 = scmp.eq.s32.totalorder %s25, 1
    %p88 = por %p86, %p87
    %p90 = scmp.ne.s32.totalorder %s73, %s89
    %p91 = scmp.eq.s32.totalorder %s25, 0
    %p92 = por %p90, %p91
    %s94 = sadd.s32 %s93, 1
    %p97 = scmp.eq.s32.totalorder %s19, 1
    %p98 = scmp.ne.s32.totalorder %s93, %s95
    %p99 = scmp.eq.s32.totalorder %s19, 0
    %p100 = por %p98, %p99
    %p101 = scmp.ne.s32.totalorder %s93, %s95
    %p102 = scmp.eq.s32.totalorder %s24, 1
    %p103 = por %p101, %p102
    %p104 = scmp.ne.s32.totalorder %s95, %s96
    %p105 = scmp.eq.s32.totalorder %s24, 0
    %p106 = por %p104, %p105
    %p107 = scmp.ne.s32.totalorder %s95, %s96
    %p108 = scmp.eq.s32.totalorder %s25, 1
    %p109 = por %p107, %p108
    %p111 = scmp.ne.s32.totalorder %s96, %s110
    %p112 = scmp.eq.s32.totalorder %s25, 0
    %p113 = por %p111, %p112
    %s115 = sadd.s32 %s114, 1
    %p118 = scmp.eq.s32.totalorder %s19, 1
    %p119 = scmp.ne.s32.totalorder %s114, %s116
    %p120 = scmp.eq.s32.totalorder %s19, 0
    %p121 = por %p119, %p120
    %p122 = scmp.ne.s32.totalorder %s114, %s116
    %p123 = scmp.eq.s32.totalorder %s24, 1
    %p124 = por %p122, %p123
    %p125 = scmp.ne.s32.totalorder %s116, %s117
    %p126 = scmp.eq.s32.totalorder %s24, 0
    %p127 = por %p125, %p126
    %p128 = scmp.ne.s32.totalorder %s116, %s117
    %p129 = scmp.eq.s32.totalorder %s25, 1
    %p130 = por %p128, %p129
    %p132 = scmp.ne.s32.totalorder %s117, %s131
    %p133 = scmp.eq.s32.totalorder %s25, 0
    %p134 = por %p132, %p133
    %s136 = sadd.s32 %s135, 1
    %p139 = scmp.eq.s32.totalorder %s19, 1
    %p140 = scmp.ne.s32.totalorder %s135, %s137
    %p141 = scmp.eq.s32.totalorder %s19, 0
    %p142 = por %p140, %p141
    %p143 = scmp.ne.s32.totalorder %s135, %s137
    %p144 = scmp.eq.s32.totalorder %s24, 1
    %p145 = por %p143, %p144
    %p146 = scmp.ne.s32.totalorder %s137, %s138
    %p147 = scmp.eq.s32.totalorder %s24, 0
    %p148 = por %p146, %p147
    %p149 = scmp.ne.s32.totalorder %s137, %s138
    %p150 = scmp.eq.s32.totalorder %s25, 1
    %p151 = por %p149, %p150
    %p153 = scmp.ne.s32.totalorder %s138, %s152
    %p154 = scmp.eq.s32.totalorder %s25, 0
    %p155 = por %p153, %p154
    %s157 = sadd.s32 %s156, 1
    %p160 = scmp.eq.s32.totalorder %s19, 1
    %p161 = scmp.ne.s32.totalorder %s156, %s158
    %p162 = scmp.eq.s32.totalorder %s19, 0
    %p163 = por %p161, %p162
    %p164 = scmp.ne.s32.totalorder %s156, %s158
    %p165 = scmp.eq.s32.totalorder %s24, 1
    %p166 = por %p164, %p165
    %p167 = scmp.ne.s32.totalorder %s158, %s159
    %p168 = scmp.eq.s32.totalorder %s24, 0
    %p169 = por %p167, %p168
    %p170 = scmp.ne.s32.totalorder %s158, %s159
    %p171 = scmp.eq.s32.totalorder %s25, 1
    %p172 = por %p170, %p171
    %p174 = scmp.ne.s32.totalorder %s159, %s173
    %p175 = scmp.eq.s32.totalorder %s25, 0
    %p176 = por %p174, %p175
    %s178 = sadd.s32 %s177, 1
    %p181 = scmp.eq.s32.totalorder %s19, 1
    %p182 = scmp.ne.s32.totalorder %s177, %s179
    %p183 = scmp.eq.s32.totalorder %s19, 0
    %p184 = por %p182, %p183
    %p185 = scmp.ne.s32.totalorder %s177, %s179
    %p186 = scmp.eq.s32.totalorder %s24, 1
    %p187 = por %p185, %p186
    %p188 = scmp.ne.s32.totalorder %s179, %s180
    %p189 = scmp.eq.s32.totalorder %s24, 0
    %p190 = por %p188, %p189
    %p191 = scmp.ne.s32.totalorder %s179, %s180
    %p192 = scmp.eq.s32.totalorder %s25, 1
    %p193 = por %p191, %p192
    %p195 = scmp.ne.s32.totalorder %s180, %s194
    %p196 = scmp.eq.s32.totalorder %s25, 0
    %p197 = por %p195, %p196
    %s199 = sadd.s32 %s198, 1
    %p202 = scmp.eq.s32.totalorder %s19, 1
    %p203 = scmp.ne.s32.totalorder %s198, %s200
    %p204 = scmp.eq.s32.totalorder %s19, 0
    %p205 = por %p203, %p204
    %p206 = scmp.ne.s32.totalorder %s198, %s200
    %p207 = scmp.eq.s32.totalorder %s24, 1
    %p208 = por %p206, %p207
    %p209 = scmp.ne.s32.totalorder %s200, %s201
    %p210 = scmp.eq.s32.totalorder %s24, 0
    %p211 = por %p209, %p210
    %p212 = scmp.ne.s32.totalorder %s200, %s201
    %p213 = scmp.eq.s32.totalorder %s25, 1
    %p214 = por %p212, %p213
    %p216 = scmp.ne.s32.totalorder %s201, %s215
    %p217 = scmp.eq.s32.totalorder %s25, 0
    %p218 = por %p216, %p217
    %s220 = sadd.s32 %s219, 1
    %p223 = scmp.eq.s32.totalorder %s19, 1
    %p224 = scmp.ne.s32.totalorder %s219, %s221
    %p225 = scmp.eq.s32.totalorder %s19, 0
    %p226 = por %p224, %p225
    %p227 = scmp.ne.s32.totalorder %s219, %s221
    %p228 = scmp.eq.s32.totalorder %s24, 1
    %p229 = por %p227, %p228
    %p230 = scmp.ne.s32.totalorder %s221, %s222
    %p231 = scmp.eq.s32.totalorder %s24, 0
    %p232 = por %p230, %p231
    %p233 = scmp.ne.s32.totalorder %s221, %s222
    %p234 = scmp.eq.s32.totalorder %s25, 1
    %p235 = por %p233, %p234
    %p237 = scmp.ne.s32.totalorder %s222, %s236
    %p238 = scmp.eq.s32.totalorder %s25, 0
    %p239 = por %p237, %p238
    %s241 = sadd.s32 %s240, 1
    %p244 = scmp.eq.s32.totalorder %s19, 1
    %p245 = scmp.ne.s32.totalorder %s240, %s242
    %p246 = scmp.eq.s32.totalorder %s19, 0
    %p247 = por %p245, %p246
    %p248 = scmp.ne.s32.totalorder %s240, %s242
    %p249 = scmp.eq.s32.totalorder %s24, 1
    %p250 = por %p248, %p249
    %p251 = scmp.ne.s32.totalorder %s242, %s243
    %p252 = scmp.eq.s32.totalorder %s24, 0
    %p253 = por %p251, %p252
    %p254 = scmp.ne.s32.totalorder %s242, %s243
    %p255 = scmp.eq.s32.totalorder %s25, 1
    %p256 = por %p254, %p255
    %p258 = scmp.ne.s32.totalorder %s243, %s257
    %p259 = scmp.eq.s32.totalorder %s25, 0
    %p260 = por %p258, %p259
    %s261 = ssub.s32 %s26, %s38
    %s262 = ssub.s32 %s27, %s34
    %s263 = sor.u32 %s261, %s262
    %p264 = scmp.eq.s32.totalorder %s263, 0
    %s266 = sadd.s32 %s265, 1
    %s267 = scalar_select %p264, %s265, %s266
    %p270 = pneg %p264
    %p271 = scmp.eq.s32.totalorder %s19, 1
    %p272 = por %p270, %p271
    %p273 = scmp.ne.s32.totalorder %s265, %s268
    %p274 = scmp.eq.s32.totalorder %s19, 0
    %p275 = por %p273, %p274
    %p276 = scmp.ne.s32.totalorder %s265, %s268
    %p277 = scmp.eq.s32.totalorder %s24, 1
    %p278 = por %p276, %p277
    %p279 = scmp.ne.s32.totalorder %s268, %s269
    %p280 = scmp.eq.s32.totalorder %s24, 0
    %p281 = por %p279, %p280
    %p282 = scmp.ne.s32.totalorder %s268, %s269
    %p283 = scmp.eq.s32.totalorder %s25, 1
    %p284 = por %p282, %p283
    %p286 = scmp.ne.s32.totalorder %s269, %s285
    %p287 = scmp.eq.s32.totalorder %s25, 0
    %p288 = por %p286, %p287
    %s289 = ssub.s32 %s26, %s38
    %s290 = ssub.s32 %s27, %s34
    %s291 = sor.u32 %s289, %s290
    %p292 = scmp.eq.s32.totalorder %s291, 0
    %s294 = sadd.s32 %s293, 1
    %s295 = scalar_select %p292, %s293, %s294
    %p298 = pneg %p292
    %p299 = scmp.eq.s32.totalorder %s19, 1
    %p300 = por %p298, %p299
    %p301 = scmp.ne.s32.totalorder %s293, %s296
    %p302 = scmp.eq.s32.totalorder %s19, 0
    %p303 = por %p301, %p302
    %p304 = scmp.ne.s32.totalorder %s293, %s296
    %p305 = scmp.eq.s32.totalorder %s24, 1
    %p306 = por %p304, %p305
    %p307 = scmp.ne.s32.totalorder %s296, %s297
    %p308 = scmp.eq.s32.totalorder %s24, 0
    %p309 = por %p307, %p308
    %p310 = scmp.ne.s32.totalorder %s296, %s297
    %p311 = scmp.eq.s32.totalorder %s25, 1
    %p312 = por %p310, %p311
    %p314 = scmp.ne.s32.totalorder %s297, %s313
    %p315 = scmp.eq.s32.totalorder %s25, 0
    %p316 = por %p314, %p315
    %s317 = ssub.s32 %s26, %s38
    %s318 = ssub.s32 %s27, %s34
    %s319 = sor.u32 %s317, %s318
    %p320 = scmp.eq.s32.totalorder %s319, 0
    %s322 = sadd.s32 %s321, 1
    %s323 = scalar_select %p320, %s321, %s322
    %p326 = pneg %p320
    %p327 = scmp.eq.s32.totalorder %s19, 1
    %p328 = por %p326, %p327
    %p329 = scmp.ne.s32.totalorder %s321, %s324
    %p330 = scmp.eq.s32.totalorder %s19, 0
    %p331 = por %p329, %p330
    %p332 = scmp.ne.s32.totalorder %s321, %s324
    %p333 = scmp.eq.s32.totalorder %s24, 1
    %p334 = por %p332, %p333
    %p335 = scmp.ne.s32.totalorder %s324, %s325
    %p336 = scmp.eq.s32.totalorder %s24, 0
    %p337 = por %p335, %p336
    %p338 = scmp.ne.s32.totalorder %s324, %s325
    %p339 = scmp.eq.s32.totalorder %s25, 1
    %p340 = por %p338, %p339
    %p342 = scmp.ne.s32.totalorder %s325, %s341
    %p343 = scmp.eq.s32.totalorder %s25, 0
    %p344 = por %p342, %p343
    %p345 = scmp.le.s32.totalorder 1, %s19
    %p346 = scmp.lt.s32.totalorder %s19, 3
    %p347 = pnand %p345, %p346
    %p348 = pneg %p347
    // Predicated region
    $region9: #{_encoder_layer_impl.2} parent=5 // pred_check
      _
    $region10: #{_encoder_layer_impl.2} parent=5 // pred_check_branch
      %350 = sbr.rel (%p347) target = $region12
    $region11: #{_encoder_layer_impl.2} parent=5 // pred_region
      %s351 = ssub.s32 %s19, 1
      // Predicated region
      $region13: #{_encoder_layer_impl.2} parent=11 // pred_check
        %p352 = pneg %p85
      $region14: #{_encoder_layer_impl.2} parent=11 // pred_check_branch
        %354 = sbr.rel (%p352) target = $region16
      $region15: #{_encoder_layer_impl.2} parent=11 // pred_region
        %p355 = scmp.lt.s32.totalorder %s29, 0
        %s356 = scalar_select %p355, %s29, 0
        %s357 = smul.addr %s356, 8
        %s358 = scalar_lea.vmem %s1, %s357
      $region16: #{_encoder_layer_impl.2} parent=11 // pred_fallthru
        _
      // Predicated region
      $region17: #{_encoder_layer_impl.2} parent=11 // pred_check
        %p359 = pneg %p106
      $region18: #{_encoder_layer_impl.2} parent=11 // pred_check_branch
        %361 = sbr.rel (%p359) target = $region20
      $region19: #{_encoder_layer_impl.2} parent=11 // pred_region
        _
      $region20: #{_encoder_layer_impl.2} parent=11 // pred_fallthru
        _
      // Predicated region
      $region21: #{_encoder_layer_impl.2} parent=11 // pred_check
        %p362 = pneg %p127
      $region22: #{_encoder_layer_impl.2} parent=11 // pred_check_branch
        %364 = sbr.rel (%p362) target = $region24
      $region23: #{_encoder_layer_impl.2} parent=11 // pred_region
        _
      $region24: #{_encoder_layer_impl.2} parent=11 // pred_fallthru
        _
      // Predicated region
      $region25: #{_encoder_layer_impl.2} parent=11 // pred_check
        %p365 = pneg %p148
      $region26: #{_encoder_layer_impl.2} parent=11 // pred_check_branch
        %367 = sbr.rel (%p365) target = $region28
      $region27: #{_encoder_layer_impl.2} parent=11 // pred_region
        _
      $region28: #{_encoder_layer_impl.2} parent=11 // pred_fallthru
        _
      // Predicated region
      $region29: #{_encoder_layer_impl.2} parent=11 // pred_check
        %p368 = pneg %p169
      $region30: #{_encoder_layer_impl.2} parent=11 // pred_check_branch
        %370 = sbr.rel (%p368) target = $region32
      $region31: #{_encoder_layer_impl.2} parent=11 // pred_region
        _
      $region32: #{_encoder_layer_impl.2} parent=11 // pred_fallthru
        _
      // Predicated region
      $region33: #{_encoder_layer_impl.2} parent=11 // pred_check
        %p371 = pneg %p190
      $region34: #{_encoder_layer_impl.2} parent=11 // pred_check_branch
        %373 = sbr.rel (%p371) target = $region36
      $region35: #{_encoder_layer_impl.2} parent=11 // pred_region
        _
      $region36: #{_encoder_layer_impl.2} parent=11 // pred_fallthru
        _
      // Predicated region
      $region37: #{_encoder_layer_impl.2} parent=11 // pred_check
        %p374 = pneg %p211
      $region38: #{_encoder_layer_impl.2} parent=11 // pred_check_branch
        %376 = sbr.rel (%p374) target = $region40
      $region39: #{_encoder_layer_impl.2} parent=11 // pred_region
        _
      $region40: #{_encoder_layer_impl.2} parent=11 // pred_fallthru
        _
      // Predicated region
      $region41: #{_encoder_layer_impl.2} parent=11 // pred_check
        %p377 = pneg %p232
      $region42: #{_encoder_layer_impl.2} parent=11 // pred_check_branch
        %379 = sbr.rel (%p377) target = $region44
      $region43: #{_encoder_layer_impl.2} parent=11 // pred_region
        _
      $region44: #{_encoder_layer_impl.2} parent=11 // pred_fallthru
        _
      // Predicated region
      $region45: #{_encoder_layer_impl.2} parent=11 // pred_check
        %p380 = pneg %p253
      $region46: #{_encoder_layer_impl.2} parent=11 // pred_check_branch
        %382 = sbr.rel (%p380) target = $region48
      $region47: #{_encoder_layer_impl.2} parent=11 // pred_region
        _
      $region48: #{_encoder_layer_impl.2} parent=11 // pred_fallthru
        _
    $region12: #{_encoder_layer_impl.2} parent=5 // pred_fallthru
      _
    %p383 = scmp.lt.s32.totalorder %s19, 2
    // Predicated region
    $region49: #{_encoder_layer_impl.2} parent=5 // pred_check
      %p384 = pneg %p383
    $region50: #{_encoder_layer_impl.2} parent=5 // pred_check_branch
      %386 = sbr.rel (%p384) target = $region52
    $region51: #{_encoder_layer_impl.2} parent=5 // pred_region
      // Predicated region
      $region53: #{_encoder_layer_impl.2} parent=51 // pred_check
        %p387 = pneg %p53
      $region54: #{_encoder_layer_impl.2} parent=51 // pred_check_branch
        %389 = sbr.rel (%p387) target = $region56
      $region55: #{_encoder_layer_impl.2} parent=51 // pred_region
        %p390 = scmp.lt.s32.totalorder %s26, 1
        %s391 = scalar_select %p390, %s26, 1
        %p392 = scmp.lt.s32.totalorder %s27, 0
        %s393 = scalar_select %p392, %s27, 0
        %s394 = sadd.s32 %s393, %s391
        %s395 = smul.addr %s394, 8
        %s396 = scalar_lea.vmem %s0, %s395
      $region56: #{_encoder_layer_impl.2} parent=51 // pred_fallthru
        _
    $region52: #{_encoder_layer_impl.2} parent=5 // pred_fallthru
      _
    %p397 = scmp.le.s32.totalorder 1, %s19
    %p398 = scmp.lt.s32.totalorder %s19, 3
    %p399 = pnand %p397, %p398
    %p400 = pneg %p399
    // Predicated region
    $region57: #{_encoder_layer_impl.2} parent=5 // pred_check
      _
    $region58: #{_encoder_layer_impl.2} parent=5 // pred_check_branch
      %402 = sbr.rel (%p399) target = $region60
    $region59: #{_encoder_layer_impl.2} parent=5 // pred_region
      %s403 = ssub.s32 %s19, 1
      %p404 = scmp.lt.s32.totalorder %s28, 1
      %s405 = scalar_select %p404, %s28, 1
      %p406 = scmp.lt.s32.totalorder %s29, 0
      %s407 = scalar_select %p406, %s29, 0
      %s408 = sadd.s32 %s407, %s405
      %s409 = smul.addr %s408, 8
      %s410 = scalar_lea.vmem %s0, %s409
      %p411 = pneg %p59
      %p412 = pneg %p56
      %p413 = scmp.lt.s32.totalorder %s29, 0
      %s414 = scalar_select %p413, %s29, 0
      %s415 = smul.addr %s414, 8
      %s416 = scalar_lea.vmem %s1, %s415
      %p417 = pneg %p85
      %p418 = pneg %p82
      %p419 = pneg %p106
      %p420 = pneg %p103
      %p421 = pneg %p127
      %p422 = pneg %p124
      %p423 = pneg %p148
      %p424 = pneg %p145
      %p425 = pneg %p169
      %p426 = pneg %p166
      %p427 = pneg %p190
      %p428 = pneg %p187
      %p429 = pneg %p211
      %p430 = pneg %p208
      %p431 = pneg %p232
      %p432 = pneg %p229
      %p433 = pneg %p253
      %p434 = pneg %p250
      %p435 = pneg %p281
      %p436 = pneg %p278
      %p437 = scmp.lt.s32.totalorder %s28, 1
      %s438 = scalar_select %p437, %s28, 1
      %p439 = scmp.lt.s32.totalorder %s29, 0
      %s440 = scalar_select %p439, %s29, 0
      %s441 = smul.addr %s438, 4
      %s442 = sadd.s32 %s440, %s441
      %s443 = smul.addr %s442, 4
      %s444 = scalar_lea.vmem %s10, %s443
      %p445 = pneg %p309
      %p446 = pneg %p306
      %p447 = scmp.lt.s32.totalorder %s28, 1
      %s448 = scalar_select %p447, %s28, 1
      %p449 = scmp.lt.s32.totalorder %s29, 0
      %s450 = scalar_select %p449, %s29, 0
      %s451 = smul.addr %s448, 4
      %s452 = sadd.s32 %s450, %s451
      %s453 = smul.addr %s452, 4
      %s454 = scalar_lea.vmem %s11, %s453
      %p455 = pneg %p337
      %p456 = pneg %p334
      %p457 = scmp.lt.s32.totalorder %s28, 1
      %s458 = scalar_select %p457, %s28, 1
      %p459 = scmp.lt.s32.totalorder %s29, 0
      %s460 = scalar_select %p459, %s29, 0
      %s461 = smul.addr %s458, 4
      %s462 = sadd.s32 %s460, %s461
      %s463 = smul.addr %s462, 4
      %s464 = scalar_lea.vmem %s12, %s463
      %p465 = scmp.lt.s32.totalorder %s28, 1
      %s466 = scalar_select %p465, %s28, 1
      %p467 = scmp.lt.s32.totalorder %s29, 0
      %s468 = scalar_select %p467, %s29, 0
      %s469 = sadd.s32 %s468, %s466
      %s470 = smul.addr %s469, 8
      %s471 = scalar_lea.vmem %s0, %s470
      %p472 = scmp.lt.s32.totalorder %s29, 0
      %s473 = scalar_select %p472, %s29, 0
      %s474 = smul.addr %s473, 8
      %s475 = scalar_lea.vmem %s1, %s474
      %p476 = scmp.lt.s32.totalorder %s28, 1
      %s477 = scalar_select %p476, %s28, 1
      %p478 = scmp.lt.s32.totalorder %s29, 0
      %s479 = scalar_select %p478, %s29, 0
      %s480 = smul.addr %s477, 4
      %s481 = sadd.s32 %s479, %s480
      %s482 = smul.addr %s481, 4
      %s483 = scalar_lea.vmem %s10, %s482
      %p484 = scmp.lt.s32.totalorder %s28, 1
      %s485 = scalar_select %p484, %s28, 1
      %p486 = scmp.lt.s32.totalorder %s29, 0
      %s487 = scalar_select %p486, %s29, 0
      %s488 = smul.addr %s485, 4
      %s489 = sadd.s32 %s487, %s488
      %s490 = smul.addr %s489, 4
      %s491 = scalar_lea.vmem %s11, %s490
      %p492 = scmp.lt.s32.totalorder %s28, 1
      %s493 = scalar_select %p492, %s28, 1
      %p494 = scmp.lt.s32.totalorder %s29, 0
      %s495 = scalar_select %p494, %s29, 0
      %s496 = smul.addr %s493, 4
      %s497 = sadd.s32 %s495, %s496
      %s498 = smul.addr %s497, 4
      %s499 = scalar_lea.vmem %s12, %s498
      %v501 = vld [vmem:[%s471] sm:$0xff]
      %v502 = vld [vmem:[%s2] sm:$0x1]
      %v503 = vld [vmem:[%s3] sm:$0x1]
      %vm504 = vcmask 261120
      %v505 = vsel %vm504, %v501, 0.0
      %506 = vadd.xlane.f32.xlu0 %v505
      %v507 = vpop.xlane.xlu0 %506
      %v508 = vrcp.pop 32.0
      %v509 = vmul.f32 %v507, %v508
      %v510 = vsub.f32 %v501, %v509
      %v511 = vmul.f32 %v510, %v510
      %v512 = vsel %vm504, %v511, 0.0
      %513 = vadd.xlane.f32.xlu0 %v512
      %v514 = vpop.xlane.xlu0 %513
      %v515 = vmul.f32 %v514, %v508
      %v516 = vadd.f32 %v515, 1e-05
      %v517 = vrsqrt.pop %v516
      %v518 = vmul.f32 %v510, %v517
      %v520 = vlaneseq
      %v521 = vshrl.u32 %v520, 7
      %v522 = vsub.s32 0, %v521
      %v523 = vrot.slane %v502, %v522
      %v525 = vmul.f32 %v518, %v523
      %v527 = vlaneseq
      %v528 = vshrl.u32 %v527, 7
      %v529 = vsub.s32 0, %v528
      %v530 = vrot.slane %v503, %v529
      %v532 = vadd.f32 %v525, %v530
      %v533 = vpack.c.bf16 %v532, %v532
      %v534 = vld [vmem:[%s475] sm:$0xff]
      %v535 = vld [vmem:[%s4] sm:$0xf]
      %v536 = vld [vmem:[%s4 + $0x4] sm:$0xf]
      %v537 = vld [vmem:[%s4 + $0x8] sm:$0xf]
      %v538 = vld [vmem:[%s4 + $0xc] sm:$0xf]
      %v539 = vld [vmem:[%s7] sm:$0x1]
      %v541 = vlaneseq
      %v542 = vshrl.u32 %v541, 7
      %v543 = vsub.s32 0, %v542
      %v544 = vrot.slane %v539, %v543
      %v550 = vunpack.c.l.b16 %v535
      %v551 = vunpack.c.l.b16 %v536
      %v552 = vunpack.c.l.b16 %v537
      %v553 = vunpack.c.l.b16 %v538
      %v554 = vpack.c.b16 %v551, %v550
      %v555 = vpack.c.b16 %v553, %v552
      %v559 = vsel %vm504, %v533, 0
      %561 = vmatprep.subr.bf16.mxu0 0
      %562 = vmatpush1.bf16.msra.mxu0 0
      %563 = vmatprep.subr.bf16.mxu0 0
      %564 = vmatpush1.bf16.msra.mxu0 0
      %565 = vmatprep.subr.bf16.mxu0 0
      %566 = vmatpush1.bf16.msra.mxu0 0
      %567 = vmatprep.subr.bf16.mxu0 0
      %568 = vmatpush1.bf16.msra.mxu0 0
      %569 = vmatprep.subr.bf16.mxu0 0
      %570 = vmatpush1.bf16.msra.mxu0 0
      %571 = vmatprep.subr.bf16.mxu0 0
      %572 = vmatpush1.bf16.msra.mxu0 0
      %573 = vmatprep.subr.bf16.mxu0 0
      %574 = vmatpush1.bf16.msra.mxu0 %v555
      %575 = vmatprep.subr.bf16.mxu0 0
      %576 = vmatpush1.bf16.msra.mxu0 %v554
      %577 = vmatprep.subr.bf16.mxu0 0
      %578 = vmatpush2.bf16.msra.mxu0 0
      %579 = vmatprep.subr.bf16.mxu0 0
      %580 = vmatpush2.bf16.msra.mxu0 0
      %581 = vmatprep.subr.bf16.mxu0 0
      %582 = vmatpush2.bf16.msra.mxu0 0
      %583 = vmatprep.subr.bf16.mxu0 0
      %584 = vmatpush2.bf16.msra.mxu0 0
      %585 = vmatprep.subr.bf16.mxu0 0
      %586 = vmatpush2.bf16.msra.mxu0 0
      %587 = vmatprep.subr.bf16.mxu0 0
      %588 = vmatpush2.bf16.msra.mxu0 0
      %589 = vmatprep.subr.bf16.mxu0 0
      %590 = vmatpush2.bf16.msra.mxu0 0
      %591 = vmatprep.subr.bf16.mxu0 0
      %592 = vmatpush2.bf16.msra.mxu0 0
      %593 = vmatprep.mubr.bf16.mxu0 0
      %594 = vmatmul.mubr.bf16.gmra.mxu0 %v559
      %v595 = vpop.f32.mrf.mxu0
      %v596 = vadd.f32 %v544, %v595
      %v597 = vpop.f32.mrf.mxu0
      %v598 = vpop.f32.mrf.mxu0
      %v599 = vpop.f32.mrf.mxu0
      %600 = vdwg.mxu0
      %v601 = vadd.f32 %v596, %v534
      %v602 = vmul.f32 %v601, 0.35355338
      %v603 = vld [vmem:[%s5] sm:$0xf]
      %v604 = vld [vmem:[%s5 + $0x4] sm:$0xf]
      %v605 = vld [vmem:[%s5 + $0x8] sm:$0xf]
      %v606 = vld [vmem:[%s5 + $0xc] sm:$0xf]
      %v607 = vld [vmem:[%s8] sm:$0x1]
      %v609 = vlaneseq
      %v610 = vshrl.u32 %v609, 7
      %v611 = vsub.s32 0, %v610
      %v612 = vrot.slane %v607, %v611
      %v618 = vunpack.c.l.b16 %v603
      %v619 = vunpack.c.l.b16 %v604
      %v620 = vunpack.c.l.b16 %v605
      %v621 = vunpack.c.l.b16 %v606
      %v622 = vpack.c.b16 %v619, %v618
      %v623 = vpack.c.b16 %v621, %v620
      %626 = vmatprep.subr.bf16.mxu0 0
      %627 = vmatpush1.bf16.msra.mxu0 0
      %628 = vmatprep.subr.bf16.mxu0 0
      %629 = vmatpush1.bf16.msra.mxu0 0
      %630 = vmatprep.subr.bf16.mxu0 0
      %631 = vmatpush1.bf16.msra.mxu0 0
      %632 = vmatprep.subr.bf16.mxu0 0
      %633 = vmatpush1.bf16.msra.mxu0 0
      %634 = vmatprep.subr.bf16.mxu0 0
      %635 = vmatpush1.bf16.msra.mxu0 0
      %636 = vmatprep.subr.bf16.mxu0 0
      %637 = vmatpush1.bf16.msra.mxu0 0
      %638 = vmatprep.subr.bf16.mxu0 0
      %639 = vmatpush1.bf16.msra.mxu0 %v623
      %640 = vmatprep.subr.bf16.mxu0 0
      %641 = vmatpush1.bf16.msra.mxu0 %v622
      %642 = vmatprep.subr.bf16.mxu0 0
      %643 = vmatpush2.bf16.msra.mxu0 0
      %644 = vmatprep.subr.bf16.mxu0 0
      %645 = vmatpush2.bf16.msra.mxu0 0
      %646 = vmatprep.subr.bf16.mxu0 0
      %647 = vmatpush2.bf16.msra.mxu0 0
      %648 = vmatprep.subr.bf16.mxu0 0
      %649 = vmatpush2.bf16.msra.mxu0 0
      %650 = vmatprep.subr.bf16.mxu0 0
      %651 = vmatpush2.bf16.msra.mxu0 0
      %652 = vmatprep.subr.bf16.mxu0 0
      %653 = vmatpush2.bf16.msra.mxu0 0
      %654 = vmatprep.subr.bf16.mxu0 0
      %655 = vmatpush2.bf16.msra.mxu0 0
      %656 = vmatprep.subr.bf16.mxu0 0
      %657 = vmatpush2.bf16.msra.mxu0 0
      %658 = vmatprep.mubr.bf16.mxu0 0
      %659 = vmatmul.mubr.bf16.gmra.mxu0 %v559
      %v660 = vpop.f32.mrf.mxu0
      %v661 = vadd.f32 %v612, %v660
      %v662 = vpop.f32.mrf.mxu0
      %v663 = vpop.f32.mrf.mxu0
      %v664 = vpop.f32.mrf.mxu0
      %665 = vdwg.mxu0
      %v666 = vadd.f32 %v661, %v534
      %v667 = vld [vmem:[%s6] sm:$0xf]
      %v668 = vld [vmem:[%s6 + $0x4] sm:$0xf]
      %v669 = vld [vmem:[%s6 + $0x8] sm:$0xf]
      %v670 = vld [vmem:[%s6 + $0xc] sm:$0xf]
      %v671 = vld [vmem:[%s9] sm:$0x1]
      %v673 = vlaneseq
      %v674 = vshrl.u32 %v673, 7
      %v675 = vsub.s32 0, %v674
      %v676 = vrot.slane %v671, %v675
      %v682 = vunpack.c.l.b16 %v667
      %v683 = vunpack.c.l.b16 %v668
      %v684 = vunpack.c.l.b16 %v669
      %v685 = vunpack.c.l.b16 %v670
      %v686 = vpack.c.b16 %v683, %v682
      %v687 = vpack.c.b16 %v685, %v684
      %690 = vmatprep.subr.bf16.mxu0 0
      %691 = vmatpush1.bf16.msra.mxu0 0
      %692 = vmatprep.subr.bf16.mxu0 0
      %693 = vmatpush1.bf16.msra.mxu0 0
      %694 = vmatprep.subr.bf16.mxu0 0
      %695 = vmatpush1.bf16.msra.mxu0 0
      %696 = vmatprep.subr.bf16.mxu0 0
      %697 = vmatpush1.bf16.msra.mxu0 0
      %698 = vmatprep.subr.bf16.mxu0 0
      %699 = vmatpush1.bf16.msra.mxu0 0
      %700 = vmatprep.subr.bf16.mxu0 0
      %701 = vmatpush1.bf16.msra.mxu0 0
      %702 = vmatprep.subr.bf16.mxu0 0
      %703 = vmatpush1.bf16.msra.mxu0 %v687
      %704 = vmatprep.subr.bf16.mxu0 0
      %705 = vmatpush1.bf16.msra.mxu0 %v686
      %706 = vmatprep.subr.bf16.mxu0 0
      %707 = vmatpush2.bf16.msra.mxu0 0
      %708 = vmatprep.subr.bf16.mxu0 0
      %709 = vmatpush2.bf16.msra.mxu0 0
      %710 = vmatprep.subr.bf16.mxu0 0
      %711 = vmatpush2.bf16.msra.mxu0 0
      %712 = vmatprep.subr.bf16.mxu0 0
      %713 = vmatpush2.bf16.msra.mxu0 0
      %714 = vmatprep.subr.bf16.mxu0 0
      %715 = vmatpush2.bf16.msra.mxu0 0
      %716 = vmatprep.subr.bf16.mxu0 0
      %717 = vmatpush2.bf16.msra.mxu0 0
      %718 = vmatprep.subr.bf16.mxu0 0
      %719 = vmatpush2.bf16.msra.mxu0 0
      %720 = vmatprep.subr.bf16.mxu0 0
      %721 = vmatpush2.bf16.msra.mxu0 0
      %722 = vmatprep.mubr.bf16.mxu0 0
      %723 = vmatmul.mubr.bf16.gmra.mxu0 %v559
      %v724 = vpop.f32.mrf.mxu0
      %v725 = vadd.f32 %v676, %v724
      %v726 = vpop.f32.mrf.mxu0
      %v727 = vpop.f32.mrf.mxu0
      %v728 = vpop.f32.mrf.mxu0
      %729 = vdwg.mxu0
      %v730 = vpack.c.bf16 %v602, %v602
      %732 = vrot.lane.b32.xlu0 %v730, 120
      %v733 = vpop.permute.xlu0 %732
      %734 = vrot.lane.b32.xlu0 %v730, 112
      %v735 = vpop.permute.xlu0 %734
      %736 = vrot.lane.b32.xlu0 %v730, 104
      %v737 = vpop.permute.xlu0 %736
      %v739 = vunpack.c.l.s4 1983009808
      %v740 = vunpack.c.0.s8 %v739
      %v741 = vlaneseq
      %v742 = vshrl.u32 %v741, 7
      %v743 = vsub.s32 %v740, %v742
      %v744 = vrot.slane %v730, %v743
      %v747 = vunpack.c.l.s4 1983009808
      %v748 = vunpack.c.0.s8 %v747
      %v749 = vlaneseq
      %v750 = vshrl.u32 %v749, 7
      %v751 = vsub.s32 %v748, %v750
      %v752 = vrot.slane %v735, %v751
      %v753 = vcombine.low %v744, %v752
      %v754 = vcombine.high %v744, %v752
      %v756 = vunpack.c.l.s4 1934713408
      %v757 = vunpack.c.0.s8 %v756
      %v758 = vlaneseq
      %v759 = vshrl.u32 %v758, 7
      %v760 = vsub.s32 %v757, %v759
      %v761 = vrot.slane %v753, %v760
      %v763 = vunpack.c.l.s4 1934713408
      %v764 = vunpack.c.0.s8 %v763
      %v765 = vlaneseq
      %v766 = vshrl.u32 %v765, 7
      %v767 = vsub.s32 %v764, %v766
      %v768 = vrot.slane %v754, %v767
      %v769 = vcombine.high %v761, 0
      %v770 = vcombine.high %v768, 0
      %v773 = vunpack.c.l.s4 1983009808
      %v774 = vunpack.c.0.s8 %v773
      %v775 = vlaneseq
      %v776 = vshrl.u32 %v775, 7
      %v777 = vsub.s32 %v774, %v776
      %v778 = vrot.slane %v733, %v777
      %v781 = vunpack.c.l.s4 1983009808
      %v782 = vunpack.c.0.s8 %v781
      %v783 = vlaneseq
      %v784 = vshrl.u32 %v783, 7
      %v785 = vsub.s32 %v782, %v784
      %v786 = vrot.slane %v737, %v785
      %v787 = vcombine.low %v778, %v786
      %v788 = vcombine.high %v778, %v786
      %v790 = vunpack.c.l.s4 1934713408
      %v791 = vunpack.c.0.s8 %v790
      %v792 = vlaneseq
      %v793 = vshrl.u32 %v792, 7
      %v794 = vsub.s32 %v791, %v793
      %v795 = vrot.slane %v787, %v794
      %v797 = vunpack.c.l.s4 1934713408
      %v798 = vunpack.c.0.s8 %v797
      %v799 = vlaneseq
      %v800 = vshrl.u32 %v799, 7
      %v801 = vsub.s32 %v798, %v800
      %v802 = vrot.slane %v788, %v801
      %v803 = vcombine.high %v795, 0
      %v804 = vcombine.high %v802, 0
      %v807 = vpack.i.b16 %v795, %v761
      %v809 = vshrl.u32 %v761, 16
      %v810 = vshrl.u32 %v795, 16
      %v811 = vpack.i.b16 %v810, %v809
      %v815 = vpack.i.b16 %v803, %v769
      %v817 = vshrl.u32 %v769, 16
      %v818 = vshrl.u32 %v803, 16
      %v819 = vpack.i.b16 %v818, %v817
      %v823 = vpack.i.b16 %v802, %v768
      %v825 = vshrl.u32 %v768, 16
      %v826 = vshrl.u32 %v802, 16
      %v827 = vpack.i.b16 %v826, %v825
      %v831 = vpack.i.b16 %v804, %v770
      %v833 = vshrl.u32 %v770, 16
      %v834 = vshrl.u32 %v804, 16
      %v835 = vpack.i.b16 %v834, %v833
      %v837 = vcombine.low %v807, %v823
      %v839 = vunpack.c.l.s4 1983009808
      %v840 = vunpack.c.0.s8 %v839
      %v841 = vlaneseq
      %v842 = vshrl.u32 %v841, 7
      %v843 = vsub.s32 %v840, %v842
      %v844 = vrot.slane %v837, %v843
      %v845 = vcombine.low %v815, %v831
      %v847 = vunpack.c.l.s4 1983009808
      %v848 = vunpack.c.0.s8 %v847
      %v849 = vlaneseq
      %v850 = vshrl.u32 %v849, 7
      %v851 = vsub.s32 %v848, %v850
      %v852 = vrot.slane %v845, %v851
      %v853 = vcombine.low %v844, %v852
      %v855 = vunpack.c.l.s4 1934713408
      %v856 = vunpack.c.0.s8 %v855
      %v857 = vlaneseq
      %v858 = vshrl.u32 %v857, 7
      %v859 = vsub.s32 %v856, %v858
      %v860 = vrot.slane %v853, %v859
      %v861 = vcombine.high %v860, 0
      %v862 = vcombine.low %v811, %v827
      %v864 = vunpack.c.l.s4 1983009808
      %v865 = vunpack.c.0.s8 %v864
      %v866 = vlaneseq
      %v867 = vshrl.u32 %v866, 7
      %v868 = vsub.s32 %v865, %v867
      %v869 = vrot.slane %v862, %v868
      %v870 = vcombine.low %v819, %v835
      %v872 = vunpack.c.l.s4 1983009808
      %v873 = vunpack.c.0.s8 %v872
      %v874 = vlaneseq
      %v875 = vshrl.u32 %v874, 7
      %v876 = vsub.s32 %v873, %v875
      %v877 = vrot.slane %v870, %v876
      %v878 = vcombine.low %v869, %v877
      %v880 = vunpack.c.l.s4 1934713408
      %v881 = vunpack.c.0.s8 %v880
      %v882 = vlaneseq
      %v883 = vshrl.u32 %v882, 7
      %v884 = vsub.s32 %v881, %v883
      %v885 = vrot.slane %v878, %v884
      %v886 = vcombine.high %v885, 0
      %v889 = vpack.i.b16 %v885, %v860
      %v891 = vshrl.u32 %v860, 16
      %v892 = vshrl.u32 %v885, 16
      %v893 = vpack.i.b16 %v892, %v891
      %v897 = vpack.i.b16 %v886, %v861
      %v899 = vshrl.u32 %v861, 16
      %v900 = vshrl.u32 %v886, 16
      %v901 = vpack.i.b16 %v900, %v899
      %vm903 = vcmask 60416
      %904 = vst.msk [vmem:[%s483] sm:$0xf] %vm903, %v889
      %905 = vst.msk [vmem:[%s483 + $0x4] sm:$0xf] %vm903, %v893
      %906 = vst.msk [vmem:[%s483 + $0x8] sm:$0xf] %vm903, %v897
      %907 = vst.msk [vmem:[%s483 + $0xc] sm:$0xf] %vm903, %v901
      %v908 = vpack.c.bf16 %v666, %v666
      %910 = vrot.lane.b32.xlu0 %v908, 120
      %v911 = vpop.permute.xlu0 %910
      %912 = vrot.lane.b32.xlu0 %v908, 112
      %v913 = vpop.permute.xlu0 %912
      %914 = vrot.lane.b32.xlu0 %v908, 104
      %v915 = vpop.permute.xlu0 %914
      %v917 = vunpack.c.l.s4 1983009808
      %v918 = vunpack.c.0.s8 %v917
      %v919 = vlaneseq
      %v920 = vshrl.u32 %v919, 7
      %v921 = vsub.s32 %v918, %v920
      %v922 = vrot.slane %v908, %v921
      %v925 = vunpack.c.l.s4 1983009808
      %v926 = vunpack.c.0.s8 %v925
      %v927 = vlaneseq
      %v928 = vshrl.u32 %v927, 7
      %v929 = vsub.s32 %v926, %v928
      %v930 = vrot.slane %v913, %v929
      %v931 = vcombine.low %v922, %v930
      %v932 = vcombine.high %v922, %v930
      %v934 = vunpack.c.l.s4 1934713408
      %v935 = vunpack.c.0.s8 %v934
      %v936 = vlaneseq
      %v937 = vshrl.u32 %v936, 7
      %v938 = vsub.s32 %v935, %v937
      %v939 = vrot.slane %v931, %v938
      %v941 = vunpack.c.l.s4 1934713408
      %v942 = vunpack.c.0.s8 %v941
      %v943 = vlaneseq
      %v944 = vshrl.u32 %v943, 7
      %v945 = vsub.s32 %v942, %v944
      %v946 = vrot.slane %v932, %v945
      %v947 = vcombine.high %v939, 0
      %v948 = vcombine.high %v946, 0
      %v951 = vunpack.c.l.s4 1983009808
      %v952 = vunpack.c.0.s8 %v951
      %v953 = vlaneseq
      %v954 = vshrl.u32 %v953, 7
      %v955 = vsub.s32 %v952, %v954
      %v956 = vrot.slane %v911, %v955
      %v959 = vunpack.c.l.s4 1983009808
      %v960 = vunpack.c.0.s8 %v959
      %v961 = vlaneseq
      %v962 = vshrl.u32 %v961, 7
      %v963 = vsub.s32 %v960, %v962
      %v964 = vrot.slane %v915, %v963
      %v965 = vcombine.low %v956, %v964
      %v966 = vcombine.high %v956, %v964
      %v968 = vunpack.c.l.s4 1934713408
      %v969 = vunpack.c.0.s8 %v968
      %v970 = vlaneseq
      %v971 = vshrl.u32 %v970, 7
      %v972 = vsub.s32 %v969, %v971
      %v973 = vrot.slane %v965, %v972
      %v975 = vunpack.c.l.s4 1934713408
      %v976 = vunpack.c.0.s8 %v975
      %v977 = vlaneseq
      %v978 = vshrl.u32 %v977, 7
      %v979 = vsub.s32 %v976, %v978
      %v980 = vrot.slane %v966, %v979
      %v981 = vcombine.high %v973, 0
      %v982 = vcombine.high %v980, 0
      %v985 = vpack.i.b16 %v973, %v939
      %v987 = vshrl.u32 %v939, 16
      %v988 = vshrl.u32 %v973, 16
      %v989 = vpack.i.b16 %v988, %v987
      %v993 = vpack.i.b16 %v981, %v947
      %v995 = vshrl.u32 %v947, 16
      %v996 = vshrl.u32 %v981, 16
      %v997 = vpack.i.b16 %v996, %v995
      %v1001 = vpack.i.b16 %v980, %v946
      %v1003 = vshrl.u32 %v946, 16
      %v1004 = vshrl.u32 %v980, 16
      %v1005 = vpack.i.b16 %v1004, %v1003
      %v1009 = vpack.i.b16 %v982, %v948
      %v1011 = vshrl.u32 %v948, 16
      %v1012 = vshrl.u32 %v982, 16
      %v1013 = vpack.i.b16 %v1012, %v1011
      %v1015 = vcombine.low %v985, %v1001
      %v1017 = vunpack.c.l.s4 1983009808
      %v1018 = vunpack.c.0.s8 %v1017
      %v1019 = vlaneseq
      %v1020 = vshrl.u32 %v1019, 7
      %v1021 = vsub.s32 %v1018, %v1020
      %v1022 = vrot.slane %v1015, %v1021
      %v1023 = vcombine.low %v993, %v1009
      %v1025 = vunpack.c.l.s4 1983009808
      %v1026 = vunpack.c.0.s8 %v1025
      %v1027 = vlaneseq
      %v1028 = vshrl.u32 %v1027, 7
      %v1029 = vsub.s32 %v1026, %v1028
      %v1030 = vrot.slane %v1023, %v1029
      %v1031 = vcombine.low %v1022, %v1030
      %v1033 = vunpack.c.l.s4 1934713408
      %v1034 = vunpack.c.0.s8 %v1033
      %v1035 = vlaneseq
      %v1036 = vshrl.u32 %v1035, 7
      %v1037 = vsub.s32 %v1034, %v1036
      %v1038 = vrot.slane %v1031, %v1037
      %v1039 = vcombine.high %v1038, 0
      %v1040 = vcombine.low %v989, %v1005
      %v1042 = vunpack.c.l.s4 1983009808
      %v1043 = vunpack.c.0.s8 %v1042
      %v1044 = vlaneseq
      %v1045 = vshrl.u32 %v1044, 7
      %v1046 = vsub.s32 %v1043, %v1045
      %v1047 = vrot.slane %v1040, %v1046
      %v1048 = vcombine.low %v997, %v1013
      %v1050 = vunpack.c.l.s4 1983009808
      %v1051 = vunpack.c.0.s8 %v1050
      %v1052 = vlaneseq
      %v1053 = vshrl.u32 %v1052, 7
      %v1054 = vsub.s32 %v1051, %v1053
      %v1055 = vrot.slane %v1048, %v1054
      %v1056 = vcombine.low %v1047, %v1055
      %v1058 = vunpack.c.l.s4 1934713408
      %v1059 = vunpack.c.0.s8 %v1058
      %v1060 = vlaneseq
      %v1061 = vshrl.u32 %v1060, 7
      %v1062 = vsub.s32 %v1059, %v1061
      %v1063 = vrot.slane %v1056, %v1062
      %v1064 = vcombine.high %v1063, 0
      %v1067 = vpack.i.b16 %v1063, %v1038
      %v1069 = vshrl.u32 %v1038, 16
      %v1070 = vshrl.u32 %v1063, 16
      %v1071 = vpack.i.b16 %v1070, %v1069
      %v1075 = vpack.i.b16 %v1064, %v1039
      %v1077 = vshrl.u32 %v1039, 16
      %v1078 = vshrl.u32 %v1064, 16
      %v1079 = vpack.i.b16 %v1078, %v1077
      %1081 = vst.msk [vmem:[%s491] sm:$0xf] %vm903, %v1067
      %1082 = vst.msk [vmem:[%s491 + $0x4] sm:$0xf] %vm903, %v1071
      %1083 = vst.msk [vmem:[%s491 + $0x8] sm:$0xf] %vm903, %v1075
      %1084 = vst.msk [vmem:[%s491 + $0xc] sm:$0xf] %vm903, %v1079
      %v1085 = vpack.c.bf16 %v725, %v725
      %1087 = vrot.lane.b32.xlu0 %v1085, 120
      %v1088 = vpop.permute.xlu0 %1087
      %1089 = vrot.lane.b32.xlu0 %v1085, 112
      %v1090 = vpop.permute.xlu0 %1089
      %1091 = vrot.lane.b32.xlu0 %v1085, 104
      %v1092 = vpop.permute.xlu0 %1091
      %v1094 = vunpack.c.l.s4 1983009808
      %v1095 = vunpack.c.0.s8 %v1094
      %v1096 = vlaneseq
      %v1097 = vshrl.u32 %v1096, 7
      %v1098 = vsub.s32 %v1095, %v1097
      %v1099 = vrot.slane %v1085, %v1098
      %v1102 = vunpack.c.l.s4 1983009808
      %v1103 = vunpack.c.0.s8 %v1102
      %v1104 = vlaneseq
      %v1105 = vshrl.u32 %v1104, 7
      %v1106 = vsub.s32 %v1103, %v1105
      %v1107 = vrot.slane %v1090, %v1106
      %v1108 = vcombine.low %v1099, %v1107
      %v1109 = vcombine.high %v1099, %v1107
      %v1111 = vunpack.c.l.s4 1934713408
      %v1112 = vunpack.c.0.s8 %v1111
      %v1113 = vlaneseq
      %v1114 = vshrl.u32 %v1113, 7
      %v1115 = vsub.s32 %v1112, %v1114
      %v1116 = vrot.slane %v1108, %v1115
      %v1118 = vunpack.c.l.s4 1934713408
      %v1119 = vunpack.c.0.s8 %v1118
      %v1120 = vlaneseq
      %v1121 = vshrl.u32 %v1120, 7
      %v1122 = vsub.s32 %v1119, %v1121
      %v1123 = vrot.slane %v1109, %v1122
      %v1124 = vcombine.high %v1116, 0
      %v1125 = vcombine.high %v1123, 0
      %v1128 = vunpack.c.l.s4 1983009808
      %v1129 = vunpack.c.0.s8 %v1128
      %v1130 = vlaneseq
      %v1131 = vshrl.u32 %v1130, 7
      %v1132 = vsub.s32 %v1129, %v1131
      %v1133 = vrot.slane %v1088, %v1132
      %v1136 = vunpack.c.l.s4 1983009808
      %v1137 = vunpack.c.0.s8 %v1136
      %v1138 = vlaneseq
      %v1139 = vshrl.u32 %v1138, 7
      %v1140 = vsub.s32 %v1137, %v1139
      %v1141 = vrot.slane %v1092, %v1140
      %v1142 = vcombine.low %v1133, %v1141
      %v1143 = vcombine.high %v1133, %v1141
      %v1145 = vunpack.c.l.s4 1934713408
      %v1146 = vunpack.c.0.s8 %v1145
      %v1147 = vlaneseq
      %v1148 = vshrl.u32 %v1147, 7
      %v1149 = vsub.s32 %v1146, %v1148
      %v1150 = vrot.slane %v1142, %v1149
      %v1152 = vunpack.c.l.s4 1934713408
      %v1153 = vunpack.c.0.s8 %v1152
      %v1154 = vlaneseq
      %v1155 = vshrl.u32 %v1154, 7
      %v1156 = vsub.s32 %v1153, %v1155
      %v1157 = vrot.slane %v1143, %v1156
      %v1158 = vcombine.high %v1150, 0
      %v1159 = vcombine.high %v1157, 0
      %v1162 = vpack.i.b16 %v1150, %v1116
      %v1164 = vshrl.u32 %v1116, 16
      %v1165 = vshrl.u32 %v1150, 16
      %v1166 = vpack.i.b16 %v1165, %v1164
      %v1170 = vpack.i.b16 %v1158, %v1124
      %v1172 = vshrl.u32 %v1124, 16
      %v1173 = vshrl.u32 %v1158, 16
      %v1174 = vpack.i.b16 %v1173, %v1172
      %v1178 = vpack.i.b16 %v1157, %v1123
      %v1180 = vshrl.u32 %v1123, 16
      %v1181 = vshrl.u32 %v1157, 16
      %v1182 = vpack.i.b16 %v1181, %v1180
      %v1186 = vpack.i.b16 %v1159, %v1125
      %v1188 = vshrl.u32 %v1125, 16
      %v1189 = vshrl.u32 %v1159, 16
      %v1190 = vpack.i.b16 %v1189, %v1188
      %v1192 = vcombine.low %v1162, %v1178
      %v1194 = vunpack.c.l.s4 1983009808
      %v1195 = vunpack.c.0.s8 %v1194
      %v1196 = vlaneseq
      %v1197 = vshrl.u32 %v1196, 7
      %v1198 = vsub.s32 %v1195, %v1197
      %v1199 = vrot.slane %v1192, %v1198
      %v1200 = vcombine.low %v1170, %v1186
      %v1202 = vunpack.c.l.s4 1983009808
      %v1203 = vunpack.c.0.s8 %v1202
      %v1204 = vlaneseq
      %v1205 = vshrl.u32 %v1204, 7
      %v1206 = vsub.s32 %v1203, %v1205
      %v1207 = vrot.slane %v1200, %v1206
      %v1208 = vcombine.low %v1199, %v1207
      %v1210 = vunpack.c.l.s4 1934713408
      %v1211 = vunpack.c.0.s8 %v1210
      %v1212 = vlaneseq
      %v1213 = vshrl.u32 %v1212, 7
      %v1214 = vsub.s32 %v1211, %v1213
      %v1215 = vrot.slane %v1208, %v1214
      %v1216 = vcombine.high %v1215, 0
      %v1217 = vcombine.low %v1166, %v1182
      %v1219 = vunpack.c.l.s4 1983009808
      %v1220 = vunpack.c.0.s8 %v1219
      %v1221 = vlaneseq
      %v1222 = vshrl.u32 %v1221, 7
      %v1223 = vsub.s32 %v1220, %v1222
      %v1224 = vrot.slane %v1217, %v1223
      %v1225 = vcombine.low %v1174, %v1190
      %v1227 = vunpack.c.l.s4 1983009808
      %v1228 = vunpack.c.0.s8 %v1227
      %v1229 = vlaneseq
      %v1230 = vshrl.u32 %v1229, 7
      %v1231 = vsub.s32 %v1228, %v1230
      %v1232 = vrot.slane %v1225, %v1231
      %v1233 = vcombine.low %v1224, %v1232
      %v1235 = vunpack.c.l.s4 1934713408
      %v1236 = vunpack.c.0.s8 %v1235
      %v1237 = vlaneseq
      %v1238 = vshrl.u32 %v1237, 7
      %v1239 = vsub.s32 %v1236, %v1238
      %v1240 = vrot.slane %v1233, %v1239
      %v1241 = vcombine.high %v1240, 0
      %v1244 = vpack.i.b16 %v1240, %v1215
      %v1246 = vshrl.u32 %v1215, 16
      %v1247 = vshrl.u32 %v1240, 16
      %v1248 = vpack.i.b16 %v1247, %v1246
      %v1252 = vpack.i.b16 %v1241, %v1216
      %v1254 = vshrl.u32 %v1216, 16
      %v1255 = vshrl.u32 %v1241, 16
      %v1256 = vpack.i.b16 %v1255, %v1254
      %1258 = vst.msk [vmem:[%s499] sm:$0xf] %vm903, %v1244
      %1259 = vst.msk [vmem:[%s499 + $0x4] sm:$0xf] %vm903, %v1248
      %1260 = vst.msk [vmem:[%s499 + $0x8] sm:$0xf] %vm903, %v1252
      %1261 = vst.msk [vmem:[%s499 + $0xc] sm:$0xf] %vm903, %v1256
      %p1262 = scmp.lt.s32.totalorder %s28, 1
      %s1263 = scalar_select %p1262, %s28, 1
      %p1264 = scmp.lt.s32.totalorder %s29, 0
      %s1265 = scalar_select %p1264, %s29, 0
      %s1266 = smul.addr %s1263, 4
      %s1267 = sadd.s32 %s1265, %s1266
      %s1268 = smul.addr %s1267, 4
      %s1269 = scalar_lea.vmem %s10, %s1268
      %p1270 = scmp.lt.s32.totalorder %s28, 1
      %s1271 = scalar_select %p1270, %s28, 1
      %p1272 = scmp.lt.s32.totalorder %s29, 0
      %s1273 = scalar_select %p1272, %s29, 0
      %s1274 = smul.addr %s1271, 4
      %s1275 = sadd.s32 %s1273, %s1274
      %s1276 = smul.addr %s1275, 4
      %s1277 = scalar_lea.vmem %s11, %s1276
      %p1278 = scmp.lt.s32.totalorder %s28, 1
      %s1279 = scalar_select %p1278, %s28, 1
      %p1280 = scmp.lt.s32.totalorder %s29, 0
      %s1281 = scalar_select %p1280, %s29, 0
      %s1282 = smul.addr %s1279, 4
      %s1283 = sadd.s32 %s1281, %s1282
      %s1284 = smul.addr %s1283, 4
      %s1285 = scalar_lea.vmem %s12, %s1284
      // Predicated region
      $region61: #{_encoder_layer_impl.2} parent=59 // pred_check
        %p1286 = pneg %p278
      $region62: #{_encoder_layer_impl.2} parent=59 // pred_check_branch
        %1288 = sbr.rel (%p1286) target = $region64
      $region63: #{_encoder_layer_impl.2} parent=59 // pred_region
        _
      $region64: #{_encoder_layer_impl.2} parent=59 // pred_fallthru
        _
      // Predicated region
      $region65: #{_encoder_layer_impl.2} parent=59 // pred_check
        %p1289 = pneg %p306
      $region66: #{_encoder_layer_impl.2} parent=59 // pred_check_branch
        %1291 = sbr.rel (%p1289) target = $region68
      $region67: #{_encoder_layer_impl.2} parent=59 // pred_region
        _
      $region68: #{_encoder_layer_impl.2} parent=59 // pred_fallthru
        _
      // Predicated region
      $region69: #{_encoder_layer_impl.2} parent=59 // pred_check
        %p1292 = pneg %p334
      $region70: #{_encoder_layer_impl.2} parent=59 // pred_check_branch
        %1294 = sbr.rel (%p1292) target = $region72
      $region71: #{_encoder_layer_impl.2} parent=59 // pred_region
        _
      $region72: #{_encoder_layer_impl.2} parent=59 // pred_fallthru
        _
    $region60: #{_encoder_layer_impl.2} parent=5 // pred_fallthru
      _
    %p1295 = scmp.le.s32.totalorder 2, %s19
    // Predicated region
    $region73: #{_encoder_layer_impl.2} parent=5 // pred_check
      %p1296 = pneg %p1295
    $region74: #{_encoder_layer_impl.2} parent=5 // pred_check_branch
      %1298 = sbr.rel (%p1296) target = $region76
    $region75: #{_encoder_layer_impl.2} parent=5 // pred_region
      %s1299 = ssub.s32 %s19, 2
      // Predicated region
      $region77: #{_encoder_layer_impl.2} parent=75 // pred_check
        %p1300 = pneg %p284
      $region78: #{_encoder_layer_impl.2} parent=75 // pred_check_branch
        %1302 = sbr.rel (%p1300) target = $region80
      $region79: #{_encoder_layer_impl.2} parent=75 // pred_region
        %p1303 = scmp.lt.s32.totalorder %s30, 1
        %s1304 = scalar_select %p1303, %s30, 1
        %p1305 = scmp.lt.s32.totalorder %s31, 0
        %s1306 = scalar_select %p1305, %s31, 0
        %s1307 = smul.addr %s1304, 4
        %s1308 = sadd.s32 %s1306, %s1307
        %s1309 = smul.addr %s1308, 4
        %s1310 = scalar_lea.vmem %s10, %s1309
      $region80: #{_encoder_layer_impl.2} parent=75 // pred_fallthru
        _
      // Predicated region
      $region81: #{_encoder_layer_impl.2} parent=75 // pred_check
        %p1311 = pneg %p312
      $region82: #{_encoder_layer_impl.2} parent=75 // pred_check_branch
        %1313 = sbr.rel (%p1311) target = $region84
      $region83: #{_encoder_layer_impl.2} parent=75 // pred_region
        %p1314 = scmp.lt.s32.totalorder %s30, 1
        %s1315 = scalar_select %p1314, %s30, 1
        %p1316 = scmp.lt.s32.totalorder %s31, 0
        %s1317 = scalar_select %p1316, %s31, 0
        %s1318 = smul.addr %s1315, 4
        %s1319 = sadd.s32 %s1317, %s1318
        %s1320 = smul.addr %s1319, 4
        %s1321 = scalar_lea.vmem %s11, %s1320
      $region84: #{_encoder_layer_impl.2} parent=75 // pred_fallthru
        _
      // Predicated region
      $region85: #{_encoder_layer_impl.2} parent=75 // pred_check
        %p1322 = pneg %p340
      $region86: #{_encoder_layer_impl.2} parent=75 // pred_check_branch
        %1324 = sbr.rel (%p1322) target = $region88
      $region87: #{_encoder_layer_impl.2} parent=75 // pred_region
        %p1325 = scmp.lt.s32.totalorder %s30, 1
        %s1326 = scalar_select %p1325, %s30, 1
        %p1327 = scmp.lt.s32.totalorder %s31, 0
        %s1328 = scalar_select %p1327, %s31, 0
        %s1329 = smul.addr %s1326, 4
        %s1330 = sadd.s32 %s1328, %s1329
        %s1331 = smul.addr %s1330, 4
        %s1332 = scalar_lea.vmem %s12, %s1331
      $region88: #{_encoder_layer_impl.2} parent=75 // pred_fallthru
        _
    $region76: #{_encoder_layer_impl.2} parent=5 // pred_fallthru
      _
  $region6: #{_encoder_layer_impl.2} parent=0 // loop_footer
    %s23 = sadd.s32 1, %s19
  $region7: #{_encoder_layer_impl.2} parent=0 // loop_footer_branch
    %18 = sbr.rel target = $region3
  $region8: #{_encoder_layer_impl.2} parent=0 // loop_exit
    _

// kernel: _encoder_layer_impl.3
$region0: #{_encoder_layer_impl.3}
  #allocation0 [shape = 'u32[]', space=smem, size = 0x4, offset = 0x4, fixed_abs, tag = 'smem constant byte address 0x4 - core index']
  #allocation1 [shape = 'u32[144,128]{1,0:T(1,128)}', space=vmem, size = 0x12000, scoped, tag = 'internal scratch']
  #allocation2 [shape = 'f32[4,8,1]{2,1,0:T(8,128)}', space=vmem, size = 0x4000, scoped, tag = 'scratch operand']
  #allocation3 [shape = 'f32[4,8,1]{2,1,0:T(8,128)}', space=vmem, size = 0x4000, scoped, tag = 'scratch operand']
  #allocation4 [shape = 'f32[4,8,8]{2,1,0:T(8,128)}', space=vmem, size = 0x4000, scoped, tag = 'scratch operand']
  %s0 = inlined_call_operand.vmem [shape: f32[2,8,32], index: 0, kind: input, shape index: {}]
  %s1 = inlined_call_operand.vmem [shape: bf16[2,4,8,8], index: 1, kind: input, shape index: {}]
  %s2 = inlined_call_operand.vmem [shape: bf16[2,4,8,8], index: 2, kind: input, shape index: {}]
  %s3 = inlined_call_operand.vmem [shape: bf16[2,4,8,8], index: 3, kind: input, shape index: {}]
  %s4 = inlined_call_operand.vmem [shape: bf16[32,32], index: 4, kind: input, shape index: {}]
  %s5 = inlined_call_operand.vmem [shape: f32[1,32], index: 5, kind: input, shape index: {}]
  %s6 = inlined_call_operand.vmem [shape: f32[1,32], index: 6, kind: input, shape index: {}]
  %s7 = inlined_call_operand.vmem [shape: f32[1,32], index: 7, kind: input, shape index: {}]
  %s8 = inlined_call_operand.vmem [shape: bf16[32,64], index: 8, kind: input, shape index: {}]
  %s9 = inlined_call_operand.vmem [shape: f32[1,64], index: 9, kind: input, shape index: {}]
  %s10 = inlined_call_operand.vmem [shape: bf16[64,32], index: 10, kind: input, shape index: {}]
  %s11 = inlined_call_operand.vmem [shape: f32[1,32], index: 11, kind: input, shape index: {}]
  %s12 = inlined_call_operand.hbm [shape: f32[2,8,32], index: 12, kind: output, shape index: {}]
  %s13 = sld [smem:[#allocation0]]
  $region97: #{_encoder_layer_impl.3} parent=0
    _
  %s15 = ssub.s32 1, %s13
  %s16 = scalar_select 0, %s15, %s13
  $region1: #{_encoder_layer_impl.3} parent=0
    #allocation5 [shape = 'u8[8192]{0}', space=vmem, size = 0x2000, scoped, tag = 'output window, operand 0']
    #allocation6 [shape = 's32[2]{0}', space=sflag, size = 0x8, scoped, tag = 'scoped memory for _encoder_layer_impl.3']
    %17 = vsyncpa [#allocation6], 0
    %s18 = scalar_lea.sflag [#allocation6], 1
    %19 = vsyncpa %s18, 0
    loop: start=0, step=1, limit=4
    $region2: #{_encoder_layer_impl.3} parent=1 // loop_pre_header
      _
    $region3: #{_encoder_layer_impl.3} parent=1 // loop_header
      %s21 = sphi 0, %s25
      %p22 = scmp.ge.s32.totalorder %s21, 4
      %s28 = sphi 0, %s47
      %s29 = sphi 0, %s43
      %s30 = sphi 0, %s39
      %s31 = sphi 0, %s28
      %s32 = sphi 0, %s29
      %s33 = sphi 0, %s30
      %s34 = sphi 0, %s31
      %s35 = sphi 0, %s32
      %s36 = sphi 0, %s33
      %s52 = sphi 0, %s54
      %s55 = sphi 0, %s52
      %s56 = sphi 0, %s55
      %s72 = sphi 0, %s56
      %s80 = sphi 0, %s82
      %s83 = sphi 0, %s80
      %s84 = sphi 0, %s83
      %s100 = sphi 0, %s84
      %s112 = sphi 0, %s114
      %s115 = sphi 0, %s112
      %s116 = sphi 0, %s115
      %s132 = sphi 0, %s116
      %s144 = sphi 0, %s146
      %s147 = sphi 0, %s144
      %s148 = sphi 0, %s147
      %s164 = sphi 0, %s148
      %s168 = sphi 0, %s168
      %s170 = sphi 0, %s168
      %s171 = sphi 0, %s170
      %s185 = sphi 0, %s171
      %s189 = sphi 0, %s189
      %s191 = sphi 0, %s189
      %s192 = sphi 0, %s191
      %s206 = sphi 0, %s192
      %s210 = sphi 0, %s210
      %s212 = sphi 0, %s210
      %s213 = sphi 0, %s212
      %s227 = sphi 0, %s213
      %s231 = sphi 0, %s231
      %s233 = sphi 0, %s231
      %s234 = sphi 0, %s233
      %s248 = sphi 0, %s234
      %s252 = sphi 0, %s252
      %s254 = sphi 0, %s252
      %s255 = sphi 0, %s254
      %s269 = sphi 0, %s255
      %s273 = sphi 0, %s273
      %s275 = sphi 0, %s273
      %s276 = sphi 0, %s275
      %s290 = sphi 0, %s276
      %s294 = sphi 0, %s294
      %s296 = sphi 0, %s294
      %s297 = sphi 0, %s296
      %s311 = sphi 0, %s297
      %s315 = sphi 0, %s315
      %s317 = sphi 0, %s315
      %s318 = sphi 0, %s317
      %s332 = sphi 0, %s318
      %s340 = sphi 0, %s342
      %s343 = sphi 0, %s340
      %s344 = sphi 0, %s343
      %s360 = sphi 0, %s344
    $region4: #{_encoder_layer_impl.3} parent=1 // loop_header_branch
      %24 = sbr.rel (%p22) target = $region8
    $region5: #{_encoder_layer_impl.3} parent=1 // loop_body
      %s26 = ssub.s32 %s21, 1
      %s27 = ssub.s32 %s21, 2
      %s37 = sadd.s32 1, %s30
      %p38 = scmp.ge.s32.totalorder %s37, 1
      %s39 = scalar_select %p38, 0, %s37
      %s40 = sadd.s32 1, %s29
      %s41 = scalar_select %p38, %s40, %s29
      %p42 = scmp.ge.s32.totalorder %s41, 1
      %s43 = scalar_select %p42, 0, %s41
      %s44 = sadd.s32 1, %s28
      %s45 = scalar_select %p42, %s44, %s28
      %p46 = scmp.ge.s32.totalorder %s45, 2
      %s47 = scalar_select %p46, 0, %s45
      %s48 = ssub.s32 %s28, %s47
      %s49 = ssub.s32 %s29, %s43
      %s50 = sor.u32 %s48, %s49
      %p51 = scmp.eq.s32.totalorder %s50, 0
      %s53 = sadd.s32 %s52, 1
      %s54 = scalar_select %p51, %s52, %s53
      %p57 = pneg %p51
      %p58 = scmp.eq.s32.totalorder %s21, 1
      %p59 = por %p57, %p58
      %p60 = scmp.ne.s32.totalorder %s52, %s55
      %p61 = scmp.eq.s32.totalorder %s21, 0
      %p62 = por %p60, %p61
      %p63 = scmp.ne.s32.totalorder %s52, %s55
      %p64 = scmp.eq.s32.totalorder %s26, 1
      %p65 = por %p63, %p64
      %p66 = scmp.ne.s32.totalorder %s55, %s56
      %p67 = scmp.eq.s32.totalorder %s26, 0
      %p68 = por %p66, %p67
      %p69 = scmp.ne.s32.totalorder %s55, %s56
      %p70 = scmp.eq.s32.totalorder %s27, 1
      %p71 = por %p69, %p70
      %p73 = scmp.ne.s32.totalorder %s56, %s72
      %p74 = scmp.eq.s32.totalorder %s27, 0
      %p75 = por %p73, %p74
      %s76 = ssub.s32 %s28, %s47
      %s77 = ssub.s32 %s29, %s43
      %s78 = sor.u32 %s76, %s77
      %p79 = scmp.eq.s32.totalorder %s78, 0
      %s81 = sadd.s32 %s80, 1
      %s82 = scalar_select %p79, %s80, %s81
      %p85 = pneg %p79
      %p86 = scmp.eq.s32.totalorder %s21, 1
      %p87 = por %p85, %p86
      %p88 = scmp.ne.s32.totalorder %s80, %s83
      %p89 = scmp.eq.s32.totalorder %s21, 0
      %p90 = por %p88, %p89
      %p91 = scmp.ne.s32.totalorder %s80, %s83
      %p92 = scmp.eq.s32.totalorder %s26, 1
      %p93 = por %p91, %p92
      %p94 = scmp.ne.s32.totalorder %s83, %s84
      %p95 = scmp.eq.s32.totalorder %s26, 0
      %p96 = por %p94, %p95
      %p97 = scmp.ne.s32.totalorder %s83, %s84
      %p98 = scmp.eq.s32.totalorder %s27, 1
      %p99 = por %p97, %p98
      %p101 = scmp.ne.s32.totalorder %s84, %s100
      %p102 = scmp.eq.s32.totalorder %s27, 0
      %p103 = por %p101, %p102
      %p104 = scmp.lt.s32.totalorder %s30, %s29
      %s105 = scalar_select %p104, %s30, %s29
      %p106 = scmp.lt.s32.totalorder %s39, %s43
      %s107 = scalar_select %p106, %s39, %s43
      %s108 = ssub.s32 %s28, %s47
      %s109 = ssub.s32 %s105, %s107
      %s110 = sor.u32 %s108, %s109
      %p111 = scmp.eq.s32.totalorder %s110, 0
      %s113 = sadd.s32 %s112, 1
      %s114 = scalar_select %p111, %s112, %s113
      %p117 = pneg %p111
      %p118 = scmp.eq.s32.totalorder %s21, 1
      %p119 = por %p117, %p118
      %p120 = scmp.ne.s32.totalorder %s112, %s115
      %p121 = scmp.eq.s32.totalorder %s21, 0
      %p122 = por %p120, %p121
      %p123 = scmp.ne.s32.totalorder %s112, %s115
      %p124 = scmp.eq.s32.totalorder %s26, 1
      %p125 = por %p123, %p124
      %p126 = scmp.ne.s32.totalorder %s115, %s116
      %p127 = scmp.eq.s32.totalorder %s26, 0
      %p128 = por %p126, %p127
      %p129 = scmp.ne.s32.totalorder %s115, %s116
      %p130 = scmp.eq.s32.totalorder %s27, 1
      %p131 = por %p129, %p130
      %p133 = scmp.ne.s32.totalorder %s116, %s132
      %p134 = scmp.eq.s32.totalorder %s27, 0
      %p135 = por %p133, %p134
      %p136 = scmp.lt.s32.totalorder %s30, %s29
      %s137 = scalar_select %p136, %s30, %s29
      %p138 = scmp.lt.s32.totalorder %s39, %s43
      %s139 = scalar_select %p138, %s39, %s43
      %s140 = ssub.s32 %s28, %s47
      %s141 = ssub.s32 %s137, %s139
      %s142 = sor.u32 %s140, %s141
      %p143 = scmp.eq.s32.totalorder %s142, 0
      %s145 = sadd.s32 %s144, 1
      %s146 = scalar_select %p143, %s144, %s145
      %p149 = pneg %p143
      %p150 = scmp.eq.s32.totalorder %s21, 1
      %p151 = por %p149, %p150
      %p152 = scmp.ne.s32.totalorder %s144, %s147
      %p153 = scmp.eq.s32.totalorder %s21, 0
      %p154 = por %p152, %p153
      %p155 = scmp.ne.s32.totalorder %s144, %s147
      %p156 = scmp.eq.s32.totalorder %s26, 1
      %p157 = por %p155, %p156
      %p158 = scmp.ne.s32.totalorder %s147, %s148
      %p159 = scmp.eq.s32.totalorder %s26, 0
      %p160 = por %p158, %p159
      %p161 = scmp.ne.s32.totalorder %s147, %s148
      %p162 = scmp.eq.s32.totalorder %s27, 1
      %p163 = por %p161, %p162
      %p165 = scmp.ne.s32.totalorder %s148, %s164
      %p166 = scmp.eq.s32.totalorder %s27, 0
      %p167 = por %p165, %p166
      %s169 = sadd.s32 %s168, 1
      %p172 = scmp.eq.s32.totalorder %s21, 1
      %p173 = scmp.ne.s32.totalorder %s168, %s170
      %p174 = scmp.eq.s32.totalorder %s21, 0
      %p175 = por %p173, %p174
      %p176 = scmp.ne.s32.totalorder %s168, %s170
      %p177 = scmp.eq.s32.totalorder %s26, 1
      %p178 = por %p176, %p177
      %p179 = scmp.ne.s32.totalorder %s170, %s171
      %p180 = scmp.eq.s32.totalorder %s26, 0
      %p181 = por %p179, %p180
      %p182 = scmp.ne.s32.totalorder %s170, %s171
      %p183 = scmp.eq.s32.totalorder %s27, 1
      %p184 = por %p182, %p183
      %p186 = scmp.ne.s32.totalorder %s171, %s185
      %p187 = scmp.eq.s32.totalorder %s27, 0
      %p188 = por %p186, %p187
      %s190 = sadd.s32 %s189, 1
      %p193 = scmp.eq.s32.totalorder %s21, 1
      %p194 = scmp.ne.s32.totalorder %s189, %s191
      %p195 = scmp.eq.s32.totalorder %s21, 0
      %p196 = por %p194, %p195
      %p197 = scmp.ne.s32.totalorder %s189, %s191
      %p198 = scmp.eq.s32.totalorder %s26, 1
      %p199 = por %p197, %p198
      %p200 = scmp.ne.s32.totalorder %s191, %s192
      %p201 = scmp.eq.s32.totalorder %s26, 0
      %p202 = por %p200, %p201
      %p203 = scmp.ne.s32.totalorder %s191, %s192
      %p204 = scmp.eq.s32.totalorder %s27, 1
      %p205 = por %p203, %p204
      %p207 = scmp.ne.s32.totalorder %s192, %s206
      %p208 = scmp.eq.s32.totalorder %s27, 0
      %p209 = por %p207, %p208
      %s211 = sadd.s32 %s210, 1
      %p214 = scmp.eq.s32.totalorder %s21, 1
      %p215 = scmp.ne.s32.totalorder %s210, %s212
      %p216 = scmp.eq.s32.totalorder %s21, 0
      %p217 = por %p215, %p216
      %p218 = scmp.ne.s32.totalorder %s210, %s212
      %p219 = scmp.eq.s32.totalorder %s26, 1
      %p220 = por %p218, %p219
      %p221 = scmp.ne.s32.totalorder %s212, %s213
      %p222 = scmp.eq.s32.totalorder %s26, 0
      %p223 = por %p221, %p222
      %p224 = scmp.ne.s32.totalorder %s212, %s213
      %p225 = scmp.eq.s32.totalorder %s27, 1
      %p226 = por %p224, %p225
      %p228 = scmp.ne.s32.totalorder %s213, %s227
      %p229 = scmp.eq.s32.totalorder %s27, 0
      %p230 = por %p228, %p229
      %s232 = sadd.s32 %s231, 1
      %p235 = scmp.eq.s32.totalorder %s21, 1
      %p236 = scmp.ne.s32.totalorder %s231, %s233
      %p237 = scmp.eq.s32.totalorder %s21, 0
      %p238 = por %p236, %p237
      %p239 = scmp.ne.s32.totalorder %s231, %s233
      %p240 = scmp.eq.s32.totalorder %s26, 1
      %p241 = por %p239, %p240
      %p242 = scmp.ne.s32.totalorder %s233, %s234
      %p243 = scmp.eq.s32.totalorder %s26, 0
      %p244 = por %p242, %p243
      %p245 = scmp.ne.s32.totalorder %s233, %s234
      %p246 = scmp.eq.s32.totalorder %s27, 1
      %p247 = por %p245, %p246
      %p249 = scmp.ne.s32.totalorder %s234, %s248
      %p250 = scmp.eq.s32.totalorder %s27, 0
      %p251 = por %p249, %p250
      %s253 = sadd.s32 %s252, 1
      %p256 = scmp.eq.s32.totalorder %s21, 1
      %p257 = scmp.ne.s32.totalorder %s252, %s254
      %p258 = scmp.eq.s32.totalorder %s21, 0
      %p259 = por %p257, %p258
      %p260 = scmp.ne.s32.totalorder %s252, %s254
      %p261 = scmp.eq.s32.totalorder %s26, 1
      %p262 = por %p260, %p261
      %p263 = scmp.ne.s32.totalorder %s254, %s255
      %p264 = scmp.eq.s32.totalorder %s26, 0
      %p265 = por %p263, %p264
      %p266 = scmp.ne.s32.totalorder %s254, %s255
      %p267 = scmp.eq.s32.totalorder %s27, 1
      %p268 = por %p266, %p267
      %p270 = scmp.ne.s32.totalorder %s255, %s269
      %p271 = scmp.eq.s32.totalorder %s27, 0
      %p272 = por %p270, %p271
      %s274 = sadd.s32 %s273, 1
      %p277 = scmp.eq.s32.totalorder %s21, 1
      %p278 = scmp.ne.s32.totalorder %s273, %s275
      %p279 = scmp.eq.s32.totalorder %s21, 0
      %p280 = por %p278, %p279
      %p281 = scmp.ne.s32.totalorder %s273, %s275
      %p282 = scmp.eq.s32.totalorder %s26, 1
      %p283 = por %p281, %p282
      %p284 = scmp.ne.s32.totalorder %s275, %s276
      %p285 = scmp.eq.s32.totalorder %s26, 0
      %p286 = por %p284, %p285
      %p287 = scmp.ne.s32.totalorder %s275, %s276
      %p288 = scmp.eq.s32.totalorder %s27, 1
      %p289 = por %p287, %p288
      %p291 = scmp.ne.s32.totalorder %s276, %s290
      %p292 = scmp.eq.s32.totalorder %s27, 0
      %p293 = por %p291, %p292
      %s295 = sadd.s32 %s294, 1
      %p298 = scmp.eq.s32.totalorder %s21, 1
      %p299 = scmp.ne.s32.totalorder %s294, %s296
      %p300 = scmp.eq.s32.totalorder %s21, 0
      %p301 = por %p299, %p300
      %p302 = scmp.ne.s32.totalorder %s294, %s296
      %p303 = scmp.eq.s32.totalorder %s26, 1
      %p304 = por %p302, %p303
      %p305 = scmp.ne.s32.totalorder %s296, %s297
      %p306 = scmp.eq.s32.totalorder %s26, 0
      %p307 = por %p305, %p306
      %p308 = scmp.ne.s32.totalorder %s296, %s297
      %p309 = scmp.eq.s32.totalorder %s27, 1
      %p310 = por %p308, %p309
      %p312 = scmp.ne.s32.totalorder %s297, %s311
      %p313 = scmp.eq.s32.totalorder %s27, 0
      %p314 = por %p312, %p313
      %s316 = sadd.s32 %s315, 1
      %p319 = scmp.eq.s32.totalorder %s21, 1
      %p320 = scmp.ne.s32.totalorder %s315, %s317
      %p321 = scmp.eq.s32.totalorder %s21, 0
      %p322 = por %p320, %p321
      %p323 = scmp.ne.s32.totalorder %s315, %s317
      %p324 = scmp.eq.s32.totalorder %s26, 1
      %p325 = por %p323, %p324
      %p326 = scmp.ne.s32.totalorder %s317, %s318
      %p327 = scmp.eq.s32.totalorder %s26, 0
      %p328 = por %p326, %p327
      %p329 = scmp.ne.s32.totalorder %s317, %s318
      %p330 = scmp.eq.s32.totalorder %s27, 1
      %p331 = por %p329, %p330
      %p333 = scmp.ne.s32.totalorder %s318, %s332
      %p334 = scmp.eq.s32.totalorder %s27, 0
      %p335 = por %p333, %p334
      %s336 = ssub.s32 %s28, %s47
      %s337 = ssub.s32 %s29, %s43
      %s338 = sor.u32 %s336, %s337
      %p339 = scmp.eq.s32.totalorder %s338, 0
      %s341 = sadd.s32 %s340, 1
      %s342 = scalar_select %p339, %s340, %s341
      %p345 = pneg %p339
      %p346 = scmp.eq.s32.totalorder %s21, 1
      %p347 = por %p345, %p346
      %p348 = scmp.ne.s32.totalorder %s340, %s343
      %p349 = scmp.eq.s32.totalorder %s21, 0
      %p350 = por %p348, %p349
      %p351 = scmp.ne.s32.totalorder %s340, %s343
      %p352 = scmp.eq.s32.totalorder %s26, 1
      %p353 = por %p351, %p352
      %p354 = scmp.ne.s32.totalorder %s343, %s344
      %p355 = scmp.eq.s32.totalorder %s26, 0
      %p356 = por %p354, %p355
      %p357 = scmp.ne.s32.totalorder %s343, %s344
      %p358 = scmp.eq.s32.totalorder %s27, 1
      %p359 = por %p357, %p358
      %p361 = scmp.ne.s32.totalorder %s344, %s360
      %p362 = scmp.eq.s32.totalorder %s27, 0
      %p363 = por %p361, %p362
      %p364 = scmp.le.s32.totalorder 1, %s21
      %p365 = scmp.lt.s32.totalorder %s21, 3
      %p366 = pnand %p364, %p365
      %p367 = pneg %p366
      // Predicated region
      $region9: #{_encoder_layer_impl.3} parent=5 // pred_check
        _
      $region10: #{_encoder_layer_impl.3} parent=5 // pred_check_branch
        %369 = sbr.rel (%p366) target = $region12
      $region11: #{_encoder_layer_impl.3} parent=5 // pred_region
        %s370 = ssub.s32 %s21, 1
        // Predicated region
        $region13: #{_encoder_layer_impl.3} parent=11 // pred_check
          %p371 = pneg %p181
        $region14: #{_encoder_layer_impl.3} parent=11 // pred_check_branch
          %373 = sbr.rel (%p371) target = $region16
        $region15: #{_encoder_layer_impl.3} parent=11 // pred_region
          _
        $region16: #{_encoder_layer_impl.3} parent=11 // pred_fallthru
          _
        // Predicated region
        $region17: #{_encoder_layer_impl.3} parent=11 // pred_check
          %p374 = pneg %p202
        $region18: #{_encoder_layer_impl.3} parent=11 // pred_check_branch
          %376 = sbr.rel (%p374) target = $region20
        $region19: #{_encoder_layer_impl.3} parent=11 // pred_region
          _
        $region20: #{_encoder_layer_impl.3} parent=11 // pred_fallthru
          _
        // Predicated region
        $region21: #{_encoder_layer_impl.3} parent=11 // pred_check
          %p377 = pneg %p223
        $region22: #{_encoder_layer_impl.3} parent=11 // pred_check_branch
          %379 = sbr.rel (%p377) target = $region24
        $region23: #{_encoder_layer_impl.3} parent=11 // pred_region
          _
        $region24: #{_encoder_layer_impl.3} parent=11 // pred_fallthru
          _
        // Predicated region
        $region25: #{_encoder_layer_impl.3} parent=11 // pred_check
          %p380 = pneg %p244
        $region26: #{_encoder_layer_impl.3} parent=11 // pred_check_branch
          %382 = sbr.rel (%p380) target = $region28
        $region27: #{_encoder_layer_impl.3} parent=11 // pred_region
          _
        $region28: #{_encoder_layer_impl.3} parent=11 // pred_fallthru
          _
        // Predicated region
        $region29: #{_encoder_layer_impl.3} parent=11 // pred_check
          %p383 = pneg %p265
        $region30: #{_encoder_layer_impl.3} parent=11 // pred_check_branch
          %385 = sbr.rel (%p383) target = $region32
        $region31: #{_encoder_layer_impl.3} parent=11 // pred_region
          _
        $region32: #{_encoder_layer_impl.3} parent=11 // pred_fallthru
          _
        // Predicated region
        $region33: #{_encoder_layer_impl.3} parent=11 // pred_check
          %p386 = pneg %p286
        $region34: #{_encoder_layer_impl.3} parent=11 // pred_check_branch
          %388 = sbr.rel (%p386) target = $region36
        $region35: #{_encoder_layer_impl.3} parent=11 // pred_region
          _
        $region36: #{_encoder_layer_impl.3} parent=11 // pred_fallthru
          _
        // Predicated region
        $region37: #{_encoder_layer_impl.3} parent=11 // pred_check
          %p389 = pneg %p307
        $region38: #{_encoder_layer_impl.3} parent=11 // pred_check_branch
          %391 = sbr.rel (%p389) target = $region40
        $region39: #{_encoder_layer_impl.3} parent=11 // pred_region
          _
        $region40: #{_encoder_layer_impl.3} parent=11 // pred_fallthru
          _
        // Predicated region
        $region41: #{_encoder_layer_impl.3} parent=11 // pred_check
          %p392 = pneg %p328
        $region42: #{_encoder_layer_impl.3} parent=11 // pred_check_branch
          %394 = sbr.rel (%p392) target = $region44
        $region43: #{_encoder_layer_impl.3} parent=11 // pred_region
          _
        $region44: #{_encoder_layer_impl.3} parent=11 // pred_fallthru
          _
      $region12: #{_encoder_layer_impl.3} parent=5 // pred_fallthru
        _
      %p395 = scmp.lt.s32.totalorder %s21, 2
      // Predicated region
      $region45: #{_encoder_layer_impl.3} parent=5 // pred_check
        %p396 = pneg %p395
      $region46: #{_encoder_layer_impl.3} parent=5 // pred_check_branch
        %398 = sbr.rel (%p396) target = $region48
      $region47: #{_encoder_layer_impl.3} parent=5 // pred_region
        // Predicated region
        $region49: #{_encoder_layer_impl.3} parent=47 // pred_check
          %p399 = pneg %p62
        $region50: #{_encoder_layer_impl.3} parent=47 // pred_check_branch
          %401 = sbr.rel (%p399) target = $region52
        $region51: #{_encoder_layer_impl.3} parent=47 // pred_region
          %p402 = scmp.lt.s32.totalorder %s28, 1
          %s403 = scalar_select %p402, %s28, 1
          %p404 = scmp.lt.s32.totalorder %s29, 0
          %s405 = scalar_select %p404, %s29, 0
          %s406 = sadd.s32 %s405, %s403
          %s407 = smul.addr %s406, 8
          %s408 = scalar_lea.vmem %s0, %s407
        $region52: #{_encoder_layer_impl.3} parent=47 // pred_fallthru
          _
        // Predicated region
        $region53: #{_encoder_layer_impl.3} parent=47 // pred_check
          %p409 = pneg %p90
        $region54: #{_encoder_layer_impl.3} parent=47 // pred_check_branch
          %411 = sbr.rel (%p409) target = $region56
        $region55: #{_encoder_layer_impl.3} parent=47 // pred_region
          %p412 = scmp.lt.s32.totalorder %s28, 1
          %s413 = scalar_select %p412, %s28, 1
          %p414 = scmp.lt.s32.totalorder %s29, 0
          %s415 = scalar_select %p414, %s29, 0
          %s416 = smul.addr %s413, 4
          %s417 = sadd.s32 %s415, %s416
          %s418 = smul.addr %s417, 4
          %s419 = scalar_lea.vmem %s1, %s418
        $region56: #{_encoder_layer_impl.3} parent=47 // pred_fallthru
          _
        // Predicated region
        $region57: #{_encoder_layer_impl.3} parent=47 // pred_check
          %p420 = pneg %p122
        $region58: #{_encoder_layer_impl.3} parent=47 // pred_check_branch
          %422 = sbr.rel (%p420) target = $region60
        $region59: #{_encoder_layer_impl.3} parent=47 // pred_region
          %p423 = scmp.lt.s32.totalorder %s30, %s29
          %s424 = scalar_select %p423, %s30, %s29
          %p425 = scmp.lt.s32.totalorder %s28, 1
          %s426 = scalar_select %p425, %s28, 1
          %p427 = scmp.lt.s32.totalorder %s424, 0
          %s428 = scalar_select %p427, %s424, 0
          %s429 = smul.addr %s426, 4
          %s430 = sadd.s32 %s428, %s429
          %s431 = smul.addr %s430, 4
          %s432 = scalar_lea.vmem %s2, %s431
          %p433 = scmp.lt.s32.totalorder %s30, %s29
          %s434 = scalar_select %p433, %s30, %s29
        $region60: #{_encoder_layer_impl.3} parent=47 // pred_fallthru
          _
        // Predicated region
        $region61: #{_encoder_layer_impl.3} parent=47 // pred_check
          %p435 = pneg %p154
        $region62: #{_encoder_layer_impl.3} parent=47 // pred_check_branch
          %437 = sbr.rel (%p435) target = $region64
        $region63: #{_encoder_layer_impl.3} parent=47 // pred_region
          %p438 = scmp.lt.s32.totalorder %s30, %s29
          %s439 = scalar_select %p438, %s30, %s29
          %p440 = scmp.lt.s32.totalorder %s28, 1
          %s441 = scalar_select %p440, %s28, 1
          %p442 = scmp.lt.s32.totalorder %s439, 0
          %s443 = scalar_select %p442, %s439, 0
          %s444 = smul.addr %s441, 4
          %s445 = sadd.s32 %s443, %s444
          %s446 = smul.addr %s445, 4
          %s447 = scalar_lea.vmem %s3, %s446
          %p448 = scmp.lt.s32.totalorder %s30, %s29
          %s449 = scalar_select %p448, %s30, %s29
        $region64: #{_encoder_layer_impl.3} parent=47 // pred_fallthru
          _
      $region48: #{_encoder_layer_impl.3} parent=5 // pred_fallthru
        _
      %p450 = scmp.le.s32.totalorder 1, %s21
      %p451 = scmp.lt.s32.totalorder %s21, 3
      %p452 = pnand %p450, %p451
      %p453 = pneg %p452
      // Predicated region
      $region65: #{_encoder_layer_impl.3} parent=5 // pred_check
        _
      $region66: #{_encoder_layer_impl.3} parent=5 // pred_check_branch
        %455 = sbr.rel (%p452) target = $region68
      $region67: #{_encoder_layer_impl.3} parent=5 // pred_region
        %s456 = ssub.s32 %s21, 1
        %p457 = scmp.lt.s32.totalorder %s31, 1
        %s458 = scalar_select %p457, %s31, 1
        %p459 = scmp.lt.s32.totalorder %s32, 0
        %s460 = scalar_select %p459, %s32, 0
        %s461 = sadd.s32 %s460, %s458
        %s462 = smul.addr %s461, 8
        %s463 = scalar_lea.vmem %s0, %s462
        %p464 = pneg %p68
        %p465 = pneg %p65
        %p466 = scmp.lt.s32.totalorder %s31, 1
        %s467 = scalar_select %p466, %s31, 1
        %p468 = scmp.lt.s32.totalorder %s32, 0
        %s469 = scalar_select %p468, %s32, 0
        %s470 = smul.addr %s467, 4
        %s471 = sadd.s32 %s469, %s470
        %s472 = smul.addr %s471, 4
        %s473 = scalar_lea.vmem %s1, %s472
        %p474 = pneg %p96
        %p475 = pneg %p93
        %p476 = scmp.lt.s32.totalorder %s33, %s32
        %s477 = scalar_select %p476, %s33, %s32
        %p478 = scmp.lt.s32.totalorder %s31, 1
        %s479 = scalar_select %p478, %s31, 1
        %p480 = scmp.lt.s32.totalorder %s477, 0
        %s481 = scalar_select %p480, %s477, 0
        %s482 = smul.addr %s479, 4
        %s483 = sadd.s32 %s481, %s482
        %s484 = smul.addr %s483, 4
        %s485 = scalar_lea.vmem %s2, %s484
        %p486 = pneg %p128
        %p487 = pneg %p125
        %p488 = scmp.lt.s32.totalorder %s33, %s32
        %s489 = scalar_select %p488, %s33, %s32
        %p490 = scmp.lt.s32.totalorder %s31, 1
        %s491 = scalar_select %p490, %s31, 1
        %p492 = scmp.lt.s32.totalorder %s489, 0
        %s493 = scalar_select %p492, %s489, 0
        %s494 = smul.addr %s491, 4
        %s495 = sadd.s32 %s493, %s494
        %s496 = smul.addr %s495, 4
        %s497 = scalar_lea.vmem %s3, %s496
        %p498 = pneg %p160
        %p499 = pneg %p157
        %p500 = pneg %p181
        %p501 = pneg %p178
        %p502 = pneg %p202
        %p503 = pneg %p199
        %p504 = pneg %p223
        %p505 = pneg %p220
        %p506 = pneg %p244
        %p507 = pneg %p241
        %p508 = pneg %p265
        %p509 = pneg %p262
        %p510 = pneg %p286
        %p511 = pneg %p283
        %p512 = pneg %p307
        %p513 = pneg %p304
        %p514 = pneg %p328
        %p515 = pneg %p325
        %p516 = pneg %p356
        %p517 = pneg %p353
        %s518 = sand.u32 %s343, 1
        %s519 = scalar_lea.sflag [#allocation6], %s518
        %s520 = sand.u32 %s343, 1
        %s521 = smul.addr %s520, 8
        %s522 = scalar_lea.vmem [#allocation5], %s521
        %p523 = scmp.lt.s32.totalorder %s31, 1
        %s524 = scalar_select %p523, %s31, 1
        %p525 = scmp.lt.s32.totalorder %s32, 0
        %s526 = scalar_select %p525, %s32, 0
        %s527 = sadd.s32 %s526, %s524
        %s528 = smul.addr %s527, 8
        %s529 = scalar_lea.vmem %s0, %s528
        %p530 = scmp.lt.s32.totalorder %s31, 1
        %s531 = scalar_select %p530, %s31, 1
        %p532 = scmp.lt.s32.totalorder %s32, 0
        %s533 = scalar_select %p532, %s32, 0
        %s534 = smul.addr %s531, 4
        %s535 = sadd.s32 %s533, %s534
        %s536 = smul.addr %s535, 4
        %s537 = scalar_lea.vmem %s1, %s536
        %p538 = scmp.lt.s32.totalorder %s33, %s32
        %s539 = scalar_select %p538, %s33, %s32
        %p540 = scmp.lt.s32.totalorder %s31, 1
        %s541 = scalar_select %p540, %s31, 1
        %p542 = scmp.lt.s32.totalorder %s539, 0
        %s543 = scalar_select %p542, %s539, 0
        %s544 = smul.addr %s541, 4
        %s545 = sadd.s32 %s543, %s544
        %s546 = smul.addr %s545, 4
        %s547 = scalar_lea.vmem %s2, %s546
        %p548 = scmp.lt.s32.totalorder %s33, %s32
        %s549 = scalar_select %p548, %s33, %s32
        %p550 = scmp.lt.s32.totalorder %s33, %s32
        %s551 = scalar_select %p550, %s33, %s32
        %p552 = scmp.lt.s32.totalorder %s31, 1
        %s553 = scalar_select %p552, %s31, 1
        %p554 = scmp.lt.s32.totalorder %s551, 0
        %s555 = scalar_select %p554, %s551, 0
        %s556 = smul.addr %s553, 4
        %s557 = sadd.s32 %s555, %s556
        %s558 = smul.addr %s557, 4
        %s559 = scalar_lea.vmem %s3, %s558
        %p560 = scmp.lt.s32.totalorder %s33, %s32
        %s561 = scalar_select %p560, %s33, %s32
        %p563 = scmp.eq.s32.totalorder %s33, 0
        // Predicated region
        $region69: #{_encoder_layer_impl.3} parent=67 // pred_check
          %p564 = pneg %p563
        $region70: #{_encoder_layer_impl.3} parent=67 // pred_check_branch
          %566 = sbr.rel (%p564) target = $region72
        $region71: #{_encoder_layer_impl.3} parent=67 // pred_region
          %vm567 = vcmask 7168
          %568 = vst.msk [vmem:[#allocation2] sm:$0xff] %vm567, -inf
          %569 = vst.msk [vmem:[#allocation2 + $0x8] sm:$0xff] %vm567, -inf
          %570 = vst.msk [vmem:[#allocation2 + $0x10] sm:$0xff] %vm567, -inf
          %571 = vst.msk [vmem:[#allocation2 + $0x18] sm:$0xff] %vm567, -inf
          %572 = vst.msk [vmem:[#allocation3] sm:$0xff] %vm567, 0.0
          %573 = vst.msk [vmem:[#allocation3 + $0x8] sm:$0xff] %vm567, 0.0
          %574 = vst.msk [vmem:[#allocation3 + $0x10] sm:$0xff] %vm567, 0.0
          %575 = vst.msk [vmem:[#allocation3 + $0x18] sm:$0xff] %vm567, 0.0
          %vm576 = vcmask 64512
          %577 = vst.msk [vmem:[#allocation4] sm:$0xff] %vm576, 0.0
          %578 = vst.msk [vmem:[#allocation4 + $0x8] sm:$0xff] %vm576, 0.0
          %579 = vst.msk [vmem:[#allocation4 + $0x10] sm:$0xff] %vm576, 0.0
          %580 = vst.msk [vmem:[#allocation4 + $0x18] sm:$0xff] %vm576, 0.0
        $region72: #{_encoder_layer_impl.3} parent=67 // pred_fallthru
          _
        %p581 = scmp.lt.s32.totalorder %s33, %s32
        // Predicated region
        $region73: #{_encoder_layer_impl.3} parent=67 // pred_check
          %p582 = pneg %p581
        $region74: #{_encoder_layer_impl.3} parent=67 // pred_check_branch
          %584 = sbr.rel (%p582) target = $region76
        $region75: #{_encoder_layer_impl.3} parent=67 // pred_region
          %v585 = vld [vmem:[%s537] sm:$0xf]
          %v586 = vld [vmem:[%s537 + $0x4] sm:$0xf]
          %v587 = vld [vmem:[%s537 + $0x8] sm:$0xf]
          %v588 = vld [vmem:[%s537 + $0xc] sm:$0xf]
          %v589 = vld [vmem:[%s547] sm:$0xf]
          %v590 = vld [vmem:[%s547 + $0x4] sm:$0xf]
          %v591 = vld [vmem:[%s547 + $0x8] sm:$0xf]
          %v592 = vld [vmem:[%s547 + $0xc] sm:$0xf]
          %vm593 = vcmask 64512
          %v595 = vsel %vm593, %v585, 0
          %v598 = vsel %vm593, %v589, 0
          %600 = vmatprep.subr.bf16.mxu0 0
          %601 = vmatpush1.bf16.xpose.msra.mxu0 0
          %602 = vmatprep.subr.bf16.mxu0 0
          %603 = vmatpush1.bf16.xpose.msra.mxu0 0
          %604 = vmatprep.subr.bf16.mxu0 0
          %605 = vmatpush1.bf16.xpose.msra.mxu0 0
          %606 = vmatprep.subr.bf16.mxu0 0
          %607 = vmatpush1.bf16.xpose.msra.mxu0 0
          %608 = vmatprep.subr.bf16.mxu0 0
          %609 = vmatpush1.bf16.xpose.msra.mxu0 0
          %610 = vmatprep.subr.bf16.mxu0 0
          %611 = vmatpush1.bf16.xpose.msra.mxu0 0
          %612 = vmatprep.subr.bf16.mxu0 0
          %613 = vmatpush1.bf16.xpose.msra.mxu0 0
          %614 = vmatprep.subr.bf16.mxu0 0
          %615 = vmatpush1.bf16.xpose.msra.mxu0 %v598
          %616 = vmatprep.subr.bf16.mxu0 0
          %617 = vmatpush2.bf16.xpose.msra.mxu0 0
          %618 = vmatprep.subr.bf16.mxu0 0
          %619 = vmatpush2.bf16.xpose.msra.mxu0 0
          %620 = vmatprep.subr.bf16.mxu0 0
          %621 = vmatpush2.bf16.xpose.msra.mxu0 0
          %622 = vmatprep.subr.bf16.mxu0 0
          %623 = vmatpush2.bf16.xpose.msra.mxu0 0
          %624 = vmatprep.subr.bf16.mxu0 0
          %625 = vmatpush2.bf16.xpose.msra.mxu0 0
          %626 = vmatprep.subr.bf16.mxu0 0
          %627 = vmatpush2.bf16.xpose.msra.mxu0 0
          %628 = vmatprep.subr.bf16.mxu0 0
          %629 = vmatpush2.bf16.xpose.msra.mxu0 0
          %630 = vmatprep.subr.bf16.mxu0 0
          %631 = vmatpush2.bf16.xpose.msra.mxu0 0
          %632 = vmatprep.mubr.bf16.mxu0 0
          %633 = vmatmul.mubr.bf16.gmra.mxu0 %v595
          %v634 = vpop.f32.mrf.mxu0
          %v635 = vadd.f32 0.0, %v634
          %v636 = vpop.f32.mrf.mxu0
          %v637 = vpop.f32.mrf.mxu0
          %v638 = vpop.f32.mrf.mxu0
          %639 = vdwg.mxu0
          %v641 = vsel %vm593, %v586, 0
          %v644 = vsel %vm593, %v590, 0
          %646 = vmatprep.subr.bf16.mxu0 0
          %647 = vmatpush1.bf16.xpose.msra.mxu0 0
          %648 = vmatprep.subr.bf16.mxu0 0
          %649 = vmatpush1.bf16.xpose.msra.mxu0 0
          %650 = vmatprep.subr.bf16.mxu0 0
          %651 = vmatpush1.bf16.xpose.msra.mxu0 0
          %652 = vmatprep.subr.bf16.mxu0 0
          %653 = vmatpush1.bf16.xpose.msra.mxu0 0
          %654 = vmatprep.subr.bf16.mxu0 0
          %655 = vmatpush1.bf16.xpose.msra.mxu0 0
          %656 = vmatprep.subr.bf16.mxu0 0
          %657 = vmatpush1.bf16.xpose.msra.mxu0 0
          %658 = vmatprep.subr.bf16.mxu0 0
          %659 = vmatpush1.bf16.xpose.msra.mxu0 0
          %660 = vmatprep.subr.bf16.mxu0 0
          %661 = vmatpush1.bf16.xpose.msra.mxu0 %v644
          %662 = vmatprep.subr.bf16.mxu0 0
          %663 = vmatpush2.bf16.xpose.msra.mxu0 0
          %664 = vmatprep.subr.bf16.mxu0 0
          %665 = vmatpush2.bf16.xpose.msra.mxu0 0
          %666 = vmatprep.subr.bf16.mxu0 0
          %667 = vmatpush2.bf16.xpose.msra.mxu0 0
          %668 = vmatprep.subr.bf16.mxu0 0
          %669 = vmatpush2.bf16.xpose.msra.mxu0 0
          %670 = vmatprep.subr.bf16.mxu0 0
          %671 = vmatpush2.bf16.xpose.msra.mxu0 0
          %672 = vmatprep.subr.bf16.mxu0 0
          %673 = vmatpush2.bf16.xpose.msra.mxu0 0
          %674 = vmatprep.subr.bf16.mxu0 0
          %675 = vmatpush2.bf16.xpose.msra.mxu0 0
          %676 = vmatprep.subr.bf16.mxu0 0
          %677 = vmatpush2.bf16.xpose.msra.mxu0 0
          %678 = vmatprep.mubr.bf16.mxu0 0
          %679 = vmatmul.mubr.bf16.gmra.mxu0 %v641
          %v680 = vpop.f32.mrf.mxu0
          %v681 = vadd.f32 0.0, %v680
          %v682 = vpop.f32.mrf.mxu0
          %v683 = vpop.f32.mrf.mxu0
          %v684 = vpop.f32.mrf.mxu0
          %685 = vdwg.mxu0
          %v687 = vsel %vm593, %v587, 0
          %v690 = vsel %vm593, %v591, 0
          %692 = vmatprep.subr.bf16.mxu0 0
          %693 = vmatpush1.bf16.xpose.msra.mxu0 0
          %694 = vmatprep.subr.bf16.mxu0 0
          %695 = vmatpush1.bf16.xpose.msra.mxu0 0
          %696 = vmatprep.subr.bf16.mxu0 0
          %697 = vmatpush1.bf16.xpose.msra.mxu0 0
          %698 = vmatprep.subr.bf16.mxu0 0
          %699 = vmatpush1.bf16.xpose.msra.mxu0 0
          %700 = vmatprep.subr.bf16.mxu0 0
          %701 = vmatpush1.bf16.xpose.msra.mxu0 0
          %702 = vmatprep.subr.bf16.mxu0 0
          %703 = vmatpush1.bf16.xpose.msra.mxu0 0
          %704 = vmatprep.subr.bf16.mxu0 0
          %705 = vmatpush1.bf16.xpose.msra.mxu0 0
          %706 = vmatprep.subr.bf16.mxu0 0
          %707 = vmatpush1.bf16.xpose.msra.mxu0 %v690
          %708 = vmatprep.subr.bf16.mxu0 0
          %709 = vmatpush2.bf16.xpose.msra.mxu0 0
          %710 = vmatprep.subr.bf16.mxu0 0
          %711 = vmatpush2.bf16.xpose.msra.mxu0 0
          %712 = vmatprep.subr.bf16.mxu0 0
          %713 = vmatpush2.bf16.xpose.msra.mxu0 0
          %714 = vmatprep.subr.bf16.mxu0 0
          %715 = vmatpush2.bf16.xpose.msra.mxu0 0
          %716 = vmatprep.subr.bf16.mxu0 0
          %717 = vmatpush2.bf16.xpose.msra.mxu0 0
          %718 = vmatprep.subr.bf16.mxu0 0
          %719 = vmatpush2.bf16.xpose.msra.mxu0 0
          %720 = vmatprep.subr.bf16.mxu0 0
          %721 = vmatpush2.bf16.xpose.msra.mxu0 0
          %722 = vmatprep.subr.bf16.mxu0 0
          %723 = vmatpush2.bf16.xpose.msra.mxu0 0
          %724 = vmatprep.mubr.bf16.mxu0 0
          %725 = vmatmul.mubr.bf16.gmra.mxu0 %v687
          %v726 = vpop.f32.mrf.mxu0
          %v727 = vadd.f32 0.0, %v726
          %v728 = vpop.f32.mrf.mxu0
          %v729 = vpop.f32.mrf.mxu0
          %v730 = vpop.f32.mrf.mxu0
          %731 = vdwg.mxu0
          %v733 = vsel %vm593, %v588, 0
          %v736 = vsel %vm593, %v592, 0
          %738 = vmatprep.subr.bf16.mxu0 0
          %739 = vmatpush1.bf16.xpose.msra.mxu0 0
          %740 = vmatprep.subr.bf16.mxu0 0
          %741 = vmatpush1.bf16.xpose.msra.mxu0 0
          %742 = vmatprep.subr.bf16.mxu0 0
          %743 = vmatpush1.bf16.xpose.msra.mxu0 0
          %744 = vmatprep.subr.bf16.mxu0 0
          %745 = vmatpush1.bf16.xpose.msra.mxu0 0
          %746 = vmatprep.subr.bf16.mxu0 0
          %747 = vmatpush1.bf16.xpose.msra.mxu0 0
          %748 = vmatprep.subr.bf16.mxu0 0
          %749 = vmatpush1.bf16.xpose.msra.mxu0 0
          %750 = vmatprep.subr.bf16.mxu0 0
          %751 = vmatpush1.bf16.xpose.msra.mxu0 0
          %752 = vmatprep.subr.bf16.mxu0 0
          %753 = vmatpush1.bf16.xpose.msra.mxu0 %v736
          %754 = vmatprep.subr.bf16.mxu0 0
          %755 = vmatpush2.bf16.xpose.msra.mxu0 0
          %756 = vmatprep.subr.bf16.mxu0 0
          %757 = vmatpush2.bf16.xpose.msra.mxu0 0
          %758 = vmatprep.subr.bf16.mxu0 0
          %759 = vmatpush2.bf16.xpose.msra.mxu0 0
          %760 = vmatprep.subr.bf16.mxu0 0
          %761 = vmatpush2.bf16.xpose.msra.mxu0 0
          %762 = vmatprep.subr.bf16.mxu0 0
          %763 = vmatpush2.bf16.xpose.msra.mxu0 0
          %764 = vmatprep.subr.bf16.mxu0 0
          %765 = vmatpush2.bf16.xpose.msra.mxu0 0
          %766 = vmatprep.subr.bf16.mxu0 0
          %767 = vmatpush2.bf16.xpose.msra.mxu0 0
          %768 = vmatprep.subr.bf16.mxu0 0
          %769 = vmatpush2.bf16.xpose.msra.mxu0 0
          %770 = vmatprep.mubr.bf16.mxu0 0
          %771 = vmatmul.mubr.bf16.gmra.mxu0 %v733
          %v772 = vpop.f32.mrf.mxu0
          %v773 = vadd.f32 0.0, %v772
          %v774 = vpop.f32.mrf.mxu0
          %v775 = vpop.f32.mrf.mxu0
          %v776 = vpop.f32.mrf.mxu0
          %777 = vdwg.mxu0
          %v778 = vld [vmem:[#allocation2] sm:$0xff]
          %v779 = vld [vmem:[#allocation2 + $0x8] sm:$0xff]
          %v780 = vld [vmem:[#allocation2 + $0x10] sm:$0xff]
          %v781 = vld [vmem:[#allocation2 + $0x18] sm:$0xff]
          %v782 = vsel %vm593, %v635, -inf
          %783 = vmax.xlane.f32.xlu0 %v782
          %v784 = vpop.xlane.xlu0 %783
          %v785 = vsel %vm593, %v681, -inf
          %786 = vmax.xlane.f32.xlu0 %v785
          %v787 = vpop.xlane.xlu0 %786
          %v788 = vsel %vm593, %v727, -inf
          %789 = vmax.xlane.f32.xlu0 %v788
          %v790 = vpop.xlane.xlu0 %789
          %v791 = vsel %vm593, %v773, -inf
          %792 = vmax.xlane.f32.xlu0 %v791
          %v793 = vpop.xlane.xlu0 %792
          %v794 = vmax.f32 %v778, %v784
          %v795 = vmax.f32 %v779, %v787
          %v796 = vmax.f32 %v780, %v790
          %v797 = vmax.f32 %v781, %v793
          %v798 = vsub.f32 %v778, %v794
          %v799 = vsub.f32 %v779, %v795
          %v800 = vsub.f32 %v780, %v796
          %v801 = vsub.f32 %v781, %v797
          %v802 = vmul.f32 %v798, 1.442695
          %v803 = vpow.pop %v802
          %v804 = vmul.f32 %v799, 1.442695
          %v805 = vpow.pop %v804
          %v806 = vmul.f32 %v800, 1.442695
          %v807 = vpow.pop %v806
          %v808 = vmul.f32 %v801, 1.442695
          %v809 = vpow.pop %v808
          %811 = vset.pattern.permute.xlu0 0
          %812 = vperm.xlu0 %811, %v794
          %v813 = vpop.permute.xlu0 %812
          %816 = vset.pattern.permute.xlu0 0
          %817 = vperm.xlu0 %816, %v795
          %v818 = vpop.permute.xlu0 %817
          %821 = vset.pattern.permute.xlu0 0
          %822 = vperm.xlu0 %821, %v796
          %v823 = vpop.permute.xlu0 %822
          %826 = vset.pattern.permute.xlu0 0
          %827 = vperm.xlu0 %826, %v797
          %v828 = vpop.permute.xlu0 %827
          %v830 = vsub.f32 %v635, %v813
          %v831 = vsub.f32 %v681, %v818
          %v832 = vsub.f32 %v727, %v823
          %v833 = vsub.f32 %v773, %v828
          %v834 = vmul.f32 %v830, 1.442695
          %v835 = vpow.pop %v834
          %v836 = vmul.f32 %v831, 1.442695
          %v837 = vpow.pop %v836
          %v838 = vmul.f32 %v832, 1.442695
          %v839 = vpow.pop %v838
          %v840 = vmul.f32 %v833, 1.442695
          %v841 = vpow.pop %v840
          %v842 = vld [vmem:[#allocation3] sm:$0xff]
          %v843 = vld [vmem:[#allocation3 + $0x8] sm:$0xff]
          %v844 = vld [vmem:[#allocation3 + $0x10] sm:$0xff]
          %v845 = vld [vmem:[#allocation3 + $0x18] sm:$0xff]
          %v846 = vmul.f32 %v803, %v842
          %v847 = vmul.f32 %v805, %v843
          %v848 = vmul.f32 %v807, %v844
          %v849 = vmul.f32 %v809, %v845
          %v850 = vsel %vm593, %v835, 0.0
          %851 = vadd.xlane.f32.xlu0 %v850
          %v852 = vpop.xlane.xlu0 %851
          %v853 = vsel %vm593, %v837, 0.0
          %854 = vadd.xlane.f32.xlu0 %v853
          %v855 = vpop.xlane.xlu0 %854
          %v856 = vsel %vm593, %v839, 0.0
          %857 = vadd.xlane.f32.xlu0 %v856
          %v858 = vpop.xlane.xlu0 %857
          %v859 = vsel %vm593, %v841, 0.0
          %860 = vadd.xlane.f32.xlu0 %v859
          %v861 = vpop.xlane.xlu0 %860
          %v862 = vadd.f32 %v846, %v852
          %v863 = vadd.f32 %v847, %v855
          %v864 = vadd.f32 %v848, %v858
          %v865 = vadd.f32 %v849, %v861
          %vm866 = vcmask 7168
          %867 = vst.msk [vmem:[#allocation3] sm:$0xff] %vm866, %v862
          %868 = vst.msk [vmem:[#allocation3 + $0x8] sm:$0xff] %vm866, %v863
          %869 = vst.msk [vmem:[#allocation3 + $0x10] sm:$0xff] %vm866, %v864
          %870 = vst.msk [vmem:[#allocation3 + $0x18] sm:$0xff] %vm866, %v865
          %v871 = vld [vmem:[#allocation4] sm:$0xff]
          %v872 = vld [vmem:[#allocation4 + $0x8] sm:$0xff]
          %v873 = vld [vmem:[#allocation4 + $0x10] sm:$0xff]
          %v874 = vld [vmem:[#allocation4 + $0x18] sm:$0xff]
          %876 = vset.pattern.permute.xlu0 0
          %877 = vperm.xlu0 %876, %v803
          %v878 = vpop.permute.xlu0 %877
          %881 = vset.pattern.permute.xlu0 0
          %882 = vperm.xlu0 %881, %v805
          %v883 = vpop.permute.xlu0 %882
          %886 = vset.pattern.permute.xlu0 0
          %887 = vperm.xlu0 %886, %v807
          %v888 = vpop.permute.xlu0 %887
          %891 = vset.pattern.permute.xlu0 0
          %892 = vperm.xlu0 %891, %v809
          %v893 = vpop.permute.xlu0 %892
          %v895 = vmul.f32 %v878, %v871
          %v896 = vmul.f32 %v883, %v872
          %v897 = vmul.f32 %v888, %v873
          %v898 = vmul.f32 %v893, %v874
          %v899 = vpack.c.bf16 %v835, %v835
          %v900 = vpack.c.bf16 %v837, %v837
          %v901 = vpack.c.bf16 %v839, %v839
          %v902 = vpack.c.bf16 %v841, %v841
          %v903 = vld [vmem:[%s559] sm:$0xf]
          %v904 = vld [vmem:[%s559 + $0x4] sm:$0xf]
          %v905 = vld [vmem:[%s559 + $0x8] sm:$0xf]
          %v906 = vld [vmem:[%s559 + $0xc] sm:$0xf]
          %v908 = vsel %vm593, %v899, 0
          %vm910 = vcmask 1043456
          %v912 = vsel %vm910, %v903, 0
          %914 = vmatprep.subr.bf16.mxu0 0
          %915 = vmatpush1.bf16.msra.mxu0 0
          %916 = vmatprep.subr.bf16.mxu0 0
          %917 = vmatpush1.bf16.msra.mxu0 0
          %918 = vmatprep.subr.bf16.mxu0 0
          %919 = vmatpush1.bf16.msra.mxu0 0
          %920 = vmatprep.subr.bf16.mxu0 0
          %921 = vmatpush1.bf16.msra.mxu0 0
          %922 = vmatprep.subr.bf16.mxu0 0
          %923 = vmatpush1.bf16.msra.mxu0 0
          %924 = vmatprep.subr.bf16.mxu0 0
          %925 = vmatpush1.bf16.msra.mxu0 0
          %926 = vmatprep.subr.bf16.mxu0 0
          %927 = vmatpush1.bf16.msra.mxu0 0
          %928 = vmatprep.subr.bf16.mxu0 0
          %929 = vmatpush1.bf16.msra.mxu0 %v912
          %930 = vmatprep.subr.bf16.mxu0 0
          %931 = vmatpush2.bf16.msra.mxu0 0
          %932 = vmatprep.subr.bf16.mxu0 0
          %933 = vmatpush2.bf16.msra.mxu0 0
          %934 = vmatprep.subr.bf16.mxu0 0
          %935 = vmatpush2.bf16.msra.mxu0 0
          %936 = vmatprep.subr.bf16.mxu0 0
          %937 = vmatpush2.bf16.msra.mxu0 0
          %938 = vmatprep.subr.bf16.mxu0 0
          %939 = vmatpush2.bf16.msra.mxu0 0
          %940 = vmatprep.subr.bf16.mxu0 0
          %941 = vmatpush2.bf16.msra.mxu0 0
          %942 = vmatprep.subr.bf16.mxu0 0
          %943 = vmatpush2.bf16.msra.mxu0 0
          %944 = vmatprep.subr.bf16.mxu0 0
          %945 = vmatpush2.bf16.msra.mxu0 0
          %946 = vmatprep.mubr.bf16.mxu0 0
          %947 = vmatmul.mubr.bf16.gmra.mxu0 %v908
          %v948 = vpop.f32.mrf.mxu0
          %v949 = vadd.f32 0.0, %v948
          %v950 = vpop.f32.mrf.mxu0
          %v951 = vpop.f32.mrf.mxu0
          %v952 = vpop.f32.mrf.mxu0
          %953 = vdwg.mxu0
          %v955 = vsel %vm593, %v900, 0
          %v958 = vsel %vm910, %v904, 0
          %960 = vmatprep.subr.bf16.mxu0 0
          %961 = vmatpush1.bf16.msra.mxu0 0
          %962 = vmatprep.subr.bf16.mxu0 0
          %963 = vmatpush1.bf16.msra.mxu0 0
          %964 = vmatprep.subr.bf16.mxu0 0
          %965 = vmatpush1.bf16.msra.mxu0 0
          %966 = vmatprep.subr.bf16.mxu0 0
          %967 = vmatpush1.bf16.msra.mxu0 0
          %968 = vmatprep.subr.bf16.mxu0 0
          %969 = vmatpush1.bf16.msra.mxu0 0
          %970 = vmatprep.subr.bf16.mxu0 0
          %971 = vmatpush1.bf16.msra.mxu0 0
          %972 = vmatprep.subr.bf16.mxu0 0
          %973 = vmatpush1.bf16.msra.mxu0 0
          %974 = vmatprep.subr.bf16.mxu0 0
          %975 = vmatpush1.bf16.msra.mxu0 %v958
          %976 = vmatprep.subr.bf16.mxu0 0
          %977 = vmatpush2.bf16.msra.mxu0 0
          %978 = vmatprep.subr.bf16.mxu0 0
          %979 = vmatpush2.bf16.msra.mxu0 0
          %980 = vmatprep.subr.bf16.mxu0 0
          %981 = vmatpush2.bf16.msra.mxu0 0
          %982 = vmatprep.subr.bf16.mxu0 0
          %983 = vmatpush2.bf16.msra.mxu0 0
          %984 = vmatprep.subr.bf16.mxu0 0
          %985 = vmatpush2.bf16.msra.mxu0 0
          %986 = vmatprep.subr.bf16.mxu0 0
          %987 = vmatpush2.bf16.msra.mxu0 0
          %988 = vmatprep.subr.bf16.mxu0 0
          %989 = vmatpush2.bf16.msra.mxu0 0
          %990 = vmatprep.subr.bf16.mxu0 0
          %991 = vmatpush2.bf16.msra.mxu0 0
          %992 = vmatprep.mubr.bf16.mxu0 0
          %993 = vmatmul.mubr.bf16.gmra.mxu0 %v955
          %v994 = vpop.f32.mrf.mxu0
          %v995 = vadd.f32 0.0, %v994
          %v996 = vpop.f32.mrf.mxu0
          %v997 = vpop.f32.mrf.mxu0
          %v998 = vpop.f32.mrf.mxu0
          %999 = vdwg.mxu0
          %v1001 = vsel %vm593, %v901, 0
          %v1004 = vsel %vm910, %v905, 0
          %1006 = vmatprep.subr.bf16.mxu0 0
          %1007 = vmatpush1.bf16.msra.mxu0 0
          %1008 = vmatprep.subr.bf16.mxu0 0
          %1009 = vmatpush1.bf16.msra.mxu0 0
          %1010 = vmatprep.subr.bf16.mxu0 0
          %1011 = vmatpush1.bf16.msra.mxu0 0
          %1012 = vmatprep.subr.bf16.mxu0 0
          %1013 = vmatpush1.bf16.msra.mxu0 0
          %1014 = vmatprep.subr.bf16.mxu0 0
          %1015 = vmatpush1.bf16.msra.mxu0 0
          %1016 = vmatprep.subr.bf16.mxu0 0
          %1017 = vmatpush1.bf16.msra.mxu0 0
          %1018 = vmatprep.subr.bf16.mxu0 0
          %1019 = vmatpush1.bf16.msra.mxu0 0
          %1020 = vmatprep.subr.bf16.mxu0 0
          %1021 = vmatpush1.bf16.msra.mxu0 %v1004
          %1022 = vmatprep.subr.bf16.mxu0 0
          %1023 = vmatpush2.bf16.msra.mxu0 0
          %1024 = vmatprep.subr.bf16.mxu0 0
          %1025 = vmatpush2.bf16.msra.mxu0 0
          %1026 = vmatprep.subr.bf16.mxu0 0
          %1027 = vmatpush2.bf16.msra.mxu0 0
          %1028 = vmatprep.subr.bf16.mxu0 0
          %1029 = vmatpush2.bf16.msra.mxu0 0
          %1030 = vmatprep.subr.bf16.mxu0 0
          %1031 = vmatpush2.bf16.msra.mxu0 0
          %1032 = vmatprep.subr.bf16.mxu0 0
          %1033 = vmatpush2.bf16.msra.mxu0 0
          %1034 = vmatprep.subr.bf16.mxu0 0
          %1035 = vmatpush2.bf16.msra.mxu0 0
          %1036 = vmatprep.subr.bf16.mxu0 0
          %1037 = vmatpush2.bf16.msra.mxu0 0
          %1038 = vmatprep.mubr.bf16.mxu0 0
          %1039 = vmatmul.mubr.bf16.gmra.mxu0 %v1001
          %v1040 = vpop.f32.mrf.mxu0
          %v1041 = vadd.f32 0.0, %v1040
          %v1042 = vpop.f32.mrf.mxu0
          %v1043 = vpop.f32.mrf.mxu0
          %v1044 = vpop.f32.mrf.mxu0
          %1045 = vdwg.mxu0
          %v1047 = vsel %vm593, %v902, 0
          %v1050 = vsel %vm910, %v906, 0
          %1052 = vmatprep.subr.bf16.mxu0 0
          %1053 = vmatpush1.bf16.msra.mxu0 0
          %1054 = vmatprep.subr.bf16.mxu0 0
          %1055 = vmatpush1.bf16.msra.mxu0 0
          %1056 = vmatprep.subr.bf16.mxu0 0
          %1057 = vmatpush1.bf16.msra.mxu0 0
          %1058 = vmatprep.subr.bf16.mxu0 0
          %1059 = vmatpush1.bf16.msra.mxu0 0
          %1060 = vmatprep.subr.bf16.mxu0 0
          %1061 = vmatpush1.bf16.msra.mxu0 0
          %1062 = vmatprep.subr.bf16.mxu0 0
          %1063 = vmatpush1.bf16.msra.mxu0 0
          %1064 = vmatprep.subr.bf16.mxu0 0
          %1065 = vmatpush1.bf16.msra.mxu0 0
          %1066 = vmatprep.subr.bf16.mxu0 0
          %1067 = vmatpush1.bf16.msra.mxu0 %v1050
          %1068 = vmatprep.subr.bf16.mxu0 0
          %1069 = vmatpush2.bf16.msra.mxu0 0
          %1070 = vmatprep.subr.bf16.mxu0 0
          %1071 = vmatpush2.bf16.msra.mxu0 0
          %1072 = vmatprep.subr.bf16.mxu0 0
          %1073 = vmatpush2.bf16.msra.mxu0 0
          %1074 = vmatprep.subr.bf16.mxu0 0
          %1075 = vmatpush2.bf16.msra.mxu0 0
          %1076 = vmatprep.subr.bf16.mxu0 0
          %1077 = vmatpush2.bf16.msra.mxu0 0
          %1078 = vmatprep.subr.bf16.mxu0 0
          %1079 = vmatpush2.bf16.msra.mxu0 0
          %1080 = vmatprep.subr.bf16.mxu0 0
          %1081 = vmatpush2.bf16.msra.mxu0 0
          %1082 = vmatprep.subr.bf16.mxu0 0
          %1083 = vmatpush2.bf16.msra.mxu0 0
          %1084 = vmatprep.mubr.bf16.mxu0 0
          %1085 = vmatmul.mubr.bf16.gmra.mxu0 %v1047
          %v1086 = vpop.f32.mrf.mxu0
          %v1087 = vadd.f32 0.0, %v1086
          %v1088 = vpop.f32.mrf.mxu0
          %v1089 = vpop.f32.mrf.mxu0
          %v1090 = vpop.f32.mrf.mxu0
          %1091 = vdwg.mxu0
          %v1092 = vadd.f32 %v895, %v949
          %v1093 = vadd.f32 %v896, %v995
          %v1094 = vadd.f32 %v897, %v1041
          %v1095 = vadd.f32 %v898, %v1087
          %1096 = vst.msk [vmem:[#allocation4] sm:$0xff] %vm593, %v1092
          %1097 = vst.msk [vmem:[#allocation4 + $0x8] sm:$0xff] %vm593, %v1093
          %1098 = vst.msk [vmem:[#allocation4 + $0x10] sm:$0xff] %vm593, %v1094
          %1099 = vst.msk [vmem:[#allocation4 + $0x18] sm:$0xff] %vm593, %v1095
          %1100 = vst.msk [vmem:[#allocation2] sm:$0xff] %vm866, %v794
          %1101 = vst.msk [vmem:[#allocation2 + $0x8] sm:$0xff] %vm866, %v795
          %1102 = vst.msk [vmem:[#allocation2 + $0x10] sm:$0xff] %vm866, %v796
          %1103 = vst.msk [vmem:[#allocation2 + $0x18] sm:$0xff] %vm866, %v797
        $region76: #{_encoder_layer_impl.3} parent=67 // pred_fallthru
          _
        %p1104 = scmp.eq.s32.totalorder %s33, %s32
        // Predicated region
        $region77: #{_encoder_layer_impl.3} parent=67 // pred_check
          %p1105 = pneg %p1104
        $region78: #{_encoder_layer_impl.3} parent=67 // pred_check_branch
          %1107 = sbr.rel (%p1105) target = $region80
        $region79: #{_encoder_layer_impl.3} parent=67 // pred_region
          %v1108 = vld [vmem:[%s537] sm:$0xf]
          %v1109 = vld [vmem:[%s537 + $0x4] sm:$0xf]
          %v1110 = vld [vmem:[%s537 + $0x8] sm:$0xf]
          %v1111 = vld [vmem:[%s537 + $0xc] sm:$0xf]
          %v1112 = vld [vmem:[%s547] sm:$0xf]
          %v1113 = vld [vmem:[%s547 + $0x4] sm:$0xf]
          %v1114 = vld [vmem:[%s547 + $0x8] sm:$0xf]
          %v1115 = vld [vmem:[%s547 + $0xc] sm:$0xf]
          %vm1116 = vcmask 64512
          %v1118 = vsel %vm1116, %v1108, 0
          %v1121 = vsel %vm1116, %v1112, 0
          %1123 = vmatprep.subr.bf16.mxu0 0
          %1124 = vmatpush1.bf16.xpose.msra.mxu0 0
          %1125 = vmatprep.subr.bf16.mxu0 0
          %1126 = vmatpush1.bf16.xpose.msra.mxu0 0
          %1127 = vmatprep.subr.bf16.mxu0 0
          %1128 = vmatpush1.bf16.xpose.msra.mxu0 0
          %1129 = vmatprep.subr.bf16.mxu0 0
          %1130 = vmatpush1.bf16.xpose.msra.mxu0 0
          %1131 = vmatprep.subr.bf16.mxu0 0
          %1132 = vmatpush1.bf16.xpose.msra.mxu0 0
          %1133 = vmatprep.subr.bf16.mxu0 0
          %1134 = vmatpush1.bf16.xpose.msra.mxu0 0
          %1135 = vmatprep.subr.bf16.mxu0 0
          %1136 = vmatpush1.bf16.xpose.msra.mxu0 0
          %1137 = vmatprep.subr.bf16.mxu0 0
          %1138 = vmatpush1.bf16.xpose.msra.mxu0 %v1121
          %1139 = vmatprep.subr.bf16.mxu0 0
          %1140 = vmatpush2.bf16.xpose.msra.mxu0 0
          %1141 = vmatprep.subr.bf16.mxu0 0
          %1142 = vmatpush2.bf16.xpose.msra.mxu0 0
          %1143 = vmatprep.subr.bf16.mxu0 0
          %1144 = vmatpush2.bf16.xpose.msra.mxu0 0
          %1145 = vmatprep.subr.bf16.mxu0 0
          %1146 = vmatpush2.bf16.xpose.msra.mxu0 0
          %1147 = vmatprep.subr.bf16.mxu0 0
          %1148 = vmatpush2.bf16.xpose.msra.mxu0 0
          %1149 = vmatprep.subr.bf16.mxu0 0
          %1150 = vmatpush2.bf16.xpose.msra.mxu0 0
          %1151 = vmatprep.subr.bf16.mxu0 0
          %1152 = vmatpush2.bf16.xpose.msra.mxu0 0
          %1153 = vmatprep.subr.bf16.mxu0 0
          %1154 = vmatpush2.bf16.xpose.msra.mxu0 0
          %1155 = vmatprep.mubr.bf16.mxu0 0
          %1156 = vmatmul.mubr.bf16.gmra.mxu0 %v1118
          %v1157 = vpop.f32.mrf.mxu0
          %v1158 = vadd.f32 0.0, %v1157
          %v1159 = vpop.f32.mrf.mxu0
          %v1160 = vpop.f32.mrf.mxu0
          %v1161 = vpop.f32.mrf.mxu0
          %1162 = vdwg.mxu0
          %v1164 = vsel %vm1116, %v1109, 0
          %v1167 = vsel %vm1116, %v1113, 0
          %1169 = vmatprep.subr.bf16.mxu0 0
          %1170 = vmatpush1.bf16.xpose.msra.mxu0 0
          %1171 = vmatprep.subr.bf16.mxu0 0
          %1172 = vmatpush1.bf16.xpose.msra.mxu0 0
          %1173 = vmatprep.subr.bf16.mxu0 0
          %1174 = vmatpush1.bf16.xpose.msra.mxu0 0
          %1175 = vmatprep.subr.bf16.mxu0 0
          %1176 = vmatpush1.bf16.xpose.msra.mxu0 0
          %1177 = vmatprep.subr.bf16.mxu0 0
          %1178 = vmatpush1.bf16.xpose.msra.mxu0 0
          %1179 = vmatprep.subr.bf16.mxu0 0
          %1180 = vmatpush1.bf16.xpose.msra.mxu0 0
          %1181 = vmatprep.subr.bf16.mxu0 0
          %1182 = vmatpush1.bf16.xpose.msra.mxu0 0
          %1183 = vmatprep.subr.bf16.mxu0 0
          %1184 = vmatpush1.bf16.xpose.msra.mxu0 %v1167
          %1185 = vmatprep.subr.bf16.mxu0 0
          %1186 = vmatpush2.bf16.xpose.msra.mxu0 0
          %1187 = vmatprep.subr.bf16.mxu0 0
          %1188 = vmatpush2.bf16.xpose.msra.mxu0 0
          %1189 = vmatprep.subr.bf16.mxu0 0
          %1190 = vmatpush2.bf16.xpose.msra.mxu0 0
          %1191 = vmatprep.subr.bf16.mxu0 0
          %1192 = vmatpush2.bf16.xpose.msra.mxu0 0
          %1193 = vmatprep.subr.bf16.mxu0 0
          %1194 = vmatpush2.bf16.xpose.msra.mxu0 0
          %1195 = vmatprep.subr.bf16.mxu0 0
          %1196 = vmatpush2.bf16.xpose.msra.mxu0 0
          %1197 = vmatprep.subr.bf16.mxu0 0
          %1198 = vmatpush2.bf16.xpose.msra.mxu0 0
          %1199 = vmatprep.subr.bf16.mxu0 0
          %1200 = vmatpush2.bf16.xpose.msra.mxu0 0
          %1201 = vmatprep.mubr.bf16.mxu0 0
          %1202 = vmatmul.mubr.bf16.gmra.mxu0 %v1164
          %v1203 = vpop.f32.mrf.mxu0
          %v1204 = vadd.f32 0.0, %v1203
          %v1205 = vpop.f32.mrf.mxu0
          %v1206 = vpop.f32.mrf.mxu0
          %v1207 = vpop.f32.mrf.mxu0
          %1208 = vdwg.mxu0
          %v1210 = vsel %vm1116, %v1110, 0
          %v1213 = vsel %vm1116, %v1114, 0
          %1215 = vmatprep.subr.bf16.mxu0 0
          %1216 = vmatpush1.bf16.xpose.msra.mxu0 0
          %1217 = vmatprep.subr.bf16.mxu0 0
          %1218 = vmatpush1.bf16.xpose.msra.mxu0 0
          %1219 = vmatprep.subr.bf16.mxu0 0
          %1220 = vmatpush1.bf16.xpose.msra.mxu0 0
          %1221 = vmatprep.subr.bf16.mxu0 0
          %1222 = vmatpush1.bf16.xpose.msra.mxu0 0
          %1223 = vmatprep.subr.bf16.mxu0 0
          %1224 = vmatpush1.bf16.xpose.msra.mxu0 0
          %1225 = vmatprep.subr.bf16.mxu0 0
          %1226 = vmatpush1.bf16.xpose.msra.mxu0 0
          %1227 = vmatprep.subr.bf16.mxu0 0
          %1228 = vmatpush1.bf16.xpose.msra.mxu0 0
          %1229 = vmatprep.subr.bf16.mxu0 0
          %1230 = vmatpush1.bf16.xpose.msra.mxu0 %v1213
          %1231 = vmatprep.subr.bf16.mxu0 0
          %1232 = vmatpush2.bf16.xpose.msra.mxu0 0
          %1233 = vmatprep.subr.bf16.mxu0 0
          %1234 = vmatpush2.bf16.xpose.msra.mxu0 0
          %1235 = vmatprep.subr.bf16.mxu0 0
          %1236 = vmatpush2.bf16.xpose.msra.mxu0 0
          %1237 = vmatprep.subr.bf16.mxu0 0
          %1238 = vmatpush2.bf16.xpose.msra.mxu0 0
          %1239 = vmatprep.subr.bf16.mxu0 0
          %1240 = vmatpush2.bf16.xpose.msra.mxu0 0
          %1241 = vmatprep.subr.bf16.mxu0 0
          %1242 = vmatpush2.bf16.xpose.msra.mxu0 0
          %1243 = vmatprep.subr.bf16.mxu0 0
          %1244 = vmatpush2.bf16.xpose.msra.mxu0 0
          %1245 = vmatprep.subr.bf16.mxu0 0
          %1246 = vmatpush2.bf16.xpose.msra.mxu0 0
          %1247 = vmatprep.mubr.bf16.mxu0 0
          %1248 = vmatmul.mubr.bf16.gmra.mxu0 %v1210
          %v1249 = vpop.f32.mrf.mxu0
          %v1250 = vadd.f32 0.0, %v1249
          %v1251 = vpop.f32.mrf.mxu0
          %v1252 = vpop.f32.mrf.mxu0
          %v1253 = vpop.f32.mrf.mxu0
          %1254 = vdwg.mxu0
          %v1256 = vsel %vm1116, %v1111, 0
          %v1259 = vsel %vm1116, %v1115, 0
          %1261 = vmatprep.subr.bf16.mxu0 0
          %1262 = vmatpush1.bf16.xpose.msra.mxu0 0
          %1263 = vmatprep.subr.bf16.mxu0 0
          %1264 = vmatpush1.bf16.xpose.msra.mxu0 0
          %1265 = vmatprep.subr.bf16.mxu0 0
          %1266 = vmatpush1.bf16.xpose.msra.mxu0 0
          %1267 = vmatprep.subr.bf16.mxu0 0
          %1268 = vmatpush1.bf16.xpose.msra.mxu0 0
          %1269 = vmatprep.subr.bf16.mxu0 0
          %1270 = vmatpush1.bf16.xpose.msra.mxu0 0
          %1271 = vmatprep.subr.bf16.mxu0 0
          %1272 = vmatpush1.bf16.xpose.msra.mxu0 0
          %1273 = vmatprep.subr.bf16.mxu0 0
          %1274 = vmatpush1.bf16.xpose.msra.mxu0 0
          %1275 = vmatprep.subr.bf16.mxu0 0
          %1276 = vmatpush1.bf16.xpose.msra.mxu0 %v1259
          %1277 = vmatprep.subr.bf16.mxu0 0
          %1278 = vmatpush2.bf16.xpose.msra.mxu0 0
          %1279 = vmatprep.subr.bf16.mxu0 0
          %1280 = vmatpush2.bf16.xpose.msra.mxu0 0
          %1281 = vmatprep.subr.bf16.mxu0 0
          %1282 = vmatpush2.bf16.xpose.msra.mxu0 0
          %1283 = vmatprep.subr.bf16.mxu0 0
          %1284 = vmatpush2.bf16.xpose.msra.mxu0 0
          %1285 = vmatprep.subr.bf16.mxu0 0
          %1286 = vmatpush2.bf16.xpose.msra.mxu0 0
          %1287 = vmatprep.subr.bf16.mxu0 0
          %1288 = vmatpush2.bf16.xpose.msra.mxu0 0
          %1289 = vmatprep.subr.bf16.mxu0 0
          %1290 = vmatpush2.bf16.xpose.msra.mxu0 0
          %1291 = vmatprep.subr.bf16.mxu0 0
          %1292 = vmatpush2.bf16.xpose.msra.mxu0 0
          %1293 = vmatprep.mubr.bf16.mxu0 0
          %1294 = vmatmul.mubr.bf16.gmra.mxu0 %v1256
          %v1295 = vpop.f32.mrf.mxu0
          %v1296 = vadd.f32 0.0, %v1295
          %v1297 = vpop.f32.mrf.mxu0
          %v1298 = vpop.f32.mrf.mxu0
          %v1299 = vpop.f32.mrf.mxu0
          %1300 = vdwg.mxu0
          %v1301 = vlaneseq
          %v1302 = vshrl.u32 %v1301, 7
          %v1303 = vlaneseq
          %v1304 = vand.u32 %v1303, 127
          %vm1305 = vcmp.le.s32.totalorder %v1304, %v1302
          %v1306 = vsel %vm1305, 1, 0
          %vm1307 = vcmp.eq.s32.totalorder %v1306, 1
          %v1308 = vsel %vm1307, %v1158, -1e+30
          %v1309 = vsel %vm1307, %v1204, -1e+30
          %v1310 = vsel %vm1307, %v1250, -1e+30
          %v1311 = vsel %vm1307, %v1296, -1e+30
          %v1312 = vld [vmem:[#allocation2] sm:$0xff]
          %v1313 = vld [vmem:[#allocation2 + $0x8] sm:$0xff]
          %v1314 = vld [vmem:[#allocation2 + $0x10] sm:$0xff]
          %v1315 = vld [vmem:[#allocation2 + $0x18] sm:$0xff]
          %v1316 = vsel %vm1116, %v1308, -inf
          %1317 = vmax.xlane.f32.xlu0 %v1316
          %v1318 = vpop.xlane.xlu0 %1317
          %v1319 = vsel %vm1116, %v1309, -inf
          %1320 = vmax.xlane.f32.xlu0 %v1319
          %v1321 = vpop.xlane.xlu0 %1320
          %v1322 = vsel %vm1116, %v1310, -inf
          %1323 = vmax.xlane.f32.xlu0 %v1322
          %v1324 = vpop.xlane.xlu0 %1323
          %v1325 = vsel %vm1116, %v1311, -inf
          %1326 = vmax.xlane.f32.xlu0 %v1325
          %v1327 = vpop.xlane.xlu0 %1326
          %v1328 = vmax.f32 %v1312, %v1318
          %v1329 = vmax.f32 %v1313, %v1321
          %v1330 = vmax.f32 %v1314, %v1324
          %v1331 = vmax.f32 %v1315, %v1327
          %v1332 = vsub.f32 %v1312, %v1328
          %v1333 = vsub.f32 %v1313, %v1329
          %v1334 = vsub.f32 %v1314, %v1330
          %v1335 = vsub.f32 %v1315, %v1331
          %v1336 = vmul.f32 %v1332, 1.442695
          %v1337 = vpow.pop %v1336
          %v1338 = vmul.f32 %v1333, 1.442695
          %v1339 = vpow.pop %v1338
          %v1340 = vmul.f32 %v1334, 1.442695
          %v1341 = vpow.pop %v1340
          %v1342 = vmul.f32 %v1335, 1.442695
          %v1343 = vpow.pop %v1342
          %1345 = vset.pattern.permute.xlu0 0
          %1346 = vperm.xlu0 %1345, %v1328
          %v1347 = vpop.permute.xlu0 %1346
          %1350 = vset.pattern.permute.xlu0 0
          %1351 = vperm.xlu0 %1350, %v1329
          %v1352 = vpop.permute.xlu0 %1351
          %1355 = vset.pattern.permute.xlu0 0
          %1356 = vperm.xlu0 %1355, %v1330
          %v1357 = vpop.permute.xlu0 %1356
          %1360 = vset.pattern.permute.xlu0 0
          %1361 = vperm.xlu0 %1360, %v1331
          %v1362 = vpop.permute.xlu0 %1361
          %v1364 = vsub.f32 %v1308, %v1347
          %v1365 = vsub.f32 %v1309, %v1352
          %v1366 = vsub.f32 %v1310, %v1357
          %v1367 = vsub.f32 %v1311, %v1362
          %v1368 = vmul.f32 %v1364, 1.442695
          %v1369 = vpow.pop %v1368
          %v1370 = vmul.f32 %v1365, 1.442695
          %v1371 = vpow.pop %v1370
          %v1372 = vmul.f32 %v1366, 1.442695
          %v1373 = vpow.pop %v1372
          %v1374 = vmul.f32 %v1367, 1.442695
          %v1375 = vpow.pop %v1374
          %v1376 = vld [vmem:[#allocation3] sm:$0xff]
          %v1377 = vld [vmem:[#allocation3 + $0x8] sm:$0xff]
          %v1378 = vld [vmem:[#allocation3 + $0x10] sm:$0xff]
          %v1379 = vld [vmem:[#allocation3 + $0x18] sm:$0xff]
          %v1380 = vmul.f32 %v1337, %v1376
          %v1381 = vmul.f32 %v1339, %v1377
          %v1382 = vmul.f32 %v1341, %v1378
          %v1383 = vmul.f32 %v1343, %v1379
          %v1384 = vsel %vm1116, %v1369, 0.0
          %1385 = vadd.xlane.f32.xlu0 %v1384
          %v1386 = vpop.xlane.xlu0 %1385
          %v1387 = vsel %vm1116, %v1371, 0.0
          %1388 = vadd.xlane.f32.xlu0 %v1387
          %v1389 = vpop.xlane.xlu0 %1388
          %v1390 = vsel %vm1116, %v1373, 0.0
          %1391 = vadd.xlane.f32.xlu0 %v1390
          %v1392 = vpop.xlane.xlu0 %1391
          %v1393 = vsel %vm1116, %v1375, 0.0
          %1394 = vadd.xlane.f32.xlu0 %v1393
          %v1395 = vpop.xlane.xlu0 %1394
          %v1396 = vadd.f32 %v1380, %v1386
          %v1397 = vadd.f32 %v1381, %v1389
          %v1398 = vadd.f32 %v1382, %v1392
          %v1399 = vadd.f32 %v1383, %v1395
          %vm1400 = vcmask 7168
          %1401 = vst.msk [vmem:[#allocation3] sm:$0xff] %vm1400, %v1396
          %1402 = vst.msk [vmem:[#allocation3 + $0x8] sm:$0xff] %vm1400, %v1397
          %1403 = vst.msk [vmem:[#allocation3 + $0x10] sm:$0xff] %vm1400, %v1398
          %1404 = vst.msk [vmem:[#allocation3 + $0x18] sm:$0xff] %vm1400, %v1399
          %v1405 = vld [vmem:[#allocation4] sm:$0xff]
          %v1406 = vld [vmem:[#allocation4 + $0x8] sm:$0xff]
          %v1407 = vld [vmem:[#allocation4 + $0x10] sm:$0xff]
          %v1408 = vld [vmem:[#allocation4 + $0x18] sm:$0xff]
          %1410 = vset.pattern.permute.xlu0 0
          %1411 = vperm.xlu0 %1410, %v1337
          %v1412 = vpop.permute.xlu0 %1411
          %1415 = vset.pattern.permute.xlu0 0
          %1416 = vperm.xlu0 %1415, %v1339
          %v1417 = vpop.permute.xlu0 %1416
          %1420 = vset.pattern.permute.xlu0 0
          %1421 = vperm.xlu0 %1420, %v1341
          %v1422 = vpop.permute.xlu0 %1421
          %1425 = vset.pattern.permute.xlu0 0
          %1426 = vperm.xlu0 %1425, %v1343
          %v1427 = vpop.permute.xlu0 %1426
          %v1429 = vmul.f32 %v1412, %v1405
          %v1430 = vmul.f32 %v1417, %v1406
          %v1431 = vmul.f32 %v1422, %v1407
          %v1432 = vmul.f32 %v1427, %v1408
          %v1433 = vpack.c.bf16 %v1369, %v1369
          %v1434 = vpack.c.bf16 %v1371, %v1371
          %v1435 = vpack.c.bf16 %v1373, %v1373
          %v1436 = vpack.c.bf16 %v1375, %v1375
          %v1437 = vld [vmem:[%s559] sm:$0xf]
          %v1438 = vld [vmem:[%s559 + $0x4] sm:$0xf]
          %v1439 = vld [vmem:[%s559 + $0x8] sm:$0xf]
          %v1440 = vld [vmem:[%s559 + $0xc] sm:$0xf]
          %v1442 = vsel %vm1116, %v1433, 0
          %vm1444 = vcmask 1043456
          %v1446 = vsel %vm1444, %v1437, 0
          %1448 = vmatprep.subr.bf16.mxu0 0
          %1449 = vmatpush1.bf16.msra.mxu0 0
          %1450 = vmatprep.subr.bf16.mxu0 0
          %1451 = vmatpush1.bf16.msra.mxu0 0
          %1452 = vmatprep.subr.bf16.mxu0 0
          %1453 = vmatpush1.bf16.msra.mxu0 0
          %1454 = vmatprep.subr.bf16.mxu0 0
          %1455 = vmatpush1.bf16.msra.mxu0 0
          %1456 = vmatprep.subr.bf16.mxu0 0
          %1457 = vmatpush1.bf16.msra.mxu0 0
          %1458 = vmatprep.subr.bf16.mxu0 0
          %1459 = vmatpush1.bf16.msra.mxu0 0
          %1460 = vmatprep.subr.bf16.mxu0 0
          %1461 = vmatpush1.bf16.msra.mxu0 0
          %1462 = vmatprep.subr.bf16.mxu0 0
          %1463 = vmatpush1.bf16.msra.mxu0 %v1446
          %1464 = vmatprep.subr.bf16.mxu0 0
          %1465 = vmatpush2.bf16.msra.mxu0 0
          %1466 = vmatprep.subr.bf16.mxu0 0
          %1467 = vmatpush2.bf16.msra.mxu0 0
          %1468 = vmatprep.subr.bf16.mxu0 0
          %1469 = vmatpush2.bf16.msra.mxu0 0
          %1470 = vmatprep.subr.bf16.mxu0 0
          %1471 = vmatpush2.bf16.msra.mxu0 0
          %1472 = vmatprep.subr.bf16.mxu0 0
          %1473 = vmatpush2.bf16.msra.mxu0 0
          %1474 = vmatprep.subr.bf16.mxu0 0
          %1475 = vmatpush2.bf16.msra.mxu0 0
          %1476 = vmatprep.subr.bf16.mxu0 0
          %1477 = vmatpush2.bf16.msra.mxu0 0
          %1478 = vmatprep.subr.bf16.mxu0 0
          %1479 = vmatpush2.bf16.msra.mxu0 0
          %1480 = vmatprep.mubr.bf16.mxu0 0
          %1481 = vmatmul.mubr.bf16.gmra.mxu0 %v1442
          %v1482 = vpop.f32.mrf.mxu0
          %v1483 = vadd.f32 0.0, %v1482
          %v1484 = vpop.f32.mrf.mxu0
          %v1485 = vpop.f32.mrf.mxu0
          %v1486 = vpop.f32.mrf.mxu0
          %1487 = vdwg.mxu0
          %v1489 = vsel %vm1116, %v1434, 0
          %v1492 = vsel %vm1444, %v1438, 0
          %1494 = vmatprep.subr.bf16.mxu0 0
          %1495 = vmatpush1.bf16.msra.mxu0 0
          %1496 = vmatprep.subr.bf16.mxu0 0
          %1497 = vmatpush1.bf16.msra.mxu0 0
          %1498 = vmatprep.subr.bf16.mxu0 0
          %1499 = vmatpush1.bf16.msra.mxu0 0
          %1500 = vmatprep.subr.bf16.mxu0 0
          %1501 = vmatpush1.bf16.msra.mxu0 0
          %1502 = vmatprep.subr.bf16.mxu0 0
          %1503 = vmatpush1.bf16.msra.mxu0 0
          %1504 = vmatprep.subr.bf16.mxu0 0
          %1505 = vmatpush1.bf16.msra.mxu0 0
          %1506 = vmatprep.subr.bf16.mxu0 0
          %1507 = vmatpush1.bf16.msra.mxu0 0
          %1508 = vmatprep.subr.bf16.mxu0 0
          %1509 = vmatpush1.bf16.msra.mxu0 %v1492
          %1510 = vmatprep.subr.bf16.mxu0 0
          %1511 = vmatpush2.bf16.msra.mxu0 0
          %1512 = vmatprep.subr.bf16.mxu0 0
          %1513 = vmatpush2.bf16.msra.mxu0 0
          %1514 = vmatprep.subr.bf16.mxu0 0
          %1515 = vmatpush2.bf16.msra.mxu0 0
          %1516 = vmatprep.subr.bf16.mxu0 0
          %1517 = vmatpush2.bf16.msra.mxu0 0
          %1518 = vmatprep.subr.bf16.mxu0 0
          %1519 = vmatpush2.bf16.msra.mxu0 0
          %1520 = vmatprep.subr.bf16.mxu0 0
          %1521 = vmatpush2.bf16.msra.mxu0 0
          %1522 = vmatprep.subr.bf16.mxu0 0
          %1523 = vmatpush2.bf16.msra.mxu0 0
          %1524 = vmatprep.subr.bf16.mxu0 0
          %1525 = vmatpush2.bf16.msra.mxu0 0
          %1526 = vmatprep.mubr.bf16.mxu0 0
          %1527 = vmatmul.mubr.bf16.gmra.mxu0 %v1489
          %v1528 = vpop.f32.mrf.mxu0
          %v1529 = vadd.f32 0.0, %v1528
          %v1530 = vpop.f32.mrf.mxu0
          %v1531 = vpop.f32.mrf.mxu0
          %v1532 = vpop.f32.mrf.mxu0
          %1533 = vdwg.mxu0
          %v1535 = vsel %vm1116, %v1435, 0
          %v1538 = vsel %vm1444, %v1439, 0
          %1540 = vmatprep.subr.bf16.mxu0 0
          %1541 = vmatpush1.bf16.msra.mxu0 0
          %1542 = vmatprep.subr.bf16.mxu0 0
          %1543 = vmatpush1.bf16.msra.mxu0 0
          %1544 = vmatprep.subr.bf16.mxu0 0
          %1545 = vmatpush1.bf16.msra.mxu0 0
          %1546 = vmatprep.subr.bf16.mxu0 0
          %1547 = vmatpush1.bf16.msra.mxu0 0
          %1548 = vmatprep.subr.bf16.mxu0 0
          %1549 = vmatpush1.bf16.msra.mxu0 0
          %1550 = vmatprep.subr.bf16.mxu0 0
          %1551 = vmatpush1.bf16.msra.mxu0 0
          %1552 = vmatprep.subr.bf16.mxu0 0
          %1553 = vmatpush1.bf16.msra.mxu0 0
          %1554 = vmatprep.subr.bf16.mxu0 0
          %1555 = vmatpush1.bf16.msra.mxu0 %v1538
          %1556 = vmatprep.subr.bf16.mxu0 0
          %1557 = vmatpush2.bf16.msra.mxu0 0
          %1558 = vmatprep.subr.bf16.mxu0 0
          %1559 = vmatpush2.bf16.msra.mxu0 0
          %1560 = vmatprep.subr.bf16.mxu0 0
          %1561 = vmatpush2.bf16.msra.mxu0 0
          %1562 = vmatprep.subr.bf16.mxu0 0
          %1563 = vmatpush2.bf16.msra.mxu0 0
          %1564 = vmatprep.subr.bf16.mxu0 0
          %1565 = vmatpush2.bf16.msra.mxu0 0
          %1566 = vmatprep.subr.bf16.mxu0 0
          %1567 = vmatpush2.bf16.msra.mxu0 0
          %1568 = vmatprep.subr.bf16.mxu0 0
          %1569 = vmatpush2.bf16.msra.mxu0 0
          %1570 = vmatprep.subr.bf16.mxu0 0
          %1571 = vmatpush2.bf16.msra.mxu0 0
          %1572 = vmatprep.mubr.bf16.mxu0 0
          %1573 = vmatmul.mubr.bf16.gmra.mxu0 %v1535
          %v1574 = vpop.f32.mrf.mxu0
          %v1575 = vadd.f32 0.0, %v1574
          %v1576 = vpop.f32.mrf.mxu0
          %v1577 = vpop.f32.mrf.mxu0
          %v1578 = vpop.f32.mrf.mxu0
          %1579 = vdwg.mxu0
          %v1581 = vsel %vm1116, %v1436, 0
          %v1584 = vsel %vm1444, %v1440, 0
          %1586 = vmatprep.subr.bf16.mxu0 0
          %1587 = vmatpush1.bf16.msra.mxu0 0
          %1588 = vmatprep.subr.bf16.mxu0 0
          %1589 = vmatpush1.bf16.msra.mxu0 0
          %1590 = vmatprep.subr.bf16.mxu0 0
          %1591 = vmatpush1.bf16.msra.mxu0 0
          %1592 = vmatprep.subr.bf16.mxu0 0
          %1593 = vmatpush1.bf16.msra.mxu0 0
          %1594 = vmatprep.subr.bf16.mxu0 0
          %1595 = vmatpush1.bf16.msra.mxu0 0
          %1596 = vmatprep.subr.bf16.mxu0 0
          %1597 = vmatpush1.bf16.msra.mxu0 0
          %1598 = vmatprep.subr.bf16.mxu0 0
          %1599 = vmatpush1.bf16.msra.mxu0 0
          %1600 = vmatprep.subr.bf16.mxu0 0
          %1601 = vmatpush1.bf16.msra.mxu0 %v1584
          %1602 = vmatprep.subr.bf16.mxu0 0
          %1603 = vmatpush2.bf16.msra.mxu0 0
          %1604 = vmatprep.subr.bf16.mxu0 0
          %1605 = vmatpush2.bf16.msra.mxu0 0
          %1606 = vmatprep.subr.bf16.mxu0 0
          %1607 = vmatpush2.bf16.msra.mxu0 0
          %1608 = vmatprep.subr.bf16.mxu0 0
          %1609 = vmatpush2.bf16.msra.mxu0 0
          %1610 = vmatprep.subr.bf16.mxu0 0
          %1611 = vmatpush2.bf16.msra.mxu0 0
          %1612 = vmatprep.subr.bf16.mxu0 0
          %1613 = vmatpush2.bf16.msra.mxu0 0
          %1614 = vmatprep.subr.bf16.mxu0 0
          %1615 = vmatpush2.bf16.msra.mxu0 0
          %1616 = vmatprep.subr.bf16.mxu0 0
          %1617 = vmatpush2.bf16.msra.mxu0 0
          %1618 = vmatprep.mubr.bf16.mxu0 0
          %1619 = vmatmul.mubr.bf16.gmra.mxu0 %v1581
          %v1620 = vpop.f32.mrf.mxu0
          %v1621 = vadd.f32 0.0, %v1620
          %v1622 = vpop.f32.mrf.mxu0
          %v1623 = vpop.f32.mrf.mxu0
          %v1624 = vpop.f32.mrf.mxu0
          %1625 = vdwg.mxu0
          %v1626 = vadd.f32 %v1429, %v1483
          %v1627 = vadd.f32 %v1430, %v1529
          %v1628 = vadd.f32 %v1431, %v1575
          %v1629 = vadd.f32 %v1432, %v1621
          %1630 = vst.msk [vmem:[#allocation4] sm:$0xff] %vm1116, %v1626
          %1631 = vst.msk [vmem:[#allocation4 + $0x8] sm:$0xff] %vm1116, %v1627
          %1632 = vst.msk [vmem:[#allocation4 + $0x10] sm:$0xff] %vm1116, %v1628
          %1633 = vst.msk [vmem:[#allocation4 + $0x18] sm:$0xff] %vm1116, %v1629
          %1634 = vst.msk [vmem:[#allocation2] sm:$0xff] %vm1400, %v1328
          %1635 = vst.msk [vmem:[#allocation2 + $0x8] sm:$0xff] %vm1400, %v1329
          %1636 = vst.msk [vmem:[#allocation2 + $0x10] sm:$0xff] %vm1400, %v1330
          %1637 = vst.msk [vmem:[#allocation2 + $0x18] sm:$0xff] %vm1400, %v1331
        $region80: #{_encoder_layer_impl.3} parent=67 // pred_fallthru
          _
        // Predicated region
        $region81: #{_encoder_layer_impl.3} parent=67 // pred_check
          %p1638 = pneg %p563
        $region82: #{_encoder_layer_impl.3} parent=67 // pred_check_branch
          %1640 = sbr.rel (%p1638) target = $region84
        $region83: #{_encoder_layer_impl.3} parent=67 // pred_region
          %v1641 = vld [vmem:[#allocation4] sm:$0xff]
          %v1642 = vld [vmem:[#allocation4 + $0x8] sm:$0xff]
          %v1643 = vld [vmem:[#allocation4 + $0x10] sm:$0xff]
          %v1644 = vld [vmem:[#allocation4 + $0x18] sm:$0xff]
          %v1645 = vld [vmem:[#allocation3] sm:$0xff]
          %v1646 = vld [vmem:[#allocation3 + $0x8] sm:$0xff]
          %v1647 = vld [vmem:[#allocation3 + $0x10] sm:$0xff]
          %v1648 = vld [vmem:[#allocation3 + $0x18] sm:$0xff]
          %v1649 = vrcp.pop %v1645
          %v1650 = vrcp.pop %v1646
          %v1651 = vrcp.pop %v1647
          %v1652 = vrcp.pop %v1648
          %1654 = vset.pattern.permute.xlu0 0
          %1655 = vperm.xlu0 %1654, %v1649
          %v1656 = vpop.permute.xlu0 %1655
          %1659 = vset.pattern.permute.xlu0 0
          %1660 = vperm.xlu0 %1659, %v1650
          %v1661 = vpop.permute.xlu0 %1660
          %1664 = vset.pattern.permute.xlu0 0
          %1665 = vperm.xlu0 %1664, %v1651
          %v1666 = vpop.permute.xlu0 %1665
          %1669 = vset.pattern.permute.xlu0 0
          %1670 = vperm.xlu0 %1669, %v1652
          %v1671 = vpop.permute.xlu0 %1670
          %v1673 = vmul.f32 %v1641, %v1656
          %v1674 = vmul.f32 %v1642, %v1661
          %v1675 = vmul.f32 %v1643, %v1666
          %v1676 = vmul.f32 %v1644, %v1671
          %v1677 = vcombine.low %v1673, %v1675
          %v1678 = vcombine.high %v1673, %v1675
          %v1680 = vunpack.c.l.s4 1983009808
          %v1681 = vunpack.c.0.s8 %v1680
          %v1682 = vlaneseq
          %v1683 = vshrl.u32 %v1682, 7
          %v1684 = vsub.s32 %v1681, %v1683
          %v1685 = vrot.slane %v1677, %v1684
          %v1687 = vunpack.c.l.s4 1983009808
          %v1688 = vunpack.c.0.s8 %v1687
          %v1689 = vlaneseq
          %v1690 = vshrl.u32 %v1689, 7
          %v1691 = vsub.s32 %v1688, %v1690
          %v1692 = vrot.slane %v1678, %v1691
          %v1693 = vcombine.low %v1674, %v1676
          %v1694 = vcombine.high %v1674, %v1676
          %v1696 = vunpack.c.l.s4 1983009808
          %v1697 = vunpack.c.0.s8 %v1696
          %v1698 = vlaneseq
          %v1699 = vshrl.u32 %v1698, 7
          %v1700 = vsub.s32 %v1697, %v1699
          %v1701 = vrot.slane %v1693, %v1700
          %v1703 = vunpack.c.l.s4 1983009808
          %v1704 = vunpack.c.0.s8 %v1703
          %v1705 = vlaneseq
          %v1706 = vshrl.u32 %v1705, 7
          %v1707 = vsub.s32 %v1704, %v1706
          %v1708 = vrot.slane %v1694, %v1707
          %v1709 = vcombine.low %v1685, %v1701
          %v1710 = vcombine.high %v1685, %v1701
          %v1712 = vunpack.c.l.s4 1934713408
          %v1713 = vunpack.c.0.s8 %v1712
          %v1714 = vlaneseq
          %v1715 = vshrl.u32 %v1714, 7
          %v1716 = vsub.s32 %v1713, %v1715
          %v1717 = vrot.slane %v1709, %v1716
          %v1719 = vunpack.c.l.s4 1934713408
          %v1720 = vunpack.c.0.s8 %v1719
          %v1721 = vlaneseq
          %v1722 = vshrl.u32 %v1721, 7
          %v1723 = vsub.s32 %v1720, %v1722
          %v1724 = vrot.slane %v1710, %v1723
          %v1725 = vcombine.low %v1692, %v1708
          %v1726 = vcombine.high %v1692, %v1708
          %v1728 = vunpack.c.l.s4 1934713408
          %v1729 = vunpack.c.0.s8 %v1728
          %v1730 = vlaneseq
          %v1731 = vshrl.u32 %v1730, 7
          %v1732 = vsub.s32 %v1729, %v1731
          %v1733 = vrot.slane %v1725, %v1732
          %v1735 = vunpack.c.l.s4 1934713408
          %v1736 = vunpack.c.0.s8 %v1735
          %v1737 = vlaneseq
          %v1738 = vshrl.u32 %v1737, 7
          %v1739 = vsub.s32 %v1736, %v1738
          %v1740 = vrot.slane %v1726, %v1739
          %v1741 = vcombine.high %v1717, 0.0
          %v1742 = vcombine.high %v1724, 0.0
          %v1743 = vcombine.high %v1733, 0.0
          %v1744 = vcombine.high %v1740, 0.0
          %v1745 = vcombine.low %v1717, %v1724
          %v1747 = vunpack.c.l.s4 1983009808
          %v1748 = vunpack.c.0.s8 %v1747
          %v1749 = vlaneseq
          %v1750 = vshrl.u32 %v1749, 7
          %v1751 = vsub.s32 %v1748, %v1750
          %v1752 = vrot.slane %v1745, %v1751
          %v1753 = vcombine.low %v1741, %v1742
          %v1755 = vunpack.c.l.s4 1983009808
          %v1756 = vunpack.c.0.s8 %v1755
          %v1757 = vlaneseq
          %v1758 = vshrl.u32 %v1757, 7
          %v1759 = vsub.s32 %v1756, %v1758
          %v1760 = vrot.slane %v1753, %v1759
          %v1761 = vcombine.low %v1733, %v1740
          %v1763 = vunpack.c.l.s4 1983009808
          %v1764 = vunpack.c.0.s8 %v1763
          %v1765 = vlaneseq
          %v1766 = vshrl.u32 %v1765, 7
          %v1767 = vsub.s32 %v1764, %v1766
          %v1768 = vrot.slane %v1761, %v1767
          %v1769 = vcombine.low %v1743, %v1744
          %v1771 = vunpack.c.l.s4 1983009808
          %v1772 = vunpack.c.0.s8 %v1771
          %v1773 = vlaneseq
          %v1774 = vshrl.u32 %v1773, 7
          %v1775 = vsub.s32 %v1772, %v1774
          %v1776 = vrot.slane %v1769, %v1775
          %v1777 = vcombine.low %v1752, %v1760
          %v1778 = vcombine.high %v1752, %v1760
          %v1780 = vunpack.c.l.s4 1934713408
          %v1781 = vunpack.c.0.s8 %v1780
          %v1782 = vlaneseq
          %v1783 = vshrl.u32 %v1782, 7
          %v1784 = vsub.s32 %v1781, %v1783
          %v1785 = vrot.slane %v1777, %v1784
          %v1787 = vunpack.c.l.s4 1934713408
          %v1788 = vunpack.c.0.s8 %v1787
          %v1789 = vlaneseq
          %v1790 = vshrl.u32 %v1789, 7
          %v1791 = vsub.s32 %v1788, %v1790
          %v1792 = vrot.slane %v1778, %v1791
          %v1793 = vcombine.low %v1768, %v1776
          %v1794 = vcombine.high %v1768, %v1776
          %v1796 = vunpack.c.l.s4 1934713408
          %v1797 = vunpack.c.0.s8 %v1796
          %v1798 = vlaneseq
          %v1799 = vshrl.u32 %v1798, 7
          %v1800 = vsub.s32 %v1797, %v1799
          %v1801 = vrot.slane %v1793, %v1800
          %v1803 = vunpack.c.l.s4 1934713408
          %v1804 = vunpack.c.0.s8 %v1803
          %v1805 = vlaneseq
          %v1806 = vshrl.u32 %v1805, 7
          %v1807 = vsub.s32 %v1804, %v1806
          %v1808 = vrot.slane %v1794, %v1807
          %v1809 = vcombine.low %v1785, %v1801
          %v1810 = vcombine.high %v1785, %v1801
          %v1811 = vcombine.low %v1792, %v1808
          %v1812 = vcombine.high %v1792, %v1808
          %1814 = vrot.lane.b32.xlu0 %v1810, 8
          %v1815 = vpop.permute.xlu0 %1814
          %1818 = vrot.lane.b32.xlu0 %v1811, 16
          %v1819 = vpop.permute.xlu0 %1818
          %1822 = vrot.lane.b32.xlu0 %v1812, 24
          %v1823 = vpop.permute.xlu0 %1822
          %vm1825 = vcmask 64512
          %v1826 = vsel %vm1825, %v1809, %v1815
          %vm1827 = vcmask 130048
          %v1828 = vsel %vm1827, %v1826, %v1819
          %vm1829 = vcmask 195584
          %v1830 = vsel %vm1829, %v1828, %v1823
          %v1831 = vpack.c.bf16 %v1830, %v1830
          %v1832 = vld [vmem:[%s4] sm:$0xf]
          %v1833 = vld [vmem:[%s4 + $0x4] sm:$0xf]
          %v1834 = vld [vmem:[%s4 + $0x8] sm:$0xf]
          %v1835 = vld [vmem:[%s4 + $0xc] sm:$0xf]
          %v1836 = vld [vmem:[%s5] sm:$0x1]
          %v1838 = vlaneseq
          %v1839 = vshrl.u32 %v1838, 7
          %v1840 = vsub.s32 0, %v1839
          %v1841 = vrot.slane %v1836, %v1840
          %v1847 = vunpack.c.l.b16 %v1832
          %v1848 = vunpack.c.l.b16 %v1833
          %v1849 = vunpack.c.l.b16 %v1834
          %v1850 = vunpack.c.l.b16 %v1835
          %v1851 = vpack.c.b16 %v1848, %v1847
          %v1852 = vpack.c.b16 %v1850, %v1849
          %vm1855 = vcmask 261120
          %v1857 = vsel %vm1855, %v1831, 0
          %1859 = vmatprep.subr.bf16.mxu0 0
          %1860 = vmatpush1.bf16.msra.mxu0 0
          %1861 = vmatprep.subr.bf16.mxu0 0
          %1862 = vmatpush1.bf16.msra.mxu0 0
          %1863 = vmatprep.subr.bf16.mxu0 0
          %1864 = vmatpush1.bf16.msra.mxu0 0
          %1865 = vmatprep.subr.bf16.mxu0 0
          %1866 = vmatpush1.bf16.msra.mxu0 0
          %1867 = vmatprep.subr.bf16.mxu0 0
          %1868 = vmatpush1.bf16.msra.mxu0 0
          %1869 = vmatprep.subr.bf16.mxu0 0
          %1870 = vmatpush1.bf16.msra.mxu0 0
          %1871 = vmatprep.subr.bf16.mxu0 0
          %1872 = vmatpush1.bf16.msra.mxu0 %v1852
          %1873 = vmatprep.subr.bf16.mxu0 0
          %1874 = vmatpush1.bf16.msra.mxu0 %v1851
          %1875 = vmatprep.subr.bf16.mxu0 0
          %1876 = vmatpush2.bf16.msra.mxu0 0
          %1877 = vmatprep.subr.bf16.mxu0 0
          %1878 = vmatpush2.bf16.msra.mxu0 0
          %1879 = vmatprep.subr.bf16.mxu0 0
          %1880 = vmatpush2.bf16.msra.mxu0 0
          %1881 = vmatprep.subr.bf16.mxu0 0
          %1882 = vmatpush2.bf16.msra.mxu0 0
          %1883 = vmatprep.subr.bf16.mxu0 0
          %1884 = vmatpush2.bf16.msra.mxu0 0
          %1885 = vmatprep.subr.bf16.mxu0 0
          %1886 = vmatpush2.bf16.msra.mxu0 0
          %1887 = vmatprep.subr.bf16.mxu0 0
          %1888 = vmatpush2.bf16.msra.mxu0 0
          %1889 = vmatprep.subr.bf16.mxu0 0
          %1890 = vmatpush2.bf16.msra.mxu0 0
          %1891 = vmatprep.mubr.bf16.mxu0 0
          %1892 = vmatmul.mubr.bf16.gmra.mxu0 %v1857
          %v1893 = vpop.f32.mrf.mxu0
          %v1894 = vadd.f32 %v1841, %v1893
          %v1895 = vpop.f32.mrf.mxu0
          %v1896 = vpop.f32.mrf.mxu0
          %v1897 = vpop.f32.mrf.mxu0
          %1898 = vdwg.mxu0
          %v1899 = vld [vmem:[%s529] sm:$0xff]
          %v1900 = vadd.f32 %v1899, %v1894
          %v1901 = vld [vmem:[%s6] sm:$0x1]
          %v1902 = vld [vmem:[%s7] sm:$0x1]
          %v1903 = vsel %vm1855, %v1900, 0.0
          %1904 = vadd.xlane.f32.xlu0 %v1903
          %v1905 = vpop.xlane.xlu0 %1904
          %v1906 = vrcp.pop 32.0
          %v1907 = vmul.f32 %v1905, %v1906
          %v1908 = vsub.f32 %v1900, %v1907
          %v1909 = vmul.f32 %v1908, %v1908
          %v1910 = vsel %vm1855, %v1909, 0.0
          %1911 = vadd.xlane.f32.xlu0 %v1910
          %v1912 = vpop.xlane.xlu0 %1911
          %v1913 = vmul.f32 %v1912, %v1906
          %v1914 = vadd.f32 %v1913, 1e-05
          %v1915 = vrsqrt.pop %v1914
          %v1916 = vmul.f32 %v1908, %v1915
          %v1918 = vlaneseq
          %v1919 = vshrl.u32 %v1918, 7
          %v1920 = vsub.s32 0, %v1919
          %v1921 = vrot.slane %v1901, %v1920
          %v1923 = vmul.f32 %v1916, %v1921
          %v1925 = vlaneseq
          %v1926 = vshrl.u32 %v1925, 7
          %v1927 = vsub.s32 0, %v1926
          %v1928 = vrot.slane %v1902, %v1927
          %v1930 = vadd.f32 %v1923, %v1928
          %v1931 = vpack.c.bf16 %v1930, %v1930
          %v1932 = vld [vmem:[%s8] sm:$0xf]
          %v1933 = vld [vmem:[%s8 + $0x4] sm:$0xf]
          %v1934 = vld [vmem:[%s8 + $0x8] sm:$0xf]
          %v1935 = vld [vmem:[%s8 + $0xc] sm:$0xf]
          %v1936 = vld [vmem:[%s9] sm:$0x1]
          %v1938 = vlaneseq
          %v1939 = vshrl.u32 %v1938, 7
          %v1940 = vsub.s32 0, %v1939
          %v1941 = vrot.slane %v1936, %v1940
          %v1947 = vunpack.c.l.b16 %v1932
          %v1948 = vunpack.c.l.b16 %v1933
          %v1949 = vunpack.c.l.b16 %v1934
          %v1950 = vunpack.c.l.b16 %v1935
          %v1951 = vpack.c.b16 %v1948, %v1947
          %v1952 = vpack.c.b16 %v1950, %v1949
          %v1956 = vsel %vm1855, %v1931, 0
          %1958 = vmatprep.subr.bf16.mxu0 0
          %1959 = vmatpush1.bf16.msra.mxu0 0
          %1960 = vmatprep.subr.bf16.mxu0 0
          %1961 = vmatpush1.bf16.msra.mxu0 0
          %1962 = vmatprep.subr.bf16.mxu0 0
          %1963 = vmatpush1.bf16.msra.mxu0 0
          %1964 = vmatprep.subr.bf16.mxu0 0
          %1965 = vmatpush1.bf16.msra.mxu0 0
          %1966 = vmatprep.subr.bf16.mxu0 0
          %1967 = vmatpush1.bf16.msra.mxu0 0
          %1968 = vmatprep.subr.bf16.mxu0 0
          %1969 = vmatpush1.bf16.msra.mxu0 0
          %1970 = vmatprep.subr.bf16.mxu0 0
          %1971 = vmatpush1.bf16.msra.mxu0 %v1952
          %1972 = vmatprep.subr.bf16.mxu0 0
          %1973 = vmatpush1.bf16.msra.mxu0 %v1951
          %1974 = vmatprep.subr.bf16.mxu0 0
          %1975 = vmatpush2.bf16.msra.mxu0 0
          %1976 = vmatprep.subr.bf16.mxu0 0
          %1977 = vmatpush2.bf16.msra.mxu0 0
          %1978 = vmatprep.subr.bf16.mxu0 0
          %1979 = vmatpush2.bf16.msra.mxu0 0
          %1980 = vmatprep.subr.bf16.mxu0 0
          %1981 = vmatpush2.bf16.msra.mxu0 0
          %1982 = vmatprep.subr.bf16.mxu0 0
          %1983 = vmatpush2.bf16.msra.mxu0 0
          %1984 = vmatprep.subr.bf16.mxu0 0
          %1985 = vmatpush2.bf16.msra.mxu0 0
          %1986 = vmatprep.subr.bf16.mxu0 0
          %1987 = vmatpush2.bf16.msra.mxu0 0
          %1988 = vmatprep.subr.bf16.mxu0 0
          %1989 = vmatpush2.bf16.msra.mxu0 0
          %1990 = vmatprep.mubr.bf16.mxu0 0
          %1991 = vmatmul.mubr.bf16.gmra.mxu0 %v1956
          %v1992 = vpop.f32.mrf.mxu0
          %v1993 = vadd.f32 %v1941, %v1992
          %v1994 = vpop.f32.mrf.mxu0
          %v1995 = vpop.f32.mrf.mxu0
          %v1996 = vpop.f32.mrf.mxu0
          %1997 = vdwg.mxu0
          %v1998 = vmax.f32 %v1993, 0.0
          %v1999 = vpack.c.bf16 %v1998, %v1998
          %v2000 = vld [vmem:[%s10] sm:$0xf]
          %v2001 = vld [vmem:[%s10 + $0x4] sm:$0xf]
          %v2002 = vld [vmem:[%s10 + $0x8] sm:$0xf]
          %v2003 = vld [vmem:[%s10 + $0xc] sm:$0xf]
          %v2004 = vld [vmem:[%s10 + $0x10] sm:$0xf]
          %v2005 = vld [vmem:[%s10 + $0x14] sm:$0xf]
          %v2006 = vld [vmem:[%s10 + $0x18] sm:$0xf]
          %v2007 = vld [vmem:[%s10 + $0x1c] sm:$0xf]
          %v2008 = vld [vmem:[%s11] sm:$0x1]
          %v2010 = vlaneseq
          %v2011 = vshrl.u32 %v2010, 7
          %v2012 = vsub.s32 0, %v2011
          %v2013 = vrot.slane %v2008, %v2012
          %v2023 = vunpack.c.l.b16 %v2000
          %v2024 = vunpack.c.l.b16 %v2001
          %v2025 = vunpack.c.l.b16 %v2002
          %v2026 = vunpack.c.l.b16 %v2003
          %v2027 = vunpack.c.l.b16 %v2004
          %v2028 = vunpack.c.l.b16 %v2005
          %v2029 = vunpack.c.l.b16 %v2006
          %v2030 = vunpack.c.l.b16 %v2007
          %v2031 = vpack.c.b16 %v2024, %v2023
          %v2032 = vpack.c.b16 %v2026, %v2025
          %v2033 = vpack.c.b16 %v2028, %v2027
          %v2034 = vpack.c.b16 %v2030, %v2029
          %vm2039 = vcmask 523264
          %v2041 = vsel %vm2039, %v1999, 0
          %2043 = vmatprep.subr.bf16.mxu0 0
          %2044 = vmatpush1.bf16.msra.mxu0 0
          %2045 = vmatprep.subr.bf16.mxu0 0
          %2046 = vmatpush1.bf16.msra.mxu0 0
          %2047 = vmatprep.subr.bf16.mxu0 0
          %2048 = vmatpush1.bf16.msra.mxu0 0
          %2049 = vmatprep.subr.bf16.mxu0 0
          %2050 = vmatpush1.bf16.msra.mxu0 0
          %2051 = vmatprep.subr.bf16.mxu0 0
          %2052 = vmatpush1.bf16.msra.mxu0 %v2034
          %2053 = vmatprep.subr.bf16.mxu0 0
          %2054 = vmatpush1.bf16.msra.mxu0 %v2033
          %2055 = vmatprep.subr.bf16.mxu0 0
          %2056 = vmatpush1.bf16.msra.mxu0 %v2032
          %2057 = vmatprep.subr.bf16.mxu0 0
          %2058 = vmatpush1.bf16.msra.mxu0 %v2031
          %2059 = vmatprep.subr.bf16.mxu0 0
          %2060 = vmatpush2.bf16.msra.mxu0 0
          %2061 = vmatprep.subr.bf16.mxu0 0
          %2062 = vmatpush2.bf16.msra.mxu0 0
          %2063 = vmatprep.subr.bf16.mxu0 0
          %2064 = vmatpush2.bf16.msra.mxu0 0
          %2065 = vmatprep.subr.bf16.mxu0 0
          %2066 = vmatpush2.bf16.msra.mxu0 0
          %2067 = vmatprep.subr.bf16.mxu0 0
          %2068 = vmatpush2.bf16.msra.mxu0 0
          %2069 = vmatprep.subr.bf16.mxu0 0
          %2070 = vmatpush2.bf16.msra.mxu0 0
          %2071 = vmatprep.subr.bf16.mxu0 0
          %2072 = vmatpush2.bf16.msra.mxu0 0
          %2073 = vmatprep.subr.bf16.mxu0 0
          %2074 = vmatpush2.bf16.msra.mxu0 0
          %2075 = vmatprep.mubr.bf16.mxu0 0
          %2076 = vmatmul.mubr.bf16.gmra.mxu0 %v2041
          %v2077 = vpop.f32.mrf.mxu0
          %v2078 = vadd.f32 %v2013, %v2077
          %v2079 = vpop.f32.mrf.mxu0
          %v2080 = vpop.f32.mrf.mxu0
          %v2081 = vpop.f32.mrf.mxu0
          %2082 = vdwg.mxu0
          %v2083 = vadd.f32 %v1900, %v2078
          %2084 = vst.msk [vmem:[%s522] sm:$0xff] %vm1855, %v2083
        $region84: #{_encoder_layer_impl.3} parent=67 // pred_fallthru
          _
        %s2085 = sand.u32 %s343, 1
        %s2086 = scalar_lea.sflag [#allocation6], %s2085
        %s2087 = sand.u32 %s343, 1
        %s2088 = smul.addr %s2087, 8
        %s2089 = scalar_lea.vmem [#allocation5], %s2088
        // Predicated region
        $region85: #{_encoder_layer_impl.3} parent=67 // pred_check
          %p2090 = pneg %p353
        $region86: #{_encoder_layer_impl.3} parent=67 // pred_check_branch
          %2092 = sbr.rel (%p2090) target = $region88
        $region87: #{_encoder_layer_impl.3} parent=67 // pred_region
          %s2094 = ssub.s32 128, 128
          %2095 = vsyncadd %s2086, %s2094
          %s2096 = sadd.s32 %s32, %s31
          %s2097 = smul.addr %s2096, 128
          %s2098 = scalar_lea.hbm %s12, %s2097
          %s2100 = sshll.u32 %s2089, 4
          %s2101 = int_to_ptr.vmem [resolvable:$true] %s2100
          %2103 = dma.vmem_to_hbm [thread:$0]  %s2101, 128, %s2098, %s2086
        $region88: #{_encoder_layer_impl.3} parent=67 // pred_fallthru
          _
      $region68: #{_encoder_layer_impl.3} parent=5 // pred_fallthru
        _
      %p2104 = scmp.le.s32.totalorder 2, %s21
      // Predicated region
      $region89: #{_encoder_layer_impl.3} parent=5 // pred_check
        %p2105 = pneg %p2104
      $region90: #{_encoder_layer_impl.3} parent=5 // pred_check_branch
        %2107 = sbr.rel (%p2105) target = $region92
      $region91: #{_encoder_layer_impl.3} parent=5 // pred_region
        %s2108 = ssub.s32 %s21, 2
        // Predicated region
        $region93: #{_encoder_layer_impl.3} parent=91 // pred_check
          %p2109 = pneg %p359
        $region94: #{_encoder_layer_impl.3} parent=91 // pred_check_branch
          %2111 = sbr.rel (%p2109) target = $region96
        $region95: #{_encoder_layer_impl.3} parent=91 // pred_region
          %s2112 = sand.u32 %s344, 1
          %s2113 = scalar_lea.sflag [#allocation6], %s2112
          %s2114 = sand.u32 %s344, 1
          %s2115 = smul.addr %s2114, 8
          %s2116 = scalar_lea.vmem [#allocation5], %s2115
          %2117 = dma.done %s2113, 128
        $region96: #{_encoder_layer_impl.3} parent=91 // pred_fallthru
          _
      $region92: #{_encoder_layer_impl.3} parent=5 // pred_fallthru
        _
    $region6: #{_encoder_layer_impl.3} parent=1 // loop_footer
      %s25 = sadd.s32 1, %s21
    $region7: #{_encoder_layer_impl.3} parent=1 // loop_footer_branch
      %20 = sbr.rel target = $region3
    $region8: #{_encoder_layer_impl.3} parent=1 // loop_exit
      _
    %2118 = vsyncpa [#allocation6], 1
    %s2119 = scalar_lea.sflag [#allocation6], 1
    %2120 = vsyncpa %s2119, 1

</llo_original>
